<compile_context>
chip_gen: v5e
topology: v5e:2x2
jax: 0.10.0
libtpu: 0.0.40
codegen_flags: <defaults>
</compile_context>

<pallas_src>
import functools

import jax
import jax.numpy as jnp
import numpy as np
from jax.experimental import pallas as pl
from jax.experimental.pallas import tpu as pltpu


# --------------------------------------------------------------------------
# small helpers
# --------------------------------------------------------------------------
def _round_up(x, m):
    return ((x + m - 1) // m) * m


def _pick_tile(total, pref, min_blocks=1):
    """Largest multiple of 128 <= pref dividing `total` (total % 128 == 0).
    `min_blocks` caps the tile so the axis keeps at least that many blocks
    (keeps 'parallel' grid axes >= 2 blocks for the 2-TensorCore v7x)."""
    cap = max(128, ((total // max(min_blocks, 1)) // 128) * 128)
    t = max(128, min((pref // 128) * 128, cap, total))
    while total % t:
        t -= 128
    return t


# --------------------------------------------------------------------------
# Kernel 1: ONE fused transposed linear for every projection of `features`
#   slab = W_all^T @ features^T + b_all     (C_all, N)   lane-dense output
#   slab rows: [ H^T (R*D) | p^T (R*head) | u^T (1) | q^T (R*head) | v^T (1) ]
# --------------------------------------------------------------------------
def _fused_linear_kernel(xt_ref, w_ref, b_ref, o_ref):
    o_ref[...] = jnp.dot(w_ref[...], xt_ref[...],
                         preferred_element_type=jnp.float32) + b_ref[...]


def _fused_linear(x_t, w_all_t, b_all, *, tl):
    c_all, f = w_all_t.shape
    npad = x_t.shape[1]
    return pl.pallas_call(
        _fused_linear_kernel,
        out_shape=jax.ShapeDtypeStruct((c_all, npad), jnp.float32),
        grid=(npad // tl,),
        in_specs=[
            pl.BlockSpec((f, tl), lambda i: (0, i)),        # features^T tile
            pl.BlockSpec((c_all, f), lambda i: (0, 0)),     # fused weight^T
            pl.BlockSpec((c_all, 1), lambda i: (0, 0)),     # fused bias
        ],
        out_specs=pl.BlockSpec((c_all, tl), lambda i: (0, i)),
        compiler_params=pltpu.CompilerParams(
            dimension_semantics=("parallel",)),
    )(x_t, w_all_t, b_all)


# --------------------------------------------------------------------------
# Kernel 2: fused multi-relation aggregation (fixed-bound softmax over src tiles)
#   layout: src nodes on sublanes, dst nodes on lanes (lane-dense everywhere).
#   output: h^T of shape (hd, N)  -- final `liner` fused into the epilogue.
#   src pack su  = [p | u]            (N, R*head + 1)
#   dst pack dst = [q ; v ; m]        (2*R*head + 1, N)   m = softmax shift bound
# --------------------------------------------------------------------------
def _agg_kernel(adj_ref, su_ref, dst_ref, ht_ref, lw_ref, lb_ref, o_ref,
                l_sc, acc_sc, *, n_rel, head, hd, D):
    k = pl.program_id(1)
    nk = pl.num_programs(1)
    RH = n_rel * head
    tk = su_ref.shape[0]

    @pl.when(k == 0)
    def _init():
        l_sc[...] = jnp.zeros(l_sc.shape, jnp.float32)
        acc_sc[...] = jnp.zeros(acc_sc.shape, jnp.float32)

    ones_row = jnp.ones((1, tk), jnp.float32)

    # relation-independent sign, computed ONCE per (dst tile, src tile)
    sign = jnp.tanh(su_ref[:, RH:RH + 1] + dst_ref[RH:RH + 1, :])   # (tk, tm)

    for r in range(n_rel):
        a_f = adj_ref[r].astype(jnp.float32)                        # 0/1 mask
        for hh in range(head):
            c = r * head + hh
            x = sign * su_ref[:, c:c + 1] + dst_ref[c:c + 1, :]     # (tk, tm)
            x = jnp.maximum(x, 0.01 * x)                            # LeakyReLU
            # fixed per-(head,dst) shift m >= x, so exp <= 1; non-edges -> 0
            e = jnp.exp(x - dst_ref[RH + 1 + c:RH + 2 + c, :]) * a_f
            # column sum on the (idle) MXU instead of a sublane VPU/XLU reduce
            l_sc[c:c + 1, :] += jnp.dot(ones_row, e,
                                        preferred_element_type=jnp.float32)
            w = e * sign                                            # (tk, tm)
            h_blk = ht_ref[r * D + hh * hd:r * D + (hh + 1) * hd, :]  # (hd, tk)
            acc_sc[c * hd:(c + 1) * hd, :] += jnp.dot(
                h_blk, w, preferred_element_type=jnp.float32)       # (hd, tm)

    @pl.when(k == nk - 1)
    def _finalize():
        tm = o_ref.shape[1]
        h_t = jnp.zeros((hd, tm), jnp.float32)
        for r in range(n_rel):
            out_r = jnp.zeros((hd, tm), jnp.float32)
            for hh in range(head):
                c = r * head + hh
                l_c = l_sc[c:c + 1, :]
                inv = pl.reciprocal(jnp.where(l_c > 0, l_c, 1.0), approx=True)
                out_r = out_r + acc_sc[c * hd:(c + 1) * hd, :] * inv
            # fused final `liner`:  h^T += lin_w[r]^T @ out_r
            h_t = h_t + jnp.dot(lw_ref[:, r * hd:(r + 1) * hd], out_r,
                                preferred_element_type=jnp.float32)
        o_ref[...] = h_t + lb_ref[...]


def _aggregate(adj_i8, src_pack, dst_pack, h_t_all, lin_w_t, lin_b_t,
               *, n_rel, head, hd, tm, tk):
    R = n_rel
    D = head * hd
    RH = R * head
    RD = R * D
    npad = adj_i8.shape[1]
    kern = functools.partial(_agg_kernel, n_rel=R, head=head, hd=hd, D=D)
    return pl.pallas_call(
        kern,
        out_shape=jax.ShapeDtypeStruct((hd, npad), jnp.float32),
        grid=(npad // tm, npad // tk),
        in_specs=[
            pl.BlockSpec((R, tk, tm), lambda i, k: (0, k, i)),     # adjacency int8
            pl.BlockSpec((tk, RH + 1), lambda i, k: (k, 0)),       # [p | u]  (src)
            pl.BlockSpec((2 * RH + 1, tm), lambda i, k: (0, i)),   # [q; v; m] (dst)
            pl.BlockSpec((RD, tk), lambda i, k: (0, k)),           # H^T (lane-dense)
            pl.BlockSpec((hd, R * hd), lambda i, k: (0, 0)),       # lin_w^T
            pl.BlockSpec((hd, 1), lambda i, k: (0, 0)),            # lin_b^T
        ],
        out_specs=pl.BlockSpec((hd, tm), lambda i, k: (0, i)),
        scratch_shapes=[
            pltpu.VMEM((RH, tm), jnp.float32),                     # softmax denom
            pltpu.VMEM((RH * hd, tm), jnp.float32),                # un-normalized acc
        ],
        compiler_params=pltpu.CompilerParams(
            dimension_semantics=("parallel", "arbitrary"),
            vmem_limit_bytes=32 * 1024 * 1024),
    )(adj_i8, src_pack, dst_pack, h_t_all, lin_w_t, lin_b_t)


# --------------------------------------------------------------------------
# Kernel 3: tiled label propagation   y = rownorm1((A@A)*A) @ labels
#   consumes the same src-major int8 adjacency (last relation selected by the
#   index_map); labels carry an extra all-ones column so numerator and L1 row
#   sums come out of a single accumulation.  A@A runs with bf16 operands
#   (0/1 entries exact) and f32 accumulation.
# --------------------------------------------------------------------------
def _label_prop_kernel(a_jk_ref, a_ki_ref, a_ji_ref, labt_ref, o_ref,
                       bi_acc, num_acc):
    j = pl.program_id(1)
    k = pl.program_id(2)
    nj = pl.num_programs(1)
    nk = pl.num_programs(2)

    @pl.when(jnp.logical_and(j == 0, k == 0))
    def _init_num():
        num_acc[...] = jnp.zeros(num_acc.shape, jnp.float32)

    @pl.when(k == 0)
    def _init_bi():
        bi_acc[...] = jnp.zeros(bi_acc.shape, jnp.float32)

    # int8 -> f32 -> bf16 (two well-supported converts); bf16 is the full-rate
    # MXU path on v5e/v6e/v7x and exact for 0/1 adjacency entries.
    a_jk = a_jk_ref[0].astype(jnp.float32).astype(jnp.bfloat16)
    a_ki = a_ki_ref[0].astype(jnp.float32).astype(jnp.bfloat16)
    bi_acc[...] += jnp.dot(a_jk, a_ki, preferred_element_type=jnp.float32)

    @pl.when(k == nk - 1)
    def _accumulate():
        ts = bi_acc[...] * a_ji_ref[0].astype(jnp.float32)          # (TJ, TI)
        num_acc[...] += jnp.dot(labt_ref[...].astype(jnp.bfloat16),
                                ts.astype(jnp.bfloat16),
                                preferred_element_type=jnp.float32)  # (C+1, TI)

    @pl.when(jnp.logical_and(j == nj - 1, k == nk - 1))
    def _finalize():
        num = num_acc[...]
        o_ref[...] = num[:-1, :] / jnp.maximum(num[-1:, :], 1e-12)


def _label_prop(adj_i8, lab_t, *, n_classes, tile):
    n_rel, npad, _ = adj_i8.shape
    t = tile
    g = npad // t
    caug = lab_t.shape[0]
    return pl.pallas_call(
        _label_prop_kernel,
        out_shape=jax.ShapeDtypeStruct((n_classes, npad), jnp.float32),
        grid=(g, g, g),
        in_specs=[
            pl.BlockSpec((1, t, t), lambda i, j, k: (n_rel - 1, j, k)),
            pl.BlockSpec((1, t, t), lambda i, j, k: (n_rel - 1, k, i)),
            pl.BlockSpec((1, t, t), lambda i, j, k: (n_rel - 1, j, i)),
            pl.BlockSpec((caug, t), lambda i, j, k: (0, j)),
        ],
        out_specs=pl.BlockSpec((n_classes, t), lambda i, j, k: (0, i)),
        scratch_shapes=[
            pltpu.VMEM((t, t), jnp.float32),          # bi = A @ A block acc
            pltpu.VMEM((caug, t), jnp.float32),       # [labels | rowsum] acc
        ],
        compiler_params=pltpu.CompilerParams(
            dimension_semantics=("parallel", "arbitrary", "arbitrary"),
            vmem_limit_bytes=32 * 1024 * 1024),
    )(adj_i8, adj_i8, adj_i8, lab_t)


# --------------------------------------------------------------------------
# host-side parameter folding (tiny, O(input_dim * D) work per forward)
# --------------------------------------------------------------------------
def _fold_params(params, *, n_rel, head, hd):
    D = head * hd
    hp = jax.lax.Precision.HIGHEST
    F = params["d_w"].shape[0]
    wf, bf = params["f_w"], params["f_b"]
    w_src, w_dst, w_diff = wf[:D], wf[D:2 * D], wf[2 * D:]

    cu = jnp.dot(params["d_w"], w_src + w_diff, precision=hp)           # (F,)
    bu = jnp.dot(params["d_b"][0], w_src + w_diff, precision=hp) + bf
    cv = jnp.dot(params["d_w"], w_dst - w_diff, precision=hp)
    bv = jnp.dot(params["d_b"][0], w_dst - w_diff, precision=hp)

    w_h = jnp.concatenate([params["rel"][r]["w_w"] for r in range(n_rel)], 1)
    b_h = jnp.concatenate([params["rel"][r]["w_b"] for r in range(n_rel)], 1)

    wp, bp, wq, bq = [], [], [], []
    for r in range(n_rel):
        pr = params["rel"][r]
        ww, wb = pr["w_w"], pr["w_b"][0]
        aw, ab = pr["a_w"], pr["a_b"]
        a_src, a_dst = aw[:hd], aw[hd:]
        w3 = ww.reshape(F, head, hd)
        b3 = wb.reshape(head, hd)
        wp.append(jnp.einsum("fhd,d->fh", w3, a_src))
        bp.append(jnp.einsum("hd,d->h", b3, a_src))
        wq.append(jnp.einsum("fhd,d->fh", w3, a_dst))
        bq.append(jnp.einsum("hd,d->h", b3, a_dst) + ab)

    # fused slab row order: [ H^T | p^T | u^T | q^T | v^T ]
    w_all_t = jnp.concatenate([
        w_h.T,                               # (R*D, F)
        jnp.concatenate(wp, 1).T,            # (R*head, F)
        cu[None, :],                         # (1, F)
        jnp.concatenate(wq, 1).T,            # (R*head, F)
        cv[None, :],                         # (1, F)
    ], axis=0).astype(jnp.float32)
    b_all = jnp.concatenate([
        b_h[0],
        jnp.concatenate(bp),
        jnp.reshape(bu, (1,)),
        jnp.concatenate(bq),
        jnp.reshape(bv, (1,)),
    ])[:, None].astype(jnp.float32)

    lin_w_t = params["lin_w"].T.astype(jnp.float32)        # (hd, n_rel*hd)
    lin_b_t = params["lin_b"].reshape(-1, 1).astype(jnp.float32)
    return w_all_t, b_all, lin_w_t, lin_b_t


# --------------------------------------------------------------------------
# Layer forward (eval mode, if_sum=True)
# --------------------------------------------------------------------------
def mr_dual_hfd_forward(params, adj_src, features, labels, *, head, hd,
                        tile_dst=256, tile_src=256, tile_lp=256):
    """adj_src: (n_rel, N, N) src-major adjacency: adj_src[r, j, i] != 0 <=> edge j -> i."""
    n_rel, n, _ = adj_src.shape
    R = n_rel
    D = head * hd
    RH = R * head
    RD = R * D
    n_classes = labels.shape[1]

    npad = _round_up(n, 128)
    pad = npad - n
    # keep the "parallel" axes at >= 2 blocks (v7x has 2 TensorCores per chip)
    tm = _pick_tile(npad, tile_dst, min_blocks=2)   # dst tile (lanes)
    tk = _pick_tile(npad, tile_src)                 # src tile (sublanes)
    tl = _pick_tile(npad, 256, min_blocks=2)
    tlp = _pick_tile(npad, tile_lp, min_blocks=2)

    adj_p = jnp.pad(adj_src.astype(jnp.int8), ((0, 0), (0, pad), (0, pad)))
    feat_t = jnp.pad(features.astype(jnp.float32), ((0, pad), (0, 0))).T  # (F, Np)

    # ONE wide fused (and transposed) matmul for every projection of `features`
    w_all_t, b_all, lin_w_t, lin_b_t = _fold_params(
        params, n_rel=R, head=head, hd=hd)
    slab = _fused_linear(feat_t, w_all_t, b_all, tl=tl)    # (C_all, Np)

    h_t_all = slab[:RD]                                    # (R*D, Np)  lane-dense H^T
    src_pack = slab[RD:RD + RH + 1].T                      # (Np, RH+1) = [p | u]
    q_t = slab[RD + RH + 1:RD + 2 * RH + 1]                # (RH, Np)
    v_t = slab[RD + 2 * RH + 1:RD + 2 * RH + 2]            # (1, Np)
    # fixed softmax shift:  pre <= max(max_j|p[:,c]| + q[c,i], 0)  (sign in [-1,1],
    # leakyrelu <= max(x,0)); tiny XLA reduction over (RH, Np).
    pmax = jnp.max(jnp.abs(slab[RD:RD + RH]), axis=1, keepdims=True)   # (RH, 1)
    m_t = jnp.maximum(pmax + q_t, 0.0)                     # (RH, Np)
    dst_pack = jnp.concatenate([q_t, v_t, m_t], axis=0)    # (2*RH+1, Np)

    h_t = _aggregate(adj_p, src_pack, dst_pack, h_t_all, lin_w_t, lin_b_t,
                     n_rel=R, head=head, hd=hd, tm=tm, tk=tk)
    h = h_t.T[:n]                                          # (N, hd)

    # label propagation on the LAST relation (matches the PyTorch python loop)
    lab_aug = jnp.concatenate(
        [labels.astype(jnp.float32), jnp.ones((n, 1), jnp.float32)], axis=1)
    lab_t = jnp.pad(lab_aug, ((0, pad), (0, 0))).T         # (C+1, Np)
    y_t = _label_prop(adj_p, lab_t, n_classes=n_classes, tile=tlp)
    y_hat = y_t.T[:n]
    return h, y_hat


# --------------------------------------------------------------------------
# pure-JAX dense reference of the same math (dst-major adjacency)
# --------------------------------------------------------------------------
def reference_forward(params, adjs, features, labels, *, head, hd):
    D = head * hd
    hp = "highest"
    d = jnp.dot(features, params["d_w"], precision=hp) + params["d_b"]
    wf, bf = params["f_w"], params["f_b"]
    u = d @ (wf[:D] + wf[2 * D:]) + bf
    v = d @ (wf[D:2 * D] - wf[2 * D:])
    sign = jnp.tanh(u[None, :] + v[:, None])            # [dst i, src j]
    hs = []
    for r, adj in enumerate(adjs):
        pr = params["rel"][r]
        hfeat = jnp.dot(features, pr["w_w"], precision=hp) + pr["w_b"]
        h3 = hfeat.reshape(-1, head, hd)
        wa, ba = pr["a_w"], pr["a_b"]
        p = jnp.einsum("nhd,d->nh", h3, wa[:hd])
        q = jnp.einsum("nhd,d->nh", h3, wa[hd:]) + ba
        pre = sign[:, :, None] * p[None, :, :] + q[:, None, :]
        pre = jnp.where(pre > 0, pre, 0.01 * pre)
        mask = (adj > 0)[:, :, None]
        pre = jnp.where(mask, pre, -1e30)
        m = pre.max(axis=1, keepdims=True)
        e = jnp.where(mask, jnp.exp(pre - m), 0.0)
        den = e.sum(axis=1, keepdims=True)
        alpha = e / jnp.where(den > 0, den, 1.0)
        sf = sign[:, :, None, None] * h3[None, :, :, :]
        out = (alpha[..., None] * sf).sum(axis=1).sum(axis=1)
        hs.append(out)
    h = jnp.concatenate(hs, axis=1)
    h = jnp.dot(h, params["lin_w"], precision=hp) + params["lin_b"]
    a = adjs[-1]
    t = jnp.dot(a, a, precision=hp) * a
    t = t / jnp.maximum(jnp.sum(jnp.abs(t), axis=1, keepdims=True), 1e-12)
    y_hat = jnp.dot(t, labels, precision=hp)
    return h, y_hat


# --------------------------------------------------------------------------
# parameter construction (uniform init like the PyTorch module)
# --------------------------------------------------------------------------
def make_params(key, *, input_dim, output_dim, head, n_relation):
    D = output_dim * head
    hd = output_dim
    ks = jax.random.split(key, 8 + 4 * n_relation)

    def unif(k, shape, bound):
        return jax.random.uniform(k, shape, jnp.float32, -bound, bound)

    params = {
        "d_w": unif(ks[0], (input_dim, D), 1.0 / np.sqrt(input_dim)),
        "d_b": unif(ks[1], (1, D), 1.0 / np.sqrt(input_dim)),
        "f_w": unif(ks[2], (3 * D,), 1.0 / np.sqrt(3 * D)),
        "f_b": unif(ks[3], (), 1.0 / np.sqrt(3 * D)),
        # if_sum=True layer: liner maps n_relation*hd -> hd
        "lin_w": unif(ks[4], (n_relation * hd, hd), 1.0 / np.sqrt(n_relation * hd)),
        "lin_b": unif(ks[5], (1, hd), 1.0 / np.sqrt(n_relation * hd)),
        "rel": [],
    }
    # Label_Propagation.weight / weight_bi / w / bias are unused in forward.
    for r in range(n_relation):
        kk = ks[8 + 4 * r: 8 + 4 * (r + 1)]
        params["rel"].append({
            "w_w": unif(kk[0], (input_dim, D), 1.0 / np.sqrt(input_dim)),
            "w_b": unif(kk[1], (1, D), 1.0 / np.sqrt(input_dim)),
            "a_w": unif(kk[2], (2 * hd,), 1.0 / np.sqrt(2 * hd)),
            "a_b": unif(kk[3], (), 1.0 / np.sqrt(2 * hd)),
        })
    return params


# --------------------------------------------------------------------------
# main
# --------------------------------------------------------------------------
if __name__ == "__main__":
    N = 512            # number of graph nodes
    INPUT_DIM = 16
    OUTPUT_DIM = 8     # = hd
    HEAD = 2
    N_RELATION = 2
    N_CLASSES = 2

    key = jax.random.PRNGKey(0)
    k_feat, k_lab, k_param, k_adj = jax.random.split(key, 4)

    features = jax.random.normal(k_feat, (N, INPUT_DIM), jnp.float32)
    label_ids = jax.random.randint(k_lab, (N,), 0, N_CLASSES)
    labels = jax.nn.one_hot(label_ids, N_CLASSES, dtype=jnp.float32)

    adj_keys = jax.random.split(k_adj, N_RELATION)
    # dst-major adjacency (reference convention): adjs_dst[r][i, j] = edge j -> i
    adjs_dst = [jax.random.bernoulli(k, 0.05, (N, N)).astype(jnp.float32)
                for k in adj_keys]
    # src-major int8 stack consumed by the kernels: adj_src[r, j, i] = edge j -> i
    adj_src = jnp.stack([a.T for a in adjs_dst]).astype(jnp.int8)

    params = make_params(k_param, input_dim=INPUT_DIM, output_dim=OUTPUT_DIM,
                         head=HEAD, n_relation=N_RELATION)

    fwd = jax.jit(functools.partial(mr_dual_hfd_forward,
                                    head=HEAD, hd=OUTPUT_DIM))
    h, y_hat = fwd(params, adj_src, features, labels)
    h = jax.block_until_ready(h)
    y_hat = jax.block_until_ready(y_hat)

    # correctness check against a pure-JAX dense reference of the same math
    h_ref, y_ref = reference_forward(params, adjs_dst, features, labels,
                                     head=HEAD, hd=OUTPUT_DIM)
    np.testing.assert_allclose(np.asarray(h), np.asarray(h_ref),
                               rtol=2e-2, atol=2e-2)
    np.testing.assert_allclose(np.asarray(y_hat), np.asarray(y_ref),
                               rtol=2e-2, atol=2e-2)

    assert h.shape == (N, OUTPUT_DIM) and y_hat.shape == (N, N_CLASSES)
    # TODO(synk): dropout layers are eval-mode identities; the loss() method
    # (host-side sampling / hinge / nll losses) is not ported.
    print("KERNEL_OK")
</pallas_src>

<mosaic_0001>
module attributes {stable_mosaic.version = 11 : i64} {
  func.func @_fused_linear_kernel(%arg0: i32, %arg1: memref<16x256xf32, #tpu.memory_space<vmem>>, %arg2: memref<42x16xf32, #tpu.memory_space<vmem>>, %arg3: memref<42x1xf32, #tpu.memory_space<vmem>>, %arg4: memref<42x256xf32, #tpu.memory_space<vmem>>) attributes {dimension_semantics = [#tpu.dimension_semantics<parallel>], iteration_bounds = array<i64: 2>, scalar_prefetch = 0 : i64, scratch_operands = 0 : i64, tpu.core_type = #tpu.core_type<tc>, window_params = [{transform_indices = @transform_0, window_bounds = array<i64: 16, 256>}, {pipeline_mode = #tpu.pipeline_mode<synchronous>, transform_indices = @transform_1, window_bounds = array<i64: 42, 16>}, {pipeline_mode = #tpu.pipeline_mode<synchronous>, transform_indices = @transform_2, window_bounds = array<i64: 42, 1>}, {transform_indices = @transform_3, window_bounds = array<i64: 42, 256>}]} {
    %c0 = arith.constant 0 : index
    %c0_0 = arith.constant 0 : index
    %0 = vector.load %arg2[%c0, %c0_0] : memref<42x16xf32, #tpu.memory_space<vmem>>, vector<42x16xf32>
    %c0_1 = arith.constant 0 : index
    %c0_2 = arith.constant 0 : index
    %1 = vector.load %arg1[%c0_1, %c0_2] : memref<16x256xf32, #tpu.memory_space<vmem>>, vector<16x256xf32>
    %cst = arith.constant dense<0.000000e+00> : vector<42x256xf32>
    %2 = tpu.matmul %0, %1, %cst {dimension_numbers = #tpu.dot_dimension_numbers<[1], [0], [0], [1], [0, 0, 1, 1], [], []>} : vector<42x16xf32>, vector<16x256xf32>, vector<42x256xf32> -> vector<42x256xf32>
    %c0_3 = arith.constant 0 : index
    %c0_4 = arith.constant 0 : index
    %3 = vector.load %arg3[%c0_3, %c0_4] : memref<42x1xf32, #tpu.memory_space<vmem>>, vector<42x1xf32>
    %4 = vector.broadcast %3 : vector<42x1xf32> to vector<42x256xf32>
    %5 = arith.addf %2, %4 : vector<42x256xf32>
    %c0_5 = arith.constant 0 : index
    %c0_6 = arith.constant 0 : index
    %6 = vector.load %arg4[%c0_5, %c0_6] : memref<42x256xf32, #tpu.memory_space<vmem>>, vector<42x256xf32>
    tpu.vector_store %arg4[%c0_5, %c0_6], %5 {strides = array<i32>} : memref<42x256xf32, #tpu.memory_space<vmem>>, vector<42x256xf32>,
    return
  }
  func.func @transform_0(%arg0: i32) -> (i32, i32) {
    %c0_i32 = arith.constant 0 : i32
    %c0_i32_0 = arith.constant 0 : i32
    return %c0_i32, %arg0 : i32, i32
  }
  func.func @transform_1(%arg0: i32) -> (i32, i32) {
    %c0_i32 = arith.constant 0 : i32
    %c0_i32_0 = arith.constant 0 : i32
    %c0_i32_1 = arith.constant 0 : i32
    return %c0_i32, %c0_i32_0 : i32, i32
  }
  func.func @transform_2(%arg0: i32) -> (i32, i32) {
    %c0_i32 = arith.constant 0 : i32
    %c0_i32_0 = arith.constant 0 : i32
    %c0_i32_1 = arith.constant 0 : i32
    return %c0_i32, %c0_i32_0 : i32, i32
  }
  func.func @transform_3(%arg0: i32) -> (i32, i32) {
    %c0_i32 = arith.constant 0 : i32
    %c0_i32_0 = arith.constant 0 : i32
    return %c0_i32, %arg0 : i32, i32
  }
}

module attributes {stable_mosaic.version = 11 : i64} {
  func.func @_label_prop_kernel(%arg0: i32, %arg1: i32, %arg2: i32, %arg3: memref<1x256x256xi8, #tpu.memory_space<vmem>>, %arg4: memref<1x256x256xi8, #tpu.memory_space<vmem>>, %arg5: memref<1x256x256xi8, #tpu.memory_space<vmem>>, %arg6: memref<3x256xf32, #tpu.memory_space<vmem>>, %arg7: memref<2x256xf32, #tpu.memory_space<vmem>>, %arg8: memref<256x256xf32, #tpu.memory_space<vmem>>, %arg9: memref<3x256xf32, #tpu.memory_space<vmem>>) attributes {dimension_semantics = [#tpu.dimension_semantics<parallel>, #tpu.dimension_semantics<arbitrary>, #tpu.dimension_semantics<arbitrary>], iteration_bounds = array<i64: 2, 2, 2>, scalar_prefetch = 0 : i64, scratch_operands = 2 : i64, tpu.core_type = #tpu.core_type<tc>, window_params = [{transform_indices = @transform_0, window_bounds = array<i64: 1, 256, 256>}, {transform_indices = @transform_1, window_bounds = array<i64: 1, 256, 256>}, {transform_indices = @transform_2, window_bounds = array<i64: 1, 256, 256>}, {transform_indices = @transform_3, window_bounds = array<i64: 3, 256>}, {transform_indices = @transform_4, window_bounds = array<i64: 2, 256>}]} {
    %c0_i32 = arith.constant 0 : i32
    %0 = arith.cmpi eq, %arg1, %c0_i32 : i32
    %c0_i32_0 = arith.constant 0 : i32
    %1 = arith.cmpi eq, %arg2, %c0_i32_0 : i32
    %2 = arith.andi %0, %1 : i1
    %3 = arith.extui %2 : i1 to i32
    %c0_i32_1 = arith.constant 0 : i32
    %4 = arith.cmpi ne, %3, %c0_i32_1 : i32
    scf.if %4 {
      %cst_17 = arith.constant 0.000000e+00 : f32
      %28 = vector.broadcast %cst_17 : f32 to vector<3x256xf32>
      %c0_18 = arith.constant 0 : index
      %c0_19 = arith.constant 0 : index
      %29 = vector.load %arg9[%c0_18, %c0_19] : memref<3x256xf32, #tpu.memory_space<vmem>>, vector<3x256xf32>
      tpu.vector_store %arg9[%c0_18, %c0_19], %28 {strides = array<i32>} : memref<3x256xf32, #tpu.memory_space<vmem>>, vector<3x256xf32>,
    } else {
    }
    %c0_i32_2 = arith.constant 0 : i32
    %5 = arith.cmpi eq, %arg2, %c0_i32_2 : i32
    %6 = arith.extui %5 : i1 to i32
    %c0_i32_3 = arith.constant 0 : i32
    %7 = arith.cmpi ne, %6, %c0_i32_3 : i32
    scf.if %7 {
      %cst_17 = arith.constant 0.000000e+00 : f32
      %28 = vector.broadcast %cst_17 : f32 to vector<256x256xf32>
      %c0_18 = arith.constant 0 : index
      %c0_19 = arith.constant 0 : index
      %29 = vector.load %arg8[%c0_18, %c0_19] : memref<256x256xf32, #tpu.memory_space<vmem>>, vector<256x256xf32>
      tpu.vector_store %arg8[%c0_18, %c0_19], %28 {strides = array<i32>} : memref<256x256xf32, #tpu.memory_space<vmem>>, vector<256x256xf32>,
    } else {
    }
    %c0 = arith.constant 0 : index
    %c0_4 = arith.constant 0 : index
    %c0_5 = arith.constant 0 : index
    %8 = vector.load %arg3[%c0, %c0_4, %c0_5] : memref<1x256x256xi8, #tpu.memory_space<vmem>>, vector<1x256x256xi8>
    %9 = vector.shape_cast %8 : vector<1x256x256xi8> to vector<256x256xi8>
    %10 = arith.sitofp %9 : vector<256x256xi8> to vector<256x256xf32>
    %11 = arith.truncf %10 : vector<256x256xf32> to vector<256x256xbf16>
    %c0_6 = arith.constant 0 : index
    %c0_7 = arith.constant 0 : index
    %c0_8 = arith.constant 0 : index
    %12 = vector.load %arg4[%c0_6, %c0_7, %c0_8] : memref<1x256x256xi8, #tpu.memory_space<vmem>>, vector<1x256x256xi8>
    %13 = vector.shape_cast %12 : vector<1x256x256xi8> to vector<256x256xi8>
    %14 = arith.sitofp %13 : vector<256x256xi8> to vector<256x256xf32>
    %15 = arith.truncf %14 : vector<256x256xf32> to vector<256x256xbf16>
    %c0_9 = arith.constant 0 : index
    %c0_10 = arith.constant 0 : index
    %16 = vector.load %arg8[%c0_9, %c0_10] : memref<256x256xf32, #tpu.memory_space<vmem>>, vector<256x256xf32>
    %cst = arith.constant dense<0.000000e+00> : vector<256x256xf32>
    %17 = tpu.matmul %11, %15, %cst {dimension_numbers = #tpu.dot_dimension_numbers<[1], [0], [0], [1], [0, 0, 1, 1], [], []>} : vector<256x256xbf16>, vector<256x256xbf16>, vector<256x256xf32> -> vector<256x256xf32>
    %18 = arith.addf %16, %17 : vector<256x256xf32>
    %c0_11 = arith.constant 0 : index
    %c0_12 = arith.constant 0 : index
    %19 = vector.load %arg8[%c0_11, %c0_12] : memref<256x256xf32, #tpu.memory_space<vmem>>, vector<256x256xf32>
    tpu.vector_store %arg8[%c0_11, %c0_12], %18 {strides = array<i32>} : memref<256x256xf32, #tpu.memory_space<vmem>>, vector<256x256xf32>,
    %c1_i32 = arith.constant 1 : i32
    %20 = arith.cmpi eq, %arg2, %c1_i32 : i32
    %21 = arith.extui %20 : i1 to i32
    %c0_i32_13 = arith.constant 0 : i32
    %22 = arith.cmpi ne, %21, %c0_i32_13 : i32
    scf.if %22 {
      %c0_17 = arith.constant 0 : index
      %c0_18 = arith.constant 0 : index
      %28 = vector.load %arg8[%c0_17, %c0_18] : memref<256x256xf32, #tpu.memory_space<vmem>>, vector<256x256xf32>
      %c0_19 = arith.constant 0 : index
      %c0_20 = arith.constant 0 : index
      %c0_21 = arith.constant 0 : index
      %29 = vector.load %arg5[%c0_19, %c0_20, %c0_21] : memref<1x256x256xi8, #tpu.memory_space<vmem>>, vector<1x256x256xi8>
      %30 = vector.shape_cast %29 : vector<1x256x256xi8> to vector<256x256xi8>
      %31 = arith.sitofp %30 : vector<256x256xi8> to vector<256x256xf32>
      %32 = arith.mulf %28, %31 : vector<256x256xf32>
      %c0_22 = arith.constant 0 : index
      %c0_23 = arith.constant 0 : index
      %33 = vector.load %arg9[%c0_22, %c0_23] : memref<3x256xf32, #tpu.memory_space<vmem>>, vector<3x256xf32>
      %c0_24 = arith.constant 0 : index
      %c0_25 = arith.constant 0 : index
      %34 = vector.load %arg6[%c0_24, %c0_25] : memref<3x256xf32, #tpu.memory_space<vmem>>, vector<3x256xf32>
      %35 = arith.truncf %34 : vector<3x256xf32> to vector<3x256xbf16>
      %36 = arith.truncf %32 : vector<256x256xf32> to vector<256x256xbf16>
      %cst_26 = arith.constant dense<0.000000e+00> : vector<3x256xf32>
      %37 = tpu.matmul %35, %36, %cst_26 {dimension_numbers = #tpu.dot_dimension_numbers<[1], [0], [0], [1], [0, 0, 1, 1], [], []>} : vector<3x256xbf16>, vector<256x256xbf16>, vector<3x256xf32> -> vector<3x256xf32>
      %38 = arith.addf %33, %37 : vector<3x256xf32>
      %c0_27 = arith.constant 0 : index
      %c0_28 = arith.constant 0 : index
      %39 = vector.load %arg9[%c0_27, %c0_28] : memref<3x256xf32, #tpu.memory_space<vmem>>, vector<3x256xf32>
      tpu.vector_store %arg9[%c0_27, %c0_28], %38 {strides = array<i32>} : memref<3x256xf32, #tpu.memory_space<vmem>>, vector<3x256xf32>,
    } else {
    }
    %c1_i32_14 = arith.constant 1 : i32
    %23 = arith.cmpi eq, %arg1, %c1_i32_14 : i32
    %c1_i32_15 = arith.constant 1 : i32
    %24 = arith.cmpi eq, %arg2, %c1_i32_15 : i32
    %25 = arith.andi %23, %24 : i1
    %26 = arith.extui %25 : i1 to i32
    %c0_i32_16 = arith.constant 0 : i32
    %27 = arith.cmpi ne, %26, %c0_i32_16 : i32
    scf.if %27 {
      %c0_17 = arith.constant 0 : index
      %c0_18 = arith.constant 0 : index
      %28 = vector.load %arg9[%c0_17, %c0_18] : memref<3x256xf32, #tpu.memory_space<vmem>>, vector<3x256xf32>
      %29 = vector.extract_strided_slice %28 {offsets = [0, 0], sizes = [2, 256], strides = [1, 1]} : vector<3x256xf32> to vector<2x256xf32>
      %30 = vector.extract_strided_slice %28 {offsets = [2, 0], sizes = [1, 256], strides = [1, 1]} : vector<3x256xf32> to vector<1x256xf32>
      %cst_19 = arith.constant 9.99999996E-13 : f32
      %31 = vector.broadcast %cst_19 : f32 to vector<1x256xf32>
      %32 = arith.maximumf %30, %31 : vector<1x256xf32>
      %33 = vector.broadcast %32 : vector<1x256xf32> to vector<2x256xf32>
      %34 = arith.divf %29, %33 : vector<2x256xf32>
      %c0_20 = arith.constant 0 : index
      %c0_21 = arith.constant 0 : index
      %35 = vector.load %arg7[%c0_20, %c0_21] : memref<2x256xf32, #tpu.memory_space<vmem>>, vector<2x256xf32>
      tpu.vector_store %arg7[%c0_20, %c0_21], %34 {strides = array<i32>} : memref<2x256xf32, #tpu.memory_space<vmem>>, vector<2x256xf32>,
    } else {
    }
    return
  }
  func.func @transform_0(%arg0: i32, %arg1: i32, %arg2: i32) -> (i32, i32, i32) {
    %c1_i32 = arith.constant 1 : i32
    %c0_i32 = arith.constant 0 : i32
    return %c1_i32, %arg1, %arg2 : i32, i32, i32
  }
  func.func @transform_1(%arg0: i32, %arg1: i32, %arg2: i32) -> (i32, i32, i32) {
    %c1_i32 = arith.constant 1 : i32
    %c0_i32 = arith.constant 0 : i32
    return %c1_i32, %arg2, %arg0 : i32, i32, i32
  }
  func.func @transform_2(%arg0: i32, %arg1: i32, %arg2: i32) -> (i32, i32, i32) {
    %c1_i32 = arith.constant 1 : i32
    %c0_i32 = arith.constant 0 : i32
    return %c1_i32, %arg1, %arg0 : i32, i32, i32
  }
  func.func @transform_3(%arg0: i32, %arg1: i32, %arg2: i32) -> (i32, i32) {
    %c0_i32 = arith.constant 0 : i32
    %c0_i32_0 = arith.constant 0 : i32
    return %c0_i32, %arg1 : i32, i32
  }
  func.func @transform_4(%arg0: i32, %arg1: i32, %arg2: i32) -> (i32, i32) {
    %c0_i32 = arith.constant 0 : i32
    %c0_i32_0 = arith.constant 0 : i32
    return %c0_i32, %arg0 : i32, i32
  }
}

module attributes {stable_mosaic.version = 11 : i64} {
  func.func @_agg_kernel(%arg0: i32, %arg1: i32, %arg2: memref<2x256x256xi8, #tpu.memory_space<vmem>>, %arg3: memref<256x5xf32, #tpu.memory_space<vmem>>, %arg4: memref<9x256xf32, #tpu.memory_space<vmem>>, %arg5: memref<32x256xf32, #tpu.memory_space<vmem>>, %arg6: memref<8x16xf32, #tpu.memory_space<vmem>>, %arg7: memref<8x1xf32, #tpu.memory_space<vmem>>, %arg8: memref<8x256xf32, #tpu.memory_space<vmem>>, %arg9: memref<4x256xf32, #tpu.memory_space<vmem>>, %arg10: memref<32x256xf32, #tpu.memory_space<vmem>>) attributes {dimension_semantics = [#tpu.dimension_semantics<parallel>, #tpu.dimension_semantics<arbitrary>], iteration_bounds = array<i64: 2, 2>, scalar_prefetch = 0 : i64, scratch_operands = 2 : i64, tpu.core_type = #tpu.core_type<tc>, window_params = [{transform_indices = @transform_0, window_bounds = array<i64: 2, 256, 256>}, {transform_indices = @transform_1, window_bounds = array<i64: 256, 5>}, {transform_indices = @transform_2, window_bounds = array<i64: 9, 256>}, {transform_indices = @transform_3, window_bounds = array<i64: 32, 256>}, {pipeline_mode = #tpu.pipeline_mode<synchronous>, transform_indices = @transform_4, window_bounds = array<i64: 8, 16>}, {pipeline_mode = #tpu.pipeline_mode<synchronous>, transform_indices = @transform_5, window_bounds = array<i64: 8, 1>}, {transform_indices = @transform_6, window_bounds = array<i64: 8, 256>}]} {
    %c0_i32 = arith.constant 0 : i32
    %0 = arith.cmpi eq, %arg1, %c0_i32 : i32
    %1 = arith.extui %0 : i1 to i32
    %c0_i32_0 = arith.constant 0 : i32
    %2 = arith.cmpi ne, %1, %c0_i32_0 : i32
    scf.if %2 {
      %cst_77 = arith.constant 0.000000e+00 : f32
      %115 = vector.broadcast %cst_77 : f32 to vector<4x256xf32>
      %c0_78 = arith.constant 0 : index
      %c0_79 = arith.constant 0 : index
      %116 = vector.load %arg9[%c0_78, %c0_79] : memref<4x256xf32, #tpu.memory_space<vmem>>, vector<4x256xf32>
      tpu.vector_store %arg9[%c0_78, %c0_79], %115 {strides = array<i32>} : memref<4x256xf32, #tpu.memory_space<vmem>>, vector<4x256xf32>,
      %cst_80 = arith.constant 0.000000e+00 : f32
      %117 = vector.broadcast %cst_80 : f32 to vector<32x256xf32>
      %c0_81 = arith.constant 0 : index
      %c0_82 = arith.constant 0 : index
      %118 = vector.load %arg10[%c0_81, %c0_82] : memref<32x256xf32, #tpu.memory_space<vmem>>, vector<32x256xf32>
      tpu.vector_store %arg10[%c0_81, %c0_82], %117 {strides = array<i32>} : memref<32x256xf32, #tpu.memory_space<vmem>>, vector<32x256xf32>,
    } else {
    }
    %cst = arith.constant 1.000000e+00 : f32
    %3 = vector.broadcast %cst : f32 to vector<1x256xf32>
    %c0 = arith.constant 0 : index
    %c4 = arith.constant 4 : index
    %4 = vector.load %arg3[%c0, %c4] : memref<256x5xf32, #tpu.memory_space<vmem>>, vector<256x1xf32>
    %c4_1 = arith.constant 4 : index
    %c0_2 = arith.constant 0 : index
    %5 = vector.load %arg4[%c4_1, %c0_2] : memref<9x256xf32, #tpu.memory_space<vmem>>, vector<1x256xf32>
    %6 = vector.broadcast %4 : vector<256x1xf32> to vector<256x256xf32>
    %7 = vector.broadcast %5 : vector<1x256xf32> to vector<256x256xf32>
    %8 = arith.addf %6, %7 : vector<256x256xf32>
    %9 = math.tanh %8 : vector<256x256xf32>
    %c0_3 = arith.constant 0 : index
    %c0_4 = arith.constant 0 : index
    %c0_5 = arith.constant 0 : index
    %10 = vector.load %arg2[%c0_3, %c0_4, %c0_5] : memref<2x256x256xi8, #tpu.memory_space<vmem>>, vector<1x256x256xi8>
    %11 = vector.shape_cast %10 : vector<1x256x256xi8> to vector<256x256xi8>
    %12 = arith.sitofp %11 : vector<256x256xi8> to vector<256x256xf32>
    %c0_6 = arith.constant 0 : index
    %c0_7 = arith.constant 0 : index
    %13 = vector.load %arg3[%c0_6, %c0_7] : memref<256x5xf32, #tpu.memory_space<vmem>>, vector<256x1xf32>
    %14 = vector.broadcast %13 : vector<256x1xf32> to vector<256x256xf32>
    %15 = arith.mulf %9, %14 : vector<256x256xf32>
    %c0_8 = arith.constant 0 : index
    %c0_9 = arith.constant 0 : index
    %16 = vector.load %arg4[%c0_8, %c0_9] : memref<9x256xf32, #tpu.memory_space<vmem>>, vector<1x256xf32>
    %17 = vector.broadcast %16 : vector<1x256xf32> to vector<256x256xf32>
    %18 = arith.addf %15, %17 : vector<256x256xf32>
    %cst_10 = arith.constant 0.00999999977 : f32
    %19 = vector.broadcast %cst_10 : f32 to vector<256x256xf32>
    %20 = arith.mulf %19, %18 : vector<256x256xf32>
    %21 = arith.maximumf %18, %20 : vector<256x256xf32>
    %c5 = arith.constant 5 : index
    %c0_11 = arith.constant 0 : index
    %22 = vector.load %arg4[%c5, %c0_11] : memref<9x256xf32, #tpu.memory_space<vmem>>, vector<1x256xf32>
    %23 = vector.broadcast %22 : vector<1x256xf32> to vector<256x256xf32>
    %24 = arith.subf %21, %23 : vector<256x256xf32>
    %25 = math.exp %24 : vector<256x256xf32>
    %26 = arith.mulf %25, %12 : vector<256x256xf32>
    %c0_12 = arith.constant 0 : index
    %c0_13 = arith.constant 0 : index
    %27 = vector.load %arg9[%c0_12, %c0_13] : memref<4x256xf32, #tpu.memory_space<vmem>>, vector<1x256xf32>
    %cst_14 = arith.constant dense<0.000000e+00> : vector<1x256xf32>
    %28 = tpu.matmul %3, %26, %cst_14 {dimension_numbers = #tpu.dot_dimension_numbers<[1], [0], [0], [1], [0, 0, 1, 1], [], []>} : vector<1x256xf32>, vector<256x256xf32>, vector<1x256xf32> -> vector<1x256xf32>
    %29 = arith.addf %27, %28 : vector<1x256xf32>
    %c0_15 = arith.constant 0 : index
    %c0_16 = arith.constant 0 : index
    %30 = vector.load %arg9[%c0_15, %c0_16] : memref<4x256xf32, #tpu.memory_space<vmem>>, vector<1x256xf32>
    tpu.vector_store %arg9[%c0_15, %c0_16], %29 {strides = array<i32>} : memref<4x256xf32, #tpu.memory_space<vmem>>, vector<1x256xf32>,
    %31 = arith.mulf %26, %9 : vector<256x256xf32>
    %c0_17 = arith.constant 0 : index
    %c0_18 = arith.constant 0 : index
    %32 = vector.load %arg5[%c0_17, %c0_18] : memref<32x256xf32, #tpu.memory_space<vmem>>, vector<8x256xf32>
    %c0_19 = arith.constant 0 : index
    %c0_20 = arith.constant 0 : index
    %33 = vector.load %arg10[%c0_19, %c0_20] : memref<32x256xf32, #tpu.memory_space<vmem>>, vector<8x256xf32>
    %cst_21 = arith.constant dense<0.000000e+00> : vector<8x256xf32>
    %34 = tpu.matmul %32, %31, %cst_21 {dimension_numbers = #tpu.dot_dimension_numbers<[1], [0], [0], [1], [0, 0, 1, 1], [], []>} : vector<8x256xf32>, vector<256x256xf32>, vector<8x256xf32> -> vector<8x256xf32>
    %35 = arith.addf %33, %34 : vector<8x256xf32>
    %c0_22 = arith.constant 0 : index
    %c0_23 = arith.constant 0 : index
    %36 = vector.load %arg10[%c0_22, %c0_23] : memref<32x256xf32, #tpu.memory_space<vmem>>, vector<8x256xf32>
    tpu.vector_store %arg10[%c0_22, %c0_23], %35 {strides = array<i32>} : memref<32x256xf32, #tpu.memory_space<vmem>>, vector<8x256xf32>,
    %c0_24 = arith.constant 0 : index
    %c1 = arith.constant 1 : index
    %37 = vector.load %arg3[%c0_24, %c1] : memref<256x5xf32, #tpu.memory_space<vmem>>, vector<256x1xf32>
    %38 = vector.broadcast %37 : vector<256x1xf32> to vector<256x256xf32>
    %39 = arith.mulf %9, %38 : vector<256x256xf32>
    %c1_25 = arith.constant 1 : index
    %c0_26 = arith.constant 0 : index
    %40 = vector.load %arg4[%c1_25, %c0_26] : memref<9x256xf32, #tpu.memory_space<vmem>>, vector<1x256xf32>
    %41 = vector.broadcast %40 : vector<1x256xf32> to vector<256x256xf32>
    %42 = arith.addf %39, %41 : vector<256x256xf32>
    %cst_27 = arith.constant 0.00999999977 : f32
    %43 = vector.broadcast %cst_27 : f32 to vector<256x256xf32>
    %44 = arith.mulf %43, %42 : vector<256x256xf32>
    %45 = arith.maximumf %42, %44 : vector<256x256xf32>
    %c6 = arith.constant 6 : index
    %c0_28 = arith.constant 0 : index
    %46 = vector.load %arg4[%c6, %c0_28] : memref<9x256xf32, #tpu.memory_space<vmem>>, vector<1x256xf32>
    %47 = vector.broadcast %46 : vector<1x256xf32> to vector<256x256xf32>
    %48 = arith.subf %45, %47 : vector<256x256xf32>
    %49 = math.exp %48 : vector<256x256xf32>
    %50 = arith.mulf %49, %12 : vector<256x256xf32>
    %c1_29 = arith.constant 1 : index
    %c0_30 = arith.constant 0 : index
    %51 = vector.load %arg9[%c1_29, %c0_30] : memref<4x256xf32, #tpu.memory_space<vmem>>, vector<1x256xf32>
    %cst_31 = arith.constant dense<0.000000e+00> : vector<1x256xf32>
    %52 = tpu.matmul %3, %50, %cst_31 {dimension_numbers = #tpu.dot_dimension_numbers<[1], [0], [0], [1], [0, 0, 1, 1], [], []>} : vector<1x256xf32>, vector<256x256xf32>, vector<1x256xf32> -> vector<1x256xf32>
    %53 = arith.addf %51, %52 : vector<1x256xf32>
    %c1_32 = arith.constant 1 : index
    %c0_33 = arith.constant 0 : index
    %54 = vector.load %arg9[%c1_32, %c0_33] : memref<4x256xf32, #tpu.memory_space<vmem>>, vector<1x256xf32>
    tpu.vector_store %arg9[%c1_32, %c0_33], %53 {strides = array<i32>} : memref<4x256xf32, #tpu.memory_space<vmem>>, vector<1x256xf32>,
    %55 = arith.mulf %50, %9 : vector<256x256xf32>
    %c8 = arith.constant 8 : index
    %c0_34 = arith.constant 0 : index
    %56 = vector.load %arg5[%c8, %c0_34] : memref<32x256xf32, #tpu.memory_space<vmem>>, vector<8x256xf32>
    %c8_35 = arith.constant 8 : index
    %c0_36 = arith.constant 0 : index
    %57 = vector.load %arg10[%c8_35, %c0_36] : memref<32x256xf32, #tpu.memory_space<vmem>>, vector<8x256xf32>
    %cst_37 = arith.constant dense<0.000000e+00> : vector<8x256xf32>
    %58 = tpu.matmul %56, %55, %cst_37 {dimension_numbers = #tpu.dot_dimension_numbers<[1], [0], [0], [1], [0, 0, 1, 1], [], []>} : vector<8x256xf32>, vector<256x256xf32>, vector<8x256xf32> -> vector<8x256xf32>
    %59 = arith.addf %57, %58 : vector<8x256xf32>
    %c8_38 = arith.constant 8 : index
    %c0_39 = arith.constant 0 : index
    %60 = vector.load %arg10[%c8_38, %c0_39] : memref<32x256xf32, #tpu.memory_space<vmem>>, vector<8x256xf32>
    tpu.vector_store %arg10[%c8_38, %c0_39], %59 {strides = array<i32>} : memref<32x256xf32, #tpu.memory_space<vmem>>, vector<8x256xf32>,
    %c1_40 = arith.constant 1 : index
    %c0_41 = arith.constant 0 : index
    %c0_42 = arith.constant 0 : index
    %61 = vector.load %arg2[%c1_40, %c0_41, %c0_42] : memref<2x256x256xi8, #tpu.memory_space<vmem>>, vector<1x256x256xi8>
    %62 = vector.shape_cast %61 : vector<1x256x256xi8> to vector<256x256xi8>
    %63 = arith.sitofp %62 : vector<256x256xi8> to vector<256x256xf32>
    %c0_43 = arith.constant 0 : index
    %c2 = arith.constant 2 : index
    %64 = vector.load %arg3[%c0_43, %c2] : memref<256x5xf32, #tpu.memory_space<vmem>>, vector<256x1xf32>
    %65 = vector.broadcast %64 : vector<256x1xf32> to vector<256x256xf32>
    %66 = arith.mulf %9, %65 : vector<256x256xf32>
    %c2_44 = arith.constant 2 : index
    %c0_45 = arith.constant 0 : index
    %67 = vector.load %arg4[%c2_44, %c0_45] : memref<9x256xf32, #tpu.memory_space<vmem>>, vector<1x256xf32>
    %68 = vector.broadcast %67 : vector<1x256xf32> to vector<256x256xf32>
    %69 = arith.addf %66, %68 : vector<256x256xf32>
    %cst_46 = arith.constant 0.00999999977 : f32
    %70 = vector.broadcast %cst_46 : f32 to vector<256x256xf32>
    %71 = arith.mulf %70, %69 : vector<256x256xf32>
    %72 = arith.maximumf %69, %71 : vector<256x256xf32>
    %c7 = arith.constant 7 : index
    %c0_47 = arith.constant 0 : index
    %73 = vector.load %arg4[%c7, %c0_47] : memref<9x256xf32, #tpu.memory_space<vmem>>, vector<1x256xf32>
    %74 = vector.broadcast %73 : vector<1x256xf32> to vector<256x256xf32>
    %75 = arith.subf %72, %74 : vector<256x256xf32>
    %76 = math.exp %75 : vector<256x256xf32>
    %77 = arith.mulf %76, %63 : vector<256x256xf32>
    %c2_48 = arith.constant 2 : index
    %c0_49 = arith.constant 0 : index
    %78 = vector.load %arg9[%c2_48, %c0_49] : memref<4x256xf32, #tpu.memory_space<vmem>>, vector<1x256xf32>
    %cst_50 = arith.constant dense<0.000000e+00> : vector<1x256xf32>
    %79 = tpu.matmul %3, %77, %cst_50 {dimension_numbers = #tpu.dot_dimension_numbers<[1], [0], [0], [1], [0, 0, 1, 1], [], []>} : vector<1x256xf32>, vector<256x256xf32>, vector<1x256xf32> -> vector<1x256xf32>
    %80 = arith.addf %78, %79 : vector<1x256xf32>
    %c2_51 = arith.constant 2 : index
    %c0_52 = arith.constant 0 : index
    %81 = vector.load %arg9[%c2_51, %c0_52] : memref<4x256xf32, #tpu.memory_space<vmem>>, vector<1x256xf32>
    tpu.vector_store %arg9[%c2_51, %c0_52], %80 {strides = array<i32>} : memref<4x256xf32, #tpu.memory_space<vmem>>, vector<1x256xf32>,
    %82 = arith.mulf %77, %9 : vector<256x256xf32>
    %c16 = arith.constant 16 : index
    %c0_53 = arith.constant 0 : index
    %83 = vector.load %arg5[%c16, %c0_53] : memref<32x256xf32, #tpu.memory_space<vmem>>, vector<8x256xf32>
    %c16_54 = arith.constant 16 : index
    %c0_55 = arith.constant 0 : index
    %84 = vector.load %arg10[%c16_54, %c0_55] : memref<32x256xf32, #tpu.memory_space<vmem>>, vector<8x256xf32>
    %cst_56 = arith.constant dense<0.000000e+00> : vector<8x256xf32>
    %85 = tpu.matmul %83, %82, %cst_56 {dimension_numbers = #tpu.dot_dimension_numbers<[1], [0], [0], [1], [0, 0, 1, 1], [], []>} : vector<8x256xf32>, vector<256x256xf32>, vector<8x256xf32> -> vector<8x256xf32>
    %86 = arith.addf %84, %85 : vector<8x256xf32>
    %c16_57 = arith.constant 16 : index
    %c0_58 = arith.constant 0 : index
    %87 = vector.load %arg10[%c16_57, %c0_58] : memref<32x256xf32, #tpu.memory_space<vmem>>, vector<8x256xf32>
    tpu.vector_store %arg10[%c16_57, %c0_58], %86 {strides = array<i32>} : memref<32x256xf32, #tpu.memory_space<vmem>>, vector<8x256xf32>,
    %c0_59 = arith.constant 0 : index
    %c3 = arith.constant 3 : index
    %88 = vector.load %arg3[%c0_59, %c3] : memref<256x5xf32, #tpu.memory_space<vmem>>, vector<256x1xf32>
    %89 = vector.broadcast %88 : vector<256x1xf32> to vector<256x256xf32>
    %90 = arith.mulf %9, %89 : vector<256x256xf32>
    %c3_60 = arith.constant 3 : index
    %c0_61 = arith.constant 0 : index
    %91 = vector.load %arg4[%c3_60, %c0_61] : memref<9x256xf32, #tpu.memory_space<vmem>>, vector<1x256xf32>
    %92 = vector.broadcast %91 : vector<1x256xf32> to vector<256x256xf32>
    %93 = arith.addf %90, %92 : vector<256x256xf32>
    %cst_62 = arith.constant 0.00999999977 : f32
    %94 = vector.broadcast %cst_62 : f32 to vector<256x256xf32>
    %95 = arith.mulf %94, %93 : vector<256x256xf32>
    %96 = arith.maximumf %93, %95 : vector<256x256xf32>
    %c8_63 = arith.constant 8 : index
    %c0_64 = arith.constant 0 : index
    %97 = vector.load %arg4[%c8_63, %c0_64] : memref<9x256xf32, #tpu.memory_space<vmem>>, vector<1x256xf32>
    %98 = vector.broadcast %97 : vector<1x256xf32> to vector<256x256xf32>
    %99 = arith.subf %96, %98 : vector<256x256xf32>
    %100 = math.exp %99 : vector<256x256xf32>
    %101 = arith.mulf %100, %63 : vector<256x256xf32>
    %c3_65 = arith.constant 3 : index
    %c0_66 = arith.constant 0 : index
    %102 = vector.load %arg9[%c3_65, %c0_66] : memref<4x256xf32, #tpu.memory_space<vmem>>, vector<1x256xf32>
    %cst_67 = arith.constant dense<0.000000e+00> : vector<1x256xf32>
    %103 = tpu.matmul %3, %101, %cst_67 {dimension_numbers = #tpu.dot_dimension_numbers<[1], [0], [0], [1], [0, 0, 1, 1], [], []>} : vector<1x256xf32>, vector<256x256xf32>, vector<1x256xf32> -> vector<1x256xf32>
    %104 = arith.addf %102, %103 : vector<1x256xf32>
    %c3_68 = arith.constant 3 : index
    %c0_69 = arith.constant 0 : index
    %105 = vector.load %arg9[%c3_68, %c0_69] : memref<4x256xf32, #tpu.memory_space<vmem>>, vector<1x256xf32>
    tpu.vector_store %arg9[%c3_68, %c0_69], %104 {strides = array<i32>} : memref<4x256xf32, #tpu.memory_space<vmem>>, vector<1x256xf32>,
    %106 = arith.mulf %101, %9 : vector<256x256xf32>
    %c24 = arith.constant 24 : index
    %c0_70 = arith.constant 0 : index
    %107 = vector.load %arg5[%c24, %c0_70] : memref<32x256xf32, #tpu.memory_space<vmem>>, vector<8x256xf32>
    %c24_71 = arith.constant 24 : index
    %c0_72 = arith.constant 0 : index
    %108 = vector.load %arg10[%c24_71, %c0_72] : memref<32x256xf32, #tpu.memory_space<vmem>>, vector<8x256xf32>
    %cst_73 = arith.constant dense<0.000000e+00> : vector<8x256xf32>
    %109 = tpu.matmul %107, %106, %cst_73 {dimension_numbers = #tpu.dot_dimension_numbers<[1], [0], [0], [1], [0, 0, 1, 1], [], []>} : vector<8x256xf32>, vector<256x256xf32>, vector<8x256xf32> -> vector<8x256xf32>
    %110 = arith.addf %108, %109 : vector<8x256xf32>
    %c24_74 = arith.constant 24 : index
    %c0_75 = arith.constant 0 : index
    %111 = vector.load %arg10[%c24_74, %c0_75] : memref<32x256xf32, #tpu.memory_space<vmem>>, vector<8x256xf32>
    tpu.vector_store %arg10[%c24_74, %c0_75], %110 {strides = array<i32>} : memref<32x256xf32, #tpu.memory_space<vmem>>, vector<8x256xf32>,
    %c1_i32 = arith.constant 1 : i32
    %112 = arith.cmpi eq, %arg1, %c1_i32 : i32
    %113 = arith.extui %112 : i1 to i32
    %c0_i32_76 = arith.constant 0 : i32
    %114 = arith.cmpi ne, %113, %c0_i32_76 : i32
    scf.if %114 {
      %cst_77 = arith.constant 0.000000e+00 : f32
      %115 = vector.broadcast %cst_77 : f32 to vector<8x256xf32>
      %cst_78 = arith.constant 0.000000e+00 : f32
      %116 = vector.broadcast %cst_78 : f32 to vector<8x256xf32>
      %c0_79 = arith.constant 0 : index
      %c0_80 = arith.constant 0 : index
      %117 = vector.load %arg9[%c0_79, %c0_80] : memref<4x256xf32, #tpu.memory_space<vmem>>, vector<1x256xf32>
      %cst_81 = arith.constant 0.000000e+00 : f32
      %118 = vector.broadcast %cst_81 : f32 to vector<1x256xf32>
      %119 = arith.cmpf ogt, %117, %118 : vector<1x256xf32>
      %cst_82 = arith.constant 1.000000e+00 : f32
      %120 = vector.broadcast %cst_82 : f32 to vector<1x256xf32>
      %121 = arith.select %119, %117, %120 : vector<1x256xi1>, vector<1x256xf32>
      %122 = tpu.reciprocal %121 {approx = true} : vector<1x256xf32> -> vector<1x256xf32>
      %c0_83 = arith.constant 0 : index
      %c0_84 = arith.constant 0 : index
      %123 = vector.load %arg10[%c0_83, %c0_84] : memref<32x256xf32, #tpu.memory_space<vmem>>, vector<8x256xf32>
      %124 = vector.broadcast %122 : vector<1x256xf32> to vector<8x256xf32>
      %125 = arith.mulf %123, %124 : vector<8x256xf32>
      %126 = arith.addf %116, %125 : vector<8x256xf32>
      %c1_85 = arith.constant 1 : index
      %c0_86 = arith.constant 0 : index
      %127 = vector.load %arg9[%c1_85, %c0_86] : memref<4x256xf32, #tpu.memory_space<vmem>>, vector<1x256xf32>
      %cst_87 = arith.constant 0.000000e+00 : f32
      %128 = vector.broadcast %cst_87 : f32 to vector<1x256xf32>
      %129 = arith.cmpf ogt, %127, %128 : vector<1x256xf32>
      %cst_88 = arith.constant 1.000000e+00 : f32
      %130 = vector.broadcast %cst_88 : f32 to vector<1x256xf32>
      %131 = arith.select %129, %127, %130 : vector<1x256xi1>, vector<1x256xf32>
      %132 = tpu.reciprocal %131 {approx = true} : vector<1x256xf32> -> vector<1x256xf32>
      %c8_89 = arith.constant 8 : index
      %c0_90 = arith.constant 0 : index
      %133 = vector.load %arg10[%c8_89, %c0_90] : memref<32x256xf32, #tpu.memory_space<vmem>>, vector<8x256xf32>
      %134 = vector.broadcast %132 : vector<1x256xf32> to vector<8x256xf32>
      %135 = arith.mulf %133, %134 : vector<8x256xf32>
      %136 = arith.addf %126, %135 : vector<8x256xf32>
      %c0_91 = arith.constant 0 : index
      %c0_92 = arith.constant 0 : index
      %137 = vector.load %arg6[%c0_91, %c0_92] : memref<8x16xf32, #tpu.memory_space<vmem>>, vector<8x8xf32>
      %cst_93 = arith.constant dense<0.000000e+00> : vector<8x256xf32>
      %138 = tpu.matmul %137, %136, %cst_93 {dimension_numbers = #tpu.dot_dimension_numbers<[1], [0], [0], [1], [0, 0, 1, 1], [], []>} : vector<8x8xf32>, vector<8x256xf32>, vector<8x256xf32> -> vector<8x256xf32>
      %139 = arith.addf %115, %138 : vector<8x256xf32>
      %cst_94 = arith.constant 0.000000e+00 : f32
      %140 = vector.broadcast %cst_94 : f32 to vector<8x256xf32>
      %c2_95 = arith.constant 2 : index
      %c0_96 = arith.constant 0 : index
      %141 = vector.load %arg9[%c2_95, %c0_96] : memref<4x256xf32, #tpu.memory_space<vmem>>, vector<1x256xf32>
      %cst_97 = arith.constant 0.000000e+00 : f32
      %142 = vector.broadcast %cst_97 : f32 to vector<1x256xf32>
      %143 = arith.cmpf ogt, %141, %142 : vector<1x256xf32>
      %cst_98 = arith.constant 1.000000e+00 : f32
      %144 = vector.broadcast %cst_98 : f32 to vector<1x256xf32>
      %145 = arith.select %143, %141, %144 : vector<1x256xi1>, vector<1x256xf32>
      %146 = tpu.reciprocal %145 {approx = true} : vector<1x256xf32> -> vector<1x256xf32>
      %c16_99 = arith.constant 16 : index
      %c0_100 = arith.constant 0 : index
      %147 = vector.load %arg10[%c16_99, %c0_100] : memref<32x256xf32, #tpu.memory_space<vmem>>, vector<8x256xf32>
      %148 = vector.broadcast %146 : vector<1x256xf32> to vector<8x256xf32>
      %149 = arith.mulf %147, %148 : vector<8x256xf32>
      %150 = arith.addf %140, %149 : vector<8x256xf32>
      %c3_101 = arith.constant 3 : index
      %c0_102 = arith.constant 0 : index
      %151 = vector.load %arg9[%c3_101, %c0_102] : memref<4x256xf32, #tpu.memory_space<vmem>>, vector<1x256xf32>
      %cst_103 = arith.constant 0.000000e+00 : f32
      %152 = vector.broadcast %cst_103 : f32 to vector<1x256xf32>
      %153 = arith.cmpf ogt, %151, %152 : vector<1x256xf32>
      %cst_104 = arith.constant 1.000000e+00 : f32
      %154 = vector.broadcast %cst_104 : f32 to vector<1x256xf32>
      %155 = arith.select %153, %151, %154 : vector<1x256xi1>, vector<1x256xf32>
      %156 = tpu.reciprocal %155 {approx = true} : vector<1x256xf32> -> vector<1x256xf32>
      %c24_105 = arith.constant 24 : index
      %c0_106 = arith.constant 0 : index
      %157 = vector.load %arg10[%c24_105, %c0_106] : memref<32x256xf32, #tpu.memory_space<vmem>>, vector<8x256xf32>
      %158 = vector.broadcast %156 : vector<1x256xf32> to vector<8x256xf32>
      %159 = arith.mulf %157, %158 : vector<8x256xf32>
      %160 = arith.addf %150, %159 : vector<8x256xf32>
      %c0_107 = arith.constant 0 : index
      %c8_108 = arith.constant 8 : index
      %161 = vector.load %arg6[%c0_107, %c8_108] : memref<8x16xf32, #tpu.memory_space<vmem>>, vector<8x8xf32>
      %cst_109 = arith.constant dense<0.000000e+00> : vector<8x256xf32>
      %162 = tpu.matmul %161, %160, %cst_109 {dimension_numbers = #tpu.dot_dimension_numbers<[1], [0], [0], [1], [0, 0, 1, 1], [], []>} : vector<8x8xf32>, vector<8x256xf32>, vector<8x256xf32> -> vector<8x256xf32>
      %163 = arith.addf %139, %162 : vector<8x256xf32>
      %c0_110 = arith.constant 0 : index
      %c0_111 = arith.constant 0 : index
      %164 = vector.load %arg7[%c0_110, %c0_111] : memref<8x1xf32, #tpu.memory_space<vmem>>, vector<8x1xf32>
      %165 = vector.broadcast %164 : vector<8x1xf32> to vector<8x256xf32>
      %166 = arith.addf %163, %165 : vector<8x256xf32>
      %c0_112 = arith.constant 0 : index
      %c0_113 = arith.constant 0 : index
      %167 = vector.load %arg8[%c0_112, %c0_113] : memref<8x256xf32, #tpu.memory_space<vmem>>, vector<8x256xf32>
      tpu.vector_store %arg8[%c0_112, %c0_113], %166 {strides = array<i32>} : memref<8x256xf32, #tpu.memory_space<vmem>>, vector<8x256xf32>,
    } else {
    }
    return
  }
  func.func @transform_0(%arg0: i32, %arg1: i32) -> (i32, i32, i32) {
    %c0_i32 = arith.constant 0 : i32
    %c0_i32_0 = arith.constant 0 : i32
    return %c0_i32, %arg1, %arg0 : i32, i32, i32
  }
  func.func @transform_1(%arg0: i32, %arg1: i32) -> (i32, i32) {
    %c0_i32 = arith.constant 0 : i32
    %c0_i32_0 = arith.constant 0 : i32
    return %arg1, %c0_i32 : i32, i32
  }
  func.func @transform_2(%arg0: i32, %arg1: i32) -> (i32, i32) {
    %c0_i32 = arith.constant 0 : i32
    %c0_i32_0 = arith.constant 0 : i32
    return %c0_i32, %arg0 : i32, i32
  }
  func.func @transform_3(%arg0: i32, %arg1: i32) -> (i32, i32) {
    %c0_i32 = arith.constant 0 : i32
    %c0_i32_0 = arith.constant 0 : i32
    return %c0_i32, %arg1 : i32, i32
  }
  func.func @transform_4(%arg0: i32, %arg1: i32) -> (i32, i32) {
    %c0_i32 = arith.constant 0 : i32
    %c0_i32_0 = arith.constant 0 : i32
    %c0_i32_1 = arith.constant 0 : i32
    return %c0_i32, %c0_i32_0 : i32, i32
  }
  func.func @transform_5(%arg0: i32, %arg1: i32) -> (i32, i32) {
    %c0_i32 = arith.constant 0 : i32
    %c0_i32_0 = arith.constant 0 : i32
    %c0_i32_1 = arith.constant 0 : i32
    return %c0_i32, %c0_i32_0 : i32, i32
  }
  func.func @transform_6(%arg0: i32, %arg1: i32) -> (i32, i32) {
    %c0_i32 = arith.constant 0 : i32
    %c0_i32_0 = arith.constant 0 : i32
    return %c0_i32, %arg0 : i32, i32
  }
}

</mosaic_0001>

<llo_original>
// kernel: squeeze.8
$region0: #{squeeze.8}
  %s0 = inlined_call_operand.vmem [shape: f32[16], index: 0, kind: input, shape index: {}]
  %s1 = inlined_call_operand.vmem [shape: f32[2,8], index: 1, kind: output, shape index: {}]
  $region1: #{squeeze.8} parent=0
    #allocation0 [shape = 'u8[4096]{0}', space=vmem, size = 0x1000, scoped, tag = 'scoped mem for output reshape']
    #allocation1 [shape = 'u8[4096]{0}', space=vmem, size = 0x1000, scoped, tag = 'scoped mem for input reshape']
    %s3 = ssub.s32 2, 1
    %v4 = vld [vmem:[%s0] sm:%s3]
    %5 = vst [vmem:[#allocation1] sm:%s3] %v4
    %v6 = vld [vmem:[#allocation1] sm:$0x1]
    %vm7 = vcmask 64512
    %8 = vst.msk [vmem:[#allocation0] sm:$0x1] %vm7, %v6
    %v9 = vld [vmem:[#allocation1] sm:$0x1]
    %10 = vrot.lane.b32.xlu0 %v9, 120
    %v11 = vpop.permute.xlu0 %10
    %vm12 = vcmask 64512
    %s13 = scalar_lea.vmem [#allocation0], 1
    %14 = vst.msk [vmem:[%s13] sm:$0x1] %vm12, %v11
    %s16 = ssub.s32 4, 1
    %v17 = vld [vmem:[#allocation0] sm:%s16]
    %s19 = ssub.s32 4, 1
    %20 = vst [vmem:[%s1] sm:%s19] %v17

// kernel: mr_dual_hfd_forward.3
$region0: #{mr_dual_hfd_forward.3}
  #allocation0 [shape = 'u32[]', space=smem, size = 0x4, offset = 0x4, fixed_abs, tag = 'smem constant byte address 0x4 - core index']
  #allocation1 [shape = 'u32[72,128]{1,0:T(1,128)}', space=vmem, size = 0x9000, scoped, tag = 'internal scratch']
  %s0 = inlined_call_operand.vmem [shape: f32[16,512], index: 0, kind: input, shape index: {}]
  %s1 = inlined_call_operand.vmem [shape: f32[42,16], index: 1, kind: input, shape index: {}]
  %s2 = inlined_call_operand.vmem [shape: f32[42,1], index: 2, kind: input, shape index: {}]
  %s3 = inlined_call_operand.vmem [shape: f32[42,512], index: 3, kind: output, shape index: {}]
  %s4 = sld [smem:[#allocation0]]
  $region87: #{mr_dual_hfd_forward.3} parent=0
    _
  %s6 = ssub.s32 1, %s4
  %s7 = scalar_select 0, %s6, %s4
  $region1: #{mr_dual_hfd_forward.3} parent=0
    #allocation2 [shape = 'u8[32768]{0}', space=vmem, size = 0x8000, scoped, tag = 'input window, operand 0']
    #allocation3 [shape = 'u8[98304]{0}', space=vmem, size = 0x18000, scoped, tag = 'output window, operand 0']
    loop: start=0, step=1, limit=4
    $region2: #{mr_dual_hfd_forward.3} parent=1 // loop_pre_header
      _
    $region3: #{mr_dual_hfd_forward.3} parent=1 // loop_header
      %s9 = sphi 0, %s13
      %p10 = scmp.ge.s32.totalorder %s9, 4
      %s19 = sphi 0, %s21
      %s22 = sphi 0, %s19
      %s23 = sphi 0, %s22
      %s39 = sphi 0, %s23
      %s43 = sphi 0, %s43
      %s45 = sphi 0, %s43
      %s46 = sphi 0, %s45
      %s60 = sphi 0, %s46
      %s64 = sphi 0, %s64
      %s66 = sphi 0, %s64
      %s67 = sphi 0, %s66
      %s81 = sphi 0, %s67
      %s87 = sphi 0, %s89
      %s90 = sphi 0, %s87
      %s91 = sphi 0, %s90
      %s107 = sphi 0, %s91
    $region4: #{mr_dual_hfd_forward.3} parent=1 // loop_header_branch
      %12 = sbr.rel (%p10) target = $region8
    $region5: #{mr_dual_hfd_forward.3} parent=1 // loop_body
      %s14 = ssub.s32 %s9, 1
      %s15 = ssub.s32 %s9, 2
      %s16 = sadd.s32 %s9, 1
      %s17 = ssub.s32 %s9, %s16
      %p18 = scmp.eq.s32.totalorder %s17, 0
      %s20 = sadd.s32 %s19, 1
      %s21 = scalar_select %p18, %s19, %s20
      %p24 = pneg %p18
      %p25 = scmp.eq.s32.totalorder %s9, 1
      %p26 = por %p24, %p25
      %p27 = scmp.ne.s32.totalorder %s19, %s22
      %p28 = scmp.eq.s32.totalorder %s9, 0
      %p29 = por %p27, %p28
      %p30 = scmp.ne.s32.totalorder %s19, %s22
      %p31 = scmp.eq.s32.totalorder %s14, 1
      %p32 = por %p30, %p31
      %p33 = scmp.ne.s32.totalorder %s22, %s23
      %p34 = scmp.eq.s32.totalorder %s14, 0
      %p35 = por %p33, %p34
      %p36 = scmp.ne.s32.totalorder %s22, %s23
      %p37 = scmp.eq.s32.totalorder %s15, 1
      %p38 = por %p36, %p37
      %p40 = scmp.ne.s32.totalorder %s23, %s39
      %p41 = scmp.eq.s32.totalorder %s15, 0
      %p42 = por %p40, %p41
      %s44 = sadd.s32 %s43, 1
      %p47 = scmp.eq.s32.totalorder %s9, 1
      %p48 = scmp.ne.s32.totalorder %s43, %s45
      %p49 = scmp.eq.s32.totalorder %s9, 0
      %p50 = por %p48, %p49
      %p51 = scmp.ne.s32.totalorder %s43, %s45
      %p52 = scmp.eq.s32.totalorder %s14, 1
      %p53 = por %p51, %p52
      %p54 = scmp.ne.s32.totalorder %s45, %s46
      %p55 = scmp.eq.s32.totalorder %s14, 0
      %p56 = por %p54, %p55
      %p57 = scmp.ne.s32.totalorder %s45, %s46
      %p58 = scmp.eq.s32.totalorder %s15, 1
      %p59 = por %p57, %p58
      %p61 = scmp.ne.s32.totalorder %s46, %s60
      %p62 = scmp.eq.s32.totalorder %s15, 0
      %p63 = por %p61, %p62
      %s65 = sadd.s32 %s64, 1
      %p68 = scmp.eq.s32.totalorder %s9, 1
      %p69 = scmp.ne.s32.totalorder %s64, %s66
      %p70 = scmp.eq.s32.totalorder %s9, 0
      %p71 = por %p69, %p70
      %p72 = scmp.ne.s32.totalorder %s64, %s66
      %p73 = scmp.eq.s32.totalorder %s14, 1
      %p74 = por %p72, %p73
      %p75 = scmp.ne.s32.totalorder %s66, %s67
      %p76 = scmp.eq.s32.totalorder %s14, 0
      %p77 = por %p75, %p76
      %p78 = scmp.ne.s32.totalorder %s66, %s67
      %p79 = scmp.eq.s32.totalorder %s15, 1
      %p80 = por %p78, %p79
      %p82 = scmp.ne.s32.totalorder %s67, %s81
      %p83 = scmp.eq.s32.totalorder %s15, 0
      %p84 = por %p82, %p83
      %s85 = ssub.s32 %s9, %s16
      %p86 = scmp.eq.s32.totalorder %s85, 0
      %s88 = sadd.s32 %s87, 1
      %s89 = scalar_select %p86, %s87, %s88
      %p92 = pneg %p86
      %p93 = scmp.eq.s32.totalorder %s9, 1
      %p94 = por %p92, %p93
      %p95 = scmp.ne.s32.totalorder %s87, %s90
      %p96 = scmp.eq.s32.totalorder %s9, 0
      %p97 = por %p95, %p96
      %p98 = scmp.ne.s32.totalorder %s87, %s90
      %p99 = scmp.eq.s32.totalorder %s14, 1
      %p100 = por %p98, %p99
      %p101 = scmp.ne.s32.totalorder %s90, %s91
      %p102 = scmp.eq.s32.totalorder %s14, 0
      %p103 = por %p101, %p102
      %p104 = scmp.ne.s32.totalorder %s90, %s91
      %p105 = scmp.eq.s32.totalorder %s15, 1
      %p106 = por %p104, %p105
      %p108 = scmp.ne.s32.totalorder %s91, %s107
      %p109 = scmp.eq.s32.totalorder %s15, 0
      %p110 = por %p108, %p109
      %p111 = scmp.le.s32.totalorder 1, %s9
      %p112 = scmp.lt.s32.totalorder %s9, 3
      %p113 = pnand %p111, %p112
      %p114 = pneg %p113
      // Predicated region
      $region9: #{mr_dual_hfd_forward.3} parent=5 // pred_check
        _
      $region10: #{mr_dual_hfd_forward.3} parent=5 // pred_check_branch
        %116 = sbr.rel (%p113) target = $region12
      $region11: #{mr_dual_hfd_forward.3} parent=5 // pred_region
        %s117 = ssub.s32 %s9, 1
        // Predicated region
        $region13: #{mr_dual_hfd_forward.3} parent=11 // pred_check
          %p118 = pneg %p56
        $region14: #{mr_dual_hfd_forward.3} parent=11 // pred_check_branch
          %120 = sbr.rel (%p118) target = $region16
        $region15: #{mr_dual_hfd_forward.3} parent=11 // pred_region
          _
        $region16: #{mr_dual_hfd_forward.3} parent=11 // pred_fallthru
          _
        // Predicated region
        $region17: #{mr_dual_hfd_forward.3} parent=11 // pred_check
          %p121 = pneg %p77
        $region18: #{mr_dual_hfd_forward.3} parent=11 // pred_check_branch
          %123 = sbr.rel (%p121) target = $region20
        $region19: #{mr_dual_hfd_forward.3} parent=11 // pred_region
          _
        $region20: #{mr_dual_hfd_forward.3} parent=11 // pred_fallthru
          _
      $region12: #{mr_dual_hfd_forward.3} parent=5 // pred_fallthru
        _
      %p124 = scmp.lt.s32.totalorder %s9, 2
      // Predicated region
      $region21: #{mr_dual_hfd_forward.3} parent=5 // pred_check
        %p125 = pneg %p124
      $region22: #{mr_dual_hfd_forward.3} parent=5 // pred_check_branch
        %127 = sbr.rel (%p125) target = $region24
      $region23: #{mr_dual_hfd_forward.3} parent=5 // pred_region
        // Predicated region
        $region25: #{mr_dual_hfd_forward.3} parent=23 // pred_check
          %p128 = pneg %p29
        $region26: #{mr_dual_hfd_forward.3} parent=23 // pred_check_branch
          %130 = sbr.rel (%p128) target = $region28
        $region27: #{mr_dual_hfd_forward.3} parent=23 // pred_region
          %s131 = sand.u32 %s19, 1
          %s132 = sand.u32 %s19, 1
          %s133 = smul.addr %s132, 32
          %s134 = scalar_lea.vmem [#allocation2], %s133
          %s135 = smul.u32 2, %s9
          %s136 = smul.addr %s135, 8
          %s137 = scalar_lea.vmem %s0, %s136
          // Predicated region
          $region29: #{mr_dual_hfd_forward.3} parent=27 // pred_check
            _
          $region30: #{mr_dual_hfd_forward.3} parent=27 // pred_check_branch
            %139 = sbr.rel (0) target = $region32
          $region31: #{mr_dual_hfd_forward.3} parent=27 // pred_region
            // Predicated region
            $region33: #{mr_dual_hfd_forward.3} parent=31 // pred_check
              _
            $region34: #{mr_dual_hfd_forward.3} parent=31 // pred_check_branch
              %141 = sbr.rel (0) target = $region36
            $region35: #{mr_dual_hfd_forward.3} parent=31 // pred_region
              loop: start=0, step=1, limit=1
              $region37: #{mr_dual_hfd_forward.3} parent=35 // loop_pre_header
                _
              $region38: #{mr_dual_hfd_forward.3} parent=35 // loop_header
                %s143 = sphi 0, %s147
                %p144 = scmp.ge.s32.totalorder %s143, 1
                %s148 = sphi %s137, %s137
                %s149 = sphi %s134, %s134
              $region39: #{mr_dual_hfd_forward.3} parent=35 // loop_header_branch
                %146 = sbr.rel (%p144) target = $region43
              $region40: #{mr_dual_hfd_forward.3} parent=35 // loop_body
                %v150 = vld [vmem:[%s148] sm:$0xff]
                %151 = vst [vmem:[%s149] sm:$0xff] %v150
                %v152 = vld [vmem:[%s148 + $0x8] sm:$0xff]
                %153 = vst [vmem:[%s149 + $0x8] sm:$0xff] %v152
                %v154 = vld [vmem:[%s148 + $0x20] sm:$0xff]
                %155 = vst [vmem:[%s149 + $0x10] sm:$0xff] %v154
                %v156 = vld [vmem:[%s148 + $0x28] sm:$0xff]
                %157 = vst [vmem:[%s149 + $0x18] sm:$0xff] %v156
              $region41: #{mr_dual_hfd_forward.3} parent=35 // loop_footer
                %s147 = sadd.s32 1, %s143
              $region42: #{mr_dual_hfd_forward.3} parent=35 // loop_footer_branch
                %142 = sbr.rel target = $region38
              $region43: #{mr_dual_hfd_forward.3} parent=35 // loop_exit
                _
            $region36: #{mr_dual_hfd_forward.3} parent=31 // pred_fallthru
              _
            // Predicated region
            $region44: #{mr_dual_hfd_forward.3} parent=31 // pred_check
              _
            $region45: #{mr_dual_hfd_forward.3} parent=31 // pred_check_branch
              %159 = sbr.rel target = $region47
            $region46: #{mr_dual_hfd_forward.3} parent=31 // pred_region
              _
            $region47: #{mr_dual_hfd_forward.3} parent=31 // pred_fallthru
              _
          $region32: #{mr_dual_hfd_forward.3} parent=27 // pred_fallthru
            _
          %160 = vnop
        $region28: #{mr_dual_hfd_forward.3} parent=23 // pred_fallthru
          _
      $region24: #{mr_dual_hfd_forward.3} parent=5 // pred_fallthru
        _
      %p161 = scmp.le.s32.totalorder 1, %s9
      %p162 = scmp.lt.s32.totalorder %s9, 3
      %p163 = pnand %p161, %p162
      %p164 = pneg %p163
      // Predicated region
      $region48: #{mr_dual_hfd_forward.3} parent=5 // pred_check
        _
      $region49: #{mr_dual_hfd_forward.3} parent=5 // pred_check_branch
        %166 = sbr.rel (%p163) target = $region51
      $region50: #{mr_dual_hfd_forward.3} parent=5 // pred_region
        %s167 = ssub.s32 %s9, 1
        %s168 = sand.u32 %s22, 1
        %s169 = sand.u32 %s22, 1
        %s170 = smul.addr %s169, 32
        %s171 = scalar_lea.vmem [#allocation2], %s170
        // Predicated region
        $region52: #{mr_dual_hfd_forward.3} parent=50 // pred_check
          %p172 = pneg %p35
        $region53: #{mr_dual_hfd_forward.3} parent=50 // pred_check_branch
          %174 = sbr.rel (%p172) target = $region55
        $region54: #{mr_dual_hfd_forward.3} parent=50 // pred_region
          _
        $region55: #{mr_dual_hfd_forward.3} parent=50 // pred_fallthru
          _
        %s175 = sand.u32 %s22, 1
        %s176 = sand.u32 %s22, 1
        %s177 = smul.addr %s176, 32
        %s178 = scalar_lea.vmem [#allocation2], %s177
        %p179 = pneg %p35
        %p180 = pneg %p32
        %p181 = pneg %p56
        %p182 = pneg %p53
        %p183 = pneg %p77
        %p184 = pneg %p74
        %p185 = pneg %p103
        %p186 = pneg %p100
        %s187 = sand.u32 %s90, 1
        %s188 = sand.u32 %s90, 1
        %s189 = smul.addr %s188, 96
        %s190 = scalar_lea.vmem [#allocation3], %s189
        %s191 = smul.u32 2, %s14
        %s192 = smul.u32 2, %s14
        %v193 = vld [vmem:[%s1] sm:$0xff]
        %v194 = vld [vmem:[%s1 + $0x8] sm:$0xff]
        %v195 = vld [vmem:[%s1 + $0x10] sm:$0xff]
        %v196 = vld [vmem:[%s1 + $0x18] sm:$0xff]
        %v197 = vld [vmem:[%s1 + $0x20] sm:$0xff]
        %v198 = vld [vmem:[%s1 + $0x28] sm:$0x3]
        %v199 = vld [vmem:[%s171] sm:$0xff]
        %v200 = vld [vmem:[%s171 + $0x8] sm:$0xff]
        %v201 = vld [vmem:[%s171 + $0x10] sm:$0xff]
        %v202 = vld [vmem:[%s171 + $0x18] sm:$0xff]
        %v203 = vld [vmem:[%s2] sm:$0xff]
        %v204 = vld [vmem:[%s2 + $0x8] sm:$0xff]
        %v205 = vld [vmem:[%s2 + $0x10] sm:$0xff]
        %v206 = vld [vmem:[%s2 + $0x18] sm:$0xff]
        %v207 = vld [vmem:[%s2 + $0x20] sm:$0xff]
        %v208 = vld [vmem:[%s2 + $0x28] sm:$0x3]
        %210 = vset.pattern.permute.xlu0 0
        %211 = vperm.xlu0 %210, %v203
        %v212 = vpop.permute.xlu0 %211
        %215 = vset.pattern.permute.xlu0 0
        %216 = vperm.xlu0 %215, %v204
        %v217 = vpop.permute.xlu0 %216
        %220 = vset.pattern.permute.xlu0 0
        %221 = vperm.xlu0 %220, %v205
        %v222 = vpop.permute.xlu0 %221
        %225 = vset.pattern.permute.xlu0 0
        %226 = vperm.xlu0 %225, %v206
        %v227 = vpop.permute.xlu0 %226
        %230 = vset.pattern.permute.xlu0 0
        %231 = vperm.xlu0 %230, %v207
        %v232 = vpop.permute.xlu0 %231
        %235 = vset.pattern.permute.xlu0 0
        %236 = vperm.xlu0 %235, %v208
        %v237 = vpop.permute.xlu0 %236
        %vm239 = vcmask 130048
        %v241 = vsel %vm239, %v193, 0
        %v244 = vsel %vm239, %v194, 0
        %v247 = vsel %vm239, %v195, 0
        %v250 = vsel %vm239, %v196, 0
        %v253 = vsel %vm239, %v197, 0
        %v256 = vsel %vm239, %v198, 0
        %258 = vmatpush.msra.mxu0 0.0
        %259 = vmatpush.msra.mxu0 0.0
        %260 = vmatpush.msra.mxu0 0.0
        %261 = vmatpush.msra.mxu0 0.0
        %262 = vmatpush.msra.mxu0 0.0
        %263 = vmatpush.msra.mxu0 0.0
        %264 = vmatpush.msra.mxu0 0.0
        %265 = vmatpush.msra.mxu0 0.0
        %266 = vmatpush.msra.mxu0 0.0
        %267 = vmatpush.msra.mxu0 0.0
        %268 = vmatpush.msra.mxu0 0.0
        %269 = vmatpush.msra.mxu0 0.0
        %270 = vmatpush.msra.mxu0 0.0
        %271 = vmatpush.msra.mxu0 0.0
        %272 = vmatpush.msra.mxu0 %v201
        %273 = vmatpush.msra.mxu0 %v199
        %274 = vmatmul.f32.gmra.mxu0 %v241
        %v275 = vpop.f32.mrf.mxu0
        %v276 = vadd.f32 %v212, %v275
        %277 = vmatmul.f32.gmra.mxu0 %v244
        %v278 = vpop.f32.mrf.mxu0
        %v279 = vadd.f32 %v217, %v278
        %280 = vmatmul.f32.gmra.mxu0 %v247
        %v281 = vpop.f32.mrf.mxu0
        %v282 = vadd.f32 %v222, %v281
        %283 = vmatmul.f32.gmra.mxu0 %v250
        %v284 = vpop.f32.mrf.mxu0
        %v285 = vadd.f32 %v227, %v284
        %286 = vmatmul.f32.gmra.mxu0 %v253
        %v287 = vpop.f32.mrf.mxu0
        %v288 = vadd.f32 %v232, %v287
        %289 = vmatmul.f32.gmra.mxu0 %v256
        %v290 = vpop.f32.mrf.mxu0
        %v291 = vadd.f32 %v237, %v290
        %292 = vdwg.mxu0
        %293 = vmatpush.msra.mxu0 0.0
        %294 = vmatpush.msra.mxu0 0.0
        %295 = vmatpush.msra.mxu0 0.0
        %296 = vmatpush.msra.mxu0 0.0
        %297 = vmatpush.msra.mxu0 0.0
        %298 = vmatpush.msra.mxu0 0.0
        %299 = vmatpush.msra.mxu0 0.0
        %300 = vmatpush.msra.mxu0 0.0
        %301 = vmatpush.msra.mxu0 0.0
        %302 = vmatpush.msra.mxu0 0.0
        %303 = vmatpush.msra.mxu0 0.0
        %304 = vmatpush.msra.mxu0 0.0
        %305 = vmatpush.msra.mxu0 0.0
        %306 = vmatpush.msra.mxu0 0.0
        %307 = vmatpush.msra.mxu0 %v202
        %308 = vmatpush.msra.mxu0 %v200
        %309 = vmatmul.f32.gmra.mxu0 %v241
        %v310 = vpop.f32.mrf.mxu0
        %v311 = vadd.f32 %v212, %v310
        %312 = vmatmul.f32.gmra.mxu0 %v244
        %v313 = vpop.f32.mrf.mxu0
        %v314 = vadd.f32 %v217, %v313
        %315 = vmatmul.f32.gmra.mxu0 %v247
        %v316 = vpop.f32.mrf.mxu0
        %v317 = vadd.f32 %v222, %v316
        %318 = vmatmul.f32.gmra.mxu0 %v250
        %v319 = vpop.f32.mrf.mxu0
        %v320 = vadd.f32 %v227, %v319
        %321 = vmatmul.f32.gmra.mxu0 %v253
        %v322 = vpop.f32.mrf.mxu0
        %v323 = vadd.f32 %v232, %v322
        %324 = vmatmul.f32.gmra.mxu0 %v256
        %v325 = vpop.f32.mrf.mxu0
        %v326 = vadd.f32 %v237, %v325
        %327 = vdwg.mxu0
        %328 = vst [vmem:[%s190] sm:$0xff] %v276
        %329 = vst [vmem:[%s190 + $0x8] sm:$0xff] %v311
        %330 = vst [vmem:[%s190 + $0x10] sm:$0xff] %v279
        %331 = vst [vmem:[%s190 + $0x18] sm:$0xff] %v314
        %332 = vst [vmem:[%s190 + $0x20] sm:$0xff] %v282
        %333 = vst [vmem:[%s190 + $0x28] sm:$0xff] %v317
        %334 = vst [vmem:[%s190 + $0x30] sm:$0xff] %v285
        %335 = vst [vmem:[%s190 + $0x38] sm:$0xff] %v320
        %336 = vst [vmem:[%s190 + $0x40] sm:$0xff] %v288
        %337 = vst [vmem:[%s190 + $0x48] sm:$0xff] %v323
        %338 = vst [vmem:[%s190 + $0x50] sm:$0x3] %v291
        %339 = vst [vmem:[%s190 + $0x58] sm:$0x3] %v326
        %s340 = sand.u32 %s90, 1
        %s341 = sand.u32 %s90, 1
        %s342 = smul.addr %s341, 96
        %s343 = scalar_lea.vmem [#allocation3], %s342
        // Predicated region
        $region56: #{mr_dual_hfd_forward.3} parent=50 // pred_check
          %p344 = pneg %p100
        $region57: #{mr_dual_hfd_forward.3} parent=50 // pred_check_branch
          %346 = sbr.rel (%p344) target = $region59
        $region58: #{mr_dual_hfd_forward.3} parent=50 // pred_region
          %s347 = smul.u32 2, %s14
          %s348 = smul.addr %s347, 8
          %s349 = scalar_lea.vmem %s3, %s348
          // Predicated region
          $region60: #{mr_dual_hfd_forward.3} parent=58 // pred_check
            _
          $region61: #{mr_dual_hfd_forward.3} parent=58 // pred_check_branch
            %351 = sbr.rel (0) target = $region63
          $region62: #{mr_dual_hfd_forward.3} parent=58 // pred_region
            // Predicated region
            $region64: #{mr_dual_hfd_forward.3} parent=62 // pred_check
              _
            $region65: #{mr_dual_hfd_forward.3} parent=62 // pred_check_branch
              %353 = sbr.rel (0) target = $region67
            $region66: #{mr_dual_hfd_forward.3} parent=62 // pred_region
              loop: start=0, step=1, limit=1
              $region68: #{mr_dual_hfd_forward.3} parent=66 // loop_pre_header
                _
              $region69: #{mr_dual_hfd_forward.3} parent=66 // loop_header
                %s355 = sphi 0, %s359
                %p356 = scmp.ge.s32.totalorder %s355, 1
                %s360 = sphi %s343, %s343
                %s361 = sphi %s349, %s349
              $region70: #{mr_dual_hfd_forward.3} parent=66 // loop_header_branch
                %358 = sbr.rel (%p356) target = $region74
              $region71: #{mr_dual_hfd_forward.3} parent=66 // loop_body
                %v362 = vld [vmem:[%s360] sm:$0xff]
                %363 = vst [vmem:[%s361] sm:$0xff] %v362
                %v364 = vld [vmem:[%s360 + $0x8] sm:$0xff]
                %365 = vst [vmem:[%s361 + $0x8] sm:$0xff] %v364
                %v366 = vld [vmem:[%s360 + $0x10] sm:$0xff]
                %367 = vst [vmem:[%s361 + $0x20] sm:$0xff] %v366
                %v368 = vld [vmem:[%s360 + $0x18] sm:$0xff]
                %369 = vst [vmem:[%s361 + $0x28] sm:$0xff] %v368
                %v370 = vld [vmem:[%s360 + $0x20] sm:$0xff]
                %371 = vst [vmem:[%s361 + $0x40] sm:$0xff] %v370
                %v372 = vld [vmem:[%s360 + $0x28] sm:$0xff]
                %373 = vst [vmem:[%s361 + $0x48] sm:$0xff] %v372
                %v374 = vld [vmem:[%s360 + $0x30] sm:$0xff]
                %375 = vst [vmem:[%s361 + $0x60] sm:$0xff] %v374
                %v376 = vld [vmem:[%s360 + $0x38] sm:$0xff]
                %377 = vst [vmem:[%s361 + $0x68] sm:$0xff] %v376
                %v378 = vld [vmem:[%s360 + $0x40] sm:$0xff]
                %379 = vst [vmem:[%s361 + $0x80] sm:$0xff] %v378
                %v380 = vld [vmem:[%s360 + $0x48] sm:$0xff]
                %381 = vst [vmem:[%s361 + $0x88] sm:$0xff] %v380
                %v382 = vld [vmem:[%s360 + $0x50] sm:$0xff]
                %383 = vst [vmem:[%s361 + $0xa0] sm:$0xff] %v382
                %v384 = vld [vmem:[%s360 + $0x58] sm:$0xff]
                %385 = vst [vmem:[%s361 + $0xa8] sm:$0xff] %v384
              $region72: #{mr_dual_hfd_forward.3} parent=66 // loop_footer
                %s359 = sadd.s32 1, %s355
              $region73: #{mr_dual_hfd_forward.3} parent=66 // loop_footer_branch
                %354 = sbr.rel target = $region69
              $region74: #{mr_dual_hfd_forward.3} parent=66 // loop_exit
                _
            $region67: #{mr_dual_hfd_forward.3} parent=62 // pred_fallthru
              _
            // Predicated region
            $region75: #{mr_dual_hfd_forward.3} parent=62 // pred_check
              _
            $region76: #{mr_dual_hfd_forward.3} parent=62 // pred_check_branch
              %387 = sbr.rel target = $region78
            $region77: #{mr_dual_hfd_forward.3} parent=62 // pred_region
              _
            $region78: #{mr_dual_hfd_forward.3} parent=62 // pred_fallthru
              _
          $region63: #{mr_dual_hfd_forward.3} parent=58 // pred_fallthru
            _
          %388 = vnop
        $region59: #{mr_dual_hfd_forward.3} parent=50 // pred_fallthru
          _
      $region51: #{mr_dual_hfd_forward.3} parent=5 // pred_fallthru
        _
      %p389 = scmp.le.s32.totalorder 2, %s9
      // Predicated region
      $region79: #{mr_dual_hfd_forward.3} parent=5 // pred_check
        %p390 = pneg %p389
      $region80: #{mr_dual_hfd_forward.3} parent=5 // pred_check_branch
        %392 = sbr.rel (%p390) target = $region82
      $region81: #{mr_dual_hfd_forward.3} parent=5 // pred_region
        %s393 = ssub.s32 %s9, 2
        // Predicated region
        $region83: #{mr_dual_hfd_forward.3} parent=81 // pred_check
          %p394 = pneg %p106
        $region84: #{mr_dual_hfd_forward.3} parent=81 // pred_check_branch
          %396 = sbr.rel (%p394) target = $region86
        $region85: #{mr_dual_hfd_forward.3} parent=81 // pred_region
          %s397 = sand.u32 %s91, 1
          %s398 = sand.u32 %s91, 1
          %s399 = smul.addr %s398, 96
          %s400 = scalar_lea.vmem [#allocation3], %s399
        $region86: #{mr_dual_hfd_forward.3} parent=81 // pred_fallthru
          _
      $region82: #{mr_dual_hfd_forward.3} parent=5 // pred_fallthru
        _
    $region6: #{mr_dual_hfd_forward.3} parent=1 // loop_footer
      %s13 = sadd.s32 1, %s9
    $region7: #{mr_dual_hfd_forward.3} parent=1 // loop_footer_branch
      %8 = sbr.rel target = $region3
    $region8: #{mr_dual_hfd_forward.3} parent=1 // loop_exit
      _

// kernel: mr_dual_hfd_forward.5
$region0: #{mr_dual_hfd_forward.5}
  #allocation0 [shape = 'u32[]', space=smem, size = 0x4, offset = 0x4, fixed_abs, tag = 'smem constant byte address 0x4 - core index']
  #allocation1 [shape = 'u32[72,128]{1,0:T(1,128)}', space=vmem, size = 0x9000, scoped, tag = 'internal scratch']
  #allocation2 [shape = 'f32[256,256]{1,0:T(8,128)}', space=vmem, size = 0x40000, scoped, tag = 'scratch operand']
  #allocation3 [shape = 'f32[3,256]{1,0:T(4,128)}', space=vmem, size = 0x1000, scoped, tag = 'scratch operand']
  %s0 = inlined_call_operand.hbm [shape: s8[2,512,512], index: 0, kind: input, shape index: {}, may-alias: {0,1,2}]
  %s1 = inlined_call_operand.hbm [shape: s8[2,512,512], index: 1, kind: input, shape index: {}, may-alias: {0,1,2}]
  %s2 = inlined_call_operand.hbm [shape: s8[2,512,512], index: 2, kind: input, shape index: {}, may-alias: {0,1,2}]
  %s3 = inlined_call_operand.vmem [shape: f32[3,512], index: 3, kind: input, shape index: {}]
  %s4 = inlined_call_operand.hbm [shape: f32[2,512], index: 4, kind: output, shape index: {}]
  %s5 = sld [smem:[#allocation0]]
  $region77: #{mr_dual_hfd_forward.5} parent=0
    _
  %s7 = ssub.s32 1, %s5
  %s8 = scalar_select 0, %s7, %s5
  $region1: #{mr_dual_hfd_forward.5} parent=0
    #allocation4 [shape = 'u8[131072]{0}', space=vmem, size = 0x20000, scoped, tag = 'input window, operand 0']
    #allocation5 [shape = 's32[2]{0}', space=sflag, size = 0x8, scoped, tag = 'scoped memory for mr_dual_hfd_forward.5']
    #allocation6 [shape = 's32[2]{0}', space=sflag, size = 0x8, scoped, tag = 'scoped memory for mr_dual_hfd_forward.5']
    #allocation7 [shape = 'u8[131072]{0}', space=vmem, size = 0x20000, scoped, tag = 'input window, operand 1']
    #allocation8 [shape = 's32[2]{0}', space=sflag, size = 0x8, scoped, tag = 'scoped memory for mr_dual_hfd_forward.5']
    #allocation9 [shape = 'u8[131072]{0}', space=vmem, size = 0x20000, scoped, tag = 'input window, operand 2']
    #allocation10 [shape = 'u8[4096]{0}', space=vmem, size = 0x1000, scoped, tag = 'output window, operand 0']
    %9 = vsyncpa [#allocation5], 0
    %s10 = scalar_lea.sflag [#allocation5], 1
    %11 = vsyncpa %s10, 0
    %12 = vsyncpa [#allocation8], 0
    %s13 = scalar_lea.sflag [#allocation8], 1
    %14 = vsyncpa %s13, 0
    %15 = vsyncpa [#allocation6], 0
    %s16 = scalar_lea.sflag [#allocation6], 1
    %17 = vsyncpa %s16, 0
    loop: start=0, step=1, limit=10
    $region2: #{mr_dual_hfd_forward.5} parent=1 // loop_pre_header
      _
    $region3: #{mr_dual_hfd_forward.5} parent=1 // loop_header
      %s19 = sphi 0, %s23
      %p20 = scmp.ge.s32.totalorder %s19, 10
      %s26 = sphi 0, %s45
      %s27 = sphi 0, %s41
      %s28 = sphi 0, %s37
      %s29 = sphi 0, %s26
      %s30 = sphi 0, %s27
      %s31 = sphi 0, %s28
      %s32 = sphi 0, %s29
      %s33 = sphi 0, %s30
      %s34 = sphi 0, %s31
      %s50 = sphi 0, %s52
      %s53 = sphi 0, %s50
      %s54 = sphi 0, %s53
      %s70 = sphi 0, %s54
      %s78 = sphi 0, %s80
      %s81 = sphi 0, %s78
      %s82 = sphi 0, %s81
      %s98 = sphi 0, %s82
      %s106 = sphi 0, %s108
      %s109 = sphi 0, %s106
      %s110 = sphi 0, %s109
      %s126 = sphi 0, %s110
      %s132 = sphi 0, %s134
      %s135 = sphi 0, %s132
      %s136 = sphi 0, %s135
      %s152 = sphi 0, %s136
      %s158 = sphi 0, %s160
      %s161 = sphi 0, %s158
      %s162 = sphi 0, %s161
      %s178 = sphi 0, %s162
    $region4: #{mr_dual_hfd_forward.5} parent=1 // loop_header_branch
      %22 = sbr.rel (%p20) target = $region8
    $region5: #{mr_dual_hfd_forward.5} parent=1 // loop_body
      %s24 = ssub.s32 %s19, 1
      %s25 = ssub.s32 %s19, 2
      %s35 = sadd.s32 1, %s28
      %p36 = scmp.ge.s32.totalorder %s35, 2
      %s37 = scalar_select %p36, 0, %s35
      %s38 = sadd.s32 1, %s27
      %s39 = scalar_select %p36, %s38, %s27
      %p40 = scmp.ge.s32.totalorder %s39, 2
      %s41 = scalar_select %p40, 0, %s39
      %s42 = sadd.s32 1, %s26
      %s43 = scalar_select %p40, %s42, %s26
      %p44 = scmp.ge.s32.totalorder %s43, 2
      %s45 = scalar_select %p44, 0, %s43
      %s46 = ssub.s32 %s27, %s41
      %s47 = ssub.s32 %s28, %s37
      %s48 = sor.u32 %s46, %s47
      %p49 = scmp.eq.s32.totalorder %s48, 0
      %s51 = sadd.s32 %s50, 1
      %s52 = scalar_select %p49, %s50, %s51
      %p55 = pneg %p49
      %p56 = scmp.eq.s32.totalorder %s19, 7
      %p57 = por %p55, %p56
      %p58 = scmp.ne.s32.totalorder %s50, %s53
      %p59 = scmp.eq.s32.totalorder %s19, 0
      %p60 = por %p58, %p59
      %p61 = scmp.ne.s32.totalorder %s50, %s53
      %p62 = scmp.eq.s32.totalorder %s24, 7
      %p63 = por %p61, %p62
      %p64 = scmp.ne.s32.totalorder %s53, %s54
      %p65 = scmp.eq.s32.totalorder %s24, 0
      %p66 = por %p64, %p65
      %p67 = scmp.ne.s32.totalorder %s53, %s54
      %p68 = scmp.eq.s32.totalorder %s25, 7
      %p69 = por %p67, %p68
      %p71 = scmp.ne.s32.totalorder %s54, %s70
      %p72 = scmp.eq.s32.totalorder %s25, 0
      %p73 = por %p71, %p72
      %s74 = ssub.s32 %s28, %s37
      %s75 = ssub.s32 %s26, %s45
      %s76 = sor.u32 %s74, %s75
      %p77 = scmp.eq.s32.totalorder %s76, 0
      %s79 = sadd.s32 %s78, 1
      %s80 = scalar_select %p77, %s78, %s79
      %p83 = pneg %p77
      %p84 = scmp.eq.s32.totalorder %s19, 7
      %p85 = por %p83, %p84
      %p86 = scmp.ne.s32.totalorder %s78, %s81
      %p87 = scmp.eq.s32.totalorder %s19, 0
      %p88 = por %p86, %p87
      %p89 = scmp.ne.s32.totalorder %s78, %s81
      %p90 = scmp.eq.s32.totalorder %s24, 7
      %p91 = por %p89, %p90
      %p92 = scmp.ne.s32.totalorder %s81, %s82
      %p93 = scmp.eq.s32.totalorder %s24, 0
      %p94 = por %p92, %p93
      %p95 = scmp.ne.s32.totalorder %s81, %s82
      %p96 = scmp.eq.s32.totalorder %s25, 7
      %p97 = por %p95, %p96
      %p99 = scmp.ne.s32.totalorder %s82, %s98
      %p100 = scmp.eq.s32.totalorder %s25, 0
      %p101 = por %p99, %p100
      %s102 = ssub.s32 %s27, %s41
      %s103 = ssub.s32 %s26, %s45
      %s104 = sor.u32 %s102, %s103
      %p105 = scmp.eq.s32.totalorder %s104, 0
      %s107 = sadd.s32 %s106, 1
      %s108 = scalar_select %p105, %s106, %s107
      %p111 = pneg %p105
      %p112 = scmp.eq.s32.totalorder %s19, 7
      %p113 = por %p111, %p112
      %p114 = scmp.ne.s32.totalorder %s106, %s109
      %p115 = scmp.eq.s32.totalorder %s19, 0
      %p116 = por %p114, %p115
      %p117 = scmp.ne.s32.totalorder %s106, %s109
      %p118 = scmp.eq.s32.totalorder %s24, 7
      %p119 = por %p117, %p118
      %p120 = scmp.ne.s32.totalorder %s109, %s110
      %p121 = scmp.eq.s32.totalorder %s24, 0
      %p122 = por %p120, %p121
      %p123 = scmp.ne.s32.totalorder %s109, %s110
      %p124 = scmp.eq.s32.totalorder %s25, 7
      %p125 = por %p123, %p124
      %p127 = scmp.ne.s32.totalorder %s110, %s126
      %p128 = scmp.eq.s32.totalorder %s25, 0
      %p129 = por %p127, %p128
      %s130 = ssub.s32 %s27, %s41
      %p131 = scmp.eq.s32.totalorder %s130, 0
      %s133 = sadd.s32 %s132, 1
      %s134 = scalar_select %p131, %s132, %s133
      %p137 = pneg %p131
      %p138 = scmp.eq.s32.totalorder %s19, 7
      %p139 = por %p137, %p138
      %p140 = scmp.ne.s32.totalorder %s132, %s135
      %p141 = scmp.eq.s32.totalorder %s19, 0
      %p142 = por %p140, %p141
      %p143 = scmp.ne.s32.totalorder %s132, %s135
      %p144 = scmp.eq.s32.totalorder %s24, 7
      %p145 = por %p143, %p144
      %p146 = scmp.ne.s32.totalorder %s135, %s136
      %p147 = scmp.eq.s32.totalorder %s24, 0
      %p148 = por %p146, %p147
      %p149 = scmp.ne.s32.totalorder %s135, %s136
      %p150 = scmp.eq.s32.totalorder %s25, 7
      %p151 = por %p149, %p150
      %p153 = scmp.ne.s32.totalorder %s136, %s152
      %p154 = scmp.eq.s32.totalorder %s25, 0
      %p155 = por %p153, %p154
      %s156 = ssub.s32 %s26, %s45
      %p157 = scmp.eq.s32.totalorder %s156, 0
      %s159 = sadd.s32 %s158, 1
      %s160 = scalar_select %p157, %s158, %s159
      %p163 = pneg %p157
      %p164 = scmp.eq.s32.totalorder %s19, 7
      %p165 = por %p163, %p164
      %p166 = scmp.ne.s32.totalorder %s158, %s161
      %p167 = scmp.eq.s32.totalorder %s19, 0
      %p168 = por %p166, %p167
      %p169 = scmp.ne.s32.totalorder %s158, %s161
      %p170 = scmp.eq.s32.totalorder %s24, 7
      %p171 = por %p169, %p170
      %p172 = scmp.ne.s32.totalorder %s161, %s162
      %p173 = scmp.eq.s32.totalorder %s24, 0
      %p174 = por %p172, %p173
      %p175 = scmp.ne.s32.totalorder %s161, %s162
      %p176 = scmp.eq.s32.totalorder %s25, 7
      %p177 = por %p175, %p176
      %p179 = scmp.ne.s32.totalorder %s162, %s178
      %p180 = scmp.eq.s32.totalorder %s25, 0
      %p181 = por %p179, %p180
      %p182 = scmp.le.s32.totalorder 1, %s19
      %p183 = scmp.lt.s32.totalorder %s19, 9
      %p184 = pnand %p182, %p183
      %p185 = pneg %p184
      // Predicated region
      $region9: #{mr_dual_hfd_forward.5} parent=5 // pred_check
        _
      $region10: #{mr_dual_hfd_forward.5} parent=5 // pred_check_branch
        %187 = sbr.rel (%p184) target = $region12
      $region11: #{mr_dual_hfd_forward.5} parent=5 // pred_region
        %s188 = ssub.s32 %s19, 1
      $region12: #{mr_dual_hfd_forward.5} parent=5 // pred_fallthru
        _
      %p189 = scmp.lt.s32.totalorder %s19, 8
      // Predicated region
      $region13: #{mr_dual_hfd_forward.5} parent=5 // pred_check
        %p190 = pneg %p189
      $region14: #{mr_dual_hfd_forward.5} parent=5 // pred_check_branch
        %192 = sbr.rel (%p190) target = $region16
      $region15: #{mr_dual_hfd_forward.5} parent=5 // pred_region
        // Predicated region
        $region17: #{mr_dual_hfd_forward.5} parent=15 // pred_check
          %p193 = pneg %p60
        $region18: #{mr_dual_hfd_forward.5} parent=15 // pred_check_branch
          %195 = sbr.rel (%p193) target = $region20
        $region19: #{mr_dual_hfd_forward.5} parent=15 // pred_region
          %s196 = sand.u32 %s50, 1
          %s197 = scalar_lea.sflag [#allocation5], %s196
          %s198 = sand.u32 %s50, 1
          %s199 = smul.addr %s198, 128
          %s200 = scalar_lea.vmem [#allocation4], %s199
          %s201 = smul.u32 8, %s27
          %s202 = smul.u32 2, %s28
          %204 = vsyncadd %s197, 0
          %s205 = smul.addr %s201, 4
          %s206 = sadd.s32 %s202, %s205
          %s207 = sadd.s32 %s206, 64
          %s208 = smul.addr %s207, 8
          %s209 = scalar_lea.hbm %s0, %s208
          %s210 = sshll.u32 %s209, 4
          %s211 = int_to_ptr.hbm [resolvable:$true] %s210
          %s212 = sshll.u32 %s200, 4
          %s213 = int_to_ptr.vmem [resolvable:$true] %s212
          %218 = dma.hbm_to_vmem [thread:$0]  %s211, 2048, %s213, %s197, 512, 256, 16
        $region20: #{mr_dual_hfd_forward.5} parent=15 // pred_fallthru
          _
        // Predicated region
        $region21: #{mr_dual_hfd_forward.5} parent=15 // pred_check
          %p219 = pneg %p88
        $region22: #{mr_dual_hfd_forward.5} parent=15 // pred_check_branch
          %221 = sbr.rel (%p219) target = $region24
        $region23: #{mr_dual_hfd_forward.5} parent=15 // pred_region
          %s222 = sand.u32 %s19, 1
          %s223 = scalar_lea.sflag [#allocation8], %s222
          %s224 = sand.u32 %s78, 1
          %s225 = smul.addr %s224, 128
          %s226 = scalar_lea.vmem [#allocation7], %s225
          %s227 = smul.u32 8, %s28
          %s228 = smul.u32 2, %s26
          %230 = vsyncadd %s223, 0
          %s231 = smul.addr %s227, 4
          %s232 = sadd.s32 %s228, %s231
          %s233 = sadd.s32 %s232, 64
          %s234 = smul.addr %s233, 8
          %s235 = scalar_lea.hbm %s1, %s234
          %s236 = sshll.u32 %s235, 4
          %s237 = int_to_ptr.hbm [resolvable:$true] %s236
          %s238 = sshll.u32 %s226, 4
          %s239 = int_to_ptr.vmem [resolvable:$true] %s238
          %244 = dma.hbm_to_vmem [thread:$0]  %s237, 2048, %s239, %s223, 512, 256, 16
        $region24: #{mr_dual_hfd_forward.5} parent=15 // pred_fallthru
          _
        // Predicated region
        $region25: #{mr_dual_hfd_forward.5} parent=15 // pred_check
          %p245 = pneg %p116
        $region26: #{mr_dual_hfd_forward.5} parent=15 // pred_check_branch
          %247 = sbr.rel (%p245) target = $region28
        $region27: #{mr_dual_hfd_forward.5} parent=15 // pred_region
          %s248 = sand.u32 %s19, 1
          %s249 = scalar_lea.sflag [#allocation8], %s248
          %s250 = sand.u32 %s106, 1
          %s251 = smul.addr %s250, 128
          %s252 = scalar_lea.vmem [#allocation9], %s251
          %s253 = smul.u32 8, %s27
          %s254 = smul.u32 2, %s26
          %256 = vsyncadd %s249, 0
          %s257 = smul.addr %s253, 4
          %s258 = sadd.s32 %s254, %s257
          %s259 = sadd.s32 %s258, 64
          %s260 = smul.addr %s259, 8
          %s261 = scalar_lea.hbm %s2, %s260
          %s262 = sshll.u32 %s261, 4
          %s263 = int_to_ptr.hbm [resolvable:$true] %s262
          %s264 = sshll.u32 %s252, 4
          %s265 = int_to_ptr.vmem [resolvable:$true] %s264
          %270 = dma.hbm_to_vmem [thread:$0]  %s263, 2048, %s265, %s249, 512, 256, 16
        $region28: #{mr_dual_hfd_forward.5} parent=15 // pred_fallthru
          _
        // Predicated region
        $region29: #{mr_dual_hfd_forward.5} parent=15 // pred_check
          %p271 = pneg %p142
        $region30: #{mr_dual_hfd_forward.5} parent=15 // pred_check_branch
          %273 = sbr.rel (%p271) target = $region32
        $region31: #{mr_dual_hfd_forward.5} parent=15 // pred_region
          %s274 = smul.u32 2, %s27
          %p275 = scmp.lt.s32.totalorder %s274, 3
          %s276 = scalar_select %p275, %s274, 3
          %s277 = smul.addr %s276, 4
          %s278 = scalar_lea.vmem %s3, %s277
          %s279 = smul.u32 2, %s27
        $region32: #{mr_dual_hfd_forward.5} parent=15 // pred_fallthru
          _
      $region16: #{mr_dual_hfd_forward.5} parent=5 // pred_fallthru
        _
      %p280 = scmp.le.s32.totalorder 1, %s19
      %p281 = scmp.lt.s32.totalorder %s19, 9
      %p282 = pnand %p280, %p281
      %p283 = pneg %p282
      // Predicated region
      $region33: #{mr_dual_hfd_forward.5} parent=5 // pred_check
        _
      $region34: #{mr_dual_hfd_forward.5} parent=5 // pred_check_branch
        %285 = sbr.rel (%p282) target = $region36
      $region35: #{mr_dual_hfd_forward.5} parent=5 // pred_region
        %s286 = ssub.s32 %s19, 1
        %s287 = sand.u32 %s53, 1
        %s288 = scalar_lea.sflag [#allocation5], %s287
        %s289 = sand.u32 %s53, 1
        %s290 = smul.addr %s289, 128
        %s291 = scalar_lea.vmem [#allocation4], %s290
        // Predicated region
        $region37: #{mr_dual_hfd_forward.5} parent=35 // pred_check
          %p292 = pneg %p66
        $region38: #{mr_dual_hfd_forward.5} parent=35 // pred_check_branch
          %294 = sbr.rel (%p292) target = $region40
        $region39: #{mr_dual_hfd_forward.5} parent=35 // pred_region
          %296 = dma.done %s288, 2048
        $region40: #{mr_dual_hfd_forward.5} parent=35 // pred_fallthru
          _
        %s297 = sand.u32 %s24, 1
        %s298 = scalar_lea.sflag [#allocation8], %s297
        %s299 = sand.u32 %s81, 1
        %s300 = smul.addr %s299, 128
        %s301 = scalar_lea.vmem [#allocation7], %s300
        // Predicated region
        $region41: #{mr_dual_hfd_forward.5} parent=35 // pred_check
          %p302 = pneg %p94
        $region42: #{mr_dual_hfd_forward.5} parent=35 // pred_check_branch
          %304 = sbr.rel (%p302) target = $region44
        $region43: #{mr_dual_hfd_forward.5} parent=35 // pred_region
          %306 = dma.done %s298, 2048
        $region44: #{mr_dual_hfd_forward.5} parent=35 // pred_fallthru
          _
        %s307 = sand.u32 %s24, 1
        %s308 = scalar_lea.sflag [#allocation8], %s307
        %s309 = sand.u32 %s109, 1
        %s310 = smul.addr %s309, 128
        %s311 = scalar_lea.vmem [#allocation9], %s310
        // Predicated region
        $region45: #{mr_dual_hfd_forward.5} parent=35 // pred_check
          %p312 = pneg %p122
        $region46: #{mr_dual_hfd_forward.5} parent=35 // pred_check_branch
          %314 = sbr.rel (%p312) target = $region48
        $region47: #{mr_dual_hfd_forward.5} parent=35 // pred_region
          %316 = dma.done %s308, 2048
        $region48: #{mr_dual_hfd_forward.5} parent=35 // pred_fallthru
          _
        %s317 = sand.u32 %s53, 1
        %s318 = scalar_lea.sflag [#allocation5], %s317
        %s319 = sand.u32 %s53, 1
        %s320 = smul.addr %s319, 128
        %s321 = scalar_lea.vmem [#allocation4], %s320
        %p322 = pneg %p66
        %p323 = pneg %p63
        %s324 = sand.u32 %s24, 1
        %s325 = scalar_lea.sflag [#allocation8], %s324
        %s326 = sand.u32 %s81, 1
        %s327 = smul.addr %s326, 128
        %s328 = scalar_lea.vmem [#allocation7], %s327
        %p329 = pneg %p94
        %p330 = pneg %p91
        %s331 = sand.u32 %s24, 1
        %s332 = scalar_lea.sflag [#allocation8], %s331
        %s333 = sand.u32 %s109, 1
        %s334 = smul.addr %s333, 128
        %s335 = scalar_lea.vmem [#allocation9], %s334
        %p336 = pneg %p122
        %p337 = pneg %p119
        %s338 = smul.u32 2, %s30
        %p339 = scmp.lt.s32.totalorder %s338, 3
        %s340 = scalar_select %p339, %s338, 3
        %s341 = smul.addr %s340, 4
        %s342 = scalar_lea.vmem %s3, %s341
        %p343 = pneg %p148
        %p344 = pneg %p145
        %p345 = pneg %p174
        %p346 = pneg %p171
        %s347 = sand.u32 %s161, 1
        %s348 = scalar_lea.sflag [#allocation6], %s347
        %s349 = sand.u32 %s161, 1
        %s350 = smul.addr %s349, 4
        %s351 = scalar_lea.vmem [#allocation10], %s350
        %s352 = smul.u32 8, %s30
        %s353 = smul.u32 2, %s31
        %s354 = smul.u32 8, %s31
        %s355 = smul.u32 2, %s29
        %s356 = smul.u32 8, %s30
        %s357 = smul.u32 2, %s29
        %s358 = smul.u32 2, %s30
        %p359 = scmp.lt.s32.totalorder %s358, 3
        %s360 = scalar_select %p359, %s358, 3
        %s361 = smul.addr %s360, 4
        %s362 = scalar_lea.vmem %s3, %s361
        %s363 = smul.u32 2, %s30
        %s364 = smul.u32 2, %s29
        %p365 = scmp.eq.s32.totalorder %s30, 0
        %p366 = scmp.eq.s32.totalorder %s31, 0
        %p367 = pnand %p365, %p366
        %p368 = pneg %p367
        // Predicated region
        $region49: #{mr_dual_hfd_forward.5} parent=35 // pred_check
          _
        $region50: #{mr_dual_hfd_forward.5} parent=35 // pred_check_branch
          %370 = sbr.rel (%p367) target = $region52
        $region51: #{mr_dual_hfd_forward.5} parent=35 // pred_region
          %371 = vst [vmem:[#allocation3] sm:$0x77] 0.0
        $region52: #{mr_dual_hfd_forward.5} parent=35 // pred_fallthru
          _
        // Predicated region
        $region53: #{mr_dual_hfd_forward.5} parent=35 // pred_check
          %p372 = pneg %p366
        $region54: #{mr_dual_hfd_forward.5} parent=35 // pred_check_branch
          %374 = sbr.rel (%p372) target = $region56
        $region55: #{mr_dual_hfd_forward.5} parent=35 // pred_region
          %375 = vst [vmem:[#allocation2] sm:$0xff] 0.0
          %376 = vst [vmem:[#allocation2 + $0x8] sm:$0xff] 0.0
          %377 = vst [vmem:[#allocation2 + $0x10] sm:$0xff] 0.0
          %378 = vst [vmem:[#allocation2 + $0x18] sm:$0xff] 0.0
          %379 = vst [vmem:[#allocation2 + $0x20] sm:$0xff] 0.0
          %380 = vst [vmem:[#allocation2 + $0x28] sm:$0xff] 0.0
          %381 = vst [vmem:[#allocation2 + $0x30] sm:$0xff] 0.0
          %382 = vst [vmem:[#allocation2 + $0x38] sm:$0xff] 0.0
          %383 = vst [vmem:[#allocation2 + $0x40] sm:$0xff] 0.0
          %384 = vst [vmem:[#allocation2 + $0x48] sm:$0xff] 0.0
          %385 = vst [vmem:[#allocation2 + $0x50] sm:$0xff] 0.0
          %386 = vst [vmem:[#allocation2 + $0x58] sm:$0xff] 0.0
          %387 = vst [vmem:[#allocation2 + $0x60] sm:$0xff] 0.0
          %388 = vst [vmem:[#allocation2 + $0x68] sm:$0xff] 0.0
          %389 = vst [vmem:[#allocation2 + $0x70] sm:$0xff] 0.0
          %390 = vst [vmem:[#allocation2 + $0x78] sm:$0xff] 0.0
          %391 = vst [vmem:[#allocation2 + $0x80] sm:$0xff] 0.0
          %392 = vst [vmem:[#allocation2 + $0x88] sm:$0xff] 0.0
          %393 = vst [vmem:[#allocation2 + $0x90] sm:$0xff] 0.0
          %394 = vst [vmem:[#allocation2 + $0x98] sm:$0xff] 0.0
          %395 = vst [vmem:[#allocation2 + $0xa0] sm:$0xff] 0.0
          %396 = vst [vmem:[#allocation2 + $0xa8] sm:$0xff] 0.0
          %397 = vst [vmem:[#allocation2 + $0xb0] sm:$0xff] 0.0
          %398 = vst [vmem:[#allocation2 + $0xb8] sm:$0xff] 0.0
          %399 = vst [vmem:[#allocation2 + $0xc0] sm:$0xff] 0.0
          %400 = vst [vmem:[#allocation2 + $0xc8] sm:$0xff] 0.0
          %401 = vst [vmem:[#allocation2 + $0xd0] sm:$0xff] 0.0
          %402 = vst [vmem:[#allocation2 + $0xd8] sm:$0xff] 0.0
          %403 = vst [vmem:[#allocation2 + $0xe0] sm:$0xff] 0.0
          %404 = vst [vmem:[#allocation2 + $0xe8] sm:$0xff] 0.0
          %405 = vst [vmem:[#allocation2 + $0xf0] sm:$0xff] 0.0
          %406 = vst [vmem:[#allocation2 + $0xf8] sm:$0xff] 0.0
          %407 = vst [vmem:[#allocation2 + $0x100] sm:$0xff] 0.0
          %408 = vst [vmem:[#allocation2 + $0x108] sm:$0xff] 0.0
          %409 = vst [vmem:[#allocation2 + $0x110] sm:$0xff] 0.0
          %410 = vst [vmem:[#allocation2 + $0x118] sm:$0xff] 0.0
          %411 = vst [vmem:[#allocation2 + $0x120] sm:$0xff] 0.0
          %412 = vst [vmem:[#allocation2 + $0x128] sm:$0xff] 0.0
          %413 = vst [vmem:[#allocation2 + $0x130] sm:$0xff] 0.0
          %414 = vst [vmem:[#allocation2 + $0x138] sm:$0xff] 0.0
          %415 = vst [vmem:[#allocation2 + $0x140] sm:$0xff] 0.0
          %416 = vst [vmem:[#allocation2 + $0x148] sm:$0xff] 0.0
          %417 = vst [vmem:[#allocation2 + $0x150] sm:$0xff] 0.0
          %418 = vst [vmem:[#allocation2 + $0x158] sm:$0xff] 0.0
          %419 = vst [vmem:[#allocation2 + $0x160] sm:$0xff] 0.0
          %420 = vst [vmem:[#allocation2 + $0x168] sm:$0xff] 0.0
          %421 = vst [vmem:[#allocation2 + $0x170] sm:$0xff] 0.0
          %422 = vst [vmem:[#allocation2 + $0x178] sm:$0xff] 0.0
          %423 = vst [vmem:[#allocation2 + $0x180] sm:$0xff] 0.0
          %424 = vst [vmem:[#allocation2 + $0x188] sm:$0xff] 0.0
          %425 = vst [vmem:[#allocation2 + $0x190] sm:$0xff] 0.0
          %426 = vst [vmem:[#allocation2 + $0x198] sm:$0xff] 0.0
          %427 = vst [vmem:[#allocation2 + $0x1a0] sm:$0xff] 0.0
          %428 = vst [vmem:[#allocation2 + $0x1a8] sm:$0xff] 0.0
          %429 = vst [vmem:[#allocation2 + $0x1b0] sm:$0xff] 0.0
          %430 = vst [vmem:[#allocation2 + $0x1b8] sm:$0xff] 0.0
          %431 = vst [vmem:[#allocation2 + $0x1c0] sm:$0xff] 0.0
          %432 = vst [vmem:[#allocation2 + $0x1c8] sm:$0xff] 0.0
          %433 = vst [vmem:[#allocation2 + $0x1d0] sm:$0xff] 0.0
          %434 = vst [vmem:[#allocation2 + $0x1d8] sm:$0xff] 0.0
          %435 = vst [vmem:[#allocation2 + $0x1e0] sm:$0xff] 0.0
          %436 = vst [vmem:[#allocation2 + $0x1e8] sm:$0xff] 0.0
          %437 = vst [vmem:[#allocation2 + $0x1f0] sm:$0xff] 0.0
          %438 = vst [vmem:[#allocation2 + $0x1f8] sm:$0xff] 0.0
        $region56: #{mr_dual_hfd_forward.5} parent=35 // pred_fallthru
          _
        %v439 = vld [vmem:[%s291] sm:$0xff]
        %v440 = vld [vmem:[%s291 + $0x8] sm:$0xff]
        %v441 = vld [vmem:[%s291 + $0x10] sm:$0xff]
        %v442 = vld [vmem:[%s291 + $0x18] sm:$0xff]
        %v443 = vld [vmem:[%s291 + $0x20] sm:$0xff]
        %v444 = vld [vmem:[%s291 + $0x28] sm:$0xff]
        %v445 = vld [vmem:[%s291 + $0x30] sm:$0xff]
        %v446 = vld [vmem:[%s291 + $0x38] sm:$0xff]
        %v447 = vld [vmem:[%s291 + $0x40] sm:$0xff]
        %v448 = vld [vmem:[%s291 + $0x48] sm:$0xff]
        %v449 = vld [vmem:[%s291 + $0x50] sm:$0xff]
        %v450 = vld [vmem:[%s291 + $0x58] sm:$0xff]
        %v451 = vld [vmem:[%s291 + $0x60] sm:$0xff]
        %v452 = vld [vmem:[%s291 + $0x68] sm:$0xff]
        %v453 = vld [vmem:[%s291 + $0x70] sm:$0xff]
        %v454 = vld [vmem:[%s291 + $0x78] sm:$0xff]
        %v455 = vunpack.c.0.s8 %v439
        %v456 = vunpack.c.0.s8 %v440
        %v457 = vunpack.c.1.s8 %v439
        %v458 = vunpack.c.1.s8 %v440
        %v459 = vunpack.c.2.s8 %v439
        %v460 = vunpack.c.2.s8 %v440
        %v461 = vunpack.c.3.s8 %v439
        %v462 = vunpack.c.3.s8 %v440
        %v463 = vunpack.c.0.s8 %v441
        %v464 = vunpack.c.0.s8 %v442
        %v465 = vunpack.c.1.s8 %v441
        %v466 = vunpack.c.1.s8 %v442
        %v467 = vunpack.c.2.s8 %v441
        %v468 = vunpack.c.2.s8 %v442
        %v469 = vunpack.c.3.s8 %v441
        %v470 = vunpack.c.3.s8 %v442
        %v471 = vunpack.c.0.s8 %v443
        %v472 = vunpack.c.0.s8 %v444
        %v473 = vunpack.c.1.s8 %v443
        %v474 = vunpack.c.1.s8 %v444
        %v475 = vunpack.c.2.s8 %v443
        %v476 = vunpack.c.2.s8 %v444
        %v477 = vunpack.c.3.s8 %v443
        %v478 = vunpack.c.3.s8 %v444
        %v479 = vunpack.c.0.s8 %v445
        %v480 = vunpack.c.0.s8 %v446
        %v481 = vunpack.c.1.s8 %v445
        %v482 = vunpack.c.1.s8 %v446
        %v483 = vunpack.c.2.s8 %v445
        %v484 = vunpack.c.2.s8 %v446
        %v485 = vunpack.c.3.s8 %v445
        %v486 = vunpack.c.3.s8 %v446
        %v487 = vunpack.c.0.s8 %v447
        %v488 = vunpack.c.0.s8 %v448
        %v489 = vunpack.c.1.s8 %v447
        %v490 = vunpack.c.1.s8 %v448
        %v491 = vunpack.c.2.s8 %v447
        %v492 = vunpack.c.2.s8 %v448
        %v493 = vunpack.c.3.s8 %v447
        %v494 = vunpack.c.3.s8 %v448
        %v495 = vunpack.c.0.s8 %v449
        %v496 = vunpack.c.0.s8 %v450
        %v497 = vunpack.c.1.s8 %v449
        %v498 = vunpack.c.1.s8 %v450
        %v499 = vunpack.c.2.s8 %v449
        %v500 = vunpack.c.2.s8 %v450
        %v501 = vunpack.c.3.s8 %v449
        %v502 = vunpack.c.3.s8 %v450
        %v503 = vunpack.c.0.s8 %v451
        %v504 = vunpack.c.0.s8 %v452
        %v505 = vunpack.c.1.s8 %v451
        %v506 = vunpack.c.1.s8 %v452
        %v507 = vunpack.c.2.s8 %v451
        %v508 = vunpack.c.2.s8 %v452
        %v509 = vunpack.c.3.s8 %v451
        %v510 = vunpack.c.3.s8 %v452
        %v511 = vunpack.c.0.s8 %v453
        %v512 = vunpack.c.0.s8 %v454
        %v513 = vunpack.c.1.s8 %v453
        %v514 = vunpack.c.1.s8 %v454
        %v515 = vunpack.c.2.s8 %v453
        %v516 = vunpack.c.2.s8 %v454
        %v517 = vunpack.c.3.s8 %v453
        %v518 = vunpack.c.3.s8 %v454
        %v519 = vcvt.s32.f32 %v455
        %v520 = vcvt.s32.f32 %v456
        %v521 = vcvt.s32.f32 %v457
        %v522 = vcvt.s32.f32 %v458
        %v523 = vcvt.s32.f32 %v459
        %v524 = vcvt.s32.f32 %v460
        %v525 = vcvt.s32.f32 %v461
        %v526 = vcvt.s32.f32 %v462
        %v527 = vcvt.s32.f32 %v463
        %v528 = vcvt.s32.f32 %v464
        %v529 = vcvt.s32.f32 %v465
        %v530 = vcvt.s32.f32 %v466
        %v531 = vcvt.s32.f32 %v467
        %v532 = vcvt.s32.f32 %v468
        %v533 = vcvt.s32.f32 %v469
        %v534 = vcvt.s32.f32 %v470
        %v535 = vcvt.s32.f32 %v471
        %v536 = vcvt.s32.f32 %v472
        %v537 = vcvt.s32.f32 %v473
        %v538 = vcvt.s32.f32 %v474
        %v539 = vcvt.s32.f32 %v475
        %v540 = vcvt.s32.f32 %v476
        %v541 = vcvt.s32.f32 %v477
        %v542 = vcvt.s32.f32 %v478
        %v543 = vcvt.s32.f32 %v479
        %v544 = vcvt.s32.f32 %v480
        %v545 = vcvt.s32.f32 %v481
        %v546 = vcvt.s32.f32 %v482
        %v547 = vcvt.s32.f32 %v483
        %v548 = vcvt.s32.f32 %v484
        %v549 = vcvt.s32.f32 %v485
        %v550 = vcvt.s32.f32 %v486
        %v551 = vcvt.s32.f32 %v487
        %v552 = vcvt.s32.f32 %v488
        %v553 = vcvt.s32.f32 %v489
        %v554 = vcvt.s32.f32 %v490
        %v555 = vcvt.s32.f32 %v491
        %v556 = vcvt.s32.f32 %v492
        %v557 = vcvt.s32.f32 %v493
        %v558 = vcvt.s32.f32 %v494
        %v559 = vcvt.s32.f32 %v495
        %v560 = vcvt.s32.f32 %v496
        %v561 = vcvt.s32.f32 %v497
        %v562 = vcvt.s32.f32 %v498
        %v563 = vcvt.s32.f32 %v499
        %v564 = vcvt.s32.f32 %v500
        %v565 = vcvt.s32.f32 %v501
        %v566 = vcvt.s32.f32 %v502
        %v567 = vcvt.s32.f32 %v503
        %v568 = vcvt.s32.f32 %v504
        %v569 = vcvt.s32.f32 %v505
        %v570 = vcvt.s32.f32 %v506
        %v571 = vcvt.s32.f32 %v507
        %v572 = vcvt.s32.f32 %v508
        %v573 = vcvt.s32.f32 %v509
        %v574 = vcvt.s32.f32 %v510
        %v575 = vcvt.s32.f32 %v511
        %v576 = vcvt.s32.f32 %v512
        %v577 = vcvt.s32.f32 %v513
        %v578 = vcvt.s32.f32 %v514
        %v579 = vcvt.s32.f32 %v515
        %v580 = vcvt.s32.f32 %v516
        %v581 = vcvt.s32.f32 %v517
        %v582 = vcvt.s32.f32 %v518
        %v583 = vpack.c.bf16 %v521, %v519
        %v584 = vpack.c.bf16 %v522, %v520
        %v585 = vpack.c.bf16 %v525, %v523
        %v586 = vpack.c.bf16 %v526, %v524
        %v587 = vpack.c.bf16 %v529, %v527
        %v588 = vpack.c.bf16 %v530, %v528
        %v589 = vpack.c.bf16 %v533, %v531
        %v590 = vpack.c.bf16 %v534, %v532
        %v591 = vpack.c.bf16 %v537, %v535
        %v592 = vpack.c.bf16 %v538, %v536
        %v593 = vpack.c.bf16 %v541, %v539
        %v594 = vpack.c.bf16 %v542, %v540
        %v595 = vpack.c.bf16 %v545, %v543
        %v596 = vpack.c.bf16 %v546, %v544
        %v597 = vpack.c.bf16 %v549, %v547
        %v598 = vpack.c.bf16 %v550, %v548
        %v599 = vpack.c.bf16 %v553, %v551
        %v600 = vpack.c.bf16 %v554, %v552
        %v601 = vpack.c.bf16 %v557, %v555
        %v602 = vpack.c.bf16 %v558, %v556
        %v603 = vpack.c.bf16 %v561, %v559
        %v604 = vpack.c.bf16 %v562, %v560
        %v605 = vpack.c.bf16 %v565, %v563
        %v606 = vpack.c.bf16 %v566, %v564
        %v607 = vpack.c.bf16 %v569, %v567
        %v608 = vpack.c.bf16 %v570, %v568
        %v609 = vpack.c.bf16 %v573, %v571
        %v610 = vpack.c.bf16 %v574, %v572
        %v611 = vpack.c.bf16 %v577, %v575
        %v612 = vpack.c.bf16 %v578, %v576
        %v613 = vpack.c.bf16 %v581, %v579
        %v614 = vpack.c.bf16 %v582, %v580
        %v615 = vld [vmem:[%s301] sm:$0xff]
        %v616 = vld [vmem:[%s301 + $0x8] sm:$0xff]
        %v617 = vld [vmem:[%s301 + $0x10] sm:$0xff]
        %v618 = vld [vmem:[%s301 + $0x18] sm:$0xff]
        %v619 = vld [vmem:[%s301 + $0x20] sm:$0xff]
        %v620 = vld [vmem:[%s301 + $0x28] sm:$0xff]
        %v621 = vld [vmem:[%s301 + $0x30] sm:$0xff]
        %v622 = vld [vmem:[%s301 + $0x38] sm:$0xff]
        %v623 = vld [vmem:[%s301 + $0x40] sm:$0xff]
        %v624 = vld [vmem:[%s301 + $0x48] sm:$0xff]
        %v625 = vld [vmem:[%s301 + $0x50] sm:$0xff]
        %v626 = vld [vmem:[%s301 + $0x58] sm:$0xff]
        %v627 = vld [vmem:[%s301 + $0x60] sm:$0xff]
        %v628 = vld [vmem:[%s301 + $0x68] sm:$0xff]
        %v629 = vld [vmem:[%s301 + $0x70] sm:$0xff]
        %v630 = vld [vmem:[%s301 + $0x78] sm:$0xff]
        %v631 = vunpack.c.0.s8 %v615
        %v632 = vunpack.c.0.s8 %v616
        %v633 = vunpack.c.1.s8 %v615
        %v634 = vunpack.c.1.s8 %v616
        %v635 = vunpack.c.2.s8 %v615
        %v636 = vunpack.c.2.s8 %v616
        %v637 = vunpack.c.3.s8 %v615
        %v638 = vunpack.c.3.s8 %v616
        %v639 = vunpack.c.0.s8 %v617
        %v640 = vunpack.c.0.s8 %v618
        %v641 = vunpack.c.1.s8 %v617
        %v642 = vunpack.c.1.s8 %v618
        %v643 = vunpack.c.2.s8 %v617
        %v644 = vunpack.c.2.s8 %v618
        %v645 = vunpack.c.3.s8 %v617
        %v646 = vunpack.c.3.s8 %v618
        %v647 = vunpack.c.0.s8 %v619
        %v648 = vunpack.c.0.s8 %v620
        %v649 = vunpack.c.1.s8 %v619
        %v650 = vunpack.c.1.s8 %v620
        %v651 = vunpack.c.2.s8 %v619
        %v652 = vunpack.c.2.s8 %v620
        %v653 = vunpack.c.3.s8 %v619
        %v654 = vunpack.c.3.s8 %v620
        %v655 = vunpack.c.0.s8 %v621
        %v656 = vunpack.c.0.s8 %v622
        %v657 = vunpack.c.1.s8 %v621
        %v658 = vunpack.c.1.s8 %v622
        %v659 = vunpack.c.2.s8 %v621
        %v660 = vunpack.c.2.s8 %v622
        %v661 = vunpack.c.3.s8 %v621
        %v662 = vunpack.c.3.s8 %v622
        %v663 = vunpack.c.0.s8 %v623
        %v664 = vunpack.c.0.s8 %v624
        %v665 = vunpack.c.1.s8 %v623
        %v666 = vunpack.c.1.s8 %v624
        %v667 = vunpack.c.2.s8 %v623
        %v668 = vunpack.c.2.s8 %v624
        %v669 = vunpack.c.3.s8 %v623
        %v670 = vunpack.c.3.s8 %v624
        %v671 = vunpack.c.0.s8 %v625
        %v672 = vunpack.c.0.s8 %v626
        %v673 = vunpack.c.1.s8 %v625
        %v674 = vunpack.c.1.s8 %v626
        %v675 = vunpack.c.2.s8 %v625
        %v676 = vunpack.c.2.s8 %v626
        %v677 = vunpack.c.3.s8 %v625
        %v678 = vunpack.c.3.s8 %v626
        %v679 = vunpack.c.0.s8 %v627
        %v680 = vunpack.c.0.s8 %v628
        %v681 = vunpack.c.1.s8 %v627
        %v682 = vunpack.c.1.s8 %v628
        %v683 = vunpack.c.2.s8 %v627
        %v684 = vunpack.c.2.s8 %v628
        %v685 = vunpack.c.3.s8 %v627
        %v686 = vunpack.c.3.s8 %v628
        %v687 = vunpack.c.0.s8 %v629
        %v688 = vunpack.c.0.s8 %v630
        %v689 = vunpack.c.1.s8 %v629
        %v690 = vunpack.c.1.s8 %v630
        %v691 = vunpack.c.2.s8 %v629
        %v692 = vunpack.c.2.s8 %v630
        %v693 = vunpack.c.3.s8 %v629
        %v694 = vunpack.c.3.s8 %v630
        %v695 = vcvt.s32.f32 %v631
        %v696 = vcvt.s32.f32 %v632
        %v697 = vcvt.s32.f32 %v633
        %v698 = vcvt.s32.f32 %v634
        %v699 = vcvt.s32.f32 %v635
        %v700 = vcvt.s32.f32 %v636
        %v701 = vcvt.s32.f32 %v637
        %v702 = vcvt.s32.f32 %v638
        %v703 = vcvt.s32.f32 %v639
        %v704 = vcvt.s32.f32 %v640
        %v705 = vcvt.s32.f32 %v641
        %v706 = vcvt.s32.f32 %v642
        %v707 = vcvt.s32.f32 %v643
        %v708 = vcvt.s32.f32 %v644
        %v709 = vcvt.s32.f32 %v645
        %v710 = vcvt.s32.f32 %v646
        %v711 = vcvt.s32.f32 %v647
        %v712 = vcvt.s32.f32 %v648
        %v713 = vcvt.s32.f32 %v649
        %v714 = vcvt.s32.f32 %v650
        %v715 = vcvt.s32.f32 %v651
        %v716 = vcvt.s32.f32 %v652
        %v717 = vcvt.s32.f32 %v653
        %v718 = vcvt.s32.f32 %v654
        %v719 = vcvt.s32.f32 %v655
        %v720 = vcvt.s32.f32 %v656
        %v721 = vcvt.s32.f32 %v657
        %v722 = vcvt.s32.f32 %v658
        %v723 = vcvt.s32.f32 %v659
        %v724 = vcvt.s32.f32 %v660
        %v725 = vcvt.s32.f32 %v661
        %v726 = vcvt.s32.f32 %v662
        %v727 = vcvt.s32.f32 %v663
        %v728 = vcvt.s32.f32 %v664
        %v729 = vcvt.s32.f32 %v665
        %v730 = vcvt.s32.f32 %v666
        %v731 = vcvt.s32.f32 %v667
        %v732 = vcvt.s32.f32 %v668
        %v733 = vcvt.s32.f32 %v669
        %v734 = vcvt.s32.f32 %v670
        %v735 = vcvt.s32.f32 %v671
        %v736 = vcvt.s32.f32 %v672
        %v737 = vcvt.s32.f32 %v673
        %v738 = vcvt.s32.f32 %v674
        %v739 = vcvt.s32.f32 %v675
        %v740 = vcvt.s32.f32 %v676
        %v741 = vcvt.s32.f32 %v677
        %v742 = vcvt.s32.f32 %v678
        %v743 = vcvt.s32.f32 %v679
        %v744 = vcvt.s32.f32 %v680
        %v745 = vcvt.s32.f32 %v681
        %v746 = vcvt.s32.f32 %v682
        %v747 = vcvt.s32.f32 %v683
        %v748 = vcvt.s32.f32 %v684
        %v749 = vcvt.s32.f32 %v685
        %v750 = vcvt.s32.f32 %v686
        %v751 = vcvt.s32.f32 %v687
        %v752 = vcvt.s32.f32 %v688
        %v753 = vcvt.s32.f32 %v689
        %v754 = vcvt.s32.f32 %v690
        %v755 = vcvt.s32.f32 %v691
        %v756 = vcvt.s32.f32 %v692
        %v757 = vcvt.s32.f32 %v693
        %v758 = vcvt.s32.f32 %v694
        %v759 = vpack.c.bf16 %v697, %v695
        %v760 = vpack.c.bf16 %v698, %v696
        %v761 = vpack.c.bf16 %v701, %v699
        %v762 = vpack.c.bf16 %v702, %v700
        %v763 = vpack.c.bf16 %v705, %v703
        %v764 = vpack.c.bf16 %v706, %v704
        %v765 = vpack.c.bf16 %v709, %v707
        %v766 = vpack.c.bf16 %v710, %v708
        %v767 = vpack.c.bf16 %v713, %v711
        %v768 = vpack.c.bf16 %v714, %v712
        %v769 = vpack.c.bf16 %v717, %v715
        %v770 = vpack.c.bf16 %v718, %v716
        %v771 = vpack.c.bf16 %v721, %v719
        %v772 = vpack.c.bf16 %v722, %v720
        %v773 = vpack.c.bf16 %v725, %v723
        %v774 = vpack.c.bf16 %v726, %v724
        %v775 = vpack.c.bf16 %v729, %v727
        %v776 = vpack.c.bf16 %v730, %v728
        %v777 = vpack.c.bf16 %v733, %v731
        %v778 = vpack.c.bf16 %v734, %v732
        %v779 = vpack.c.bf16 %v737, %v735
        %v780 = vpack.c.bf16 %v738, %v736
        %v781 = vpack.c.bf16 %v741, %v739
        %v782 = vpack.c.bf16 %v742, %v740
        %v783 = vpack.c.bf16 %v745, %v743
        %v784 = vpack.c.bf16 %v746, %v744
        %v785 = vpack.c.bf16 %v749, %v747
        %v786 = vpack.c.bf16 %v750, %v748
        %v787 = vpack.c.bf16 %v753, %v751
        %v788 = vpack.c.bf16 %v754, %v752
        %v789 = vpack.c.bf16 %v757, %v755
        %v790 = vpack.c.bf16 %v758, %v756
        %v791 = vld [vmem:[#allocation2] sm:$0xff]
        %v792 = vld [vmem:[#allocation2 + $0x8] sm:$0xff]
        %v793 = vld [vmem:[#allocation2 + $0x10] sm:$0xff]
        %v794 = vld [vmem:[#allocation2 + $0x18] sm:$0xff]
        %v795 = vld [vmem:[#allocation2 + $0x20] sm:$0xff]
        %v796 = vld [vmem:[#allocation2 + $0x28] sm:$0xff]
        %v797 = vld [vmem:[#allocation2 + $0x30] sm:$0xff]
        %v798 = vld [vmem:[#allocation2 + $0x38] sm:$0xff]
        %v799 = vld [vmem:[#allocation2 + $0x40] sm:$0xff]
        %v800 = vld [vmem:[#allocation2 + $0x48] sm:$0xff]
        %v801 = vld [vmem:[#allocation2 + $0x50] sm:$0xff]
        %v802 = vld [vmem:[#allocation2 + $0x58] sm:$0xff]
        %v803 = vld [vmem:[#allocation2 + $0x60] sm:$0xff]
        %v804 = vld [vmem:[#allocation2 + $0x68] sm:$0xff]
        %v805 = vld [vmem:[#allocation2 + $0x70] sm:$0xff]
        %v806 = vld [vmem:[#allocation2 + $0x78] sm:$0xff]
        %v807 = vld [vmem:[#allocation2 + $0x80] sm:$0xff]
        %v808 = vld [vmem:[#allocation2 + $0x88] sm:$0xff]
        %v809 = vld [vmem:[#allocation2 + $0x90] sm:$0xff]
        %v810 = vld [vmem:[#allocation2 + $0x98] sm:$0xff]
        %v811 = vld [vmem:[#allocation2 + $0xa0] sm:$0xff]
        %v812 = vld [vmem:[#allocation2 + $0xa8] sm:$0xff]
        %v813 = vld [vmem:[#allocation2 + $0xb0] sm:$0xff]
        %v814 = vld [vmem:[#allocation2 + $0xb8] sm:$0xff]
        %v815 = vld [vmem:[#allocation2 + $0xc0] sm:$0xff]
        %v816 = vld [vmem:[#allocation2 + $0xc8] sm:$0xff]
        %v817 = vld [vmem:[#allocation2 + $0xd0] sm:$0xff]
        %v818 = vld [vmem:[#allocation2 + $0xd8] sm:$0xff]
        %v819 = vld [vmem:[#allocation2 + $0xe0] sm:$0xff]
        %v820 = vld [vmem:[#allocation2 + $0xe8] sm:$0xff]
        %v821 = vld [vmem:[#allocation2 + $0xf0] sm:$0xff]
        %v822 = vld [vmem:[#allocation2 + $0xf8] sm:$0xff]
        %v823 = vld [vmem:[#allocation2 + $0x100] sm:$0xff]
        %v824 = vld [vmem:[#allocation2 + $0x108] sm:$0xff]
        %v825 = vld [vmem:[#allocation2 + $0x110] sm:$0xff]
        %v826 = vld [vmem:[#allocation2 + $0x118] sm:$0xff]
        %v827 = vld [vmem:[#allocation2 + $0x120] sm:$0xff]
        %v828 = vld [vmem:[#allocation2 + $0x128] sm:$0xff]
        %v829 = vld [vmem:[#allocation2 + $0x130] sm:$0xff]
        %v830 = vld [vmem:[#allocation2 + $0x138] sm:$0xff]
        %v831 = vld [vmem:[#allocation2 + $0x140] sm:$0xff]
        %v832 = vld [vmem:[#allocation2 + $0x148] sm:$0xff]
        %v833 = vld [vmem:[#allocation2 + $0x150] sm:$0xff]
        %v834 = vld [vmem:[#allocation2 + $0x158] sm:$0xff]
        %v835 = vld [vmem:[#allocation2 + $0x160] sm:$0xff]
        %v836 = vld [vmem:[#allocation2 + $0x168] sm:$0xff]
        %v837 = vld [vmem:[#allocation2 + $0x170] sm:$0xff]
        %v838 = vld [vmem:[#allocation2 + $0x178] sm:$0xff]
        %v839 = vld [vmem:[#allocation2 + $0x180] sm:$0xff]
        %v840 = vld [vmem:[#allocation2 + $0x188] sm:$0xff]
        %v841 = vld [vmem:[#allocation2 + $0x190] sm:$0xff]
        %v842 = vld [vmem:[#allocation2 + $0x198] sm:$0xff]
        %v843 = vld [vmem:[#allocation2 + $0x1a0] sm:$0xff]
        %v844 = vld [vmem:[#allocation2 + $0x1a8] sm:$0xff]
        %v845 = vld [vmem:[#allocation2 + $0x1b0] sm:$0xff]
        %v846 = vld [vmem:[#allocation2 + $0x1b8] sm:$0xff]
        %v847 = vld [vmem:[#allocation2 + $0x1c0] sm:$0xff]
        %v848 = vld [vmem:[#allocation2 + $0x1c8] sm:$0xff]
        %v849 = vld [vmem:[#allocation2 + $0x1d0] sm:$0xff]
        %v850 = vld [vmem:[#allocation2 + $0x1d8] sm:$0xff]
        %v851 = vld [vmem:[#allocation2 + $0x1e0] sm:$0xff]
        %v852 = vld [vmem:[#allocation2 + $0x1e8] sm:$0xff]
        %v853 = vld [vmem:[#allocation2 + $0x1f0] sm:$0xff]
        %v854 = vld [vmem:[#allocation2 + $0x1f8] sm:$0xff]
        %855 = vmatpush.bf16.msra.mxu0 %v773
        %856 = vmatpush.bf16.msra.mxu0 %v771
        %857 = vmatpush.bf16.msra.mxu0 %v769
        %858 = vmatpush.bf16.msra.mxu0 %v767
        %859 = vmatpush.bf16.msra.mxu0 %v765
        %860 = vmatpush.bf16.msra.mxu0 %v763
        %861 = vmatpush.bf16.msra.mxu0 %v761
        %862 = vmatpush.bf16.msra.mxu0 %v759
        %863 = vmatmul.bf16.gmra.mxu0 %v583
        %v864 = vpop.f32.mrf.mxu0
        %v865 = vadd.f32 0.0, %v864
        %v866 = vpop.f32.mrf.mxu0
        %v867 = vadd.f32 0.0, %v866
        %868 = vmatmul.bf16.gmra.mxu0 %v585
        %v869 = vpop.f32.mrf.mxu0
        %v870 = vadd.f32 0.0, %v869
        %v871 = vpop.f32.mrf.mxu0
        %v872 = vadd.f32 0.0, %v871
        %873 = vmatmul.bf16.gmra.mxu0 %v587
        %v874 = vpop.f32.mrf.mxu0
        %v875 = vadd.f32 0.0, %v874
        %v876 = vpop.f32.mrf.mxu0
        %v877 = vadd.f32 0.0, %v876
        %878 = vmatmul.bf16.gmra.mxu0 %v589
        %v879 = vpop.f32.mrf.mxu0
        %v880 = vadd.f32 0.0, %v879
        %v881 = vpop.f32.mrf.mxu0
        %v882 = vadd.f32 0.0, %v881
        %883 = vmatmul.bf16.gmra.mxu0 %v591
        %v884 = vpop.f32.mrf.mxu0
        %v885 = vadd.f32 0.0, %v884
        %v886 = vpop.f32.mrf.mxu0
        %v887 = vadd.f32 0.0, %v886
        %888 = vmatmul.bf16.gmra.mxu0 %v593
        %v889 = vpop.f32.mrf.mxu0
        %v890 = vadd.f32 0.0, %v889
        %v891 = vpop.f32.mrf.mxu0
        %v892 = vadd.f32 0.0, %v891
        %893 = vmatmul.bf16.gmra.mxu0 %v595
        %v894 = vpop.f32.mrf.mxu0
        %v895 = vadd.f32 0.0, %v894
        %v896 = vpop.f32.mrf.mxu0
        %v897 = vadd.f32 0.0, %v896
        %898 = vmatmul.bf16.gmra.mxu0 %v597
        %v899 = vpop.f32.mrf.mxu0
        %v900 = vadd.f32 0.0, %v899
        %v901 = vpop.f32.mrf.mxu0
        %v902 = vadd.f32 0.0, %v901
        %903 = vmatmul.bf16.gmra.mxu0 %v599
        %v904 = vpop.f32.mrf.mxu0
        %v905 = vadd.f32 0.0, %v904
        %v906 = vpop.f32.mrf.mxu0
        %v907 = vadd.f32 0.0, %v906
        %908 = vmatmul.bf16.gmra.mxu0 %v601
        %v909 = vpop.f32.mrf.mxu0
        %v910 = vadd.f32 0.0, %v909
        %v911 = vpop.f32.mrf.mxu0
        %v912 = vadd.f32 0.0, %v911
        %913 = vmatmul.bf16.gmra.mxu0 %v603
        %v914 = vpop.f32.mrf.mxu0
        %v915 = vadd.f32 0.0, %v914
        %v916 = vpop.f32.mrf.mxu0
        %v917 = vadd.f32 0.0, %v916
        %918 = vmatmul.bf16.gmra.mxu0 %v605
        %v919 = vpop.f32.mrf.mxu0
        %v920 = vadd.f32 0.0, %v919
        %v921 = vpop.f32.mrf.mxu0
        %v922 = vadd.f32 0.0, %v921
        %923 = vmatmul.bf16.gmra.mxu0 %v607
        %v924 = vpop.f32.mrf.mxu0
        %v925 = vadd.f32 0.0, %v924
        %v926 = vpop.f32.mrf.mxu0
        %v927 = vadd.f32 0.0, %v926
        %928 = vmatmul.bf16.gmra.mxu0 %v609
        %v929 = vpop.f32.mrf.mxu0
        %v930 = vadd.f32 0.0, %v929
        %v931 = vpop.f32.mrf.mxu0
        %v932 = vadd.f32 0.0, %v931
        %933 = vmatmul.bf16.gmra.mxu0 %v611
        %v934 = vpop.f32.mrf.mxu0
        %v935 = vadd.f32 0.0, %v934
        %v936 = vpop.f32.mrf.mxu0
        %v937 = vadd.f32 0.0, %v936
        %938 = vmatmul.bf16.gmra.mxu0 %v613
        %v939 = vpop.f32.mrf.mxu0
        %v940 = vadd.f32 0.0, %v939
        %v941 = vpop.f32.mrf.mxu0
        %v942 = vadd.f32 0.0, %v941
        %943 = vdwg.mxu0
        %944 = vmatpush.bf16.msra.mxu0 %v789
        %945 = vmatpush.bf16.msra.mxu0 %v787
        %946 = vmatpush.bf16.msra.mxu0 %v785
        %947 = vmatpush.bf16.msra.mxu0 %v783
        %948 = vmatpush.bf16.msra.mxu0 %v781
        %949 = vmatpush.bf16.msra.mxu0 %v779
        %950 = vmatpush.bf16.msra.mxu0 %v777
        %951 = vmatpush.bf16.msra.mxu0 %v775
        %952 = vmatmul.bf16.gmra.mxu0 %v584
        %v953 = vpop.f32.mrf.mxu0
        %v954 = vadd.f32 %v865, %v953
        %v955 = vpop.f32.mrf.mxu0
        %v956 = vadd.f32 %v867, %v955
        %957 = vmatmul.bf16.gmra.mxu0 %v586
        %v958 = vpop.f32.mrf.mxu0
        %v959 = vadd.f32 %v870, %v958
        %v960 = vpop.f32.mrf.mxu0
        %v961 = vadd.f32 %v872, %v960
        %962 = vmatmul.bf16.gmra.mxu0 %v588
        %v963 = vpop.f32.mrf.mxu0
        %v964 = vadd.f32 %v875, %v963
        %v965 = vpop.f32.mrf.mxu0
        %v966 = vadd.f32 %v877, %v965
        %967 = vmatmul.bf16.gmra.mxu0 %v590
        %v968 = vpop.f32.mrf.mxu0
        %v969 = vadd.f32 %v880, %v968
        %v970 = vpop.f32.mrf.mxu0
        %v971 = vadd.f32 %v882, %v970
        %972 = vmatmul.bf16.gmra.mxu0 %v592
        %v973 = vpop.f32.mrf.mxu0
        %v974 = vadd.f32 %v885, %v973
        %v975 = vpop.f32.mrf.mxu0
        %v976 = vadd.f32 %v887, %v975
        %977 = vmatmul.bf16.gmra.mxu0 %v594
        %v978 = vpop.f32.mrf.mxu0
        %v979 = vadd.f32 %v890, %v978
        %v980 = vpop.f32.mrf.mxu0
        %v981 = vadd.f32 %v892, %v980
        %982 = vmatmul.bf16.gmra.mxu0 %v596
        %v983 = vpop.f32.mrf.mxu0
        %v984 = vadd.f32 %v895, %v983
        %v985 = vpop.f32.mrf.mxu0
        %v986 = vadd.f32 %v897, %v985
        %987 = vmatmul.bf16.gmra.mxu0 %v598
        %v988 = vpop.f32.mrf.mxu0
        %v989 = vadd.f32 %v900, %v988
        %v990 = vpop.f32.mrf.mxu0
        %v991 = vadd.f32 %v902, %v990
        %992 = vmatmul.bf16.gmra.mxu0 %v600
        %v993 = vpop.f32.mrf.mxu0
        %v994 = vadd.f32 %v905, %v993
        %v995 = vpop.f32.mrf.mxu0
        %v996 = vadd.f32 %v907, %v995
        %997 = vmatmul.bf16.gmra.mxu0 %v602
        %v998 = vpop.f32.mrf.mxu0
        %v999 = vadd.f32 %v910, %v998
        %v1000 = vpop.f32.mrf.mxu0
        %v1001 = vadd.f32 %v912, %v1000
        %1002 = vmatmul.bf16.gmra.mxu0 %v604
        %v1003 = vpop.f32.mrf.mxu0
        %v1004 = vadd.f32 %v915, %v1003
        %v1005 = vpop.f32.mrf.mxu0
        %v1006 = vadd.f32 %v917, %v1005
        %1007 = vmatmul.bf16.gmra.mxu0 %v606
        %v1008 = vpop.f32.mrf.mxu0
        %v1009 = vadd.f32 %v920, %v1008
        %v1010 = vpop.f32.mrf.mxu0
        %v1011 = vadd.f32 %v922, %v1010
        %1012 = vmatmul.bf16.gmra.mxu0 %v608
        %v1013 = vpop.f32.mrf.mxu0
        %v1014 = vadd.f32 %v925, %v1013
        %v1015 = vpop.f32.mrf.mxu0
        %v1016 = vadd.f32 %v927, %v1015
        %1017 = vmatmul.bf16.gmra.mxu0 %v610
        %v1018 = vpop.f32.mrf.mxu0
        %v1019 = vadd.f32 %v930, %v1018
        %v1020 = vpop.f32.mrf.mxu0
        %v1021 = vadd.f32 %v932, %v1020
        %1022 = vmatmul.bf16.gmra.mxu0 %v612
        %v1023 = vpop.f32.mrf.mxu0
        %v1024 = vadd.f32 %v935, %v1023
        %v1025 = vpop.f32.mrf.mxu0
        %v1026 = vadd.f32 %v937, %v1025
        %1027 = vmatmul.bf16.gmra.mxu0 %v614
        %v1028 = vpop.f32.mrf.mxu0
        %v1029 = vadd.f32 %v940, %v1028
        %v1030 = vpop.f32.mrf.mxu0
        %v1031 = vadd.f32 %v942, %v1030
        %1032 = vdwg.mxu0
        %1033 = vmatpush.bf16.msra.mxu0 %v774
        %1034 = vmatpush.bf16.msra.mxu0 %v772
        %1035 = vmatpush.bf16.msra.mxu0 %v770
        %1036 = vmatpush.bf16.msra.mxu0 %v768
        %1037 = vmatpush.bf16.msra.mxu0 %v766
        %1038 = vmatpush.bf16.msra.mxu0 %v764
        %1039 = vmatpush.bf16.msra.mxu0 %v762
        %1040 = vmatpush.bf16.msra.mxu0 %v760
        %1041 = vmatmul.bf16.gmra.mxu0 %v583
        %v1042 = vpop.f32.mrf.mxu0
        %v1043 = vadd.f32 0.0, %v1042
        %v1044 = vpop.f32.mrf.mxu0
        %v1045 = vadd.f32 0.0, %v1044
        %1046 = vmatmul.bf16.gmra.mxu0 %v585
        %v1047 = vpop.f32.mrf.mxu0
        %v1048 = vadd.f32 0.0, %v1047
        %v1049 = vpop.f32.mrf.mxu0
        %v1050 = vadd.f32 0.0, %v1049
        %1051 = vmatmul.bf16.gmra.mxu0 %v587
        %v1052 = vpop.f32.mrf.mxu0
        %v1053 = vadd.f32 0.0, %v1052
        %v1054 = vpop.f32.mrf.mxu0
        %v1055 = vadd.f32 0.0, %v1054
        %1056 = vmatmul.bf16.gmra.mxu0 %v589
        %v1057 = vpop.f32.mrf.mxu0
        %v1058 = vadd.f32 0.0, %v1057
        %v1059 = vpop.f32.mrf.mxu0
        %v1060 = vadd.f32 0.0, %v1059
        %1061 = vmatmul.bf16.gmra.mxu0 %v591
        %v1062 = vpop.f32.mrf.mxu0
        %v1063 = vadd.f32 0.0, %v1062
        %v1064 = vpop.f32.mrf.mxu0
        %v1065 = vadd.f32 0.0, %v1064
        %1066 = vmatmul.bf16.gmra.mxu0 %v593
        %v1067 = vpop.f32.mrf.mxu0
        %v1068 = vadd.f32 0.0, %v1067
        %v1069 = vpop.f32.mrf.mxu0
        %v1070 = vadd.f32 0.0, %v1069
        %1071 = vmatmul.bf16.gmra.mxu0 %v595
        %v1072 = vpop.f32.mrf.mxu0
        %v1073 = vadd.f32 0.0, %v1072
        %v1074 = vpop.f32.mrf.mxu0
        %v1075 = vadd.f32 0.0, %v1074
        %1076 = vmatmul.bf16.gmra.mxu0 %v597
        %v1077 = vpop.f32.mrf.mxu0
        %v1078 = vadd.f32 0.0, %v1077
        %v1079 = vpop.f32.mrf.mxu0
        %v1080 = vadd.f32 0.0, %v1079
        %1081 = vmatmul.bf16.gmra.mxu0 %v599
        %v1082 = vpop.f32.mrf.mxu0
        %v1083 = vadd.f32 0.0, %v1082
        %v1084 = vpop.f32.mrf.mxu0
        %v1085 = vadd.f32 0.0, %v1084
        %1086 = vmatmul.bf16.gmra.mxu0 %v601
        %v1087 = vpop.f32.mrf.mxu0
        %v1088 = vadd.f32 0.0, %v1087
        %v1089 = vpop.f32.mrf.mxu0
        %v1090 = vadd.f32 0.0, %v1089
        %1091 = vmatmul.bf16.gmra.mxu0 %v603
        %v1092 = vpop.f32.mrf.mxu0
        %v1093 = vadd.f32 0.0, %v1092
        %v1094 = vpop.f32.mrf.mxu0
        %v1095 = vadd.f32 0.0, %v1094
        %1096 = vmatmul.bf16.gmra.mxu0 %v605
        %v1097 = vpop.f32.mrf.mxu0
        %v1098 = vadd.f32 0.0, %v1097
        %v1099 = vpop.f32.mrf.mxu0
        %v1100 = vadd.f32 0.0, %v1099
        %1101 = vmatmul.bf16.gmra.mxu0 %v607
        %v1102 = vpop.f32.mrf.mxu0
        %v1103 = vadd.f32 0.0, %v1102
        %v1104 = vpop.f32.mrf.mxu0
        %v1105 = vadd.f32 0.0, %v1104
        %1106 = vmatmul.bf16.gmra.mxu0 %v609
        %v1107 = vpop.f32.mrf.mxu0
        %v1108 = vadd.f32 0.0, %v1107
        %v1109 = vpop.f32.mrf.mxu0
        %v1110 = vadd.f32 0.0, %v1109
        %1111 = vmatmul.bf16.gmra.mxu0 %v611
        %v1112 = vpop.f32.mrf.mxu0
        %v1113 = vadd.f32 0.0, %v1112
        %v1114 = vpop.f32.mrf.mxu0
        %v1115 = vadd.f32 0.0, %v1114
        %1116 = vmatmul.bf16.gmra.mxu0 %v613
        %v1117 = vpop.f32.mrf.mxu0
        %v1118 = vadd.f32 0.0, %v1117
        %v1119 = vpop.f32.mrf.mxu0
        %v1120 = vadd.f32 0.0, %v1119
        %1121 = vdwg.mxu0
        %1122 = vmatpush.bf16.msra.mxu0 %v790
        %1123 = vmatpush.bf16.msra.mxu0 %v788
        %1124 = vmatpush.bf16.msra.mxu0 %v786
        %1125 = vmatpush.bf16.msra.mxu0 %v784
        %1126 = vmatpush.bf16.msra.mxu0 %v782
        %1127 = vmatpush.bf16.msra.mxu0 %v780
        %1128 = vmatpush.bf16.msra.mxu0 %v778
        %1129 = vmatpush.bf16.msra.mxu0 %v776
        %1130 = vmatmul.bf16.gmra.mxu0 %v584
        %v1131 = vpop.f32.mrf.mxu0
        %v1132 = vadd.f32 %v1043, %v1131
        %v1133 = vpop.f32.mrf.mxu0
        %v1134 = vadd.f32 %v1045, %v1133
        %1135 = vmatmul.bf16.gmra.mxu0 %v586
        %v1136 = vpop.f32.mrf.mxu0
        %v1137 = vadd.f32 %v1048, %v1136
        %v1138 = vpop.f32.mrf.mxu0
        %v1139 = vadd.f32 %v1050, %v1138
        %1140 = vmatmul.bf16.gmra.mxu0 %v588
        %v1141 = vpop.f32.mrf.mxu0
        %v1142 = vadd.f32 %v1053, %v1141
        %v1143 = vpop.f32.mrf.mxu0
        %v1144 = vadd.f32 %v1055, %v1143
        %1145 = vmatmul.bf16.gmra.mxu0 %v590
        %v1146 = vpop.f32.mrf.mxu0
        %v1147 = vadd.f32 %v1058, %v1146
        %v1148 = vpop.f32.mrf.mxu0
        %v1149 = vadd.f32 %v1060, %v1148
        %1150 = vmatmul.bf16.gmra.mxu0 %v592
        %v1151 = vpop.f32.mrf.mxu0
        %v1152 = vadd.f32 %v1063, %v1151
        %v1153 = vpop.f32.mrf.mxu0
        %v1154 = vadd.f32 %v1065, %v1153
        %1155 = vmatmul.bf16.gmra.mxu0 %v594
        %v1156 = vpop.f32.mrf.mxu0
        %v1157 = vadd.f32 %v1068, %v1156
        %v1158 = vpop.f32.mrf.mxu0
        %v1159 = vadd.f32 %v1070, %v1158
        %1160 = vmatmul.bf16.gmra.mxu0 %v596
        %v1161 = vpop.f32.mrf.mxu0
        %v1162 = vadd.f32 %v1073, %v1161
        %v1163 = vpop.f32.mrf.mxu0
        %v1164 = vadd.f32 %v1075, %v1163
        %1165 = vmatmul.bf16.gmra.mxu0 %v598
        %v1166 = vpop.f32.mrf.mxu0
        %v1167 = vadd.f32 %v1078, %v1166
        %v1168 = vpop.f32.mrf.mxu0
        %v1169 = vadd.f32 %v1080, %v1168
        %1170 = vmatmul.bf16.gmra.mxu0 %v600
        %v1171 = vpop.f32.mrf.mxu0
        %v1172 = vadd.f32 %v1083, %v1171
        %v1173 = vpop.f32.mrf.mxu0
        %v1174 = vadd.f32 %v1085, %v1173
        %1175 = vmatmul.bf16.gmra.mxu0 %v602
        %v1176 = vpop.f32.mrf.mxu0
        %v1177 = vadd.f32 %v1088, %v1176
        %v1178 = vpop.f32.mrf.mxu0
        %v1179 = vadd.f32 %v1090, %v1178
        %1180 = vmatmul.bf16.gmra.mxu0 %v604
        %v1181 = vpop.f32.mrf.mxu0
        %v1182 = vadd.f32 %v1093, %v1181
        %v1183 = vpop.f32.mrf.mxu0
        %v1184 = vadd.f32 %v1095, %v1183
        %1185 = vmatmul.bf16.gmra.mxu0 %v606
        %v1186 = vpop.f32.mrf.mxu0
        %v1187 = vadd.f32 %v1098, %v1186
        %v1188 = vpop.f32.mrf.mxu0
        %v1189 = vadd.f32 %v1100, %v1188
        %1190 = vmatmul.bf16.gmra.mxu0 %v608
        %v1191 = vpop.f32.mrf.mxu0
        %v1192 = vadd.f32 %v1103, %v1191
        %v1193 = vpop.f32.mrf.mxu0
        %v1194 = vadd.f32 %v1105, %v1193
        %1195 = vmatmul.bf16.gmra.mxu0 %v610
        %v1196 = vpop.f32.mrf.mxu0
        %v1197 = vadd.f32 %v1108, %v1196
        %v1198 = vpop.f32.mrf.mxu0
        %v1199 = vadd.f32 %v1110, %v1198
        %1200 = vmatmul.bf16.gmra.mxu0 %v612
        %v1201 = vpop.f32.mrf.mxu0
        %v1202 = vadd.f32 %v1113, %v1201
        %v1203 = vpop.f32.mrf.mxu0
        %v1204 = vadd.f32 %v1115, %v1203
        %1205 = vmatmul.bf16.gmra.mxu0 %v614
        %v1206 = vpop.f32.mrf.mxu0
        %v1207 = vadd.f32 %v1118, %v1206
        %v1208 = vpop.f32.mrf.mxu0
        %v1209 = vadd.f32 %v1120, %v1208
        %1210 = vdwg.mxu0
        %v1211 = vadd.f32 %v791, %v954
        %v1212 = vadd.f32 %v792, %v1132
        %v1213 = vadd.f32 %v793, %v956
        %v1214 = vadd.f32 %v794, %v1134
        %v1215 = vadd.f32 %v795, %v959
        %v1216 = vadd.f32 %v796, %v1137
        %v1217 = vadd.f32 %v797, %v961
        %v1218 = vadd.f32 %v798, %v1139
        %v1219 = vadd.f32 %v799, %v964
        %v1220 = vadd.f32 %v800, %v1142
        %v1221 = vadd.f32 %v801, %v966
        %v1222 = vadd.f32 %v802, %v1144
        %v1223 = vadd.f32 %v803, %v969
        %v1224 = vadd.f32 %v804, %v1147
        %v1225 = vadd.f32 %v805, %v971
        %v1226 = vadd.f32 %v806, %v1149
        %v1227 = vadd.f32 %v807, %v974
        %v1228 = vadd.f32 %v808, %v1152
        %v1229 = vadd.f32 %v809, %v976
        %v1230 = vadd.f32 %v810, %v1154
        %v1231 = vadd.f32 %v811, %v979
        %v1232 = vadd.f32 %v812, %v1157
        %v1233 = vadd.f32 %v813, %v981
        %v1234 = vadd.f32 %v814, %v1159
        %v1235 = vadd.f32 %v815, %v984
        %v1236 = vadd.f32 %v816, %v1162
        %v1237 = vadd.f32 %v817, %v986
        %v1238 = vadd.f32 %v818, %v1164
        %v1239 = vadd.f32 %v819, %v989
        %v1240 = vadd.f32 %v820, %v1167
        %v1241 = vadd.f32 %v821, %v991
        %v1242 = vadd.f32 %v822, %v1169
        %v1243 = vadd.f32 %v823, %v994
        %v1244 = vadd.f32 %v824, %v1172
        %v1245 = vadd.f32 %v825, %v996
        %v1246 = vadd.f32 %v826, %v1174
        %v1247 = vadd.f32 %v827, %v999
        %v1248 = vadd.f32 %v828, %v1177
        %v1249 = vadd.f32 %v829, %v1001
        %v1250 = vadd.f32 %v830, %v1179
        %v1251 = vadd.f32 %v831, %v1004
        %v1252 = vadd.f32 %v832, %v1182
        %v1253 = vadd.f32 %v833, %v1006
        %v1254 = vadd.f32 %v834, %v1184
        %v1255 = vadd.f32 %v835, %v1009
        %v1256 = vadd.f32 %v836, %v1187
        %v1257 = vadd.f32 %v837, %v1011
        %v1258 = vadd.f32 %v838, %v1189
        %v1259 = vadd.f32 %v839, %v1014
        %v1260 = vadd.f32 %v840, %v1192
        %v1261 = vadd.f32 %v841, %v1016
        %v1262 = vadd.f32 %v842, %v1194
        %v1263 = vadd.f32 %v843, %v1019
        %v1264 = vadd.f32 %v844, %v1197
        %v1265 = vadd.f32 %v845, %v1021
        %v1266 = vadd.f32 %v846, %v1199
        %v1267 = vadd.f32 %v847, %v1024
        %v1268 = vadd.f32 %v848, %v1202
        %v1269 = vadd.f32 %v849, %v1026
        %v1270 = vadd.f32 %v850, %v1204
        %v1271 = vadd.f32 %v851, %v1029
        %v1272 = vadd.f32 %v852, %v1207
        %v1273 = vadd.f32 %v853, %v1031
        %v1274 = vadd.f32 %v854, %v1209
        %1275 = vst [vmem:[#allocation2] sm:$0xff] %v1211
        %1276 = vst [vmem:[#allocation2 + $0x8] sm:$0xff] %v1212
        %1277 = vst [vmem:[#allocation2 + $0x10] sm:$0xff] %v1213
        %1278 = vst [vmem:[#allocation2 + $0x18] sm:$0xff] %v1214
        %1279 = vst [vmem:[#allocation2 + $0x20] sm:$0xff] %v1215
        %1280 = vst [vmem:[#allocation2 + $0x28] sm:$0xff] %v1216
        %1281 = vst [vmem:[#allocation2 + $0x30] sm:$0xff] %v1217
        %1282 = vst [vmem:[#allocation2 + $0x38] sm:$0xff] %v1218
        %1283 = vst [vmem:[#allocation2 + $0x40] sm:$0xff] %v1219
        %1284 = vst [vmem:[#allocation2 + $0x48] sm:$0xff] %v1220
        %1285 = vst [vmem:[#allocation2 + $0x50] sm:$0xff] %v1221
        %1286 = vst [vmem:[#allocation2 + $0x58] sm:$0xff] %v1222
        %1287 = vst [vmem:[#allocation2 + $0x60] sm:$0xff] %v1223
        %1288 = vst [vmem:[#allocation2 + $0x68] sm:$0xff] %v1224
        %1289 = vst [vmem:[#allocation2 + $0x70] sm:$0xff] %v1225
        %1290 = vst [vmem:[#allocation2 + $0x78] sm:$0xff] %v1226
        %1291 = vst [vmem:[#allocation2 + $0x80] sm:$0xff] %v1227
        %1292 = vst [vmem:[#allocation2 + $0x88] sm:$0xff] %v1228
        %1293 = vst [vmem:[#allocation2 + $0x90] sm:$0xff] %v1229
        %1294 = vst [vmem:[#allocation2 + $0x98] sm:$0xff] %v1230
        %1295 = vst [vmem:[#allocation2 + $0xa0] sm:$0xff] %v1231
        %1296 = vst [vmem:[#allocation2 + $0xa8] sm:$0xff] %v1232
        %1297 = vst [vmem:[#allocation2 + $0xb0] sm:$0xff] %v1233
        %1298 = vst [vmem:[#allocation2 + $0xb8] sm:$0xff] %v1234
        %1299 = vst [vmem:[#allocation2 + $0xc0] sm:$0xff] %v1235
        %1300 = vst [vmem:[#allocation2 + $0xc8] sm:$0xff] %v1236
        %1301 = vst [vmem:[#allocation2 + $0xd0] sm:$0xff] %v1237
        %1302 = vst [vmem:[#allocation2 + $0xd8] sm:$0xff] %v1238
        %1303 = vst [vmem:[#allocation2 + $0xe0] sm:$0xff] %v1239
        %1304 = vst [vmem:[#allocation2 + $0xe8] sm:$0xff] %v1240
        %1305 = vst [vmem:[#allocation2 + $0xf0] sm:$0xff] %v1241
        %1306 = vst [vmem:[#allocation2 + $0xf8] sm:$0xff] %v1242
        %1307 = vst [vmem:[#allocation2 + $0x100] sm:$0xff] %v1243
        %1308 = vst [vmem:[#allocation2 + $0x108] sm:$0xff] %v1244
        %1309 = vst [vmem:[#allocation2 + $0x110] sm:$0xff] %v1245
        %1310 = vst [vmem:[#allocation2 + $0x118] sm:$0xff] %v1246
        %1311 = vst [vmem:[#allocation2 + $0x120] sm:$0xff] %v1247
        %1312 = vst [vmem:[#allocation2 + $0x128] sm:$0xff] %v1248
        %1313 = vst [vmem:[#allocation2 + $0x130] sm:$0xff] %v1249
        %1314 = vst [vmem:[#allocation2 + $0x138] sm:$0xff] %v1250
        %1315 = vst [vmem:[#allocation2 + $0x140] sm:$0xff] %v1251
        %1316 = vst [vmem:[#allocation2 + $0x148] sm:$0xff] %v1252
        %1317 = vst [vmem:[#allocation2 + $0x150] sm:$0xff] %v1253
        %1318 = vst [vmem:[#allocation2 + $0x158] sm:$0xff] %v1254
        %1319 = vst [vmem:[#allocation2 + $0x160] sm:$0xff] %v1255
        %1320 = vst [vmem:[#allocation2 + $0x168] sm:$0xff] %v1256
        %1321 = vst [vmem:[#allocation2 + $0x170] sm:$0xff] %v1257
        %1322 = vst [vmem:[#allocation2 + $0x178] sm:$0xff] %v1258
        %1323 = vst [vmem:[#allocation2 + $0x180] sm:$0xff] %v1259
        %1324 = vst [vmem:[#allocation2 + $0x188] sm:$0xff] %v1260
        %1325 = vst [vmem:[#allocation2 + $0x190] sm:$0xff] %v1261
        %1326 = vst [vmem:[#allocation2 + $0x198] sm:$0xff] %v1262
        %1327 = vst [vmem:[#allocation2 + $0x1a0] sm:$0xff] %v1263
        %1328 = vst [vmem:[#allocation2 + $0x1a8] sm:$0xff] %v1264
        %1329 = vst [vmem:[#allocation2 + $0x1b0] sm:$0xff] %v1265
        %1330 = vst [vmem:[#allocation2 + $0x1b8] sm:$0xff] %v1266
        %1331 = vst [vmem:[#allocation2 + $0x1c0] sm:$0xff] %v1267
        %1332 = vst [vmem:[#allocation2 + $0x1c8] sm:$0xff] %v1268
        %1333 = vst [vmem:[#allocation2 + $0x1d0] sm:$0xff] %v1269
        %1334 = vst [vmem:[#allocation2 + $0x1d8] sm:$0xff] %v1270
        %1335 = vst [vmem:[#allocation2 + $0x1e0] sm:$0xff] %v1271
        %1336 = vst [vmem:[#allocation2 + $0x1e8] sm:$0xff] %v1272
        %1337 = vst [vmem:[#allocation2 + $0x1f0] sm:$0xff] %v1273
        %1338 = vst [vmem:[#allocation2 + $0x1f8] sm:$0xff] %v1274
        %p1339 = scmp.eq.s32.totalorder %s31, 1
        // Predicated region
        $region57: #{mr_dual_hfd_forward.5} parent=35 // pred_check
          %p1340 = pneg %p1339
        $region58: #{mr_dual_hfd_forward.5} parent=35 // pred_check_branch
          %1342 = sbr.rel (%p1340) target = $region60
        $region59: #{mr_dual_hfd_forward.5} parent=35 // pred_region
          %v1343 = vld [vmem:[#allocation2] sm:$0xff]
          %v1344 = vld [vmem:[#allocation2 + $0x8] sm:$0xff]
          %v1345 = vld [vmem:[#allocation2 + $0x10] sm:$0xff]
          %v1346 = vld [vmem:[#allocation2 + $0x18] sm:$0xff]
          %v1347 = vld [vmem:[#allocation2 + $0x20] sm:$0xff]
          %v1348 = vld [vmem:[#allocation2 + $0x28] sm:$0xff]
          %v1349 = vld [vmem:[#allocation2 + $0x30] sm:$0xff]
          %v1350 = vld [vmem:[#allocation2 + $0x38] sm:$0xff]
          %v1351 = vld [vmem:[#allocation2 + $0x40] sm:$0xff]
          %v1352 = vld [vmem:[#allocation2 + $0x48] sm:$0xff]
          %v1353 = vld [vmem:[#allocation2 + $0x50] sm:$0xff]
          %v1354 = vld [vmem:[#allocation2 + $0x58] sm:$0xff]
          %v1355 = vld [vmem:[#allocation2 + $0x60] sm:$0xff]
          %v1356 = vld [vmem:[#allocation2 + $0x68] sm:$0xff]
          %v1357 = vld [vmem:[#allocation2 + $0x70] sm:$0xff]
          %v1358 = vld [vmem:[#allocation2 + $0x78] sm:$0xff]
          %v1359 = vld [vmem:[#allocation2 + $0x80] sm:$0xff]
          %v1360 = vld [vmem:[#allocation2 + $0x88] sm:$0xff]
          %v1361 = vld [vmem:[#allocation2 + $0x90] sm:$0xff]
          %v1362 = vld [vmem:[#allocation2 + $0x98] sm:$0xff]
          %v1363 = vld [vmem:[#allocation2 + $0xa0] sm:$0xff]
          %v1364 = vld [vmem:[#allocation2 + $0xa8] sm:$0xff]
          %v1365 = vld [vmem:[#allocation2 + $0xb0] sm:$0xff]
          %v1366 = vld [vmem:[#allocation2 + $0xb8] sm:$0xff]
          %v1367 = vld [vmem:[#allocation2 + $0xc0] sm:$0xff]
          %v1368 = vld [vmem:[#allocation2 + $0xc8] sm:$0xff]
          %v1369 = vld [vmem:[#allocation2 + $0xd0] sm:$0xff]
          %v1370 = vld [vmem:[#allocation2 + $0xd8] sm:$0xff]
          %v1371 = vld [vmem:[#allocation2 + $0xe0] sm:$0xff]
          %v1372 = vld [vmem:[#allocation2 + $0xe8] sm:$0xff]
          %v1373 = vld [vmem:[#allocation2 + $0xf0] sm:$0xff]
          %v1374 = vld [vmem:[#allocation2 + $0xf8] sm:$0xff]
          %v1375 = vld [vmem:[#allocation2 + $0x100] sm:$0xff]
          %v1376 = vld [vmem:[#allocation2 + $0x108] sm:$0xff]
          %v1377 = vld [vmem:[#allocation2 + $0x110] sm:$0xff]
          %v1378 = vld [vmem:[#allocation2 + $0x118] sm:$0xff]
          %v1379 = vld [vmem:[#allocation2 + $0x120] sm:$0xff]
          %v1380 = vld [vmem:[#allocation2 + $0x128] sm:$0xff]
          %v1381 = vld [vmem:[#allocation2 + $0x130] sm:$0xff]
          %v1382 = vld [vmem:[#allocation2 + $0x138] sm:$0xff]
          %v1383 = vld [vmem:[#allocation2 + $0x140] sm:$0xff]
          %v1384 = vld [vmem:[#allocation2 + $0x148] sm:$0xff]
          %v1385 = vld [vmem:[#allocation2 + $0x150] sm:$0xff]
          %v1386 = vld [vmem:[#allocation2 + $0x158] sm:$0xff]
          %v1387 = vld [vmem:[#allocation2 + $0x160] sm:$0xff]
          %v1388 = vld [vmem:[#allocation2 + $0x168] sm:$0xff]
          %v1389 = vld [vmem:[#allocation2 + $0x170] sm:$0xff]
          %v1390 = vld [vmem:[#allocation2 + $0x178] sm:$0xff]
          %v1391 = vld [vmem:[#allocation2 + $0x180] sm:$0xff]
          %v1392 = vld [vmem:[#allocation2 + $0x188] sm:$0xff]
          %v1393 = vld [vmem:[#allocation2 + $0x190] sm:$0xff]
          %v1394 = vld [vmem:[#allocation2 + $0x198] sm:$0xff]
          %v1395 = vld [vmem:[#allocation2 + $0x1a0] sm:$0xff]
          %v1396 = vld [vmem:[#allocation2 + $0x1a8] sm:$0xff]
          %v1397 = vld [vmem:[#allocation2 + $0x1b0] sm:$0xff]
          %v1398 = vld [vmem:[#allocation2 + $0x1b8] sm:$0xff]
          %v1399 = vld [vmem:[#allocation2 + $0x1c0] sm:$0xff]
          %v1400 = vld [vmem:[#allocation2 + $0x1c8] sm:$0xff]
          %v1401 = vld [vmem:[#allocation2 + $0x1d0] sm:$0xff]
          %v1402 = vld [vmem:[#allocation2 + $0x1d8] sm:$0xff]
          %v1403 = vld [vmem:[#allocation2 + $0x1e0] sm:$0xff]
          %v1404 = vld [vmem:[#allocation2 + $0x1e8] sm:$0xff]
          %v1405 = vld [vmem:[#allocation2 + $0x1f0] sm:$0xff]
          %v1406 = vld [vmem:[#allocation2 + $0x1f8] sm:$0xff]
          %v1407 = vld [vmem:[%s311] sm:$0xff]
          %v1408 = vld [vmem:[%s311 + $0x8] sm:$0xff]
          %v1409 = vld [vmem:[%s311 + $0x10] sm:$0xff]
          %v1410 = vld [vmem:[%s311 + $0x18] sm:$0xff]
          %v1411 = vld [vmem:[%s311 + $0x20] sm:$0xff]
          %v1412 = vld [vmem:[%s311 + $0x28] sm:$0xff]
          %v1413 = vld [vmem:[%s311 + $0x30] sm:$0xff]
          %v1414 = vld [vmem:[%s311 + $0x38] sm:$0xff]
          %v1415 = vld [vmem:[%s311 + $0x40] sm:$0xff]
          %v1416 = vld [vmem:[%s311 + $0x48] sm:$0xff]
          %v1417 = vld [vmem:[%s311 + $0x50] sm:$0xff]
          %v1418 = vld [vmem:[%s311 + $0x58] sm:$0xff]
          %v1419 = vld [vmem:[%s311 + $0x60] sm:$0xff]
          %v1420 = vld [vmem:[%s311 + $0x68] sm:$0xff]
          %v1421 = vld [vmem:[%s311 + $0x70] sm:$0xff]
          %v1422 = vld [vmem:[%s311 + $0x78] sm:$0xff]
          %v1423 = vunpack.c.0.s8 %v1407
          %v1424 = vunpack.c.0.s8 %v1408
          %v1425 = vunpack.c.1.s8 %v1407
          %v1426 = vunpack.c.1.s8 %v1408
          %v1427 = vunpack.c.2.s8 %v1407
          %v1428 = vunpack.c.2.s8 %v1408
          %v1429 = vunpack.c.3.s8 %v1407
          %v1430 = vunpack.c.3.s8 %v1408
          %v1431 = vunpack.c.0.s8 %v1409
          %v1432 = vunpack.c.0.s8 %v1410
          %v1433 = vunpack.c.1.s8 %v1409
          %v1434 = vunpack.c.1.s8 %v1410
          %v1435 = vunpack.c.2.s8 %v1409
          %v1436 = vunpack.c.2.s8 %v1410
          %v1437 = vunpack.c.3.s8 %v1409
          %v1438 = vunpack.c.3.s8 %v1410
          %v1439 = vunpack.c.0.s8 %v1411
          %v1440 = vunpack.c.0.s8 %v1412
          %v1441 = vunpack.c.1.s8 %v1411
          %v1442 = vunpack.c.1.s8 %v1412
          %v1443 = vunpack.c.2.s8 %v1411
          %v1444 = vunpack.c.2.s8 %v1412
          %v1445 = vunpack.c.3.s8 %v1411
          %v1446 = vunpack.c.3.s8 %v1412
          %v1447 = vunpack.c.0.s8 %v1413
          %v1448 = vunpack.c.0.s8 %v1414
          %v1449 = vunpack.c.1.s8 %v1413
          %v1450 = vunpack.c.1.s8 %v1414
          %v1451 = vunpack.c.2.s8 %v1413
          %v1452 = vunpack.c.2.s8 %v1414
          %v1453 = vunpack.c.3.s8 %v1413
          %v1454 = vunpack.c.3.s8 %v1414
          %v1455 = vunpack.c.0.s8 %v1415
          %v1456 = vunpack.c.0.s8 %v1416
          %v1457 = vunpack.c.1.s8 %v1415
          %v1458 = vunpack.c.1.s8 %v1416
          %v1459 = vunpack.c.2.s8 %v1415
          %v1460 = vunpack.c.2.s8 %v1416
          %v1461 = vunpack.c.3.s8 %v1415
          %v1462 = vunpack.c.3.s8 %v1416
          %v1463 = vunpack.c.0.s8 %v1417
          %v1464 = vunpack.c.0.s8 %v1418
          %v1465 = vunpack.c.1.s8 %v1417
          %v1466 = vunpack.c.1.s8 %v1418
          %v1467 = vunpack.c.2.s8 %v1417
          %v1468 = vunpack.c.2.s8 %v1418
          %v1469 = vunpack.c.3.s8 %v1417
          %v1470 = vunpack.c.3.s8 %v1418
          %v1471 = vunpack.c.0.s8 %v1419
          %v1472 = vunpack.c.0.s8 %v1420
          %v1473 = vunpack.c.1.s8 %v1419
          %v1474 = vunpack.c.1.s8 %v1420
          %v1475 = vunpack.c.2.s8 %v1419
          %v1476 = vunpack.c.2.s8 %v1420
          %v1477 = vunpack.c.3.s8 %v1419
          %v1478 = vunpack.c.3.s8 %v1420
          %v1479 = vunpack.c.0.s8 %v1421
          %v1480 = vunpack.c.0.s8 %v1422
          %v1481 = vunpack.c.1.s8 %v1421
          %v1482 = vunpack.c.1.s8 %v1422
          %v1483 = vunpack.c.2.s8 %v1421
          %v1484 = vunpack.c.2.s8 %v1422
          %v1485 = vunpack.c.3.s8 %v1421
          %v1486 = vunpack.c.3.s8 %v1422
          %v1487 = vcvt.s32.f32 %v1423
          %v1488 = vcvt.s32.f32 %v1424
          %v1489 = vcvt.s32.f32 %v1425
          %v1490 = vcvt.s32.f32 %v1426
          %v1491 = vcvt.s32.f32 %v1427
          %v1492 = vcvt.s32.f32 %v1428
          %v1493 = vcvt.s32.f32 %v1429
          %v1494 = vcvt.s32.f32 %v1430
          %v1495 = vcvt.s32.f32 %v1431
          %v1496 = vcvt.s32.f32 %v1432
          %v1497 = vcvt.s32.f32 %v1433
          %v1498 = vcvt.s32.f32 %v1434
          %v1499 = vcvt.s32.f32 %v1435
          %v1500 = vcvt.s32.f32 %v1436
          %v1501 = vcvt.s32.f32 %v1437
          %v1502 = vcvt.s32.f32 %v1438
          %v1503 = vcvt.s32.f32 %v1439
          %v1504 = vcvt.s32.f32 %v1440
          %v1505 = vcvt.s32.f32 %v1441
          %v1506 = vcvt.s32.f32 %v1442
          %v1507 = vcvt.s32.f32 %v1443
          %v1508 = vcvt.s32.f32 %v1444
          %v1509 = vcvt.s32.f32 %v1445
          %v1510 = vcvt.s32.f32 %v1446
          %v1511 = vcvt.s32.f32 %v1447
          %v1512 = vcvt.s32.f32 %v1448
          %v1513 = vcvt.s32.f32 %v1449
          %v1514 = vcvt.s32.f32 %v1450
          %v1515 = vcvt.s32.f32 %v1451
          %v1516 = vcvt.s32.f32 %v1452
          %v1517 = vcvt.s32.f32 %v1453
          %v1518 = vcvt.s32.f32 %v1454
          %v1519 = vcvt.s32.f32 %v1455
          %v1520 = vcvt.s32.f32 %v1456
          %v1521 = vcvt.s32.f32 %v1457
          %v1522 = vcvt.s32.f32 %v1458
          %v1523 = vcvt.s32.f32 %v1459
          %v1524 = vcvt.s32.f32 %v1460
          %v1525 = vcvt.s32.f32 %v1461
          %v1526 = vcvt.s32.f32 %v1462
          %v1527 = vcvt.s32.f32 %v1463
          %v1528 = vcvt.s32.f32 %v1464
          %v1529 = vcvt.s32.f32 %v1465
          %v1530 = vcvt.s32.f32 %v1466
          %v1531 = vcvt.s32.f32 %v1467
          %v1532 = vcvt.s32.f32 %v1468
          %v1533 = vcvt.s32.f32 %v1469
          %v1534 = vcvt.s32.f32 %v1470
          %v1535 = vcvt.s32.f32 %v1471
          %v1536 = vcvt.s32.f32 %v1472
          %v1537 = vcvt.s32.f32 %v1473
          %v1538 = vcvt.s32.f32 %v1474
          %v1539 = vcvt.s32.f32 %v1475
          %v1540 = vcvt.s32.f32 %v1476
          %v1541 = vcvt.s32.f32 %v1477
          %v1542 = vcvt.s32.f32 %v1478
          %v1543 = vcvt.s32.f32 %v1479
          %v1544 = vcvt.s32.f32 %v1480
          %v1545 = vcvt.s32.f32 %v1481
          %v1546 = vcvt.s32.f32 %v1482
          %v1547 = vcvt.s32.f32 %v1483
          %v1548 = vcvt.s32.f32 %v1484
          %v1549 = vcvt.s32.f32 %v1485
          %v1550 = vcvt.s32.f32 %v1486
          %v1551 = vmul.f32 %v1343, %v1487
          %v1552 = vmul.f32 %v1344, %v1488
          %v1553 = vmul.f32 %v1345, %v1489
          %v1554 = vmul.f32 %v1346, %v1490
          %v1555 = vmul.f32 %v1347, %v1491
          %v1556 = vmul.f32 %v1348, %v1492
          %v1557 = vmul.f32 %v1349, %v1493
          %v1558 = vmul.f32 %v1350, %v1494
          %v1559 = vmul.f32 %v1351, %v1495
          %v1560 = vmul.f32 %v1352, %v1496
          %v1561 = vmul.f32 %v1353, %v1497
          %v1562 = vmul.f32 %v1354, %v1498
          %v1563 = vmul.f32 %v1355, %v1499
          %v1564 = vmul.f32 %v1356, %v1500
          %v1565 = vmul.f32 %v1357, %v1501
          %v1566 = vmul.f32 %v1358, %v1502
          %v1567 = vmul.f32 %v1359, %v1503
          %v1568 = vmul.f32 %v1360, %v1504
          %v1569 = vmul.f32 %v1361, %v1505
          %v1570 = vmul.f32 %v1362, %v1506
          %v1571 = vmul.f32 %v1363, %v1507
          %v1572 = vmul.f32 %v1364, %v1508
          %v1573 = vmul.f32 %v1365, %v1509
          %v1574 = vmul.f32 %v1366, %v1510
          %v1575 = vmul.f32 %v1367, %v1511
          %v1576 = vmul.f32 %v1368, %v1512
          %v1577 = vmul.f32 %v1369, %v1513
          %v1578 = vmul.f32 %v1370, %v1514
          %v1579 = vmul.f32 %v1371, %v1515
          %v1580 = vmul.f32 %v1372, %v1516
          %v1581 = vmul.f32 %v1373, %v1517
          %v1582 = vmul.f32 %v1374, %v1518
          %v1583 = vmul.f32 %v1375, %v1519
          %v1584 = vmul.f32 %v1376, %v1520
          %v1585 = vmul.f32 %v1377, %v1521
          %v1586 = vmul.f32 %v1378, %v1522
          %v1587 = vmul.f32 %v1379, %v1523
          %v1588 = vmul.f32 %v1380, %v1524
          %v1589 = vmul.f32 %v1381, %v1525
          %v1590 = vmul.f32 %v1382, %v1526
          %v1591 = vmul.f32 %v1383, %v1527
          %v1592 = vmul.f32 %v1384, %v1528
          %v1593 = vmul.f32 %v1385, %v1529
          %v1594 = vmul.f32 %v1386, %v1530
          %v1595 = vmul.f32 %v1387, %v1531
          %v1596 = vmul.f32 %v1388, %v1532
          %v1597 = vmul.f32 %v1389, %v1533
          %v1598 = vmul.f32 %v1390, %v1534
          %v1599 = vmul.f32 %v1391, %v1535
          %v1600 = vmul.f32 %v1392, %v1536
          %v1601 = vmul.f32 %v1393, %v1537
          %v1602 = vmul.f32 %v1394, %v1538
          %v1603 = vmul.f32 %v1395, %v1539
          %v1604 = vmul.f32 %v1396, %v1540
          %v1605 = vmul.f32 %v1397, %v1541
          %v1606 = vmul.f32 %v1398, %v1542
          %v1607 = vmul.f32 %v1399, %v1543
          %v1608 = vmul.f32 %v1400, %v1544
          %v1609 = vmul.f32 %v1401, %v1545
          %v1610 = vmul.f32 %v1402, %v1546
          %v1611 = vmul.f32 %v1403, %v1547
          %v1612 = vmul.f32 %v1404, %v1548
          %v1613 = vmul.f32 %v1405, %v1549
          %v1614 = vmul.f32 %v1406, %v1550
          %v1615 = vld [vmem:[#allocation3] sm:$0x77]
          %v1616 = vld [vmem:[%s362] sm:$0x77]
          %1618 = vst [vmem:[#allocation1] ss:$2 sm:$0xff] %v1616
          %v1619 = vld.sshfl [vmem:[#allocation1] sm:$0xff pattern:$0x75316420]
          %v1620 = vld.sshfl [vmem:[#allocation1 + $0x8] sm:$0xff pattern:$0x75316420]
          %v1623 = vpack.c.bf16 %v1619, %v1619
          %v1624 = vpack.c.bf16 %v1620, %v1620
          %v1625 = vpack.c.bf16 %v1553, %v1551
          %v1626 = vpack.c.bf16 %v1554, %v1552
          %v1627 = vpack.c.bf16 %v1557, %v1555
          %v1628 = vpack.c.bf16 %v1558, %v1556
          %v1629 = vpack.c.bf16 %v1561, %v1559
          %v1630 = vpack.c.bf16 %v1562, %v1560
          %v1631 = vpack.c.bf16 %v1565, %v1563
          %v1632 = vpack.c.bf16 %v1566, %v1564
          %v1633 = vpack.c.bf16 %v1569, %v1567
          %v1634 = vpack.c.bf16 %v1570, %v1568
          %v1635 = vpack.c.bf16 %v1573, %v1571
          %v1636 = vpack.c.bf16 %v1574, %v1572
          %v1637 = vpack.c.bf16 %v1577, %v1575
          %v1638 = vpack.c.bf16 %v1578, %v1576
          %v1639 = vpack.c.bf16 %v1581, %v1579
          %v1640 = vpack.c.bf16 %v1582, %v1580
          %v1641 = vpack.c.bf16 %v1585, %v1583
          %v1642 = vpack.c.bf16 %v1586, %v1584
          %v1643 = vpack.c.bf16 %v1589, %v1587
          %v1644 = vpack.c.bf16 %v1590, %v1588
          %v1645 = vpack.c.bf16 %v1593, %v1591
          %v1646 = vpack.c.bf16 %v1594, %v1592
          %v1647 = vpack.c.bf16 %v1597, %v1595
          %v1648 = vpack.c.bf16 %v1598, %v1596
          %v1649 = vpack.c.bf16 %v1601, %v1599
          %v1650 = vpack.c.bf16 %v1602, %v1600
          %v1651 = vpack.c.bf16 %v1605, %v1603
          %v1652 = vpack.c.bf16 %v1606, %v1604
          %v1653 = vpack.c.bf16 %v1609, %v1607
          %v1654 = vpack.c.bf16 %v1610, %v1608
          %v1655 = vpack.c.bf16 %v1613, %v1611
          %v1656 = vpack.c.bf16 %v1614, %v1612
          %1657 = vmatpush.bf16.msra.mxu0 %v1639
          %1658 = vmatpush.bf16.msra.mxu0 %v1637
          %1659 = vmatpush.bf16.msra.mxu0 %v1635
          %1660 = vmatpush.bf16.msra.mxu0 %v1633
          %1661 = vmatpush.bf16.msra.mxu0 %v1631
          %1662 = vmatpush.bf16.msra.mxu0 %v1629
          %1663 = vmatpush.bf16.msra.mxu0 %v1627
          %1664 = vmatpush.bf16.msra.mxu0 %v1625
          %1665 = vmatmul.bf16.gmra.mxu0 %v1623
          %v1666 = vpop.f32.mrf.mxu0
          %v1667 = vadd.f32 0.0, %v1666
          %v1668 = vpop.f32.mrf.mxu0
          %1669 = vdwg.mxu0
          %1670 = vmatpush.bf16.msra.mxu0 %v1655
          %1671 = vmatpush.bf16.msra.mxu0 %v1653
          %1672 = vmatpush.bf16.msra.mxu0 %v1651
          %1673 = vmatpush.bf16.msra.mxu0 %v1649
          %1674 = vmatpush.bf16.msra.mxu0 %v1647
          %1675 = vmatpush.bf16.msra.mxu0 %v1645
          %1676 = vmatpush.bf16.msra.mxu0 %v1643
          %1677 = vmatpush.bf16.msra.mxu0 %v1641
          %1678 = vmatmul.bf16.gmra.mxu0 %v1624
          %v1679 = vpop.f32.mrf.mxu0
          %v1680 = vadd.f32 %v1667, %v1679
          %v1681 = vpop.f32.mrf.mxu0
          %1682 = vdwg.mxu0
          %1683 = vmatpush.bf16.msra.mxu0 %v1640
          %1684 = vmatpush.bf16.msra.mxu0 %v1638
          %1685 = vmatpush.bf16.msra.mxu0 %v1636
          %1686 = vmatpush.bf16.msra.mxu0 %v1634
          %1687 = vmatpush.bf16.msra.mxu0 %v1632
          %1688 = vmatpush.bf16.msra.mxu0 %v1630
          %1689 = vmatpush.bf16.msra.mxu0 %v1628
          %1690 = vmatpush.bf16.msra.mxu0 %v1626
          %1691 = vmatmul.bf16.gmra.mxu0 %v1623
          %v1692 = vpop.f32.mrf.mxu0
          %v1693 = vadd.f32 0.0, %v1692
          %v1694 = vpop.f32.mrf.mxu0
          %1695 = vdwg.mxu0
          %1696 = vmatpush.bf16.msra.mxu0 %v1656
          %1697 = vmatpush.bf16.msra.mxu0 %v1654
          %1698 = vmatpush.bf16.msra.mxu0 %v1652
          %1699 = vmatpush.bf16.msra.mxu0 %v1650
          %1700 = vmatpush.bf16.msra.mxu0 %v1648
          %1701 = vmatpush.bf16.msra.mxu0 %v1646
          %1702 = vmatpush.bf16.msra.mxu0 %v1644
          %1703 = vmatpush.bf16.msra.mxu0 %v1642
          %1704 = vmatmul.bf16.gmra.mxu0 %v1624
          %v1705 = vpop.f32.mrf.mxu0
          %v1706 = vadd.f32 %v1693, %v1705
          %v1707 = vpop.f32.mrf.mxu0
          %1708 = vdwg.mxu0
          %v1711 = vrot.slane %v1706, 4
          %vm1712 = vcmask 1043456
          %v1713 = vsel %vm1712, %v1680, %v1711
          %v1715 = vadd.f32 %v1615, %v1713
          %1716 = vst [vmem:[#allocation3] sm:$0x77] %v1715
        $region60: #{mr_dual_hfd_forward.5} parent=35 // pred_fallthru
          _
        %p1717 = scmp.eq.s32.totalorder %s30, 1
        %p1718 = pnand %p1717, %p1339
        %p1719 = pneg %p1718
        // Predicated region
        $region61: #{mr_dual_hfd_forward.5} parent=35 // pred_check
          _
        $region62: #{mr_dual_hfd_forward.5} parent=35 // pred_check_branch
          %1721 = sbr.rel (%p1718) target = $region64
        $region63: #{mr_dual_hfd_forward.5} parent=35 // pred_region
          %v1722 = vld [vmem:[#allocation3] sm:$0x77]
          %v1723 = vmax.f32 %v1722, 1e-12
          %v1725 = vperm.slane %v1723, 2
          %v1726 = vperm.slane %v1723, 6
          %v1729 = vperm.slane %v1725, 2
          %v1730 = vperm.slane %v1726, 2
          %v1733 = vrot.slane %v1730, 4
          %vm1734 = vcmask 1043456
          %v1735 = vsel %vm1734, %v1729, %v1733
          %v1737 = vrcp.pop %v1735
          %v1738 = vmul.f32 %v1735, %v1737
          %v1739 = vsub.f32 1.0, %v1738
          %v1740 = vmul.f32 %v1737, %v1739
          %v1741 = vadd.f32 %v1737, %v1740
          %vm1742 = vweird.f32 %v1735
          %vm1743 = vweird.f32 %v1737
          %vm1744 = vmor %vm1742, %vm1743
          %v1745 = vsel %vm1744, %v1737, %v1741
          %v1746 = vand.u32 2147483647, %v1735
          %vm1747 = vcmp.eq.f32.partialorder %v1746, 8.507059e+37
          %v1748 = vand.u32 %v1735, 2147483648
          %v1749 = vor.u32 1.1754944e-38, %v1748
          %v1750 = vsel %vm1747, %v1749, %v1745
          %v1751 = vmul.f32 %v1722, %v1750
          %v1753 = vrot.slane %v1751, 2
          %vm1754 = vcmask 1041408
          %v1755 = vsel %vm1754, %v1751, %v1753
          %1757 = vst [vmem:[%s351] sm:$0xf] %v1755
        $region64: #{mr_dual_hfd_forward.5} parent=35 // pred_fallthru
          _
        %s1758 = sand.u32 %s161, 1
        %s1759 = scalar_lea.sflag [#allocation6], %s1758
        %s1760 = sand.u32 %s161, 1
        %s1761 = smul.addr %s1760, 4
        %s1762 = scalar_lea.vmem [#allocation10], %s1761
        // Predicated region
        $region65: #{mr_dual_hfd_forward.5} parent=35 // pred_check
          %p1763 = pneg %p171
        $region66: #{mr_dual_hfd_forward.5} parent=35 // pred_check_branch
          %1765 = sbr.rel (%p1763) target = $region68
        $region67: #{mr_dual_hfd_forward.5} parent=35 // pred_region
          %s1766 = smul.u32 2, %s29
          %1768 = vsyncadd %s1759, 0
          %s1769 = smul.addr %s1766, 2
          %s1770 = scalar_lea.hbm %s4, %s1769
          %s1772 = sshll.u32 %s1762, 4
          %s1773 = int_to_ptr.vmem [resolvable:$true] %s1772
          %s1774 = sshll.u32 %s1770, 4
          %s1775 = int_to_ptr.hbm [resolvable:$true] %s1774
          %1777 = dma.vmem_to_hbm [thread:$0]  %s1773, 64, %s1775, %s1759
        $region68: #{mr_dual_hfd_forward.5} parent=35 // pred_fallthru
          _
      $region36: #{mr_dual_hfd_forward.5} parent=5 // pred_fallthru
        _
      %p1778 = scmp.le.s32.totalorder 2, %s19
      // Predicated region
      $region69: #{mr_dual_hfd_forward.5} parent=5 // pred_check
        %p1779 = pneg %p1778
      $region70: #{mr_dual_hfd_forward.5} parent=5 // pred_check_branch
        %1781 = sbr.rel (%p1779) target = $region72
      $region71: #{mr_dual_hfd_forward.5} parent=5 // pred_region
        %s1782 = ssub.s32 %s19, 2
        // Predicated region
        $region73: #{mr_dual_hfd_forward.5} parent=71 // pred_check
          %p1783 = pneg %p177
        $region74: #{mr_dual_hfd_forward.5} parent=71 // pred_check_branch
          %1785 = sbr.rel (%p1783) target = $region76
        $region75: #{mr_dual_hfd_forward.5} parent=71 // pred_region
          %s1786 = sand.u32 %s162, 1
          %s1787 = scalar_lea.sflag [#allocation6], %s1786
          %s1788 = sand.u32 %s162, 1
          %s1789 = smul.addr %s1788, 4
          %s1790 = scalar_lea.vmem [#allocation10], %s1789
          %1792 = dma.done %s1787, 64
        $region76: #{mr_dual_hfd_forward.5} parent=71 // pred_fallthru
          _
      $region72: #{mr_dual_hfd_forward.5} parent=5 // pred_fallthru
        _
    $region6: #{mr_dual_hfd_forward.5} parent=1 // loop_footer
      %s23 = sadd.s32 1, %s19
    $region7: #{mr_dual_hfd_forward.5} parent=1 // loop_footer_branch
      %18 = sbr.rel target = $region3
    $region8: #{mr_dual_hfd_forward.5} parent=1 // loop_exit
      _
    %1793 = vsyncpa [#allocation5], 1
    %s1794 = scalar_lea.sflag [#allocation5], 1
    %1795 = vsyncpa %s1794, 1
    %1796 = vsyncpa [#allocation8], 1
    %s1797 = scalar_lea.sflag [#allocation8], 1
    %1798 = vsyncpa %s1797, 1
    %1799 = vsyncpa [#allocation6], 1
    %s1800 = scalar_lea.sflag [#allocation6], 1
    %1801 = vsyncpa %s1800, 1

// kernel: mr_dual_hfd_forward.4
$region0: #{mr_dual_hfd_forward.4}
  #allocation0 [shape = 'u32[]', space=smem, size = 0x4, offset = 0x4, fixed_abs, tag = 'smem constant byte address 0x4 - core index']
  #allocation1 [shape = 'u32[72,128]{1,0:T(1,128)}', space=vmem, size = 0x9000, scoped, tag = 'internal scratch']
  #allocation2 [shape = 'f32[4,256]{1,0:T(4,128)}', space=vmem, size = 0x1000, scoped, tag = 'scratch operand']
  #allocation3 [shape = 'f32[32,256]{1,0:T(8,128)}', space=vmem, size = 0x8000, scoped, tag = 'scratch operand']
  %s0 = inlined_call_operand.vmem [shape: s8[2,512,512], index: 0, kind: input, shape index: {}]
  %s1 = inlined_call_operand.vmem [shape: f32[512,5], index: 1, kind: input, shape index: {}]
  %s2 = inlined_call_operand.vmem [shape: f32[9,512], index: 2, kind: input, shape index: {}]
  %s3 = inlined_call_operand.vmem [shape: f32[32,512], index: 3, kind: input, shape index: {}]
  %s4 = inlined_call_operand.vmem [shape: f32[8,16], index: 4, kind: input, shape index: {}]
  %s5 = inlined_call_operand.vmem [shape: f32[8,1], index: 5, kind: input, shape index: {}]
  %s6 = inlined_call_operand.hbm [shape: f32[8,512], index: 6, kind: output, shape index: {}]
  %s7 = sld [smem:[#allocation0]]
  $region134: #{mr_dual_hfd_forward.4} parent=0
    _
  %s9 = ssub.s32 1, %s7
  %s10 = scalar_select 0, %s9, %s7
  $region1: #{mr_dual_hfd_forward.4} parent=0
    #allocation4 [shape = 'u8[262144]{0}', space=vmem, size = 0x40000, scoped, tag = 'input window, operand 0']
    #allocation5 [shape = 'u8[32768]{0}', space=vmem, size = 0x8000, scoped, tag = 'input window, operand 2']
    #allocation6 [shape = 'u8[65536]{0}', space=vmem, size = 0x10000, scoped, tag = 'input window, operand 3']
    #allocation7 [shape = 'u8[16384]{0}', space=vmem, size = 0x4000, scoped, tag = 'output window, operand 0']
    #allocation8 [shape = 's32[2]{0}', space=sflag, size = 0x8, scoped, tag = 'scoped memory for mr_dual_hfd_forward.4']
    %11 = vsyncpa [#allocation8], 0
    %s12 = scalar_lea.sflag [#allocation8], 1
    %13 = vsyncpa %s12, 0
    loop: start=0, step=1, limit=6
    $region2: #{mr_dual_hfd_forward.4} parent=1 // loop_pre_header
      _
    $region3: #{mr_dual_hfd_forward.4} parent=1 // loop_header
      %s15 = sphi 0, %s19
      %p16 = scmp.ge.s32.totalorder %s15, 6
      %s22 = sphi 0, %s34
      %s23 = sphi 0, %s30
      %s24 = sphi 0, %s22
      %s25 = sphi 0, %s23
      %s26 = sphi 0, %s24
      %s27 = sphi 0, %s25
      %s39 = sphi 0, %s41
      %s42 = sphi 0, %s39
      %s43 = sphi 0, %s42
      %s59 = sphi 0, %s43
      %s65 = sphi 0, %s67
      %s68 = sphi 0, %s65
      %s69 = sphi 0, %s68
      %s85 = sphi 0, %s69
      %s91 = sphi 0, %s93
      %s94 = sphi 0, %s91
      %s95 = sphi 0, %s94
      %s111 = sphi 0, %s95
      %s117 = sphi 0, %s119
      %s120 = sphi 0, %s117
      %s121 = sphi 0, %s120
      %s137 = sphi 0, %s121
      %s141 = sphi 0, %s141
      %s143 = sphi 0, %s141
      %s144 = sphi 0, %s143
      %s158 = sphi 0, %s144
      %s162 = sphi 0, %s162
      %s164 = sphi 0, %s162
      %s165 = sphi 0, %s164
      %s179 = sphi 0, %s165
      %s185 = sphi 0, %s187
      %s188 = sphi 0, %s185
      %s189 = sphi 0, %s188
      %s205 = sphi 0, %s189
    $region4: #{mr_dual_hfd_forward.4} parent=1 // loop_header_branch
      %18 = sbr.rel (%p16) target = $region8
    $region5: #{mr_dual_hfd_forward.4} parent=1 // loop_body
      %s20 = ssub.s32 %s15, 1
      %s21 = ssub.s32 %s15, 2
      %s28 = sadd.s32 1, %s23
      %p29 = scmp.ge.s32.totalorder %s28, 2
      %s30 = scalar_select %p29, 0, %s28
      %s31 = sadd.s32 1, %s22
      %s32 = scalar_select %p29, %s31, %s22
      %p33 = scmp.ge.s32.totalorder %s32, 2
      %s34 = scalar_select %p33, 0, %s32
      %s35 = ssub.s32 %s23, %s30
      %s36 = ssub.s32 %s22, %s34
      %s37 = sor.u32 %s35, %s36
      %p38 = scmp.eq.s32.totalorder %s37, 0
      %s40 = sadd.s32 %s39, 1
      %s41 = scalar_select %p38, %s39, %s40
      %p44 = pneg %p38
      %p45 = scmp.eq.s32.totalorder %s15, 3
      %p46 = por %p44, %p45
      %p47 = scmp.ne.s32.totalorder %s39, %s42
      %p48 = scmp.eq.s32.totalorder %s15, 0
      %p49 = por %p47, %p48
      %p50 = scmp.ne.s32.totalorder %s39, %s42
      %p51 = scmp.eq.s32.totalorder %s20, 3
      %p52 = por %p50, %p51
      %p53 = scmp.ne.s32.totalorder %s42, %s43
      %p54 = scmp.eq.s32.totalorder %s20, 0
      %p55 = por %p53, %p54
      %p56 = scmp.ne.s32.totalorder %s42, %s43
      %p57 = scmp.eq.s32.totalorder %s21, 3
      %p58 = por %p56, %p57
      %p60 = scmp.ne.s32.totalorder %s43, %s59
      %p61 = scmp.eq.s32.totalorder %s21, 0
      %p62 = por %p60, %p61
      %s63 = ssub.s32 %s23, %s30
      %p64 = scmp.eq.s32.totalorder %s63, 0
      %s66 = sadd.s32 %s65, 1
      %s67 = scalar_select %p64, %s65, %s66
      %p70 = pneg %p64
      %p71 = scmp.eq.s32.totalorder %s15, 3
      %p72 = por %p70, %p71
      %p73 = scmp.ne.s32.totalorder %s65, %s68
      %p74 = scmp.eq.s32.totalorder %s15, 0
      %p75 = por %p73, %p74
      %p76 = scmp.ne.s32.totalorder %s65, %s68
      %p77 = scmp.eq.s32.totalorder %s20, 3
      %p78 = por %p76, %p77
      %p79 = scmp.ne.s32.totalorder %s68, %s69
      %p80 = scmp.eq.s32.totalorder %s20, 0
      %p81 = por %p79, %p80
      %p82 = scmp.ne.s32.totalorder %s68, %s69
      %p83 = scmp.eq.s32.totalorder %s21, 3
      %p84 = por %p82, %p83
      %p86 = scmp.ne.s32.totalorder %s69, %s85
      %p87 = scmp.eq.s32.totalorder %s21, 0
      %p88 = por %p86, %p87
      %s89 = ssub.s32 %s22, %s34
      %p90 = scmp.eq.s32.totalorder %s89, 0
      %s92 = sadd.s32 %s91, 1
      %s93 = scalar_select %p90, %s91, %s92
      %p96 = pneg %p90
      %p97 = scmp.eq.s32.totalorder %s15, 3
      %p98 = por %p96, %p97
      %p99 = scmp.ne.s32.totalorder %s91, %s94
      %p100 = scmp.eq.s32.totalorder %s15, 0
      %p101 = por %p99, %p100
      %p102 = scmp.ne.s32.totalorder %s91, %s94
      %p103 = scmp.eq.s32.totalorder %s20, 3
      %p104 = por %p102, %p103
      %p105 = scmp.ne.s32.totalorder %s94, %s95
      %p106 = scmp.eq.s32.totalorder %s20, 0
      %p107 = por %p105, %p106
      %p108 = scmp.ne.s32.totalorder %s94, %s95
      %p109 = scmp.eq.s32.totalorder %s21, 3
      %p110 = por %p108, %p109
      %p112 = scmp.ne.s32.totalorder %s95, %s111
      %p113 = scmp.eq.s32.totalorder %s21, 0
      %p114 = por %p112, %p113
      %s115 = ssub.s32 %s23, %s30
      %p116 = scmp.eq.s32.totalorder %s115, 0
      %s118 = sadd.s32 %s117, 1
      %s119 = scalar_select %p116, %s117, %s118
      %p122 = pneg %p116
      %p123 = scmp.eq.s32.totalorder %s15, 3
      %p124 = por %p122, %p123
      %p125 = scmp.ne.s32.totalorder %s117, %s120
      %p126 = scmp.eq.s32.totalorder %s15, 0
      %p127 = por %p125, %p126
      %p128 = scmp.ne.s32.totalorder %s117, %s120
      %p129 = scmp.eq.s32.totalorder %s20, 3
      %p130 = por %p128, %p129
      %p131 = scmp.ne.s32.totalorder %s120, %s121
      %p132 = scmp.eq.s32.totalorder %s20, 0
      %p133 = por %p131, %p132
      %p134 = scmp.ne.s32.totalorder %s120, %s121
      %p135 = scmp.eq.s32.totalorder %s21, 3
      %p136 = por %p134, %p135
      %p138 = scmp.ne.s32.totalorder %s121, %s137
      %p139 = scmp.eq.s32.totalorder %s21, 0
      %p140 = por %p138, %p139
      %s142 = sadd.s32 %s141, 1
      %p145 = scmp.eq.s32.totalorder %s15, 3
      %p146 = scmp.ne.s32.totalorder %s141, %s143
      %p147 = scmp.eq.s32.totalorder %s15, 0
      %p148 = por %p146, %p147
      %p149 = scmp.ne.s32.totalorder %s141, %s143
      %p150 = scmp.eq.s32.totalorder %s20, 3
      %p151 = por %p149, %p150
      %p152 = scmp.ne.s32.totalorder %s143, %s144
      %p153 = scmp.eq.s32.totalorder %s20, 0
      %p154 = por %p152, %p153
      %p155 = scmp.ne.s32.totalorder %s143, %s144
      %p156 = scmp.eq.s32.totalorder %s21, 3
      %p157 = por %p155, %p156
      %p159 = scmp.ne.s32.totalorder %s144, %s158
      %p160 = scmp.eq.s32.totalorder %s21, 0
      %p161 = por %p159, %p160
      %s163 = sadd.s32 %s162, 1
      %p166 = scmp.eq.s32.totalorder %s15, 3
      %p167 = scmp.ne.s32.totalorder %s162, %s164
      %p168 = scmp.eq.s32.totalorder %s15, 0
      %p169 = por %p167, %p168
      %p170 = scmp.ne.s32.totalorder %s162, %s164
      %p171 = scmp.eq.s32.totalorder %s20, 3
      %p172 = por %p170, %p171
      %p173 = scmp.ne.s32.totalorder %s164, %s165
      %p174 = scmp.eq.s32.totalorder %s20, 0
      %p175 = por %p173, %p174
      %p176 = scmp.ne.s32.totalorder %s164, %s165
      %p177 = scmp.eq.s32.totalorder %s21, 3
      %p178 = por %p176, %p177
      %p180 = scmp.ne.s32.totalorder %s165, %s179
      %p181 = scmp.eq.s32.totalorder %s21, 0
      %p182 = por %p180, %p181
      %s183 = ssub.s32 %s22, %s34
      %p184 = scmp.eq.s32.totalorder %s183, 0
      %s186 = sadd.s32 %s185, 1
      %s187 = scalar_select %p184, %s185, %s186
      %p190 = pneg %p184
      %p191 = scmp.eq.s32.totalorder %s15, 3
      %p192 = por %p190, %p191
      %p193 = scmp.ne.s32.totalorder %s185, %s188
      %p194 = scmp.eq.s32.totalorder %s15, 0
      %p195 = por %p193, %p194
      %p196 = scmp.ne.s32.totalorder %s185, %s188
      %p197 = scmp.eq.s32.totalorder %s20, 3
      %p198 = por %p196, %p197
      %p199 = scmp.ne.s32.totalorder %s188, %s189
      %p200 = scmp.eq.s32.totalorder %s20, 0
      %p201 = por %p199, %p200
      %p202 = scmp.ne.s32.totalorder %s188, %s189
      %p203 = scmp.eq.s32.totalorder %s21, 3
      %p204 = por %p202, %p203
      %p206 = scmp.ne.s32.totalorder %s189, %s205
      %p207 = scmp.eq.s32.totalorder %s21, 0
      %p208 = por %p206, %p207
      %p209 = scmp.le.s32.totalorder 1, %s15
      %p210 = scmp.lt.s32.totalorder %s15, 5
      %p211 = pnand %p209, %p210
      %p212 = pneg %p211
      // Predicated region
      $region9: #{mr_dual_hfd_forward.4} parent=5 // pred_check
        _
      $region10: #{mr_dual_hfd_forward.4} parent=5 // pred_check_branch
        %214 = sbr.rel (%p211) target = $region12
      $region11: #{mr_dual_hfd_forward.4} parent=5 // pred_region
        %s215 = ssub.s32 %s15, 1
        // Predicated region
        $region13: #{mr_dual_hfd_forward.4} parent=11 // pred_check
          %p216 = pneg %p154
        $region14: #{mr_dual_hfd_forward.4} parent=11 // pred_check_branch
          %218 = sbr.rel (%p216) target = $region16
        $region15: #{mr_dual_hfd_forward.4} parent=11 // pred_region
          _
        $region16: #{mr_dual_hfd_forward.4} parent=11 // pred_fallthru
          _
        // Predicated region
        $region17: #{mr_dual_hfd_forward.4} parent=11 // pred_check
          %p219 = pneg %p175
        $region18: #{mr_dual_hfd_forward.4} parent=11 // pred_check_branch
          %221 = sbr.rel (%p219) target = $region20
        $region19: #{mr_dual_hfd_forward.4} parent=11 // pred_region
          _
        $region20: #{mr_dual_hfd_forward.4} parent=11 // pred_fallthru
          _
      $region12: #{mr_dual_hfd_forward.4} parent=5 // pred_fallthru
        _
      %p222 = scmp.lt.s32.totalorder %s15, 4
      // Predicated region
      $region21: #{mr_dual_hfd_forward.4} parent=5 // pred_check
        %p223 = pneg %p222
      $region22: #{mr_dual_hfd_forward.4} parent=5 // pred_check_branch
        %225 = sbr.rel (%p223) target = $region24
      $region23: #{mr_dual_hfd_forward.4} parent=5 // pred_region
        // Predicated region
        $region25: #{mr_dual_hfd_forward.4} parent=23 // pred_check
          %p226 = pneg %p49
        $region26: #{mr_dual_hfd_forward.4} parent=23 // pred_check_branch
          %228 = sbr.rel (%p226) target = $region28
        $region27: #{mr_dual_hfd_forward.4} parent=23 // pred_region
          %s229 = sand.u32 %s39, 1
          %s230 = sand.u32 %s39, 1
          %s231 = smul.addr %s230, 256
          %s232 = scalar_lea.vmem [#allocation4], %s231
          %s233 = smul.u32 8, %s23
          %s234 = smul.u32 2, %s22
          %s235 = smul.addr %s233, 4
          %s236 = sadd.s32 %s234, %s235
          %s237 = smul.addr %s236, 8
          %s238 = scalar_lea.vmem %s0, %s237
          // Predicated region
          $region29: #{mr_dual_hfd_forward.4} parent=27 // pred_check
            _
          $region30: #{mr_dual_hfd_forward.4} parent=27 // pred_check_branch
            %240 = sbr.rel (0) target = $region32
          $region31: #{mr_dual_hfd_forward.4} parent=27 // pred_region
            // Predicated region
            $region33: #{mr_dual_hfd_forward.4} parent=31 // pred_check
              _
            $region34: #{mr_dual_hfd_forward.4} parent=31 // pred_check_branch
              %242 = sbr.rel (0) target = $region36
            $region35: #{mr_dual_hfd_forward.4} parent=31 // pred_region
              loop: start=0, step=1, limit=1
              $region37: #{mr_dual_hfd_forward.4} parent=35 // loop_pre_header
                _
              $region38: #{mr_dual_hfd_forward.4} parent=35 // loop_header
                %s244 = sphi 0, %s248
                %p245 = scmp.ge.s32.totalorder %s244, 1
                %s249 = sphi %s238, %s238
                %s250 = sphi %s232, %s232
              $region39: #{mr_dual_hfd_forward.4} parent=35 // loop_header_branch
                %247 = sbr.rel (%p245) target = $region43
              $region40: #{mr_dual_hfd_forward.4} parent=35 // loop_body
                %v251 = vld [vmem:[%s249] sm:$0xff]
                %252 = vst [vmem:[%s250] sm:$0xff] %v251
                %v253 = vld [vmem:[%s249 + $0x8] sm:$0xff]
                %254 = vst [vmem:[%s250 + $0x8] sm:$0xff] %v253
                %v255 = vld [vmem:[%s249 + $0x20] sm:$0xff]
                %256 = vst [vmem:[%s250 + $0x10] sm:$0xff] %v255
                %v257 = vld [vmem:[%s249 + $0x28] sm:$0xff]
                %258 = vst [vmem:[%s250 + $0x18] sm:$0xff] %v257
                %v259 = vld [vmem:[%s249 + $0x40] sm:$0xff]
                %260 = vst [vmem:[%s250 + $0x20] sm:$0xff] %v259
                %v261 = vld [vmem:[%s249 + $0x48] sm:$0xff]
                %262 = vst [vmem:[%s250 + $0x28] sm:$0xff] %v261
                %v263 = vld [vmem:[%s249 + $0x60] sm:$0xff]
                %264 = vst [vmem:[%s250 + $0x30] sm:$0xff] %v263
                %v265 = vld [vmem:[%s249 + $0x68] sm:$0xff]
                %266 = vst [vmem:[%s250 + $0x38] sm:$0xff] %v265
                %v267 = vld [vmem:[%s249 + $0x80] sm:$0xff]
                %268 = vst [vmem:[%s250 + $0x40] sm:$0xff] %v267
                %v269 = vld [vmem:[%s249 + $0x88] sm:$0xff]
                %270 = vst [vmem:[%s250 + $0x48] sm:$0xff] %v269
                %v271 = vld [vmem:[%s249 + $0xa0] sm:$0xff]
                %272 = vst [vmem:[%s250 + $0x50] sm:$0xff] %v271
                %v273 = vld [vmem:[%s249 + $0xa8] sm:$0xff]
                %274 = vst [vmem:[%s250 + $0x58] sm:$0xff] %v273
                %v275 = vld [vmem:[%s249 + $0xc0] sm:$0xff]
                %276 = vst [vmem:[%s250 + $0x60] sm:$0xff] %v275
                %v277 = vld [vmem:[%s249 + $0xc8] sm:$0xff]
                %278 = vst [vmem:[%s250 + $0x68] sm:$0xff] %v277
                %v279 = vld [vmem:[%s249 + $0xe0] sm:$0xff]
                %280 = vst [vmem:[%s250 + $0x70] sm:$0xff] %v279
                %v281 = vld [vmem:[%s249 + $0xe8] sm:$0xff]
                %282 = vst [vmem:[%s250 + $0x78] sm:$0xff] %v281
                %v283 = vld [vmem:[%s249 + $0x200] sm:$0xff]
                %284 = vst [vmem:[%s250 + $0x80] sm:$0xff] %v283
                %v285 = vld [vmem:[%s249 + $0x208] sm:$0xff]
                %286 = vst [vmem:[%s250 + $0x88] sm:$0xff] %v285
                %v287 = vld [vmem:[%s249 + $0x220] sm:$0xff]
                %288 = vst [vmem:[%s250 + $0x90] sm:$0xff] %v287
                %v289 = vld [vmem:[%s249 + $0x228] sm:$0xff]
                %290 = vst [vmem:[%s250 + $0x98] sm:$0xff] %v289
                %v291 = vld [vmem:[%s249 + $0x240] sm:$0xff]
                %292 = vst [vmem:[%s250 + $0xa0] sm:$0xff] %v291
                %v293 = vld [vmem:[%s249 + $0x248] sm:$0xff]
                %294 = vst [vmem:[%s250 + $0xa8] sm:$0xff] %v293
                %v295 = vld [vmem:[%s249 + $0x260] sm:$0xff]
                %296 = vst [vmem:[%s250 + $0xb0] sm:$0xff] %v295
                %v297 = vld [vmem:[%s249 + $0x268] sm:$0xff]
                %298 = vst [vmem:[%s250 + $0xb8] sm:$0xff] %v297
                %v299 = vld [vmem:[%s249 + $0x280] sm:$0xff]
                %300 = vst [vmem:[%s250 + $0xc0] sm:$0xff] %v299
                %v301 = vld [vmem:[%s249 + $0x288] sm:$0xff]
                %302 = vst [vmem:[%s250 + $0xc8] sm:$0xff] %v301
                %v303 = vld [vmem:[%s249 + $0x2a0] sm:$0xff]
                %304 = vst [vmem:[%s250 + $0xd0] sm:$0xff] %v303
                %v305 = vld [vmem:[%s249 + $0x2a8] sm:$0xff]
                %306 = vst [vmem:[%s250 + $0xd8] sm:$0xff] %v305
                %v307 = vld [vmem:[%s249 + $0x2c0] sm:$0xff]
                %308 = vst [vmem:[%s250 + $0xe0] sm:$0xff] %v307
                %v309 = vld [vmem:[%s249 + $0x2c8] sm:$0xff]
                %310 = vst [vmem:[%s250 + $0xe8] sm:$0xff] %v309
                %v311 = vld [vmem:[%s249 + $0x2e0] sm:$0xff]
                %312 = vst [vmem:[%s250 + $0xf0] sm:$0xff] %v311
                %v313 = vld [vmem:[%s249 + $0x2e8] sm:$0xff]
                %314 = vst [vmem:[%s250 + $0xf8] sm:$0xff] %v313
              $region41: #{mr_dual_hfd_forward.4} parent=35 // loop_footer
                %s248 = sadd.s32 1, %s244
              $region42: #{mr_dual_hfd_forward.4} parent=35 // loop_footer_branch
                %243 = sbr.rel target = $region38
              $region43: #{mr_dual_hfd_forward.4} parent=35 // loop_exit
                _
            $region36: #{mr_dual_hfd_forward.4} parent=31 // pred_fallthru
              _
            // Predicated region
            $region44: #{mr_dual_hfd_forward.4} parent=31 // pred_check
              _
            $region45: #{mr_dual_hfd_forward.4} parent=31 // pred_check_branch
              %316 = sbr.rel target = $region47
            $region46: #{mr_dual_hfd_forward.4} parent=31 // pred_region
              _
            $region47: #{mr_dual_hfd_forward.4} parent=31 // pred_fallthru
              _
          $region32: #{mr_dual_hfd_forward.4} parent=27 // pred_fallthru
            _
          %317 = vnop
        $region28: #{mr_dual_hfd_forward.4} parent=23 // pred_fallthru
          _
        // Predicated region
        $region48: #{mr_dual_hfd_forward.4} parent=23 // pred_check
          %p318 = pneg %p75
        $region49: #{mr_dual_hfd_forward.4} parent=23 // pred_check_branch
          %320 = sbr.rel (%p318) target = $region51
        $region50: #{mr_dual_hfd_forward.4} parent=23 // pred_region
          %s321 = smul.u32 32, %s23
          %p322 = scmp.lt.s32.totalorder %s321, 63
          %s323 = scalar_select %p322, %s321, 63
          %s324 = smul.addr %s323, 8
          %s325 = scalar_lea.vmem %s1, %s324
          %s326 = smul.u32 32, %s23
        $region51: #{mr_dual_hfd_forward.4} parent=23 // pred_fallthru
          _
        // Predicated region
        $region52: #{mr_dual_hfd_forward.4} parent=23 // pred_check
          %p327 = pneg %p101
        $region53: #{mr_dual_hfd_forward.4} parent=23 // pred_check_branch
          %329 = sbr.rel (%p327) target = $region55
        $region54: #{mr_dual_hfd_forward.4} parent=23 // pred_region
          %s330 = sand.u32 %s91, 1
          %s331 = sand.u32 %s91, 1
          %s332 = smul.addr %s331, 32
          %s333 = scalar_lea.vmem [#allocation5], %s332
          %s334 = smul.u32 2, %s22
          %s335 = smul.addr %s334, 8
          %s336 = scalar_lea.vmem %s2, %s335
          // Predicated region
          $region56: #{mr_dual_hfd_forward.4} parent=54 // pred_check
            _
          $region57: #{mr_dual_hfd_forward.4} parent=54 // pred_check_branch
            %338 = sbr.rel (0) target = $region59
          $region58: #{mr_dual_hfd_forward.4} parent=54 // pred_region
            // Predicated region
            $region60: #{mr_dual_hfd_forward.4} parent=58 // pred_check
              _
            $region61: #{mr_dual_hfd_forward.4} parent=58 // pred_check_branch
              %340 = sbr.rel (0) target = $region63
            $region62: #{mr_dual_hfd_forward.4} parent=58 // pred_region
              loop: start=0, step=1, limit=1
              $region64: #{mr_dual_hfd_forward.4} parent=62 // loop_pre_header
                _
              $region65: #{mr_dual_hfd_forward.4} parent=62 // loop_header
                %s342 = sphi 0, %s346
                %p343 = scmp.ge.s32.totalorder %s342, 1
                %s347 = sphi %s336, %s336
                %s348 = sphi %s333, %s333
              $region66: #{mr_dual_hfd_forward.4} parent=62 // loop_header_branch
                %345 = sbr.rel (%p343) target = $region70
              $region67: #{mr_dual_hfd_forward.4} parent=62 // loop_body
                %v349 = vld [vmem:[%s347] sm:$0xff]
                %350 = vst [vmem:[%s348] sm:$0xff] %v349
                %v351 = vld [vmem:[%s347 + $0x8] sm:$0xff]
                %352 = vst [vmem:[%s348 + $0x8] sm:$0xff] %v351
                %v353 = vld [vmem:[%s347 + $0x20] sm:$0xff]
                %354 = vst [vmem:[%s348 + $0x10] sm:$0xff] %v353
                %v355 = vld [vmem:[%s347 + $0x28] sm:$0xff]
                %356 = vst [vmem:[%s348 + $0x18] sm:$0xff] %v355
              $region68: #{mr_dual_hfd_forward.4} parent=62 // loop_footer
                %s346 = sadd.s32 1, %s342
              $region69: #{mr_dual_hfd_forward.4} parent=62 // loop_footer_branch
                %341 = sbr.rel target = $region65
              $region70: #{mr_dual_hfd_forward.4} parent=62 // loop_exit
                _
            $region63: #{mr_dual_hfd_forward.4} parent=58 // pred_fallthru
              _
            // Predicated region
            $region71: #{mr_dual_hfd_forward.4} parent=58 // pred_check
              _
            $region72: #{mr_dual_hfd_forward.4} parent=58 // pred_check_branch
              %358 = sbr.rel target = $region74
            $region73: #{mr_dual_hfd_forward.4} parent=58 // pred_region
              _
            $region74: #{mr_dual_hfd_forward.4} parent=58 // pred_fallthru
              _
          $region59: #{mr_dual_hfd_forward.4} parent=54 // pred_fallthru
            _
          %359 = vnop
        $region55: #{mr_dual_hfd_forward.4} parent=23 // pred_fallthru
          _
        // Predicated region
        $region75: #{mr_dual_hfd_forward.4} parent=23 // pred_check
          %p360 = pneg %p127
        $region76: #{mr_dual_hfd_forward.4} parent=23 // pred_check_branch
          %362 = sbr.rel (%p360) target = $region78
        $region77: #{mr_dual_hfd_forward.4} parent=23 // pred_region
          %s363 = sand.u32 %s117, 1
          %s364 = sand.u32 %s117, 1
          %s365 = smul.addr %s364, 64
          %s366 = scalar_lea.vmem [#allocation6], %s365
          %s367 = smul.u32 2, %s23
          %s368 = smul.addr %s367, 8
          %s369 = scalar_lea.vmem %s3, %s368
          // Predicated region
          $region79: #{mr_dual_hfd_forward.4} parent=77 // pred_check
            _
          $region80: #{mr_dual_hfd_forward.4} parent=77 // pred_check_branch
            %371 = sbr.rel (0) target = $region82
          $region81: #{mr_dual_hfd_forward.4} parent=77 // pred_region
            // Predicated region
            $region83: #{mr_dual_hfd_forward.4} parent=81 // pred_check
              _
            $region84: #{mr_dual_hfd_forward.4} parent=81 // pred_check_branch
              %373 = sbr.rel (0) target = $region86
            $region85: #{mr_dual_hfd_forward.4} parent=81 // pred_region
              loop: start=0, step=1, limit=1
              $region87: #{mr_dual_hfd_forward.4} parent=85 // loop_pre_header
                _
              $region88: #{mr_dual_hfd_forward.4} parent=85 // loop_header
                %s375 = sphi 0, %s379
                %p376 = scmp.ge.s32.totalorder %s375, 1
                %s380 = sphi %s369, %s369
                %s381 = sphi %s366, %s366
              $region89: #{mr_dual_hfd_forward.4} parent=85 // loop_header_branch
                %378 = sbr.rel (%p376) target = $region93
              $region90: #{mr_dual_hfd_forward.4} parent=85 // loop_body
                %v382 = vld [vmem:[%s380] sm:$0xff]
                %383 = vst [vmem:[%s381] sm:$0xff] %v382
                %v384 = vld [vmem:[%s380 + $0x8] sm:$0xff]
                %385 = vst [vmem:[%s381 + $0x8] sm:$0xff] %v384
                %v386 = vld [vmem:[%s380 + $0x20] sm:$0xff]
                %387 = vst [vmem:[%s381 + $0x10] sm:$0xff] %v386
                %v388 = vld [vmem:[%s380 + $0x28] sm:$0xff]
                %389 = vst [vmem:[%s381 + $0x18] sm:$0xff] %v388
                %v390 = vld [vmem:[%s380 + $0x40] sm:$0xff]
                %391 = vst [vmem:[%s381 + $0x20] sm:$0xff] %v390
                %v392 = vld [vmem:[%s380 + $0x48] sm:$0xff]
                %393 = vst [vmem:[%s381 + $0x28] sm:$0xff] %v392
                %v394 = vld [vmem:[%s380 + $0x60] sm:$0xff]
                %395 = vst [vmem:[%s381 + $0x30] sm:$0xff] %v394
                %v396 = vld [vmem:[%s380 + $0x68] sm:$0xff]
                %397 = vst [vmem:[%s381 + $0x38] sm:$0xff] %v396
              $region91: #{mr_dual_hfd_forward.4} parent=85 // loop_footer
                %s379 = sadd.s32 1, %s375
              $region92: #{mr_dual_hfd_forward.4} parent=85 // loop_footer_branch
                %374 = sbr.rel target = $region88
              $region93: #{mr_dual_hfd_forward.4} parent=85 // loop_exit
                _
            $region86: #{mr_dual_hfd_forward.4} parent=81 // pred_fallthru
              _
            // Predicated region
            $region94: #{mr_dual_hfd_forward.4} parent=81 // pred_check
              _
            $region95: #{mr_dual_hfd_forward.4} parent=81 // pred_check_branch
              %399 = sbr.rel target = $region97
            $region96: #{mr_dual_hfd_forward.4} parent=81 // pred_region
              _
            $region97: #{mr_dual_hfd_forward.4} parent=81 // pred_fallthru
              _
          $region82: #{mr_dual_hfd_forward.4} parent=77 // pred_fallthru
            _
          %400 = vnop
        $region78: #{mr_dual_hfd_forward.4} parent=23 // pred_fallthru
          _
      $region24: #{mr_dual_hfd_forward.4} parent=5 // pred_fallthru
        _
      %p401 = scmp.le.s32.totalorder 1, %s15
      %p402 = scmp.lt.s32.totalorder %s15, 5
      %p403 = pnand %p401, %p402
      %p404 = pneg %p403
      // Predicated region
      $region98: #{mr_dual_hfd_forward.4} parent=5 // pred_check
        _
      $region99: #{mr_dual_hfd_forward.4} parent=5 // pred_check_branch
        %406 = sbr.rel (%p403) target = $region101
      $region100: #{mr_dual_hfd_forward.4} parent=5 // pred_region
        %s407 = ssub.s32 %s15, 1
        %s408 = sand.u32 %s42, 1
        %s409 = sand.u32 %s42, 1
        %s410 = smul.addr %s409, 256
        %s411 = scalar_lea.vmem [#allocation4], %s410
        // Predicated region
        $region102: #{mr_dual_hfd_forward.4} parent=100 // pred_check
          %p412 = pneg %p55
        $region103: #{mr_dual_hfd_forward.4} parent=100 // pred_check_branch
          %414 = sbr.rel (%p412) target = $region105
        $region104: #{mr_dual_hfd_forward.4} parent=100 // pred_region
          _
        $region105: #{mr_dual_hfd_forward.4} parent=100 // pred_fallthru
          _
        %s415 = sand.u32 %s94, 1
        %s416 = sand.u32 %s94, 1
        %s417 = smul.addr %s416, 32
        %s418 = scalar_lea.vmem [#allocation5], %s417
        // Predicated region
        $region106: #{mr_dual_hfd_forward.4} parent=100 // pred_check
          %p419 = pneg %p107
        $region107: #{mr_dual_hfd_forward.4} parent=100 // pred_check_branch
          %421 = sbr.rel (%p419) target = $region109
        $region108: #{mr_dual_hfd_forward.4} parent=100 // pred_region
          _
        $region109: #{mr_dual_hfd_forward.4} parent=100 // pred_fallthru
          _
        %s422 = sand.u32 %s120, 1
        %s423 = sand.u32 %s120, 1
        %s424 = smul.addr %s423, 64
        %s425 = scalar_lea.vmem [#allocation6], %s424
        // Predicated region
        $region110: #{mr_dual_hfd_forward.4} parent=100 // pred_check
          %p426 = pneg %p133
        $region111: #{mr_dual_hfd_forward.4} parent=100 // pred_check_branch
          %428 = sbr.rel (%p426) target = $region113
        $region112: #{mr_dual_hfd_forward.4} parent=100 // pred_region
          _
        $region113: #{mr_dual_hfd_forward.4} parent=100 // pred_fallthru
          _
        %s429 = sand.u32 %s42, 1
        %s430 = sand.u32 %s42, 1
        %s431 = smul.addr %s430, 256
        %s432 = scalar_lea.vmem [#allocation4], %s431
        %p433 = pneg %p55
        %p434 = pneg %p52
        %s435 = smul.u32 32, %s25
        %p436 = scmp.lt.s32.totalorder %s435, 63
        %s437 = scalar_select %p436, %s435, 63
        %s438 = smul.addr %s437, 8
        %s439 = scalar_lea.vmem %s1, %s438
        %p440 = pneg %p81
        %p441 = pneg %p78
        %s442 = sand.u32 %s94, 1
        %s443 = sand.u32 %s94, 1
        %s444 = smul.addr %s443, 32
        %s445 = scalar_lea.vmem [#allocation5], %s444
        %p446 = pneg %p107
        %p447 = pneg %p104
        %s448 = sand.u32 %s120, 1
        %s449 = sand.u32 %s120, 1
        %s450 = smul.addr %s449, 64
        %s451 = scalar_lea.vmem [#allocation6], %s450
        %p452 = pneg %p133
        %p453 = pneg %p130
        %p454 = pneg %p154
        %p455 = pneg %p151
        %p456 = pneg %p175
        %p457 = pneg %p172
        %p458 = pneg %p201
        %p459 = pneg %p198
        %s460 = sand.u32 %s188, 1
        %s461 = scalar_lea.sflag [#allocation8], %s460
        %s462 = sand.u32 %s188, 1
        %s463 = smul.addr %s462, 16
        %s464 = scalar_lea.vmem [#allocation7], %s463
        %s465 = smul.u32 8, %s25
        %s466 = smul.u32 2, %s24
        %s467 = smul.u32 32, %s25
        %p468 = scmp.lt.s32.totalorder %s467, 63
        %s469 = scalar_select %p468, %s467, 63
        %s470 = smul.addr %s469, 8
        %s471 = scalar_lea.vmem %s1, %s470
        %s472 = smul.u32 32, %s25
        %s473 = smul.u32 2, %s24
        %s474 = smul.u32 2, %s25
        %s475 = smul.u32 2, %s24
        %p476 = scmp.eq.s32.totalorder %s25, 0
        // Predicated region
        $region114: #{mr_dual_hfd_forward.4} parent=100 // pred_check
          %p477 = pneg %p476
        $region115: #{mr_dual_hfd_forward.4} parent=100 // pred_check_branch
          %479 = sbr.rel (%p477) target = $region117
        $region116: #{mr_dual_hfd_forward.4} parent=100 // pred_region
          %480 = vst [vmem:[#allocation2] sm:$0xff] 0.0
          %481 = vst [vmem:[#allocation3] sm:$0xff] 0.0
          %482 = vst [vmem:[#allocation3 + $0x8] sm:$0xff] 0.0
          %483 = vst [vmem:[#allocation3 + $0x10] sm:$0xff] 0.0
          %484 = vst [vmem:[#allocation3 + $0x18] sm:$0xff] 0.0
          %485 = vst [vmem:[#allocation3 + $0x20] sm:$0xff] 0.0
          %486 = vst [vmem:[#allocation3 + $0x28] sm:$0xff] 0.0
          %487 = vst [vmem:[#allocation3 + $0x30] sm:$0xff] 0.0
          %488 = vst [vmem:[#allocation3 + $0x38] sm:$0xff] 0.0
        $region117: #{mr_dual_hfd_forward.4} parent=100 // pred_fallthru
          _
        %v489 = vld [vmem:[%s471] sm:$0xff]
        %v490 = vld [vmem:[%s471 + $0x8] sm:$0xff]
        %v491 = vld [vmem:[%s471 + $0x10] sm:$0xff]
        %v492 = vld [vmem:[%s471 + $0x18] sm:$0xff]
        %v493 = vld [vmem:[%s471 + $0x20] sm:$0xff]
        %v494 = vld [vmem:[%s471 + $0x28] sm:$0xff]
        %v495 = vld [vmem:[%s471 + $0x30] sm:$0xff]
        %v496 = vld [vmem:[%s471 + $0x38] sm:$0xff]
        %v497 = vld [vmem:[%s471 + $0x40] sm:$0xff]
        %v498 = vld [vmem:[%s471 + $0x48] sm:$0xff]
        %v499 = vld [vmem:[%s471 + $0x50] sm:$0xff]
        %v500 = vld [vmem:[%s471 + $0x58] sm:$0xff]
        %v501 = vld [vmem:[%s471 + $0x60] sm:$0xff]
        %v502 = vld [vmem:[%s471 + $0x68] sm:$0xff]
        %v503 = vld [vmem:[%s471 + $0x70] sm:$0xff]
        %v504 = vld [vmem:[%s471 + $0x78] sm:$0xff]
        %v505 = vld [vmem:[%s471 + $0x80] sm:$0xff]
        %v506 = vld [vmem:[%s471 + $0x88] sm:$0xff]
        %v507 = vld [vmem:[%s471 + $0x90] sm:$0xff]
        %v508 = vld [vmem:[%s471 + $0x98] sm:$0xff]
        %v509 = vld [vmem:[%s471 + $0xa0] sm:$0xff]
        %v510 = vld [vmem:[%s471 + $0xa8] sm:$0xff]
        %v511 = vld [vmem:[%s471 + $0xb0] sm:$0xff]
        %v512 = vld [vmem:[%s471 + $0xb8] sm:$0xff]
        %v513 = vld [vmem:[%s471 + $0xc0] sm:$0xff]
        %v514 = vld [vmem:[%s471 + $0xc8] sm:$0xff]
        %v515 = vld [vmem:[%s471 + $0xd0] sm:$0xff]
        %v516 = vld [vmem:[%s471 + $0xd8] sm:$0xff]
        %v517 = vld [vmem:[%s471 + $0xe0] sm:$0xff]
        %v518 = vld [vmem:[%s471 + $0xe8] sm:$0xff]
        %v519 = vld [vmem:[%s471 + $0xf0] sm:$0xff]
        %v520 = vld [vmem:[%s471 + $0xf8] sm:$0xff]
        %s521 = scalar_lea.vmem %s418, 4 [#allocation5]
        %v522 = vld [vmem:[%s521] ss:$8 sm:$0x3]
        %524 = vset.pattern.permute.xlu0 4
        %525 = vperm.xlu0 %524, %v489
        %v526 = vpop.permute.xlu0 %525
        %529 = vset.pattern.permute.xlu0 4
        %530 = vperm.xlu0 %529, %v490
        %v531 = vpop.permute.xlu0 %530
        %534 = vset.pattern.permute.xlu0 4
        %535 = vperm.xlu0 %534, %v491
        %v536 = vpop.permute.xlu0 %535
        %539 = vset.pattern.permute.xlu0 4
        %540 = vperm.xlu0 %539, %v492
        %v541 = vpop.permute.xlu0 %540
        %544 = vset.pattern.permute.xlu0 4
        %545 = vperm.xlu0 %544, %v493
        %v546 = vpop.permute.xlu0 %545
        %549 = vset.pattern.permute.xlu0 4
        %550 = vperm.xlu0 %549, %v494
        %v551 = vpop.permute.xlu0 %550
        %554 = vset.pattern.permute.xlu0 4
        %555 = vperm.xlu0 %554, %v495
        %v556 = vpop.permute.xlu0 %555
        %559 = vset.pattern.permute.xlu0 4
        %560 = vperm.xlu0 %559, %v496
        %v561 = vpop.permute.xlu0 %560
        %564 = vset.pattern.permute.xlu0 4
        %565 = vperm.xlu0 %564, %v497
        %v566 = vpop.permute.xlu0 %565
        %569 = vset.pattern.permute.xlu0 4
        %570 = vperm.xlu0 %569, %v498
        %v571 = vpop.permute.xlu0 %570
        %574 = vset.pattern.permute.xlu0 4
        %575 = vperm.xlu0 %574, %v499
        %v576 = vpop.permute.xlu0 %575
        %579 = vset.pattern.permute.xlu0 4
        %580 = vperm.xlu0 %579, %v500
        %v581 = vpop.permute.xlu0 %580
        %584 = vset.pattern.permute.xlu0 4
        %585 = vperm.xlu0 %584, %v501
        %v586 = vpop.permute.xlu0 %585
        %589 = vset.pattern.permute.xlu0 4
        %590 = vperm.xlu0 %589, %v502
        %v591 = vpop.permute.xlu0 %590
        %594 = vset.pattern.permute.xlu0 4
        %595 = vperm.xlu0 %594, %v503
        %v596 = vpop.permute.xlu0 %595
        %599 = vset.pattern.permute.xlu0 4
        %600 = vperm.xlu0 %599, %v504
        %v601 = vpop.permute.xlu0 %600
        %604 = vset.pattern.permute.xlu0 4
        %605 = vperm.xlu0 %604, %v505
        %v606 = vpop.permute.xlu0 %605
        %609 = vset.pattern.permute.xlu0 4
        %610 = vperm.xlu0 %609, %v506
        %v611 = vpop.permute.xlu0 %610
        %614 = vset.pattern.permute.xlu0 4
        %615 = vperm.xlu0 %614, %v507
        %v616 = vpop.permute.xlu0 %615
        %619 = vset.pattern.permute.xlu0 4
        %620 = vperm.xlu0 %619, %v508
        %v621 = vpop.permute.xlu0 %620
        %624 = vset.pattern.permute.xlu0 4
        %625 = vperm.xlu0 %624, %v509
        %v626 = vpop.permute.xlu0 %625
        %629 = vset.pattern.permute.xlu0 4
        %630 = vperm.xlu0 %629, %v510
        %v631 = vpop.permute.xlu0 %630
        %634 = vset.pattern.permute.xlu0 4
        %635 = vperm.xlu0 %634, %v511
        %v636 = vpop.permute.xlu0 %635
        %639 = vset.pattern.permute.xlu0 4
        %640 = vperm.xlu0 %639, %v512
        %v641 = vpop.permute.xlu0 %640
        %644 = vset.pattern.permute.xlu0 4
        %645 = vperm.xlu0 %644, %v513
        %v646 = vpop.permute.xlu0 %645
        %649 = vset.pattern.permute.xlu0 4
        %650 = vperm.xlu0 %649, %v514
        %v651 = vpop.permute.xlu0 %650
        %654 = vset.pattern.permute.xlu0 4
        %655 = vperm.xlu0 %654, %v515
        %v656 = vpop.permute.xlu0 %655
        %659 = vset.pattern.permute.xlu0 4
        %660 = vperm.xlu0 %659, %v516
        %v661 = vpop.permute.xlu0 %660
        %664 = vset.pattern.permute.xlu0 4
        %665 = vperm.xlu0 %664, %v517
        %v666 = vpop.permute.xlu0 %665
        %669 = vset.pattern.permute.xlu0 4
        %670 = vperm.xlu0 %669, %v518
        %v671 = vpop.permute.xlu0 %670
        %674 = vset.pattern.permute.xlu0 4
        %675 = vperm.xlu0 %674, %v519
        %v676 = vpop.permute.xlu0 %675
        %679 = vset.pattern.permute.xlu0 4
        %680 = vperm.xlu0 %679, %v520
        %v681 = vpop.permute.xlu0 %680
        %v684 = vperm.slane %v522, 0
        %v685 = vperm.slane %v522, 1
        %v688 = vadd.f32 %v526, %v684
        %v689 = vadd.f32 %v526, %v685
        %v690 = vadd.f32 %v531, %v684
        %v691 = vadd.f32 %v531, %v685
        %v692 = vadd.f32 %v536, %v684
        %v693 = vadd.f32 %v536, %v685
        %v694 = vadd.f32 %v541, %v684
        %v695 = vadd.f32 %v541, %v685
        %v696 = vadd.f32 %v546, %v684
        %v697 = vadd.f32 %v546, %v685
        %v698 = vadd.f32 %v551, %v684
        %v699 = vadd.f32 %v551, %v685
        %v700 = vadd.f32 %v556, %v684
        %v701 = vadd.f32 %v556, %v685
        %v702 = vadd.f32 %v561, %v684
        %v703 = vadd.f32 %v561, %v685
        %v704 = vadd.f32 %v566, %v684
        %v705 = vadd.f32 %v566, %v685
        %v706 = vadd.f32 %v571, %v684
        %v707 = vadd.f32 %v571, %v685
        %v708 = vadd.f32 %v576, %v684
        %v709 = vadd.f32 %v576, %v685
        %v710 = vadd.f32 %v581, %v684
        %v711 = vadd.f32 %v581, %v685
        %v712 = vadd.f32 %v586, %v684
        %v713 = vadd.f32 %v586, %v685
        %v714 = vadd.f32 %v591, %v684
        %v715 = vadd.f32 %v591, %v685
        %v716 = vadd.f32 %v596, %v684
        %v717 = vadd.f32 %v596, %v685
        %v718 = vadd.f32 %v601, %v684
        %v719 = vadd.f32 %v601, %v685
        %v720 = vadd.f32 %v606, %v684
        %v721 = vadd.f32 %v606, %v685
        %v722 = vadd.f32 %v611, %v684
        %v723 = vadd.f32 %v611, %v685
        %v724 = vadd.f32 %v616, %v684
        %v725 = vadd.f32 %v616, %v685
        %v726 = vadd.f32 %v621, %v684
        %v727 = vadd.f32 %v621, %v685
        %v728 = vadd.f32 %v626, %v684
        %v729 = vadd.f32 %v626, %v685
        %v730 = vadd.f32 %v631, %v684
        %v731 = vadd.f32 %v631, %v685
        %v732 = vadd.f32 %v636, %v684
        %v733 = vadd.f32 %v636, %v685
        %v734 = vadd.f32 %v641, %v684
        %v735 = vadd.f32 %v641, %v685
        %v736 = vadd.f32 %v646, %v684
        %v737 = vadd.f32 %v646, %v685
        %v738 = vadd.f32 %v651, %v684
        %v739 = vadd.f32 %v651, %v685
        %v740 = vadd.f32 %v656, %v684
        %v741 = vadd.f32 %v656, %v685
        %v742 = vadd.f32 %v661, %v684
        %v743 = vadd.f32 %v661, %v685
        %v744 = vadd.f32 %v666, %v684
        %v745 = vadd.f32 %v666, %v685
        %v746 = vadd.f32 %v671, %v684
        %v747 = vadd.f32 %v671, %v685
        %v748 = vadd.f32 %v676, %v684
        %v749 = vadd.f32 %v676, %v685
        %v750 = vadd.f32 %v681, %v684
        %v751 = vadd.f32 %v681, %v685
        %v752 = vtanh.pop %v688
        %v753 = vtanh.pop %v689
        %v754 = vtanh.pop %v690
        %v755 = vtanh.pop %v691
        %v756 = vtanh.pop %v692
        %v757 = vtanh.pop %v693
        %v758 = vtanh.pop %v694
        %v759 = vtanh.pop %v695
        %v760 = vtanh.pop %v696
        %v761 = vtanh.pop %v697
        %v762 = vtanh.pop %v698
        %v763 = vtanh.pop %v699
        %v764 = vtanh.pop %v700
        %v765 = vtanh.pop %v701
        %v766 = vtanh.pop %v702
        %v767 = vtanh.pop %v703
        %v768 = vtanh.pop %v704
        %v769 = vtanh.pop %v705
        %v770 = vtanh.pop %v706
        %v771 = vtanh.pop %v707
        %v772 = vtanh.pop %v708
        %v773 = vtanh.pop %v709
        %v774 = vtanh.pop %v710
        %v775 = vtanh.pop %v711
        %v776 = vtanh.pop %v712
        %v777 = vtanh.pop %v713
        %v778 = vtanh.pop %v714
        %v779 = vtanh.pop %v715
        %v780 = vtanh.pop %v716
        %v781 = vtanh.pop %v717
        %v782 = vtanh.pop %v718
        %v783 = vtanh.pop %v719
        %v784 = vtanh.pop %v720
        %v785 = vtanh.pop %v721
        %v786 = vtanh.pop %v722
        %v787 = vtanh.pop %v723
        %v788 = vtanh.pop %v724
        %v789 = vtanh.pop %v725
        %v790 = vtanh.pop %v726
        %v791 = vtanh.pop %v727
        %v792 = vtanh.pop %v728
        %v793 = vtanh.pop %v729
        %v794 = vtanh.pop %v730
        %v795 = vtanh.pop %v731
        %v796 = vtanh.pop %v732
        %v797 = vtanh.pop %v733
        %v798 = vtanh.pop %v734
        %v799 = vtanh.pop %v735
        %v800 = vtanh.pop %v736
        %v801 = vtanh.pop %v737
        %v802 = vtanh.pop %v738
        %v803 = vtanh.pop %v739
        %v804 = vtanh.pop %v740
        %v805 = vtanh.pop %v741
        %v806 = vtanh.pop %v742
        %v807 = vtanh.pop %v743
        %v808 = vtanh.pop %v744
        %v809 = vtanh.pop %v745
        %v810 = vtanh.pop %v746
        %v811 = vtanh.pop %v747
        %v812 = vtanh.pop %v748
        %v813 = vtanh.pop %v749
        %v814 = vtanh.pop %v750
        %v815 = vtanh.pop %v751
        %v816 = vld [vmem:[%s411] sm:$0xff]
        %v817 = vld [vmem:[%s411 + $0x8] sm:$0xff]
        %v818 = vld [vmem:[%s411 + $0x10] sm:$0xff]
        %v819 = vld [vmem:[%s411 + $0x18] sm:$0xff]
        %v820 = vld [vmem:[%s411 + $0x20] sm:$0xff]
        %v821 = vld [vmem:[%s411 + $0x28] sm:$0xff]
        %v822 = vld [vmem:[%s411 + $0x30] sm:$0xff]
        %v823 = vld [vmem:[%s411 + $0x38] sm:$0xff]
        %v824 = vld [vmem:[%s411 + $0x40] sm:$0xff]
        %v825 = vld [vmem:[%s411 + $0x48] sm:$0xff]
        %v826 = vld [vmem:[%s411 + $0x50] sm:$0xff]
        %v827 = vld [vmem:[%s411 + $0x58] sm:$0xff]
        %v828 = vld [vmem:[%s411 + $0x60] sm:$0xff]
        %v829 = vld [vmem:[%s411 + $0x68] sm:$0xff]
        %v830 = vld [vmem:[%s411 + $0x70] sm:$0xff]
        %v831 = vld [vmem:[%s411 + $0x78] sm:$0xff]
        %v832 = vunpack.c.0.s8 %v816
        %v833 = vunpack.c.0.s8 %v817
        %v834 = vunpack.c.1.s8 %v816
        %v835 = vunpack.c.1.s8 %v817
        %v836 = vunpack.c.2.s8 %v816
        %v837 = vunpack.c.2.s8 %v817
        %v838 = vunpack.c.3.s8 %v816
        %v839 = vunpack.c.3.s8 %v817
        %v840 = vunpack.c.0.s8 %v818
        %v841 = vunpack.c.0.s8 %v819
        %v842 = vunpack.c.1.s8 %v818
        %v843 = vunpack.c.1.s8 %v819
        %v844 = vunpack.c.2.s8 %v818
        %v845 = vunpack.c.2.s8 %v819
        %v846 = vunpack.c.3.s8 %v818
        %v847 = vunpack.c.3.s8 %v819
        %v848 = vunpack.c.0.s8 %v820
        %v849 = vunpack.c.0.s8 %v821
        %v850 = vunpack.c.1.s8 %v820
        %v851 = vunpack.c.1.s8 %v821
        %v852 = vunpack.c.2.s8 %v820
        %v853 = vunpack.c.2.s8 %v821
        %v854 = vunpack.c.3.s8 %v820
        %v855 = vunpack.c.3.s8 %v821
        %v856 = vunpack.c.0.s8 %v822
        %v857 = vunpack.c.0.s8 %v823
        %v858 = vunpack.c.1.s8 %v822
        %v859 = vunpack.c.1.s8 %v823
        %v860 = vunpack.c.2.s8 %v822
        %v861 = vunpack.c.2.s8 %v823
        %v862 = vunpack.c.3.s8 %v822
        %v863 = vunpack.c.3.s8 %v823
        %v864 = vunpack.c.0.s8 %v824
        %v865 = vunpack.c.0.s8 %v825
        %v866 = vunpack.c.1.s8 %v824
        %v867 = vunpack.c.1.s8 %v825
        %v868 = vunpack.c.2.s8 %v824
        %v869 = vunpack.c.2.s8 %v825
        %v870 = vunpack.c.3.s8 %v824
        %v871 = vunpack.c.3.s8 %v825
        %v872 = vunpack.c.0.s8 %v826
        %v873 = vunpack.c.0.s8 %v827
        %v874 = vunpack.c.1.s8 %v826
        %v875 = vunpack.c.1.s8 %v827
        %v876 = vunpack.c.2.s8 %v826
        %v877 = vunpack.c.2.s8 %v827
        %v878 = vunpack.c.3.s8 %v826
        %v879 = vunpack.c.3.s8 %v827
        %v880 = vunpack.c.0.s8 %v828
        %v881 = vunpack.c.0.s8 %v829
        %v882 = vunpack.c.1.s8 %v828
        %v883 = vunpack.c.1.s8 %v829
        %v884 = vunpack.c.2.s8 %v828
        %v885 = vunpack.c.2.s8 %v829
        %v886 = vunpack.c.3.s8 %v828
        %v887 = vunpack.c.3.s8 %v829
        %v888 = vunpack.c.0.s8 %v830
        %v889 = vunpack.c.0.s8 %v831
        %v890 = vunpack.c.1.s8 %v830
        %v891 = vunpack.c.1.s8 %v831
        %v892 = vunpack.c.2.s8 %v830
        %v893 = vunpack.c.2.s8 %v831
        %v894 = vunpack.c.3.s8 %v830
        %v895 = vunpack.c.3.s8 %v831
        %v896 = vcvt.s32.f32 %v832
        %v897 = vcvt.s32.f32 %v833
        %v898 = vcvt.s32.f32 %v834
        %v899 = vcvt.s32.f32 %v835
        %v900 = vcvt.s32.f32 %v836
        %v901 = vcvt.s32.f32 %v837
        %v902 = vcvt.s32.f32 %v838
        %v903 = vcvt.s32.f32 %v839
        %v904 = vcvt.s32.f32 %v840
        %v905 = vcvt.s32.f32 %v841
        %v906 = vcvt.s32.f32 %v842
        %v907 = vcvt.s32.f32 %v843
        %v908 = vcvt.s32.f32 %v844
        %v909 = vcvt.s32.f32 %v845
        %v910 = vcvt.s32.f32 %v846
        %v911 = vcvt.s32.f32 %v847
        %v912 = vcvt.s32.f32 %v848
        %v913 = vcvt.s32.f32 %v849
        %v914 = vcvt.s32.f32 %v850
        %v915 = vcvt.s32.f32 %v851
        %v916 = vcvt.s32.f32 %v852
        %v917 = vcvt.s32.f32 %v853
        %v918 = vcvt.s32.f32 %v854
        %v919 = vcvt.s32.f32 %v855
        %v920 = vcvt.s32.f32 %v856
        %v921 = vcvt.s32.f32 %v857
        %v922 = vcvt.s32.f32 %v858
        %v923 = vcvt.s32.f32 %v859
        %v924 = vcvt.s32.f32 %v860
        %v925 = vcvt.s32.f32 %v861
        %v926 = vcvt.s32.f32 %v862
        %v927 = vcvt.s32.f32 %v863
        %v928 = vcvt.s32.f32 %v864
        %v929 = vcvt.s32.f32 %v865
        %v930 = vcvt.s32.f32 %v866
        %v931 = vcvt.s32.f32 %v867
        %v932 = vcvt.s32.f32 %v868
        %v933 = vcvt.s32.f32 %v869
        %v934 = vcvt.s32.f32 %v870
        %v935 = vcvt.s32.f32 %v871
        %v936 = vcvt.s32.f32 %v872
        %v937 = vcvt.s32.f32 %v873
        %v938 = vcvt.s32.f32 %v874
        %v939 = vcvt.s32.f32 %v875
        %v940 = vcvt.s32.f32 %v876
        %v941 = vcvt.s32.f32 %v877
        %v942 = vcvt.s32.f32 %v878
        %v943 = vcvt.s32.f32 %v879
        %v944 = vcvt.s32.f32 %v880
        %v945 = vcvt.s32.f32 %v881
        %v946 = vcvt.s32.f32 %v882
        %v947 = vcvt.s32.f32 %v883
        %v948 = vcvt.s32.f32 %v884
        %v949 = vcvt.s32.f32 %v885
        %v950 = vcvt.s32.f32 %v886
        %v951 = vcvt.s32.f32 %v887
        %v952 = vcvt.s32.f32 %v888
        %v953 = vcvt.s32.f32 %v889
        %v954 = vcvt.s32.f32 %v890
        %v955 = vcvt.s32.f32 %v891
        %v956 = vcvt.s32.f32 %v892
        %v957 = vcvt.s32.f32 %v893
        %v958 = vcvt.s32.f32 %v894
        %v959 = vcvt.s32.f32 %v895
        %960 = vset.pattern.permute.xlu0 0
        %961 = vperm.xlu0 %960, %v489
        %v962 = vpop.permute.xlu0 %961
        %964 = vset.pattern.permute.xlu0 0
        %965 = vperm.xlu0 %964, %v490
        %v966 = vpop.permute.xlu0 %965
        %968 = vset.pattern.permute.xlu0 0
        %969 = vperm.xlu0 %968, %v491
        %v970 = vpop.permute.xlu0 %969
        %972 = vset.pattern.permute.xlu0 0
        %973 = vperm.xlu0 %972, %v492
        %v974 = vpop.permute.xlu0 %973
        %976 = vset.pattern.permute.xlu0 0
        %977 = vperm.xlu0 %976, %v493
        %v978 = vpop.permute.xlu0 %977
        %980 = vset.pattern.permute.xlu0 0
        %981 = vperm.xlu0 %980, %v494
        %v982 = vpop.permute.xlu0 %981
        %984 = vset.pattern.permute.xlu0 0
        %985 = vperm.xlu0 %984, %v495
        %v986 = vpop.permute.xlu0 %985
        %988 = vset.pattern.permute.xlu0 0
        %989 = vperm.xlu0 %988, %v496
        %v990 = vpop.permute.xlu0 %989
        %992 = vset.pattern.permute.xlu0 0
        %993 = vperm.xlu0 %992, %v497
        %v994 = vpop.permute.xlu0 %993
        %996 = vset.pattern.permute.xlu0 0
        %997 = vperm.xlu0 %996, %v498
        %v998 = vpop.permute.xlu0 %997
        %1000 = vset.pattern.permute.xlu0 0
        %1001 = vperm.xlu0 %1000, %v499
        %v1002 = vpop.permute.xlu0 %1001
        %1004 = vset.pattern.permute.xlu0 0
        %1005 = vperm.xlu0 %1004, %v500
        %v1006 = vpop.permute.xlu0 %1005
        %1008 = vset.pattern.permute.xlu0 0
        %1009 = vperm.xlu0 %1008, %v501
        %v1010 = vpop.permute.xlu0 %1009
        %1012 = vset.pattern.permute.xlu0 0
        %1013 = vperm.xlu0 %1012, %v502
        %v1014 = vpop.permute.xlu0 %1013
        %1016 = vset.pattern.permute.xlu0 0
        %1017 = vperm.xlu0 %1016, %v503
        %v1018 = vpop.permute.xlu0 %1017
        %1020 = vset.pattern.permute.xlu0 0
        %1021 = vperm.xlu0 %1020, %v504
        %v1022 = vpop.permute.xlu0 %1021
        %1024 = vset.pattern.permute.xlu0 0
        %1025 = vperm.xlu0 %1024, %v505
        %v1026 = vpop.permute.xlu0 %1025
        %1028 = vset.pattern.permute.xlu0 0
        %1029 = vperm.xlu0 %1028, %v506
        %v1030 = vpop.permute.xlu0 %1029
        %1032 = vset.pattern.permute.xlu0 0
        %1033 = vperm.xlu0 %1032, %v507
        %v1034 = vpop.permute.xlu0 %1033
        %1036 = vset.pattern.permute.xlu0 0
        %1037 = vperm.xlu0 %1036, %v508
        %v1038 = vpop.permute.xlu0 %1037
        %1040 = vset.pattern.permute.xlu0 0
        %1041 = vperm.xlu0 %1040, %v509
        %v1042 = vpop.permute.xlu0 %1041
        %1044 = vset.pattern.permute.xlu0 0
        %1045 = vperm.xlu0 %1044, %v510
        %v1046 = vpop.permute.xlu0 %1045
        %1048 = vset.pattern.permute.xlu0 0
        %1049 = vperm.xlu0 %1048, %v511
        %v1050 = vpop.permute.xlu0 %1049
        %1052 = vset.pattern.permute.xlu0 0
        %1053 = vperm.xlu0 %1052, %v512
        %v1054 = vpop.permute.xlu0 %1053
        %1056 = vset.pattern.permute.xlu0 0
        %1057 = vperm.xlu0 %1056, %v513
        %v1058 = vpop.permute.xlu0 %1057
        %1060 = vset.pattern.permute.xlu0 0
        %1061 = vperm.xlu0 %1060, %v514
        %v1062 = vpop.permute.xlu0 %1061
        %1064 = vset.pattern.permute.xlu0 0
        %1065 = vperm.xlu0 %1064, %v515
        %v1066 = vpop.permute.xlu0 %1065
        %1068 = vset.pattern.permute.xlu0 0
        %1069 = vperm.xlu0 %1068, %v516
        %v1070 = vpop.permute.xlu0 %1069
        %1072 = vset.pattern.permute.xlu0 0
        %1073 = vperm.xlu0 %1072, %v517
        %v1074 = vpop.permute.xlu0 %1073
        %1076 = vset.pattern.permute.xlu0 0
        %1077 = vperm.xlu0 %1076, %v518
        %v1078 = vpop.permute.xlu0 %1077
        %1080 = vset.pattern.permute.xlu0 0
        %1081 = vperm.xlu0 %1080, %v519
        %v1082 = vpop.permute.xlu0 %1081
        %1084 = vset.pattern.permute.xlu0 0
        %1085 = vperm.xlu0 %1084, %v520
        %v1086 = vpop.permute.xlu0 %1085
        %v1088 = vmul.f32 %v752, %v962
        %v1089 = vmul.f32 %v753, %v962
        %v1090 = vmul.f32 %v754, %v966
        %v1091 = vmul.f32 %v755, %v966
        %v1092 = vmul.f32 %v756, %v970
        %v1093 = vmul.f32 %v757, %v970
        %v1094 = vmul.f32 %v758, %v974
        %v1095 = vmul.f32 %v759, %v974
        %v1096 = vmul.f32 %v760, %v978
        %v1097 = vmul.f32 %v761, %v978
        %v1098 = vmul.f32 %v762, %v982
        %v1099 = vmul.f32 %v763, %v982
        %v1100 = vmul.f32 %v764, %v986
        %v1101 = vmul.f32 %v765, %v986
        %v1102 = vmul.f32 %v766, %v990
        %v1103 = vmul.f32 %v767, %v990
        %v1104 = vmul.f32 %v768, %v994
        %v1105 = vmul.f32 %v769, %v994
        %v1106 = vmul.f32 %v770, %v998
        %v1107 = vmul.f32 %v771, %v998
        %v1108 = vmul.f32 %v772, %v1002
        %v1109 = vmul.f32 %v773, %v1002
        %v1110 = vmul.f32 %v774, %v1006
        %v1111 = vmul.f32 %v775, %v1006
        %v1112 = vmul.f32 %v776, %v1010
        %v1113 = vmul.f32 %v777, %v1010
        %v1114 = vmul.f32 %v778, %v1014
        %v1115 = vmul.f32 %v779, %v1014
        %v1116 = vmul.f32 %v780, %v1018
        %v1117 = vmul.f32 %v781, %v1018
        %v1118 = vmul.f32 %v782, %v1022
        %v1119 = vmul.f32 %v783, %v1022
        %v1120 = vmul.f32 %v784, %v1026
        %v1121 = vmul.f32 %v785, %v1026
        %v1122 = vmul.f32 %v786, %v1030
        %v1123 = vmul.f32 %v787, %v1030
        %v1124 = vmul.f32 %v788, %v1034
        %v1125 = vmul.f32 %v789, %v1034
        %v1126 = vmul.f32 %v790, %v1038
        %v1127 = vmul.f32 %v791, %v1038
        %v1128 = vmul.f32 %v792, %v1042
        %v1129 = vmul.f32 %v793, %v1042
        %v1130 = vmul.f32 %v794, %v1046
        %v1131 = vmul.f32 %v795, %v1046
        %v1132 = vmul.f32 %v796, %v1050
        %v1133 = vmul.f32 %v797, %v1050
        %v1134 = vmul.f32 %v798, %v1054
        %v1135 = vmul.f32 %v799, %v1054
        %v1136 = vmul.f32 %v800, %v1058
        %v1137 = vmul.f32 %v801, %v1058
        %v1138 = vmul.f32 %v802, %v1062
        %v1139 = vmul.f32 %v803, %v1062
        %v1140 = vmul.f32 %v804, %v1066
        %v1141 = vmul.f32 %v805, %v1066
        %v1142 = vmul.f32 %v806, %v1070
        %v1143 = vmul.f32 %v807, %v1070
        %v1144 = vmul.f32 %v808, %v1074
        %v1145 = vmul.f32 %v809, %v1074
        %v1146 = vmul.f32 %v810, %v1078
        %v1147 = vmul.f32 %v811, %v1078
        %v1148 = vmul.f32 %v812, %v1082
        %v1149 = vmul.f32 %v813, %v1082
        %v1150 = vmul.f32 %v814, %v1086
        %v1151 = vmul.f32 %v815, %v1086
        %v1152 = vld [vmem:[%s418] ss:$8 sm:$0x3]
        %v1154 = vperm.slane %v1152, 0
        %v1155 = vperm.slane %v1152, 1
        %v1158 = vadd.f32 %v1088, %v1154
        %v1159 = vadd.f32 %v1089, %v1155
        %v1160 = vadd.f32 %v1090, %v1154
        %v1161 = vadd.f32 %v1091, %v1155
        %v1162 = vadd.f32 %v1092, %v1154
        %v1163 = vadd.f32 %v1093, %v1155
        %v1164 = vadd.f32 %v1094, %v1154
        %v1165 = vadd.f32 %v1095, %v1155
        %v1166 = vadd.f32 %v1096, %v1154
        %v1167 = vadd.f32 %v1097, %v1155
        %v1168 = vadd.f32 %v1098, %v1154
        %v1169 = vadd.f32 %v1099, %v1155
        %v1170 = vadd.f32 %v1100, %v1154
        %v1171 = vadd.f32 %v1101, %v1155
        %v1172 = vadd.f32 %v1102, %v1154
        %v1173 = vadd.f32 %v1103, %v1155
        %v1174 = vadd.f32 %v1104, %v1154
        %v1175 = vadd.f32 %v1105, %v1155
        %v1176 = vadd.f32 %v1106, %v1154
        %v1177 = vadd.f32 %v1107, %v1155
        %v1178 = vadd.f32 %v1108, %v1154
        %v1179 = vadd.f32 %v1109, %v1155
        %v1180 = vadd.f32 %v1110, %v1154
        %v1181 = vadd.f32 %v1111, %v1155
        %v1182 = vadd.f32 %v1112, %v1154
        %v1183 = vadd.f32 %v1113, %v1155
        %v1184 = vadd.f32 %v1114, %v1154
        %v1185 = vadd.f32 %v1115, %v1155
        %v1186 = vadd.f32 %v1116, %v1154
        %v1187 = vadd.f32 %v1117, %v1155
        %v1188 = vadd.f32 %v1118, %v1154
        %v1189 = vadd.f32 %v1119, %v1155
        %v1190 = vadd.f32 %v1120, %v1154
        %v1191 = vadd.f32 %v1121, %v1155
        %v1192 = vadd.f32 %v1122, %v1154
        %v1193 = vadd.f32 %v1123, %v1155
        %v1194 = vadd.f32 %v1124, %v1154
        %v1195 = vadd.f32 %v1125, %v1155
        %v1196 = vadd.f32 %v1126, %v1154
        %v1197 = vadd.f32 %v1127, %v1155
        %v1198 = vadd.f32 %v1128, %v1154
        %v1199 = vadd.f32 %v1129, %v1155
        %v1200 = vadd.f32 %v1130, %v1154
        %v1201 = vadd.f32 %v1131, %v1155
        %v1202 = vadd.f32 %v1132, %v1154
        %v1203 = vadd.f32 %v1133, %v1155
        %v1204 = vadd.f32 %v1134, %v1154
        %v1205 = vadd.f32 %v1135, %v1155
        %v1206 = vadd.f32 %v1136, %v1154
        %v1207 = vadd.f32 %v1137, %v1155
        %v1208 = vadd.f32 %v1138, %v1154
        %v1209 = vadd.f32 %v1139, %v1155
        %v1210 = vadd.f32 %v1140, %v1154
        %v1211 = vadd.f32 %v1141, %v1155
        %v1212 = vadd.f32 %v1142, %v1154
        %v1213 = vadd.f32 %v1143, %v1155
        %v1214 = vadd.f32 %v1144, %v1154
        %v1215 = vadd.f32 %v1145, %v1155
        %v1216 = vadd.f32 %v1146, %v1154
        %v1217 = vadd.f32 %v1147, %v1155
        %v1218 = vadd.f32 %v1148, %v1154
        %v1219 = vadd.f32 %v1149, %v1155
        %v1220 = vadd.f32 %v1150, %v1154
        %v1221 = vadd.f32 %v1151, %v1155
        %v1222 = vmul.f32 %v1158, 0.01
        %v1223 = vmul.f32 %v1159, 0.01
        %v1224 = vmul.f32 %v1160, 0.01
        %v1225 = vmul.f32 %v1161, 0.01
        %v1226 = vmul.f32 %v1162, 0.01
        %v1227 = vmul.f32 %v1163, 0.01
        %v1228 = vmul.f32 %v1164, 0.01
        %v1229 = vmul.f32 %v1165, 0.01
        %v1230 = vmul.f32 %v1166, 0.01
        %v1231 = vmul.f32 %v1167, 0.01
        %v1232 = vmul.f32 %v1168, 0.01
        %v1233 = vmul.f32 %v1169, 0.01
        %v1234 = vmul.f32 %v1170, 0.01
        %v1235 = vmul.f32 %v1171, 0.01
        %v1236 = vmul.f32 %v1172, 0.01
        %v1237 = vmul.f32 %v1173, 0.01
        %v1238 = vmul.f32 %v1174, 0.01
        %v1239 = vmul.f32 %v1175, 0.01
        %v1240 = vmul.f32 %v1176, 0.01
        %v1241 = vmul.f32 %v1177, 0.01
        %v1242 = vmul.f32 %v1178, 0.01
        %v1243 = vmul.f32 %v1179, 0.01
        %v1244 = vmul.f32 %v1180, 0.01
        %v1245 = vmul.f32 %v1181, 0.01
        %v1246 = vmul.f32 %v1182, 0.01
        %v1247 = vmul.f32 %v1183, 0.01
        %v1248 = vmul.f32 %v1184, 0.01
        %v1249 = vmul.f32 %v1185, 0.01
        %v1250 = vmul.f32 %v1186, 0.01
        %v1251 = vmul.f32 %v1187, 0.01
        %v1252 = vmul.f32 %v1188, 0.01
        %v1253 = vmul.f32 %v1189, 0.01
        %v1254 = vmul.f32 %v1190, 0.01
        %v1255 = vmul.f32 %v1191, 0.01
        %v1256 = vmul.f32 %v1192, 0.01
        %v1257 = vmul.f32 %v1193, 0.01
        %v1258 = vmul.f32 %v1194, 0.01
        %v1259 = vmul.f32 %v1195, 0.01
        %v1260 = vmul.f32 %v1196, 0.01
        %v1261 = vmul.f32 %v1197, 0.01
        %v1262 = vmul.f32 %v1198, 0.01
        %v1263 = vmul.f32 %v1199, 0.01
        %v1264 = vmul.f32 %v1200, 0.01
        %v1265 = vmul.f32 %v1201, 0.01
        %v1266 = vmul.f32 %v1202, 0.01
        %v1267 = vmul.f32 %v1203, 0.01
        %v1268 = vmul.f32 %v1204, 0.01
        %v1269 = vmul.f32 %v1205, 0.01
        %v1270 = vmul.f32 %v1206, 0.01
        %v1271 = vmul.f32 %v1207, 0.01
        %v1272 = vmul.f32 %v1208, 0.01
        %v1273 = vmul.f32 %v1209, 0.01
        %v1274 = vmul.f32 %v1210, 0.01
        %v1275 = vmul.f32 %v1211, 0.01
        %v1276 = vmul.f32 %v1212, 0.01
        %v1277 = vmul.f32 %v1213, 0.01
        %v1278 = vmul.f32 %v1214, 0.01
        %v1279 = vmul.f32 %v1215, 0.01
        %v1280 = vmul.f32 %v1216, 0.01
        %v1281 = vmul.f32 %v1217, 0.01
        %v1282 = vmul.f32 %v1218, 0.01
        %v1283 = vmul.f32 %v1219, 0.01
        %v1284 = vmul.f32 %v1220, 0.01
        %v1285 = vmul.f32 %v1221, 0.01
        %v1286 = vmax.f32 %v1158, %v1222
        %v1287 = vmax.f32 %v1159, %v1223
        %v1288 = vmax.f32 %v1160, %v1224
        %v1289 = vmax.f32 %v1161, %v1225
        %v1290 = vmax.f32 %v1162, %v1226
        %v1291 = vmax.f32 %v1163, %v1227
        %v1292 = vmax.f32 %v1164, %v1228
        %v1293 = vmax.f32 %v1165, %v1229
        %v1294 = vmax.f32 %v1166, %v1230
        %v1295 = vmax.f32 %v1167, %v1231
        %v1296 = vmax.f32 %v1168, %v1232
        %v1297 = vmax.f32 %v1169, %v1233
        %v1298 = vmax.f32 %v1170, %v1234
        %v1299 = vmax.f32 %v1171, %v1235
        %v1300 = vmax.f32 %v1172, %v1236
        %v1301 = vmax.f32 %v1173, %v1237
        %v1302 = vmax.f32 %v1174, %v1238
        %v1303 = vmax.f32 %v1175, %v1239
        %v1304 = vmax.f32 %v1176, %v1240
        %v1305 = vmax.f32 %v1177, %v1241
        %v1306 = vmax.f32 %v1178, %v1242
        %v1307 = vmax.f32 %v1179, %v1243
        %v1308 = vmax.f32 %v1180, %v1244
        %v1309 = vmax.f32 %v1181, %v1245
        %v1310 = vmax.f32 %v1182, %v1246
        %v1311 = vmax.f32 %v1183, %v1247
        %v1312 = vmax.f32 %v1184, %v1248
        %v1313 = vmax.f32 %v1185, %v1249
        %v1314 = vmax.f32 %v1186, %v1250
        %v1315 = vmax.f32 %v1187, %v1251
        %v1316 = vmax.f32 %v1188, %v1252
        %v1317 = vmax.f32 %v1189, %v1253
        %v1318 = vmax.f32 %v1190, %v1254
        %v1319 = vmax.f32 %v1191, %v1255
        %v1320 = vmax.f32 %v1192, %v1256
        %v1321 = vmax.f32 %v1193, %v1257
        %v1322 = vmax.f32 %v1194, %v1258
        %v1323 = vmax.f32 %v1195, %v1259
        %v1324 = vmax.f32 %v1196, %v1260
        %v1325 = vmax.f32 %v1197, %v1261
        %v1326 = vmax.f32 %v1198, %v1262
        %v1327 = vmax.f32 %v1199, %v1263
        %v1328 = vmax.f32 %v1200, %v1264
        %v1329 = vmax.f32 %v1201, %v1265
        %v1330 = vmax.f32 %v1202, %v1266
        %v1331 = vmax.f32 %v1203, %v1267
        %v1332 = vmax.f32 %v1204, %v1268
        %v1333 = vmax.f32 %v1205, %v1269
        %v1334 = vmax.f32 %v1206, %v1270
        %v1335 = vmax.f32 %v1207, %v1271
        %v1336 = vmax.f32 %v1208, %v1272
        %v1337 = vmax.f32 %v1209, %v1273
        %v1338 = vmax.f32 %v1210, %v1274
        %v1339 = vmax.f32 %v1211, %v1275
        %v1340 = vmax.f32 %v1212, %v1276
        %v1341 = vmax.f32 %v1213, %v1277
        %v1342 = vmax.f32 %v1214, %v1278
        %v1343 = vmax.f32 %v1215, %v1279
        %v1344 = vmax.f32 %v1216, %v1280
        %v1345 = vmax.f32 %v1217, %v1281
        %v1346 = vmax.f32 %v1218, %v1282
        %v1347 = vmax.f32 %v1219, %v1283
        %v1348 = vmax.f32 %v1220, %v1284
        %v1349 = vmax.f32 %v1221, %v1285
        %s1350 = scalar_lea.vmem %s418, 5 [#allocation5]
        %v1351 = vld [vmem:[%s1350] ss:$8 sm:$0x3]
        %v1353 = vperm.slane %v1351, 0
        %v1354 = vperm.slane %v1351, 1
        %v1357 = vsub.f32 %v1286, %v1353
        %v1358 = vsub.f32 %v1287, %v1354
        %v1359 = vsub.f32 %v1288, %v1353
        %v1360 = vsub.f32 %v1289, %v1354
        %v1361 = vsub.f32 %v1290, %v1353
        %v1362 = vsub.f32 %v1291, %v1354
        %v1363 = vsub.f32 %v1292, %v1353
        %v1364 = vsub.f32 %v1293, %v1354
        %v1365 = vsub.f32 %v1294, %v1353
        %v1366 = vsub.f32 %v1295, %v1354
        %v1367 = vsub.f32 %v1296, %v1353
        %v1368 = vsub.f32 %v1297, %v1354
        %v1369 = vsub.f32 %v1298, %v1353
        %v1370 = vsub.f32 %v1299, %v1354
        %v1371 = vsub.f32 %v1300, %v1353
        %v1372 = vsub.f32 %v1301, %v1354
        %v1373 = vsub.f32 %v1302, %v1353
        %v1374 = vsub.f32 %v1303, %v1354
        %v1375 = vsub.f32 %v1304, %v1353
        %v1376 = vsub.f32 %v1305, %v1354
        %v1377 = vsub.f32 %v1306, %v1353
        %v1378 = vsub.f32 %v1307, %v1354
        %v1379 = vsub.f32 %v1308, %v1353
        %v1380 = vsub.f32 %v1309, %v1354
        %v1381 = vsub.f32 %v1310, %v1353
        %v1382 = vsub.f32 %v1311, %v1354
        %v1383 = vsub.f32 %v1312, %v1353
        %v1384 = vsub.f32 %v1313, %v1354
        %v1385 = vsub.f32 %v1314, %v1353
        %v1386 = vsub.f32 %v1315, %v1354
        %v1387 = vsub.f32 %v1316, %v1353
        %v1388 = vsub.f32 %v1317, %v1354
        %v1389 = vsub.f32 %v1318, %v1353
        %v1390 = vsub.f32 %v1319, %v1354
        %v1391 = vsub.f32 %v1320, %v1353
        %v1392 = vsub.f32 %v1321, %v1354
        %v1393 = vsub.f32 %v1322, %v1353
        %v1394 = vsub.f32 %v1323, %v1354
        %v1395 = vsub.f32 %v1324, %v1353
        %v1396 = vsub.f32 %v1325, %v1354
        %v1397 = vsub.f32 %v1326, %v1353
        %v1398 = vsub.f32 %v1327, %v1354
        %v1399 = vsub.f32 %v1328, %v1353
        %v1400 = vsub.f32 %v1329, %v1354
        %v1401 = vsub.f32 %v1330, %v1353
        %v1402 = vsub.f32 %v1331, %v1354
        %v1403 = vsub.f32 %v1332, %v1353
        %v1404 = vsub.f32 %v1333, %v1354
        %v1405 = vsub.f32 %v1334, %v1353
        %v1406 = vsub.f32 %v1335, %v1354
        %v1407 = vsub.f32 %v1336, %v1353
        %v1408 = vsub.f32 %v1337, %v1354
        %v1409 = vsub.f32 %v1338, %v1353
        %v1410 = vsub.f32 %v1339, %v1354
        %v1411 = vsub.f32 %v1340, %v1353
        %v1412 = vsub.f32 %v1341, %v1354
        %v1413 = vsub.f32 %v1342, %v1353
        %v1414 = vsub.f32 %v1343, %v1354
        %v1415 = vsub.f32 %v1344, %v1353
        %v1416 = vsub.f32 %v1345, %v1354
        %v1417 = vsub.f32 %v1346, %v1353
        %v1418 = vsub.f32 %v1347, %v1354
        %v1419 = vsub.f32 %v1348, %v1353
        %v1420 = vsub.f32 %v1349, %v1354
        %v1421 = vmul.f32 %v1357, 1.442695
        %v1422 = vpow.pop %v1421
        %v1423 = vmul.f32 %v1358, 1.442695
        %v1424 = vpow.pop %v1423
        %v1425 = vmul.f32 %v1359, 1.442695
        %v1426 = vpow.pop %v1425
        %v1427 = vmul.f32 %v1360, 1.442695
        %v1428 = vpow.pop %v1427
        %v1429 = vmul.f32 %v1361, 1.442695
        %v1430 = vpow.pop %v1429
        %v1431 = vmul.f32 %v1362, 1.442695
        %v1432 = vpow.pop %v1431
        %v1433 = vmul.f32 %v1363, 1.442695
        %v1434 = vpow.pop %v1433
        %v1435 = vmul.f32 %v1364, 1.442695
        %v1436 = vpow.pop %v1435
        %v1437 = vmul.f32 %v1365, 1.442695
        %v1438 = vpow.pop %v1437
        %v1439 = vmul.f32 %v1366, 1.442695
        %v1440 = vpow.pop %v1439
        %v1441 = vmul.f32 %v1367, 1.442695
        %v1442 = vpow.pop %v1441
        %v1443 = vmul.f32 %v1368, 1.442695
        %v1444 = vpow.pop %v1443
        %v1445 = vmul.f32 %v1369, 1.442695
        %v1446 = vpow.pop %v1445
        %v1447 = vmul.f32 %v1370, 1.442695
        %v1448 = vpow.pop %v1447
        %v1449 = vmul.f32 %v1371, 1.442695
        %v1450 = vpow.pop %v1449
        %v1451 = vmul.f32 %v1372, 1.442695
        %v1452 = vpow.pop %v1451
        %v1453 = vmul.f32 %v1373, 1.442695
        %v1454 = vpow.pop %v1453
        %v1455 = vmul.f32 %v1374, 1.442695
        %v1456 = vpow.pop %v1455
        %v1457 = vmul.f32 %v1375, 1.442695
        %v1458 = vpow.pop %v1457
        %v1459 = vmul.f32 %v1376, 1.442695
        %v1460 = vpow.pop %v1459
        %v1461 = vmul.f32 %v1377, 1.442695
        %v1462 = vpow.pop %v1461
        %v1463 = vmul.f32 %v1378, 1.442695
        %v1464 = vpow.pop %v1463
        %v1465 = vmul.f32 %v1379, 1.442695
        %v1466 = vpow.pop %v1465
        %v1467 = vmul.f32 %v1380, 1.442695
        %v1468 = vpow.pop %v1467
        %v1469 = vmul.f32 %v1381, 1.442695
        %v1470 = vpow.pop %v1469
        %v1471 = vmul.f32 %v1382, 1.442695
        %v1472 = vpow.pop %v1471
        %v1473 = vmul.f32 %v1383, 1.442695
        %v1474 = vpow.pop %v1473
        %v1475 = vmul.f32 %v1384, 1.442695
        %v1476 = vpow.pop %v1475
        %v1477 = vmul.f32 %v1385, 1.442695
        %v1478 = vpow.pop %v1477
        %v1479 = vmul.f32 %v1386, 1.442695
        %v1480 = vpow.pop %v1479
        %v1481 = vmul.f32 %v1387, 1.442695
        %v1482 = vpow.pop %v1481
        %v1483 = vmul.f32 %v1388, 1.442695
        %v1484 = vpow.pop %v1483
        %v1485 = vmul.f32 %v1389, 1.442695
        %v1486 = vpow.pop %v1485
        %v1487 = vmul.f32 %v1390, 1.442695
        %v1488 = vpow.pop %v1487
        %v1489 = vmul.f32 %v1391, 1.442695
        %v1490 = vpow.pop %v1489
        %v1491 = vmul.f32 %v1392, 1.442695
        %v1492 = vpow.pop %v1491
        %v1493 = vmul.f32 %v1393, 1.442695
        %v1494 = vpow.pop %v1493
        %v1495 = vmul.f32 %v1394, 1.442695
        %v1496 = vpow.pop %v1495
        %v1497 = vmul.f32 %v1395, 1.442695
        %v1498 = vpow.pop %v1497
        %v1499 = vmul.f32 %v1396, 1.442695
        %v1500 = vpow.pop %v1499
        %v1501 = vmul.f32 %v1397, 1.442695
        %v1502 = vpow.pop %v1501
        %v1503 = vmul.f32 %v1398, 1.442695
        %v1504 = vpow.pop %v1503
        %v1505 = vmul.f32 %v1399, 1.442695
        %v1506 = vpow.pop %v1505
        %v1507 = vmul.f32 %v1400, 1.442695
        %v1508 = vpow.pop %v1507
        %v1509 = vmul.f32 %v1401, 1.442695
        %v1510 = vpow.pop %v1509
        %v1511 = vmul.f32 %v1402, 1.442695
        %v1512 = vpow.pop %v1511
        %v1513 = vmul.f32 %v1403, 1.442695
        %v1514 = vpow.pop %v1513
        %v1515 = vmul.f32 %v1404, 1.442695
        %v1516 = vpow.pop %v1515
        %v1517 = vmul.f32 %v1405, 1.442695
        %v1518 = vpow.pop %v1517
        %v1519 = vmul.f32 %v1406, 1.442695
        %v1520 = vpow.pop %v1519
        %v1521 = vmul.f32 %v1407, 1.442695
        %v1522 = vpow.pop %v1521
        %v1523 = vmul.f32 %v1408, 1.442695
        %v1524 = vpow.pop %v1523
        %v1525 = vmul.f32 %v1409, 1.442695
        %v1526 = vpow.pop %v1525
        %v1527 = vmul.f32 %v1410, 1.442695
        %v1528 = vpow.pop %v1527
        %v1529 = vmul.f32 %v1411, 1.442695
        %v1530 = vpow.pop %v1529
        %v1531 = vmul.f32 %v1412, 1.442695
        %v1532 = vpow.pop %v1531
        %v1533 = vmul.f32 %v1413, 1.442695
        %v1534 = vpow.pop %v1533
        %v1535 = vmul.f32 %v1414, 1.442695
        %v1536 = vpow.pop %v1535
        %v1537 = vmul.f32 %v1415, 1.442695
        %v1538 = vpow.pop %v1537
        %v1539 = vmul.f32 %v1416, 1.442695
        %v1540 = vpow.pop %v1539
        %v1541 = vmul.f32 %v1417, 1.442695
        %v1542 = vpow.pop %v1541
        %v1543 = vmul.f32 %v1418, 1.442695
        %v1544 = vpow.pop %v1543
        %v1545 = vmul.f32 %v1419, 1.442695
        %v1546 = vpow.pop %v1545
        %v1547 = vmul.f32 %v1420, 1.442695
        %v1548 = vpow.pop %v1547
        %v1549 = vmul.f32 %v1422, %v896
        %v1550 = vmul.f32 %v1424, %v897
        %v1551 = vmul.f32 %v1426, %v898
        %v1552 = vmul.f32 %v1428, %v899
        %v1553 = vmul.f32 %v1430, %v900
        %v1554 = vmul.f32 %v1432, %v901
        %v1555 = vmul.f32 %v1434, %v902
        %v1556 = vmul.f32 %v1436, %v903
        %v1557 = vmul.f32 %v1438, %v904
        %v1558 = vmul.f32 %v1440, %v905
        %v1559 = vmul.f32 %v1442, %v906
        %v1560 = vmul.f32 %v1444, %v907
        %v1561 = vmul.f32 %v1446, %v908
        %v1562 = vmul.f32 %v1448, %v909
        %v1563 = vmul.f32 %v1450, %v910
        %v1564 = vmul.f32 %v1452, %v911
        %v1565 = vmul.f32 %v1454, %v912
        %v1566 = vmul.f32 %v1456, %v913
        %v1567 = vmul.f32 %v1458, %v914
        %v1568 = vmul.f32 %v1460, %v915
        %v1569 = vmul.f32 %v1462, %v916
        %v1570 = vmul.f32 %v1464, %v917
        %v1571 = vmul.f32 %v1466, %v918
        %v1572 = vmul.f32 %v1468, %v919
        %v1573 = vmul.f32 %v1470, %v920
        %v1574 = vmul.f32 %v1472, %v921
        %v1575 = vmul.f32 %v1474, %v922
        %v1576 = vmul.f32 %v1476, %v923
        %v1577 = vmul.f32 %v1478, %v924
        %v1578 = vmul.f32 %v1480, %v925
        %v1579 = vmul.f32 %v1482, %v926
        %v1580 = vmul.f32 %v1484, %v927
        %v1581 = vmul.f32 %v1486, %v928
        %v1582 = vmul.f32 %v1488, %v929
        %v1583 = vmul.f32 %v1490, %v930
        %v1584 = vmul.f32 %v1492, %v931
        %v1585 = vmul.f32 %v1494, %v932
        %v1586 = vmul.f32 %v1496, %v933
        %v1587 = vmul.f32 %v1498, %v934
        %v1588 = vmul.f32 %v1500, %v935
        %v1589 = vmul.f32 %v1502, %v936
        %v1590 = vmul.f32 %v1504, %v937
        %v1591 = vmul.f32 %v1506, %v938
        %v1592 = vmul.f32 %v1508, %v939
        %v1593 = vmul.f32 %v1510, %v940
        %v1594 = vmul.f32 %v1512, %v941
        %v1595 = vmul.f32 %v1514, %v942
        %v1596 = vmul.f32 %v1516, %v943
        %v1597 = vmul.f32 %v1518, %v944
        %v1598 = vmul.f32 %v1520, %v945
        %v1599 = vmul.f32 %v1522, %v946
        %v1600 = vmul.f32 %v1524, %v947
        %v1601 = vmul.f32 %v1526, %v948
        %v1602 = vmul.f32 %v1528, %v949
        %v1603 = vmul.f32 %v1530, %v950
        %v1604 = vmul.f32 %v1532, %v951
        %v1605 = vmul.f32 %v1534, %v952
        %v1606 = vmul.f32 %v1536, %v953
        %v1607 = vmul.f32 %v1538, %v954
        %v1608 = vmul.f32 %v1540, %v955
        %v1609 = vmul.f32 %v1542, %v956
        %v1610 = vmul.f32 %v1544, %v957
        %v1611 = vmul.f32 %v1546, %v958
        %v1612 = vmul.f32 %v1548, %v959
        %v1613 = vld [vmem:[#allocation2] ss:$4 sm:$0x3]
        %1614 = vmatpush.msra.mxu0 %v1579
        %1615 = vmatpush.msra.mxu0 %v1577
        %1616 = vmatpush.msra.mxu0 %v1575
        %1617 = vmatpush.msra.mxu0 %v1573
        %1618 = vmatpush.msra.mxu0 %v1571
        %1619 = vmatpush.msra.mxu0 %v1569
        %1620 = vmatpush.msra.mxu0 %v1567
        %1621 = vmatpush.msra.mxu0 %v1565
        %1622 = vmatpush.msra.mxu0 %v1563
        %1623 = vmatpush.msra.mxu0 %v1561
        %1624 = vmatpush.msra.mxu0 %v1559
        %1625 = vmatpush.msra.mxu0 %v1557
        %1626 = vmatpush.msra.mxu0 %v1555
        %1627 = vmatpush.msra.mxu0 %v1553
        %1628 = vmatpush.msra.mxu0 %v1551
        %1629 = vmatpush.msra.mxu0 %v1549
        %1630 = vmatmul.f32.gmra.mxu0 1.0
        %v1631 = vpop.f32.mrf.mxu0
        %v1632 = vadd.f32 0.0, %v1631
        %1633 = vdwg.mxu0
        %1634 = vmatpush.msra.mxu0 %v1611
        %1635 = vmatpush.msra.mxu0 %v1609
        %1636 = vmatpush.msra.mxu0 %v1607
        %1637 = vmatpush.msra.mxu0 %v1605
        %1638 = vmatpush.msra.mxu0 %v1603
        %1639 = vmatpush.msra.mxu0 %v1601
        %1640 = vmatpush.msra.mxu0 %v1599
        %1641 = vmatpush.msra.mxu0 %v1597
        %1642 = vmatpush.msra.mxu0 %v1595
        %1643 = vmatpush.msra.mxu0 %v1593
        %1644 = vmatpush.msra.mxu0 %v1591
        %1645 = vmatpush.msra.mxu0 %v1589
        %1646 = vmatpush.msra.mxu0 %v1587
        %1647 = vmatpush.msra.mxu0 %v1585
        %1648 = vmatpush.msra.mxu0 %v1583
        %1649 = vmatpush.msra.mxu0 %v1581
        %1650 = vmatmul.f32.gmra.mxu0 1.0
        %v1651 = vpop.f32.mrf.mxu0
        %v1652 = vadd.f32 %v1632, %v1651
        %1653 = vdwg.mxu0
        %1654 = vmatpush.msra.mxu0 %v1580
        %1655 = vmatpush.msra.mxu0 %v1578
        %1656 = vmatpush.msra.mxu0 %v1576
        %1657 = vmatpush.msra.mxu0 %v1574
        %1658 = vmatpush.msra.mxu0 %v1572
        %1659 = vmatpush.msra.mxu0 %v1570
        %1660 = vmatpush.msra.mxu0 %v1568
        %1661 = vmatpush.msra.mxu0 %v1566
        %1662 = vmatpush.msra.mxu0 %v1564
        %1663 = vmatpush.msra.mxu0 %v1562
        %1664 = vmatpush.msra.mxu0 %v1560
        %1665 = vmatpush.msra.mxu0 %v1558
        %1666 = vmatpush.msra.mxu0 %v1556
        %1667 = vmatpush.msra.mxu0 %v1554
        %1668 = vmatpush.msra.mxu0 %v1552
        %1669 = vmatpush.msra.mxu0 %v1550
        %1670 = vmatmul.f32.gmra.mxu0 1.0
        %v1671 = vpop.f32.mrf.mxu0
        %v1672 = vadd.f32 0.0, %v1671
        %1673 = vdwg.mxu0
        %1674 = vmatpush.msra.mxu0 %v1612
        %1675 = vmatpush.msra.mxu0 %v1610
        %1676 = vmatpush.msra.mxu0 %v1608
        %1677 = vmatpush.msra.mxu0 %v1606
        %1678 = vmatpush.msra.mxu0 %v1604
        %1679 = vmatpush.msra.mxu0 %v1602
        %1680 = vmatpush.msra.mxu0 %v1600
        %1681 = vmatpush.msra.mxu0 %v1598
        %1682 = vmatpush.msra.mxu0 %v1596
        %1683 = vmatpush.msra.mxu0 %v1594
        %1684 = vmatpush.msra.mxu0 %v1592
        %1685 = vmatpush.msra.mxu0 %v1590
        %1686 = vmatpush.msra.mxu0 %v1588
        %1687 = vmatpush.msra.mxu0 %v1586
        %1688 = vmatpush.msra.mxu0 %v1584
        %1689 = vmatpush.msra.mxu0 %v1582
        %1690 = vmatmul.f32.gmra.mxu0 1.0
        %v1691 = vpop.f32.mrf.mxu0
        %v1692 = vadd.f32 %v1672, %v1691
        %1693 = vdwg.mxu0
        %v1696 = vrot.slane %v1692, 7
        %vm1697 = vcmask 1040384
        %v1698 = vsel %vm1697, %v1652, %v1696
        %v1700 = vadd.f32 %v1613, %v1698
        %v1701 = vlaneseq
        %vm1702 = vcmp.ge.s32.totalorder %v1701, 0
        %vm1703 = vcmp.lt.s32.totalorder %v1701, 256
        %vm1704 = vmand %vm1702, %vm1703
        %1705 = vst.msk [vmem:[#allocation2] ss:$4 sm:$0x3] %vm1704, %v1700
        %v1706 = vmul.f32 %v1549, %v752
        %v1707 = vmul.f32 %v1550, %v753
        %v1708 = vmul.f32 %v1551, %v754
        %v1709 = vmul.f32 %v1552, %v755
        %v1710 = vmul.f32 %v1553, %v756
        %v1711 = vmul.f32 %v1554, %v757
        %v1712 = vmul.f32 %v1555, %v758
        %v1713 = vmul.f32 %v1556, %v759
        %v1714 = vmul.f32 %v1557, %v760
        %v1715 = vmul.f32 %v1558, %v761
        %v1716 = vmul.f32 %v1559, %v762
        %v1717 = vmul.f32 %v1560, %v763
        %v1718 = vmul.f32 %v1561, %v764
        %v1719 = vmul.f32 %v1562, %v765
        %v1720 = vmul.f32 %v1563, %v766
        %v1721 = vmul.f32 %v1564, %v767
        %v1722 = vmul.f32 %v1565, %v768
        %v1723 = vmul.f32 %v1566, %v769
        %v1724 = vmul.f32 %v1567, %v770
        %v1725 = vmul.f32 %v1568, %v771
        %v1726 = vmul.f32 %v1569, %v772
        %v1727 = vmul.f32 %v1570, %v773
        %v1728 = vmul.f32 %v1571, %v774
        %v1729 = vmul.f32 %v1572, %v775
        %v1730 = vmul.f32 %v1573, %v776
        %v1731 = vmul.f32 %v1574, %v777
        %v1732 = vmul.f32 %v1575, %v778
        %v1733 = vmul.f32 %v1576, %v779
        %v1734 = vmul.f32 %v1577, %v780
        %v1735 = vmul.f32 %v1578, %v781
        %v1736 = vmul.f32 %v1579, %v782
        %v1737 = vmul.f32 %v1580, %v783
        %v1738 = vmul.f32 %v1581, %v784
        %v1739 = vmul.f32 %v1582, %v785
        %v1740 = vmul.f32 %v1583, %v786
        %v1741 = vmul.f32 %v1584, %v787
        %v1742 = vmul.f32 %v1585, %v788
        %v1743 = vmul.f32 %v1586, %v789
        %v1744 = vmul.f32 %v1587, %v790
        %v1745 = vmul.f32 %v1588, %v791
        %v1746 = vmul.f32 %v1589, %v792
        %v1747 = vmul.f32 %v1590, %v793
        %v1748 = vmul.f32 %v1591, %v794
        %v1749 = vmul.f32 %v1592, %v795
        %v1750 = vmul.f32 %v1593, %v796
        %v1751 = vmul.f32 %v1594, %v797
        %v1752 = vmul.f32 %v1595, %v798
        %v1753 = vmul.f32 %v1596, %v799
        %v1754 = vmul.f32 %v1597, %v800
        %v1755 = vmul.f32 %v1598, %v801
        %v1756 = vmul.f32 %v1599, %v802
        %v1757 = vmul.f32 %v1600, %v803
        %v1758 = vmul.f32 %v1601, %v804
        %v1759 = vmul.f32 %v1602, %v805
        %v1760 = vmul.f32 %v1603, %v806
        %v1761 = vmul.f32 %v1604, %v807
        %v1762 = vmul.f32 %v1605, %v808
        %v1763 = vmul.f32 %v1606, %v809
        %v1764 = vmul.f32 %v1607, %v810
        %v1765 = vmul.f32 %v1608, %v811
        %v1766 = vmul.f32 %v1609, %v812
        %v1767 = vmul.f32 %v1610, %v813
        %v1768 = vmul.f32 %v1611, %v814
        %v1769 = vmul.f32 %v1612, %v815
        %v1770 = vld [vmem:[%s425] sm:$0xff]
        %v1771 = vld [vmem:[%s425 + $0x8] sm:$0xff]
        %v1772 = vld [vmem:[#allocation3] sm:$0xff]
        %v1773 = vld [vmem:[#allocation3 + $0x8] sm:$0xff]
        %1774 = vmatpush.msra.mxu0 %v1736
        %1775 = vmatpush.msra.mxu0 %v1734
        %1776 = vmatpush.msra.mxu0 %v1732
        %1777 = vmatpush.msra.mxu0 %v1730
        %1778 = vmatpush.msra.mxu0 %v1728
        %1779 = vmatpush.msra.mxu0 %v1726
        %1780 = vmatpush.msra.mxu0 %v1724
        %1781 = vmatpush.msra.mxu0 %v1722
        %1782 = vmatpush.msra.mxu0 %v1720
        %1783 = vmatpush.msra.mxu0 %v1718
        %1784 = vmatpush.msra.mxu0 %v1716
        %1785 = vmatpush.msra.mxu0 %v1714
        %1786 = vmatpush.msra.mxu0 %v1712
        %1787 = vmatpush.msra.mxu0 %v1710
        %1788 = vmatpush.msra.mxu0 %v1708
        %1789 = vmatpush.msra.mxu0 %v1706
        %1790 = vmatmul.f32.gmra.mxu0 %v1770
        %v1791 = vpop.f32.mrf.mxu0
        %v1792 = vadd.f32 0.0, %v1791
        %1793 = vdwg.mxu0
        %1794 = vmatpush.msra.mxu0 %v1768
        %1795 = vmatpush.msra.mxu0 %v1766
        %1796 = vmatpush.msra.mxu0 %v1764
        %1797 = vmatpush.msra.mxu0 %v1762
        %1798 = vmatpush.msra.mxu0 %v1760
        %1799 = vmatpush.msra.mxu0 %v1758
        %1800 = vmatpush.msra.mxu0 %v1756
        %1801 = vmatpush.msra.mxu0 %v1754
        %1802 = vmatpush.msra.mxu0 %v1752
        %1803 = vmatpush.msra.mxu0 %v1750
        %1804 = vmatpush.msra.mxu0 %v1748
        %1805 = vmatpush.msra.mxu0 %v1746
        %1806 = vmatpush.msra.mxu0 %v1744
        %1807 = vmatpush.msra.mxu0 %v1742
        %1808 = vmatpush.msra.mxu0 %v1740
        %1809 = vmatpush.msra.mxu0 %v1738
        %1810 = vmatmul.f32.gmra.mxu0 %v1771
        %v1811 = vpop.f32.mrf.mxu0
        %v1812 = vadd.f32 %v1792, %v1811
        %1813 = vdwg.mxu0
        %1814 = vmatpush.msra.mxu0 %v1737
        %1815 = vmatpush.msra.mxu0 %v1735
        %1816 = vmatpush.msra.mxu0 %v1733
        %1817 = vmatpush.msra.mxu0 %v1731
        %1818 = vmatpush.msra.mxu0 %v1729
        %1819 = vmatpush.msra.mxu0 %v1727
        %1820 = vmatpush.msra.mxu0 %v1725
        %1821 = vmatpush.msra.mxu0 %v1723
        %1822 = vmatpush.msra.mxu0 %v1721
        %1823 = vmatpush.msra.mxu0 %v1719
        %1824 = vmatpush.msra.mxu0 %v1717
        %1825 = vmatpush.msra.mxu0 %v1715
        %1826 = vmatpush.msra.mxu0 %v1713
        %1827 = vmatpush.msra.mxu0 %v1711
        %1828 = vmatpush.msra.mxu0 %v1709
        %1829 = vmatpush.msra.mxu0 %v1707
        %1830 = vmatmul.f32.gmra.mxu0 %v1770
        %v1831 = vpop.f32.mrf.mxu0
        %v1832 = vadd.f32 0.0, %v1831
        %1833 = vdwg.mxu0
        %1834 = vmatpush.msra.mxu0 %v1769
        %1835 = vmatpush.msra.mxu0 %v1767
        %1836 = vmatpush.msra.mxu0 %v1765
        %1837 = vmatpush.msra.mxu0 %v1763
        %1838 = vmatpush.msra.mxu0 %v1761
        %1839 = vmatpush.msra.mxu0 %v1759
        %1840 = vmatpush.msra.mxu0 %v1757
        %1841 = vmatpush.msra.mxu0 %v1755
        %1842 = vmatpush.msra.mxu0 %v1753
        %1843 = vmatpush.msra.mxu0 %v1751
        %1844 = vmatpush.msra.mxu0 %v1749
        %1845 = vmatpush.msra.mxu0 %v1747
        %1846 = vmatpush.msra.mxu0 %v1745
        %1847 = vmatpush.msra.mxu0 %v1743
        %1848 = vmatpush.msra.mxu0 %v1741
        %1849 = vmatpush.msra.mxu0 %v1739
        %1850 = vmatmul.f32.gmra.mxu0 %v1771
        %v1851 = vpop.f32.mrf.mxu0
        %v1852 = vadd.f32 %v1832, %v1851
        %1853 = vdwg.mxu0
        %v1854 = vadd.f32 %v1772, %v1812
        %v1855 = vadd.f32 %v1773, %v1852
        %1856 = vst [vmem:[#allocation3] sm:$0xff] %v1854
        %1857 = vst [vmem:[#allocation3 + $0x8] sm:$0xff] %v1855
        %v1858 = vld [vmem:[%s471] sm:$0xff]
        %v1859 = vld [vmem:[%s471 + $0x8] sm:$0xff]
        %v1860 = vld [vmem:[%s471 + $0x10] sm:$0xff]
        %v1861 = vld [vmem:[%s471 + $0x18] sm:$0xff]
        %v1862 = vld [vmem:[%s471 + $0x20] sm:$0xff]
        %v1863 = vld [vmem:[%s471 + $0x28] sm:$0xff]
        %v1864 = vld [vmem:[%s471 + $0x30] sm:$0xff]
        %v1865 = vld [vmem:[%s471 + $0x38] sm:$0xff]
        %v1866 = vld [vmem:[%s471 + $0x40] sm:$0xff]
        %v1867 = vld [vmem:[%s471 + $0x48] sm:$0xff]
        %v1868 = vld [vmem:[%s471 + $0x50] sm:$0xff]
        %v1869 = vld [vmem:[%s471 + $0x58] sm:$0xff]
        %v1870 = vld [vmem:[%s471 + $0x60] sm:$0xff]
        %v1871 = vld [vmem:[%s471 + $0x68] sm:$0xff]
        %v1872 = vld [vmem:[%s471 + $0x70] sm:$0xff]
        %v1873 = vld [vmem:[%s471 + $0x78] sm:$0xff]
        %v1874 = vld [vmem:[%s471 + $0x80] sm:$0xff]
        %v1875 = vld [vmem:[%s471 + $0x88] sm:$0xff]
        %v1876 = vld [vmem:[%s471 + $0x90] sm:$0xff]
        %v1877 = vld [vmem:[%s471 + $0x98] sm:$0xff]
        %v1878 = vld [vmem:[%s471 + $0xa0] sm:$0xff]
        %v1879 = vld [vmem:[%s471 + $0xa8] sm:$0xff]
        %v1880 = vld [vmem:[%s471 + $0xb0] sm:$0xff]
        %v1881 = vld [vmem:[%s471 + $0xb8] sm:$0xff]
        %v1882 = vld [vmem:[%s471 + $0xc0] sm:$0xff]
        %v1883 = vld [vmem:[%s471 + $0xc8] sm:$0xff]
        %v1884 = vld [vmem:[%s471 + $0xd0] sm:$0xff]
        %v1885 = vld [vmem:[%s471 + $0xd8] sm:$0xff]
        %v1886 = vld [vmem:[%s471 + $0xe0] sm:$0xff]
        %v1887 = vld [vmem:[%s471 + $0xe8] sm:$0xff]
        %v1888 = vld [vmem:[%s471 + $0xf0] sm:$0xff]
        %v1889 = vld [vmem:[%s471 + $0xf8] sm:$0xff]
        %1891 = vset.pattern.permute.xlu0 1
        %1892 = vperm.xlu0 %1891, %v1858
        %v1893 = vpop.permute.xlu0 %1892
        %1896 = vset.pattern.permute.xlu0 1
        %1897 = vperm.xlu0 %1896, %v1859
        %v1898 = vpop.permute.xlu0 %1897
        %1901 = vset.pattern.permute.xlu0 1
        %1902 = vperm.xlu0 %1901, %v1860
        %v1903 = vpop.permute.xlu0 %1902
        %1906 = vset.pattern.permute.xlu0 1
        %1907 = vperm.xlu0 %1906, %v1861
        %v1908 = vpop.permute.xlu0 %1907
        %1911 = vset.pattern.permute.xlu0 1
        %1912 = vperm.xlu0 %1911, %v1862
        %v1913 = vpop.permute.xlu0 %1912
        %1916 = vset.pattern.permute.xlu0 1
        %1917 = vperm.xlu0 %1916, %v1863
        %v1918 = vpop.permute.xlu0 %1917
        %1921 = vset.pattern.permute.xlu0 1
        %1922 = vperm.xlu0 %1921, %v1864
        %v1923 = vpop.permute.xlu0 %1922
        %1926 = vset.pattern.permute.xlu0 1
        %1927 = vperm.xlu0 %1926, %v1865
        %v1928 = vpop.permute.xlu0 %1927
        %1931 = vset.pattern.permute.xlu0 1
        %1932 = vperm.xlu0 %1931, %v1866
        %v1933 = vpop.permute.xlu0 %1932
        %1936 = vset.pattern.permute.xlu0 1
        %1937 = vperm.xlu0 %1936, %v1867
        %v1938 = vpop.permute.xlu0 %1937
        %1941 = vset.pattern.permute.xlu0 1
        %1942 = vperm.xlu0 %1941, %v1868
        %v1943 = vpop.permute.xlu0 %1942
        %1946 = vset.pattern.permute.xlu0 1
        %1947 = vperm.xlu0 %1946, %v1869
        %v1948 = vpop.permute.xlu0 %1947
        %1951 = vset.pattern.permute.xlu0 1
        %1952 = vperm.xlu0 %1951, %v1870
        %v1953 = vpop.permute.xlu0 %1952
        %1956 = vset.pattern.permute.xlu0 1
        %1957 = vperm.xlu0 %1956, %v1871
        %v1958 = vpop.permute.xlu0 %1957
        %1961 = vset.pattern.permute.xlu0 1
        %1962 = vperm.xlu0 %1961, %v1872
        %v1963 = vpop.permute.xlu0 %1962
        %1966 = vset.pattern.permute.xlu0 1
        %1967 = vperm.xlu0 %1966, %v1873
        %v1968 = vpop.permute.xlu0 %1967
        %1971 = vset.pattern.permute.xlu0 1
        %1972 = vperm.xlu0 %1971, %v1874
        %v1973 = vpop.permute.xlu0 %1972
        %1976 = vset.pattern.permute.xlu0 1
        %1977 = vperm.xlu0 %1976, %v1875
        %v1978 = vpop.permute.xlu0 %1977
        %1981 = vset.pattern.permute.xlu0 1
        %1982 = vperm.xlu0 %1981, %v1876
        %v1983 = vpop.permute.xlu0 %1982
        %1986 = vset.pattern.permute.xlu0 1
        %1987 = vperm.xlu0 %1986, %v1877
        %v1988 = vpop.permute.xlu0 %1987
        %1991 = vset.pattern.permute.xlu0 1
        %1992 = vperm.xlu0 %1991, %v1878
        %v1993 = vpop.permute.xlu0 %1992
        %1996 = vset.pattern.permute.xlu0 1
        %1997 = vperm.xlu0 %1996, %v1879
        %v1998 = vpop.permute.xlu0 %1997
        %2001 = vset.pattern.permute.xlu0 1
        %2002 = vperm.xlu0 %2001, %v1880
        %v2003 = vpop.permute.xlu0 %2002
        %2006 = vset.pattern.permute.xlu0 1
        %2007 = vperm.xlu0 %2006, %v1881
        %v2008 = vpop.permute.xlu0 %2007
        %2011 = vset.pattern.permute.xlu0 1
        %2012 = vperm.xlu0 %2011, %v1882
        %v2013 = vpop.permute.xlu0 %2012
        %2016 = vset.pattern.permute.xlu0 1
        %2017 = vperm.xlu0 %2016, %v1883
        %v2018 = vpop.permute.xlu0 %2017
        %2021 = vset.pattern.permute.xlu0 1
        %2022 = vperm.xlu0 %2021, %v1884
        %v2023 = vpop.permute.xlu0 %2022
        %2026 = vset.pattern.permute.xlu0 1
        %2027 = vperm.xlu0 %2026, %v1885
        %v2028 = vpop.permute.xlu0 %2027
        %2031 = vset.pattern.permute.xlu0 1
        %2032 = vperm.xlu0 %2031, %v1886
        %v2033 = vpop.permute.xlu0 %2032
        %2036 = vset.pattern.permute.xlu0 1
        %2037 = vperm.xlu0 %2036, %v1887
        %v2038 = vpop.permute.xlu0 %2037
        %2041 = vset.pattern.permute.xlu0 1
        %2042 = vperm.xlu0 %2041, %v1888
        %v2043 = vpop.permute.xlu0 %2042
        %2046 = vset.pattern.permute.xlu0 1
        %2047 = vperm.xlu0 %2046, %v1889
        %v2048 = vpop.permute.xlu0 %2047
        %v2050 = vmul.f32 %v752, %v1893
        %v2051 = vmul.f32 %v753, %v1893
        %v2052 = vmul.f32 %v754, %v1898
        %v2053 = vmul.f32 %v755, %v1898
        %v2054 = vmul.f32 %v756, %v1903
        %v2055 = vmul.f32 %v757, %v1903
        %v2056 = vmul.f32 %v758, %v1908
        %v2057 = vmul.f32 %v759, %v1908
        %v2058 = vmul.f32 %v760, %v1913
        %v2059 = vmul.f32 %v761, %v1913
        %v2060 = vmul.f32 %v762, %v1918
        %v2061 = vmul.f32 %v763, %v1918
        %v2062 = vmul.f32 %v764, %v1923
        %v2063 = vmul.f32 %v765, %v1923
        %v2064 = vmul.f32 %v766, %v1928
        %v2065 = vmul.f32 %v767, %v1928
        %v2066 = vmul.f32 %v768, %v1933
        %v2067 = vmul.f32 %v769, %v1933
        %v2068 = vmul.f32 %v770, %v1938
        %v2069 = vmul.f32 %v771, %v1938
        %v2070 = vmul.f32 %v772, %v1943
        %v2071 = vmul.f32 %v773, %v1943
        %v2072 = vmul.f32 %v774, %v1948
        %v2073 = vmul.f32 %v775, %v1948
        %v2074 = vmul.f32 %v776, %v1953
        %v2075 = vmul.f32 %v777, %v1953
        %v2076 = vmul.f32 %v778, %v1958
        %v2077 = vmul.f32 %v779, %v1958
        %v2078 = vmul.f32 %v780, %v1963
        %v2079 = vmul.f32 %v781, %v1963
        %v2080 = vmul.f32 %v782, %v1968
        %v2081 = vmul.f32 %v783, %v1968
        %v2082 = vmul.f32 %v784, %v1973
        %v2083 = vmul.f32 %v785, %v1973
        %v2084 = vmul.f32 %v786, %v1978
        %v2085 = vmul.f32 %v787, %v1978
        %v2086 = vmul.f32 %v788, %v1983
        %v2087 = vmul.f32 %v789, %v1983
        %v2088 = vmul.f32 %v790, %v1988
        %v2089 = vmul.f32 %v791, %v1988
        %v2090 = vmul.f32 %v792, %v1993
        %v2091 = vmul.f32 %v793, %v1993
        %v2092 = vmul.f32 %v794, %v1998
        %v2093 = vmul.f32 %v795, %v1998
        %v2094 = vmul.f32 %v796, %v2003
        %v2095 = vmul.f32 %v797, %v2003
        %v2096 = vmul.f32 %v798, %v2008
        %v2097 = vmul.f32 %v799, %v2008
        %v2098 = vmul.f32 %v800, %v2013
        %v2099 = vmul.f32 %v801, %v2013
        %v2100 = vmul.f32 %v802, %v2018
        %v2101 = vmul.f32 %v803, %v2018
        %v2102 = vmul.f32 %v804, %v2023
        %v2103 = vmul.f32 %v805, %v2023
        %v2104 = vmul.f32 %v806, %v2028
        %v2105 = vmul.f32 %v807, %v2028
        %v2106 = vmul.f32 %v808, %v2033
        %v2107 = vmul.f32 %v809, %v2033
        %v2108 = vmul.f32 %v810, %v2038
        %v2109 = vmul.f32 %v811, %v2038
        %v2110 = vmul.f32 %v812, %v2043
        %v2111 = vmul.f32 %v813, %v2043
        %v2112 = vmul.f32 %v814, %v2048
        %v2113 = vmul.f32 %v815, %v2048
        %s2114 = scalar_lea.vmem %s418, 1 [#allocation5]
        %v2115 = vld [vmem:[%s2114] ss:$8 sm:$0x3]
        %v2117 = vperm.slane %v2115, 0
        %v2118 = vperm.slane %v2115, 1
        %v2121 = vadd.f32 %v2050, %v2117
        %v2122 = vadd.f32 %v2051, %v2118
        %v2123 = vadd.f32 %v2052, %v2117
        %v2124 = vadd.f32 %v2053, %v2118
        %v2125 = vadd.f32 %v2054, %v2117
        %v2126 = vadd.f32 %v2055, %v2118
        %v2127 = vadd.f32 %v2056, %v2117
        %v2128 = vadd.f32 %v2057, %v2118
        %v2129 = vadd.f32 %v2058, %v2117
        %v2130 = vadd.f32 %v2059, %v2118
        %v2131 = vadd.f32 %v2060, %v2117
        %v2132 = vadd.f32 %v2061, %v2118
        %v2133 = vadd.f32 %v2062, %v2117
        %v2134 = vadd.f32 %v2063, %v2118
        %v2135 = vadd.f32 %v2064, %v2117
        %v2136 = vadd.f32 %v2065, %v2118
        %v2137 = vadd.f32 %v2066, %v2117
        %v2138 = vadd.f32 %v2067, %v2118
        %v2139 = vadd.f32 %v2068, %v2117
        %v2140 = vadd.f32 %v2069, %v2118
        %v2141 = vadd.f32 %v2070, %v2117
        %v2142 = vadd.f32 %v2071, %v2118
        %v2143 = vadd.f32 %v2072, %v2117
        %v2144 = vadd.f32 %v2073, %v2118
        %v2145 = vadd.f32 %v2074, %v2117
        %v2146 = vadd.f32 %v2075, %v2118
        %v2147 = vadd.f32 %v2076, %v2117
        %v2148 = vadd.f32 %v2077, %v2118
        %v2149 = vadd.f32 %v2078, %v2117
        %v2150 = vadd.f32 %v2079, %v2118
        %v2151 = vadd.f32 %v2080, %v2117
        %v2152 = vadd.f32 %v2081, %v2118
        %v2153 = vadd.f32 %v2082, %v2117
        %v2154 = vadd.f32 %v2083, %v2118
        %v2155 = vadd.f32 %v2084, %v2117
        %v2156 = vadd.f32 %v2085, %v2118
        %v2157 = vadd.f32 %v2086, %v2117
        %v2158 = vadd.f32 %v2087, %v2118
        %v2159 = vadd.f32 %v2088, %v2117
        %v2160 = vadd.f32 %v2089, %v2118
        %v2161 = vadd.f32 %v2090, %v2117
        %v2162 = vadd.f32 %v2091, %v2118
        %v2163 = vadd.f32 %v2092, %v2117
        %v2164 = vadd.f32 %v2093, %v2118
        %v2165 = vadd.f32 %v2094, %v2117
        %v2166 = vadd.f32 %v2095, %v2118
        %v2167 = vadd.f32 %v2096, %v2117
        %v2168 = vadd.f32 %v2097, %v2118
        %v2169 = vadd.f32 %v2098, %v2117
        %v2170 = vadd.f32 %v2099, %v2118
        %v2171 = vadd.f32 %v2100, %v2117
        %v2172 = vadd.f32 %v2101, %v2118
        %v2173 = vadd.f32 %v2102, %v2117
        %v2174 = vadd.f32 %v2103, %v2118
        %v2175 = vadd.f32 %v2104, %v2117
        %v2176 = vadd.f32 %v2105, %v2118
        %v2177 = vadd.f32 %v2106, %v2117
        %v2178 = vadd.f32 %v2107, %v2118
        %v2179 = vadd.f32 %v2108, %v2117
        %v2180 = vadd.f32 %v2109, %v2118
        %v2181 = vadd.f32 %v2110, %v2117
        %v2182 = vadd.f32 %v2111, %v2118
        %v2183 = vadd.f32 %v2112, %v2117
        %v2184 = vadd.f32 %v2113, %v2118
        %v2185 = vmul.f32 %v2121, 0.01
        %v2186 = vmul.f32 %v2122, 0.01
        %v2187 = vmul.f32 %v2123, 0.01
        %v2188 = vmul.f32 %v2124, 0.01
        %v2189 = vmul.f32 %v2125, 0.01
        %v2190 = vmul.f32 %v2126, 0.01
        %v2191 = vmul.f32 %v2127, 0.01
        %v2192 = vmul.f32 %v2128, 0.01
        %v2193 = vmul.f32 %v2129, 0.01
        %v2194 = vmul.f32 %v2130, 0.01
        %v2195 = vmul.f32 %v2131, 0.01
        %v2196 = vmul.f32 %v2132, 0.01
        %v2197 = vmul.f32 %v2133, 0.01
        %v2198 = vmul.f32 %v2134, 0.01
        %v2199 = vmul.f32 %v2135, 0.01
        %v2200 = vmul.f32 %v2136, 0.01
        %v2201 = vmul.f32 %v2137, 0.01
        %v2202 = vmul.f32 %v2138, 0.01
        %v2203 = vmul.f32 %v2139, 0.01
        %v2204 = vmul.f32 %v2140, 0.01
        %v2205 = vmul.f32 %v2141, 0.01
        %v2206 = vmul.f32 %v2142, 0.01
        %v2207 = vmul.f32 %v2143, 0.01
        %v2208 = vmul.f32 %v2144, 0.01
        %v2209 = vmul.f32 %v2145, 0.01
        %v2210 = vmul.f32 %v2146, 0.01
        %v2211 = vmul.f32 %v2147, 0.01
        %v2212 = vmul.f32 %v2148, 0.01
        %v2213 = vmul.f32 %v2149, 0.01
        %v2214 = vmul.f32 %v2150, 0.01
        %v2215 = vmul.f32 %v2151, 0.01
        %v2216 = vmul.f32 %v2152, 0.01
        %v2217 = vmul.f32 %v2153, 0.01
        %v2218 = vmul.f32 %v2154, 0.01
        %v2219 = vmul.f32 %v2155, 0.01
        %v2220 = vmul.f32 %v2156, 0.01
        %v2221 = vmul.f32 %v2157, 0.01
        %v2222 = vmul.f32 %v2158, 0.01
        %v2223 = vmul.f32 %v2159, 0.01
        %v2224 = vmul.f32 %v2160, 0.01
        %v2225 = vmul.f32 %v2161, 0.01
        %v2226 = vmul.f32 %v2162, 0.01
        %v2227 = vmul.f32 %v2163, 0.01
        %v2228 = vmul.f32 %v2164, 0.01
        %v2229 = vmul.f32 %v2165, 0.01
        %v2230 = vmul.f32 %v2166, 0.01
        %v2231 = vmul.f32 %v2167, 0.01
        %v2232 = vmul.f32 %v2168, 0.01
        %v2233 = vmul.f32 %v2169, 0.01
        %v2234 = vmul.f32 %v2170, 0.01
        %v2235 = vmul.f32 %v2171, 0.01
        %v2236 = vmul.f32 %v2172, 0.01
        %v2237 = vmul.f32 %v2173, 0.01
        %v2238 = vmul.f32 %v2174, 0.01
        %v2239 = vmul.f32 %v2175, 0.01
        %v2240 = vmul.f32 %v2176, 0.01
        %v2241 = vmul.f32 %v2177, 0.01
        %v2242 = vmul.f32 %v2178, 0.01
        %v2243 = vmul.f32 %v2179, 0.01
        %v2244 = vmul.f32 %v2180, 0.01
        %v2245 = vmul.f32 %v2181, 0.01
        %v2246 = vmul.f32 %v2182, 0.01
        %v2247 = vmul.f32 %v2183, 0.01
        %v2248 = vmul.f32 %v2184, 0.01
        %v2249 = vmax.f32 %v2121, %v2185
        %v2250 = vmax.f32 %v2122, %v2186
        %v2251 = vmax.f32 %v2123, %v2187
        %v2252 = vmax.f32 %v2124, %v2188
        %v2253 = vmax.f32 %v2125, %v2189
        %v2254 = vmax.f32 %v2126, %v2190
        %v2255 = vmax.f32 %v2127, %v2191
        %v2256 = vmax.f32 %v2128, %v2192
        %v2257 = vmax.f32 %v2129, %v2193
        %v2258 = vmax.f32 %v2130, %v2194
        %v2259 = vmax.f32 %v2131, %v2195
        %v2260 = vmax.f32 %v2132, %v2196
        %v2261 = vmax.f32 %v2133, %v2197
        %v2262 = vmax.f32 %v2134, %v2198
        %v2263 = vmax.f32 %v2135, %v2199
        %v2264 = vmax.f32 %v2136, %v2200
        %v2265 = vmax.f32 %v2137, %v2201
        %v2266 = vmax.f32 %v2138, %v2202
        %v2267 = vmax.f32 %v2139, %v2203
        %v2268 = vmax.f32 %v2140, %v2204
        %v2269 = vmax.f32 %v2141, %v2205
        %v2270 = vmax.f32 %v2142, %v2206
        %v2271 = vmax.f32 %v2143, %v2207
        %v2272 = vmax.f32 %v2144, %v2208
        %v2273 = vmax.f32 %v2145, %v2209
        %v2274 = vmax.f32 %v2146, %v2210
        %v2275 = vmax.f32 %v2147, %v2211
        %v2276 = vmax.f32 %v2148, %v2212
        %v2277 = vmax.f32 %v2149, %v2213
        %v2278 = vmax.f32 %v2150, %v2214
        %v2279 = vmax.f32 %v2151, %v2215
        %v2280 = vmax.f32 %v2152, %v2216
        %v2281 = vmax.f32 %v2153, %v2217
        %v2282 = vmax.f32 %v2154, %v2218
        %v2283 = vmax.f32 %v2155, %v2219
        %v2284 = vmax.f32 %v2156, %v2220
        %v2285 = vmax.f32 %v2157, %v2221
        %v2286 = vmax.f32 %v2158, %v2222
        %v2287 = vmax.f32 %v2159, %v2223
        %v2288 = vmax.f32 %v2160, %v2224
        %v2289 = vmax.f32 %v2161, %v2225
        %v2290 = vmax.f32 %v2162, %v2226
        %v2291 = vmax.f32 %v2163, %v2227
        %v2292 = vmax.f32 %v2164, %v2228
        %v2293 = vmax.f32 %v2165, %v2229
        %v2294 = vmax.f32 %v2166, %v2230
        %v2295 = vmax.f32 %v2167, %v2231
        %v2296 = vmax.f32 %v2168, %v2232
        %v2297 = vmax.f32 %v2169, %v2233
        %v2298 = vmax.f32 %v2170, %v2234
        %v2299 = vmax.f32 %v2171, %v2235
        %v2300 = vmax.f32 %v2172, %v2236
        %v2301 = vmax.f32 %v2173, %v2237
        %v2302 = vmax.f32 %v2174, %v2238
        %v2303 = vmax.f32 %v2175, %v2239
        %v2304 = vmax.f32 %v2176, %v2240
        %v2305 = vmax.f32 %v2177, %v2241
        %v2306 = vmax.f32 %v2178, %v2242
        %v2307 = vmax.f32 %v2179, %v2243
        %v2308 = vmax.f32 %v2180, %v2244
        %v2309 = vmax.f32 %v2181, %v2245
        %v2310 = vmax.f32 %v2182, %v2246
        %v2311 = vmax.f32 %v2183, %v2247
        %v2312 = vmax.f32 %v2184, %v2248
        %s2313 = scalar_lea.vmem %s418, 6 [#allocation5]
        %v2314 = vld [vmem:[%s2313] ss:$8 sm:$0x3]
        %v2316 = vperm.slane %v2314, 0
        %v2317 = vperm.slane %v2314, 1
        %v2320 = vsub.f32 %v2249, %v2316
        %v2321 = vsub.f32 %v2250, %v2317
        %v2322 = vsub.f32 %v2251, %v2316
        %v2323 = vsub.f32 %v2252, %v2317
        %v2324 = vsub.f32 %v2253, %v2316
        %v2325 = vsub.f32 %v2254, %v2317
        %v2326 = vsub.f32 %v2255, %v2316
        %v2327 = vsub.f32 %v2256, %v2317
        %v2328 = vsub.f32 %v2257, %v2316
        %v2329 = vsub.f32 %v2258, %v2317
        %v2330 = vsub.f32 %v2259, %v2316
        %v2331 = vsub.f32 %v2260, %v2317
        %v2332 = vsub.f32 %v2261, %v2316
        %v2333 = vsub.f32 %v2262, %v2317
        %v2334 = vsub.f32 %v2263, %v2316
        %v2335 = vsub.f32 %v2264, %v2317
        %v2336 = vsub.f32 %v2265, %v2316
        %v2337 = vsub.f32 %v2266, %v2317
        %v2338 = vsub.f32 %v2267, %v2316
        %v2339 = vsub.f32 %v2268, %v2317
        %v2340 = vsub.f32 %v2269, %v2316
        %v2341 = vsub.f32 %v2270, %v2317
        %v2342 = vsub.f32 %v2271, %v2316
        %v2343 = vsub.f32 %v2272, %v2317
        %v2344 = vsub.f32 %v2273, %v2316
        %v2345 = vsub.f32 %v2274, %v2317
        %v2346 = vsub.f32 %v2275, %v2316
        %v2347 = vsub.f32 %v2276, %v2317
        %v2348 = vsub.f32 %v2277, %v2316
        %v2349 = vsub.f32 %v2278, %v2317
        %v2350 = vsub.f32 %v2279, %v2316
        %v2351 = vsub.f32 %v2280, %v2317
        %v2352 = vsub.f32 %v2281, %v2316
        %v2353 = vsub.f32 %v2282, %v2317
        %v2354 = vsub.f32 %v2283, %v2316
        %v2355 = vsub.f32 %v2284, %v2317
        %v2356 = vsub.f32 %v2285, %v2316
        %v2357 = vsub.f32 %v2286, %v2317
        %v2358 = vsub.f32 %v2287, %v2316
        %v2359 = vsub.f32 %v2288, %v2317
        %v2360 = vsub.f32 %v2289, %v2316
        %v2361 = vsub.f32 %v2290, %v2317
        %v2362 = vsub.f32 %v2291, %v2316
        %v2363 = vsub.f32 %v2292, %v2317
        %v2364 = vsub.f32 %v2293, %v2316
        %v2365 = vsub.f32 %v2294, %v2317
        %v2366 = vsub.f32 %v2295, %v2316
        %v2367 = vsub.f32 %v2296, %v2317
        %v2368 = vsub.f32 %v2297, %v2316
        %v2369 = vsub.f32 %v2298, %v2317
        %v2370 = vsub.f32 %v2299, %v2316
        %v2371 = vsub.f32 %v2300, %v2317
        %v2372 = vsub.f32 %v2301, %v2316
        %v2373 = vsub.f32 %v2302, %v2317
        %v2374 = vsub.f32 %v2303, %v2316
        %v2375 = vsub.f32 %v2304, %v2317
        %v2376 = vsub.f32 %v2305, %v2316
        %v2377 = vsub.f32 %v2306, %v2317
        %v2378 = vsub.f32 %v2307, %v2316
        %v2379 = vsub.f32 %v2308, %v2317
        %v2380 = vsub.f32 %v2309, %v2316
        %v2381 = vsub.f32 %v2310, %v2317
        %v2382 = vsub.f32 %v2311, %v2316
        %v2383 = vsub.f32 %v2312, %v2317
        %v2384 = vmul.f32 %v2320, 1.442695
        %v2385 = vpow.pop %v2384
        %v2386 = vmul.f32 %v2321, 1.442695
        %v2387 = vpow.pop %v2386
        %v2388 = vmul.f32 %v2322, 1.442695
        %v2389 = vpow.pop %v2388
        %v2390 = vmul.f32 %v2323, 1.442695
        %v2391 = vpow.pop %v2390
        %v2392 = vmul.f32 %v2324, 1.442695
        %v2393 = vpow.pop %v2392
        %v2394 = vmul.f32 %v2325, 1.442695
        %v2395 = vpow.pop %v2394
        %v2396 = vmul.f32 %v2326, 1.442695
        %v2397 = vpow.pop %v2396
        %v2398 = vmul.f32 %v2327, 1.442695
        %v2399 = vpow.pop %v2398
        %v2400 = vmul.f32 %v2328, 1.442695
        %v2401 = vpow.pop %v2400
        %v2402 = vmul.f32 %v2329, 1.442695
        %v2403 = vpow.pop %v2402
        %v2404 = vmul.f32 %v2330, 1.442695
        %v2405 = vpow.pop %v2404
        %v2406 = vmul.f32 %v2331, 1.442695
        %v2407 = vpow.pop %v2406
        %v2408 = vmul.f32 %v2332, 1.442695
        %v2409 = vpow.pop %v2408
        %v2410 = vmul.f32 %v2333, 1.442695
        %v2411 = vpow.pop %v2410
        %v2412 = vmul.f32 %v2334, 1.442695
        %v2413 = vpow.pop %v2412
        %v2414 = vmul.f32 %v2335, 1.442695
        %v2415 = vpow.pop %v2414
        %v2416 = vmul.f32 %v2336, 1.442695
        %v2417 = vpow.pop %v2416
        %v2418 = vmul.f32 %v2337, 1.442695
        %v2419 = vpow.pop %v2418
        %v2420 = vmul.f32 %v2338, 1.442695
        %v2421 = vpow.pop %v2420
        %v2422 = vmul.f32 %v2339, 1.442695
        %v2423 = vpow.pop %v2422
        %v2424 = vmul.f32 %v2340, 1.442695
        %v2425 = vpow.pop %v2424
        %v2426 = vmul.f32 %v2341, 1.442695
        %v2427 = vpow.pop %v2426
        %v2428 = vmul.f32 %v2342, 1.442695
        %v2429 = vpow.pop %v2428
        %v2430 = vmul.f32 %v2343, 1.442695
        %v2431 = vpow.pop %v2430
        %v2432 = vmul.f32 %v2344, 1.442695
        %v2433 = vpow.pop %v2432
        %v2434 = vmul.f32 %v2345, 1.442695
        %v2435 = vpow.pop %v2434
        %v2436 = vmul.f32 %v2346, 1.442695
        %v2437 = vpow.pop %v2436
        %v2438 = vmul.f32 %v2347, 1.442695
        %v2439 = vpow.pop %v2438
        %v2440 = vmul.f32 %v2348, 1.442695
        %v2441 = vpow.pop %v2440
        %v2442 = vmul.f32 %v2349, 1.442695
        %v2443 = vpow.pop %v2442
        %v2444 = vmul.f32 %v2350, 1.442695
        %v2445 = vpow.pop %v2444
        %v2446 = vmul.f32 %v2351, 1.442695
        %v2447 = vpow.pop %v2446
        %v2448 = vmul.f32 %v2352, 1.442695
        %v2449 = vpow.pop %v2448
        %v2450 = vmul.f32 %v2353, 1.442695
        %v2451 = vpow.pop %v2450
        %v2452 = vmul.f32 %v2354, 1.442695
        %v2453 = vpow.pop %v2452
        %v2454 = vmul.f32 %v2355, 1.442695
        %v2455 = vpow.pop %v2454
        %v2456 = vmul.f32 %v2356, 1.442695
        %v2457 = vpow.pop %v2456
        %v2458 = vmul.f32 %v2357, 1.442695
        %v2459 = vpow.pop %v2458
        %v2460 = vmul.f32 %v2358, 1.442695
        %v2461 = vpow.pop %v2460
        %v2462 = vmul.f32 %v2359, 1.442695
        %v2463 = vpow.pop %v2462
        %v2464 = vmul.f32 %v2360, 1.442695
        %v2465 = vpow.pop %v2464
        %v2466 = vmul.f32 %v2361, 1.442695
        %v2467 = vpow.pop %v2466
        %v2468 = vmul.f32 %v2362, 1.442695
        %v2469 = vpow.pop %v2468
        %v2470 = vmul.f32 %v2363, 1.442695
        %v2471 = vpow.pop %v2470
        %v2472 = vmul.f32 %v2364, 1.442695
        %v2473 = vpow.pop %v2472
        %v2474 = vmul.f32 %v2365, 1.442695
        %v2475 = vpow.pop %v2474
        %v2476 = vmul.f32 %v2366, 1.442695
        %v2477 = vpow.pop %v2476
        %v2478 = vmul.f32 %v2367, 1.442695
        %v2479 = vpow.pop %v2478
        %v2480 = vmul.f32 %v2368, 1.442695
        %v2481 = vpow.pop %v2480
        %v2482 = vmul.f32 %v2369, 1.442695
        %v2483 = vpow.pop %v2482
        %v2484 = vmul.f32 %v2370, 1.442695
        %v2485 = vpow.pop %v2484
        %v2486 = vmul.f32 %v2371, 1.442695
        %v2487 = vpow.pop %v2486
        %v2488 = vmul.f32 %v2372, 1.442695
        %v2489 = vpow.pop %v2488
        %v2490 = vmul.f32 %v2373, 1.442695
        %v2491 = vpow.pop %v2490
        %v2492 = vmul.f32 %v2374, 1.442695
        %v2493 = vpow.pop %v2492
        %v2494 = vmul.f32 %v2375, 1.442695
        %v2495 = vpow.pop %v2494
        %v2496 = vmul.f32 %v2376, 1.442695
        %v2497 = vpow.pop %v2496
        %v2498 = vmul.f32 %v2377, 1.442695
        %v2499 = vpow.pop %v2498
        %v2500 = vmul.f32 %v2378, 1.442695
        %v2501 = vpow.pop %v2500
        %v2502 = vmul.f32 %v2379, 1.442695
        %v2503 = vpow.pop %v2502
        %v2504 = vmul.f32 %v2380, 1.442695
        %v2505 = vpow.pop %v2504
        %v2506 = vmul.f32 %v2381, 1.442695
        %v2507 = vpow.pop %v2506
        %v2508 = vmul.f32 %v2382, 1.442695
        %v2509 = vpow.pop %v2508
        %v2510 = vmul.f32 %v2383, 1.442695
        %v2511 = vpow.pop %v2510
        %v2512 = vmul.f32 %v2385, %v896
        %v2513 = vmul.f32 %v2387, %v897
        %v2514 = vmul.f32 %v2389, %v898
        %v2515 = vmul.f32 %v2391, %v899
        %v2516 = vmul.f32 %v2393, %v900
        %v2517 = vmul.f32 %v2395, %v901
        %v2518 = vmul.f32 %v2397, %v902
        %v2519 = vmul.f32 %v2399, %v903
        %v2520 = vmul.f32 %v2401, %v904
        %v2521 = vmul.f32 %v2403, %v905
        %v2522 = vmul.f32 %v2405, %v906
        %v2523 = vmul.f32 %v2407, %v907
        %v2524 = vmul.f32 %v2409, %v908
        %v2525 = vmul.f32 %v2411, %v909
        %v2526 = vmul.f32 %v2413, %v910
        %v2527 = vmul.f32 %v2415, %v911
        %v2528 = vmul.f32 %v2417, %v912
        %v2529 = vmul.f32 %v2419, %v913
        %v2530 = vmul.f32 %v2421, %v914
        %v2531 = vmul.f32 %v2423, %v915
        %v2532 = vmul.f32 %v2425, %v916
        %v2533 = vmul.f32 %v2427, %v917
        %v2534 = vmul.f32 %v2429, %v918
        %v2535 = vmul.f32 %v2431, %v919
        %v2536 = vmul.f32 %v2433, %v920
        %v2537 = vmul.f32 %v2435, %v921
        %v2538 = vmul.f32 %v2437, %v922
        %v2539 = vmul.f32 %v2439, %v923
        %v2540 = vmul.f32 %v2441, %v924
        %v2541 = vmul.f32 %v2443, %v925
        %v2542 = vmul.f32 %v2445, %v926
        %v2543 = vmul.f32 %v2447, %v927
        %v2544 = vmul.f32 %v2449, %v928
        %v2545 = vmul.f32 %v2451, %v929
        %v2546 = vmul.f32 %v2453, %v930
        %v2547 = vmul.f32 %v2455, %v931
        %v2548 = vmul.f32 %v2457, %v932
        %v2549 = vmul.f32 %v2459, %v933
        %v2550 = vmul.f32 %v2461, %v934
        %v2551 = vmul.f32 %v2463, %v935
        %v2552 = vmul.f32 %v2465, %v936
        %v2553 = vmul.f32 %v2467, %v937
        %v2554 = vmul.f32 %v2469, %v938
        %v2555 = vmul.f32 %v2471, %v939
        %v2556 = vmul.f32 %v2473, %v940
        %v2557 = vmul.f32 %v2475, %v941
        %v2558 = vmul.f32 %v2477, %v942
        %v2559 = vmul.f32 %v2479, %v943
        %v2560 = vmul.f32 %v2481, %v944
        %v2561 = vmul.f32 %v2483, %v945
        %v2562 = vmul.f32 %v2485, %v946
        %v2563 = vmul.f32 %v2487, %v947
        %v2564 = vmul.f32 %v2489, %v948
        %v2565 = vmul.f32 %v2491, %v949
        %v2566 = vmul.f32 %v2493, %v950
        %v2567 = vmul.f32 %v2495, %v951
        %v2568 = vmul.f32 %v2497, %v952
        %v2569 = vmul.f32 %v2499, %v953
        %v2570 = vmul.f32 %v2501, %v954
        %v2571 = vmul.f32 %v2503, %v955
        %v2572 = vmul.f32 %v2505, %v956
        %v2573 = vmul.f32 %v2507, %v957
        %v2574 = vmul.f32 %v2509, %v958
        %v2575 = vmul.f32 %v2511, %v959
        %s2576 = scalar_lea.vmem [#allocation2], 1
        %v2577 = vld [vmem:[%s2576] ss:$4 sm:$0x3]
        %2578 = vmatpush.msra.mxu0 %v2542
        %2579 = vmatpush.msra.mxu0 %v2540
        %2580 = vmatpush.msra.mxu0 %v2538
        %2581 = vmatpush.msra.mxu0 %v2536
        %2582 = vmatpush.msra.mxu0 %v2534
        %2583 = vmatpush.msra.mxu0 %v2532
        %2584 = vmatpush.msra.mxu0 %v2530
        %2585 = vmatpush.msra.mxu0 %v2528
        %2586 = vmatpush.msra.mxu0 %v2526
        %2587 = vmatpush.msra.mxu0 %v2524
        %2588 = vmatpush.msra.mxu0 %v2522
        %2589 = vmatpush.msra.mxu0 %v2520
        %2590 = vmatpush.msra.mxu0 %v2518
        %2591 = vmatpush.msra.mxu0 %v2516
        %2592 = vmatpush.msra.mxu0 %v2514
        %2593 = vmatpush.msra.mxu0 %v2512
        %2594 = vmatmul.f32.gmra.mxu0 1.0
        %v2595 = vpop.f32.mrf.mxu0
        %v2596 = vadd.f32 0.0, %v2595
        %2597 = vdwg.mxu0
        %2598 = vmatpush.msra.mxu0 %v2574
        %2599 = vmatpush.msra.mxu0 %v2572
        %2600 = vmatpush.msra.mxu0 %v2570
        %2601 = vmatpush.msra.mxu0 %v2568
        %2602 = vmatpush.msra.mxu0 %v2566
        %2603 = vmatpush.msra.mxu0 %v2564
        %2604 = vmatpush.msra.mxu0 %v2562
        %2605 = vmatpush.msra.mxu0 %v2560
        %2606 = vmatpush.msra.mxu0 %v2558
        %2607 = vmatpush.msra.mxu0 %v2556
        %2608 = vmatpush.msra.mxu0 %v2554
        %2609 = vmatpush.msra.mxu0 %v2552
        %2610 = vmatpush.msra.mxu0 %v2550
        %2611 = vmatpush.msra.mxu0 %v2548
        %2612 = vmatpush.msra.mxu0 %v2546
        %2613 = vmatpush.msra.mxu0 %v2544
        %2614 = vmatmul.f32.gmra.mxu0 1.0
        %v2615 = vpop.f32.mrf.mxu0
        %v2616 = vadd.f32 %v2596, %v2615
        %2617 = vdwg.mxu0
        %2618 = vmatpush.msra.mxu0 %v2543
        %2619 = vmatpush.msra.mxu0 %v2541
        %2620 = vmatpush.msra.mxu0 %v2539
        %2621 = vmatpush.msra.mxu0 %v2537
        %2622 = vmatpush.msra.mxu0 %v2535
        %2623 = vmatpush.msra.mxu0 %v2533
        %2624 = vmatpush.msra.mxu0 %v2531
        %2625 = vmatpush.msra.mxu0 %v2529
        %2626 = vmatpush.msra.mxu0 %v2527
        %2627 = vmatpush.msra.mxu0 %v2525
        %2628 = vmatpush.msra.mxu0 %v2523
        %2629 = vmatpush.msra.mxu0 %v2521
        %2630 = vmatpush.msra.mxu0 %v2519
        %2631 = vmatpush.msra.mxu0 %v2517
        %2632 = vmatpush.msra.mxu0 %v2515
        %2633 = vmatpush.msra.mxu0 %v2513
        %2634 = vmatmul.f32.gmra.mxu0 1.0
        %v2635 = vpop.f32.mrf.mxu0
        %v2636 = vadd.f32 0.0, %v2635
        %2637 = vdwg.mxu0
        %2638 = vmatpush.msra.mxu0 %v2575
        %2639 = vmatpush.msra.mxu0 %v2573
        %2640 = vmatpush.msra.mxu0 %v2571
        %2641 = vmatpush.msra.mxu0 %v2569
        %2642 = vmatpush.msra.mxu0 %v2567
        %2643 = vmatpush.msra.mxu0 %v2565
        %2644 = vmatpush.msra.mxu0 %v2563
        %2645 = vmatpush.msra.mxu0 %v2561
        %2646 = vmatpush.msra.mxu0 %v2559
        %2647 = vmatpush.msra.mxu0 %v2557
        %2648 = vmatpush.msra.mxu0 %v2555
        %2649 = vmatpush.msra.mxu0 %v2553
        %2650 = vmatpush.msra.mxu0 %v2551
        %2651 = vmatpush.msra.mxu0 %v2549
        %2652 = vmatpush.msra.mxu0 %v2547
        %2653 = vmatpush.msra.mxu0 %v2545
        %2654 = vmatmul.f32.gmra.mxu0 1.0
        %v2655 = vpop.f32.mrf.mxu0
        %v2656 = vadd.f32 %v2636, %v2655
        %2657 = vdwg.mxu0
        %v2660 = vrot.slane %v2656, 7
        %v2661 = vsel %vm1697, %v2616, %v2660
        %v2663 = vadd.f32 %v2577, %v2661
        %2664 = vst.msk [vmem:[%s2576] ss:$4 sm:$0x3] %vm1704, %v2663
        %v2665 = vmul.f32 %v2512, %v752
        %v2666 = vmul.f32 %v2513, %v753
        %v2667 = vmul.f32 %v2514, %v754
        %v2668 = vmul.f32 %v2515, %v755
        %v2669 = vmul.f32 %v2516, %v756
        %v2670 = vmul.f32 %v2517, %v757
        %v2671 = vmul.f32 %v2518, %v758
        %v2672 = vmul.f32 %v2519, %v759
        %v2673 = vmul.f32 %v2520, %v760
        %v2674 = vmul.f32 %v2521, %v761
        %v2675 = vmul.f32 %v2522, %v762
        %v2676 = vmul.f32 %v2523, %v763
        %v2677 = vmul.f32 %v2524, %v764
        %v2678 = vmul.f32 %v2525, %v765
        %v2679 = vmul.f32 %v2526, %v766
        %v2680 = vmul.f32 %v2527, %v767
        %v2681 = vmul.f32 %v2528, %v768
        %v2682 = vmul.f32 %v2529, %v769
        %v2683 = vmul.f32 %v2530, %v770
        %v2684 = vmul.f32 %v2531, %v771
        %v2685 = vmul.f32 %v2532, %v772
        %v2686 = vmul.f32 %v2533, %v773
        %v2687 = vmul.f32 %v2534, %v774
        %v2688 = vmul.f32 %v2535, %v775
        %v2689 = vmul.f32 %v2536, %v776
        %v2690 = vmul.f32 %v2537, %v777
        %v2691 = vmul.f32 %v2538, %v778
        %v2692 = vmul.f32 %v2539, %v779
        %v2693 = vmul.f32 %v2540, %v780
        %v2694 = vmul.f32 %v2541, %v781
        %v2695 = vmul.f32 %v2542, %v782
        %v2696 = vmul.f32 %v2543, %v783
        %v2697 = vmul.f32 %v2544, %v784
        %v2698 = vmul.f32 %v2545, %v785
        %v2699 = vmul.f32 %v2546, %v786
        %v2700 = vmul.f32 %v2547, %v787
        %v2701 = vmul.f32 %v2548, %v788
        %v2702 = vmul.f32 %v2549, %v789
        %v2703 = vmul.f32 %v2550, %v790
        %v2704 = vmul.f32 %v2551, %v791
        %v2705 = vmul.f32 %v2552, %v792
        %v2706 = vmul.f32 %v2553, %v793
        %v2707 = vmul.f32 %v2554, %v794
        %v2708 = vmul.f32 %v2555, %v795
        %v2709 = vmul.f32 %v2556, %v796
        %v2710 = vmul.f32 %v2557, %v797
        %v2711 = vmul.f32 %v2558, %v798
        %v2712 = vmul.f32 %v2559, %v799
        %v2713 = vmul.f32 %v2560, %v800
        %v2714 = vmul.f32 %v2561, %v801
        %v2715 = vmul.f32 %v2562, %v802
        %v2716 = vmul.f32 %v2563, %v803
        %v2717 = vmul.f32 %v2564, %v804
        %v2718 = vmul.f32 %v2565, %v805
        %v2719 = vmul.f32 %v2566, %v806
        %v2720 = vmul.f32 %v2567, %v807
        %v2721 = vmul.f32 %v2568, %v808
        %v2722 = vmul.f32 %v2569, %v809
        %v2723 = vmul.f32 %v2570, %v810
        %v2724 = vmul.f32 %v2571, %v811
        %v2725 = vmul.f32 %v2572, %v812
        %v2726 = vmul.f32 %v2573, %v813
        %v2727 = vmul.f32 %v2574, %v814
        %v2728 = vmul.f32 %v2575, %v815
        %v2729 = vld [vmem:[%s425 + $0x10] sm:$0xff]
        %v2730 = vld [vmem:[%s425 + $0x18] sm:$0xff]
        %v2731 = vld [vmem:[#allocation3 + $0x10] sm:$0xff]
        %v2732 = vld [vmem:[#allocation3 + $0x18] sm:$0xff]
        %2733 = vmatpush.msra.mxu0 %v2695
        %2734 = vmatpush.msra.mxu0 %v2693
        %2735 = vmatpush.msra.mxu0 %v2691
        %2736 = vmatpush.msra.mxu0 %v2689
        %2737 = vmatpush.msra.mxu0 %v2687
        %2738 = vmatpush.msra.mxu0 %v2685
        %2739 = vmatpush.msra.mxu0 %v2683
        %2740 = vmatpush.msra.mxu0 %v2681
        %2741 = vmatpush.msra.mxu0 %v2679
        %2742 = vmatpush.msra.mxu0 %v2677
        %2743 = vmatpush.msra.mxu0 %v2675
        %2744 = vmatpush.msra.mxu0 %v2673
        %2745 = vmatpush.msra.mxu0 %v2671
        %2746 = vmatpush.msra.mxu0 %v2669
        %2747 = vmatpush.msra.mxu0 %v2667
        %2748 = vmatpush.msra.mxu0 %v2665
        %2749 = vmatmul.f32.gmra.mxu0 %v2729
        %v2750 = vpop.f32.mrf.mxu0
        %v2751 = vadd.f32 0.0, %v2750
        %2752 = vdwg.mxu0
        %2753 = vmatpush.msra.mxu0 %v2727
        %2754 = vmatpush.msra.mxu0 %v2725
        %2755 = vmatpush.msra.mxu0 %v2723
        %2756 = vmatpush.msra.mxu0 %v2721
        %2757 = vmatpush.msra.mxu0 %v2719
        %2758 = vmatpush.msra.mxu0 %v2717
        %2759 = vmatpush.msra.mxu0 %v2715
        %2760 = vmatpush.msra.mxu0 %v2713
        %2761 = vmatpush.msra.mxu0 %v2711
        %2762 = vmatpush.msra.mxu0 %v2709
        %2763 = vmatpush.msra.mxu0 %v2707
        %2764 = vmatpush.msra.mxu0 %v2705
        %2765 = vmatpush.msra.mxu0 %v2703
        %2766 = vmatpush.msra.mxu0 %v2701
        %2767 = vmatpush.msra.mxu0 %v2699
        %2768 = vmatpush.msra.mxu0 %v2697
        %2769 = vmatmul.f32.gmra.mxu0 %v2730
        %v2770 = vpop.f32.mrf.mxu0
        %v2771 = vadd.f32 %v2751, %v2770
        %2772 = vdwg.mxu0
        %2773 = vmatpush.msra.mxu0 %v2696
        %2774 = vmatpush.msra.mxu0 %v2694
        %2775 = vmatpush.msra.mxu0 %v2692
        %2776 = vmatpush.msra.mxu0 %v2690
        %2777 = vmatpush.msra.mxu0 %v2688
        %2778 = vmatpush.msra.mxu0 %v2686
        %2779 = vmatpush.msra.mxu0 %v2684
        %2780 = vmatpush.msra.mxu0 %v2682
        %2781 = vmatpush.msra.mxu0 %v2680
        %2782 = vmatpush.msra.mxu0 %v2678
        %2783 = vmatpush.msra.mxu0 %v2676
        %2784 = vmatpush.msra.mxu0 %v2674
        %2785 = vmatpush.msra.mxu0 %v2672
        %2786 = vmatpush.msra.mxu0 %v2670
        %2787 = vmatpush.msra.mxu0 %v2668
        %2788 = vmatpush.msra.mxu0 %v2666
        %2789 = vmatmul.f32.gmra.mxu0 %v2729
        %v2790 = vpop.f32.mrf.mxu0
        %v2791 = vadd.f32 0.0, %v2790
        %2792 = vdwg.mxu0
        %2793 = vmatpush.msra.mxu0 %v2728
        %2794 = vmatpush.msra.mxu0 %v2726
        %2795 = vmatpush.msra.mxu0 %v2724
        %2796 = vmatpush.msra.mxu0 %v2722
        %2797 = vmatpush.msra.mxu0 %v2720
        %2798 = vmatpush.msra.mxu0 %v2718
        %2799 = vmatpush.msra.mxu0 %v2716
        %2800 = vmatpush.msra.mxu0 %v2714
        %2801 = vmatpush.msra.mxu0 %v2712
        %2802 = vmatpush.msra.mxu0 %v2710
        %2803 = vmatpush.msra.mxu0 %v2708
        %2804 = vmatpush.msra.mxu0 %v2706
        %2805 = vmatpush.msra.mxu0 %v2704
        %2806 = vmatpush.msra.mxu0 %v2702
        %2807 = vmatpush.msra.mxu0 %v2700
        %2808 = vmatpush.msra.mxu0 %v2698
        %2809 = vmatmul.f32.gmra.mxu0 %v2730
        %v2810 = vpop.f32.mrf.mxu0
        %v2811 = vadd.f32 %v2791, %v2810
        %2812 = vdwg.mxu0
        %v2813 = vadd.f32 %v2731, %v2771
        %v2814 = vadd.f32 %v2732, %v2811
        %2815 = vst [vmem:[#allocation3 + $0x10] sm:$0xff] %v2813
        %2816 = vst [vmem:[#allocation3 + $0x18] sm:$0xff] %v2814
        %s2817 = scalar_lea.vmem %s411, 128 [#allocation4]
        %v2818 = vld [vmem:[%s2817] sm:$0xff]
        %v2819 = vld [vmem:[%s2817 + $0x8] sm:$0xff]
        %v2820 = vld [vmem:[%s2817 + $0x10] sm:$0xff]
        %v2821 = vld [vmem:[%s2817 + $0x18] sm:$0xff]
        %v2822 = vld [vmem:[%s2817 + $0x20] sm:$0xff]
        %v2823 = vld [vmem:[%s2817 + $0x28] sm:$0xff]
        %v2824 = vld [vmem:[%s2817 + $0x30] sm:$0xff]
        %v2825 = vld [vmem:[%s2817 + $0x38] sm:$0xff]
        %v2826 = vld [vmem:[%s2817 + $0x40] sm:$0xff]
        %v2827 = vld [vmem:[%s2817 + $0x48] sm:$0xff]
        %v2828 = vld [vmem:[%s2817 + $0x50] sm:$0xff]
        %v2829 = vld [vmem:[%s2817 + $0x58] sm:$0xff]
        %v2830 = vld [vmem:[%s2817 + $0x60] sm:$0xff]
        %v2831 = vld [vmem:[%s2817 + $0x68] sm:$0xff]
        %v2832 = vld [vmem:[%s2817 + $0x70] sm:$0xff]
        %v2833 = vld [vmem:[%s2817 + $0x78] sm:$0xff]
        %v2834 = vunpack.c.0.s8 %v2818
        %v2835 = vunpack.c.0.s8 %v2819
        %v2836 = vunpack.c.1.s8 %v2818
        %v2837 = vunpack.c.1.s8 %v2819
        %v2838 = vunpack.c.2.s8 %v2818
        %v2839 = vunpack.c.2.s8 %v2819
        %v2840 = vunpack.c.3.s8 %v2818
        %v2841 = vunpack.c.3.s8 %v2819
        %v2842 = vunpack.c.0.s8 %v2820
        %v2843 = vunpack.c.0.s8 %v2821
        %v2844 = vunpack.c.1.s8 %v2820
        %v2845 = vunpack.c.1.s8 %v2821
        %v2846 = vunpack.c.2.s8 %v2820
        %v2847 = vunpack.c.2.s8 %v2821
        %v2848 = vunpack.c.3.s8 %v2820
        %v2849 = vunpack.c.3.s8 %v2821
        %v2850 = vunpack.c.0.s8 %v2822
        %v2851 = vunpack.c.0.s8 %v2823
        %v2852 = vunpack.c.1.s8 %v2822
        %v2853 = vunpack.c.1.s8 %v2823
        %v2854 = vunpack.c.2.s8 %v2822
        %v2855 = vunpack.c.2.s8 %v2823
        %v2856 = vunpack.c.3.s8 %v2822
        %v2857 = vunpack.c.3.s8 %v2823
        %v2858 = vunpack.c.0.s8 %v2824
        %v2859 = vunpack.c.0.s8 %v2825
        %v2860 = vunpack.c.1.s8 %v2824
        %v2861 = vunpack.c.1.s8 %v2825
        %v2862 = vunpack.c.2.s8 %v2824
        %v2863 = vunpack.c.2.s8 %v2825
        %v2864 = vunpack.c.3.s8 %v2824
        %v2865 = vunpack.c.3.s8 %v2825
        %v2866 = vunpack.c.0.s8 %v2826
        %v2867 = vunpack.c.0.s8 %v2827
        %v2868 = vunpack.c.1.s8 %v2826
        %v2869 = vunpack.c.1.s8 %v2827
        %v2870 = vunpack.c.2.s8 %v2826
        %v2871 = vunpack.c.2.s8 %v2827
        %v2872 = vunpack.c.3.s8 %v2826
        %v2873 = vunpack.c.3.s8 %v2827
        %v2874 = vunpack.c.0.s8 %v2828
        %v2875 = vunpack.c.0.s8 %v2829
        %v2876 = vunpack.c.1.s8 %v2828
        %v2877 = vunpack.c.1.s8 %v2829
        %v2878 = vunpack.c.2.s8 %v2828
        %v2879 = vunpack.c.2.s8 %v2829
        %v2880 = vunpack.c.3.s8 %v2828
        %v2881 = vunpack.c.3.s8 %v2829
        %v2882 = vunpack.c.0.s8 %v2830
        %v2883 = vunpack.c.0.s8 %v2831
        %v2884 = vunpack.c.1.s8 %v2830
        %v2885 = vunpack.c.1.s8 %v2831
        %v2886 = vunpack.c.2.s8 %v2830
        %v2887 = vunpack.c.2.s8 %v2831
        %v2888 = vunpack.c.3.s8 %v2830
        %v2889 = vunpack.c.3.s8 %v2831
        %v2890 = vunpack.c.0.s8 %v2832
        %v2891 = vunpack.c.0.s8 %v2833
        %v2892 = vunpack.c.1.s8 %v2832
        %v2893 = vunpack.c.1.s8 %v2833
        %v2894 = vunpack.c.2.s8 %v2832
        %v2895 = vunpack.c.2.s8 %v2833
        %v2896 = vunpack.c.3.s8 %v2832
        %v2897 = vunpack.c.3.s8 %v2833
        %v2898 = vcvt.s32.f32 %v2834
        %v2899 = vcvt.s32.f32 %v2835
        %v2900 = vcvt.s32.f32 %v2836
        %v2901 = vcvt.s32.f32 %v2837
        %v2902 = vcvt.s32.f32 %v2838
        %v2903 = vcvt.s32.f32 %v2839
        %v2904 = vcvt.s32.f32 %v2840
        %v2905 = vcvt.s32.f32 %v2841
        %v2906 = vcvt.s32.f32 %v2842
        %v2907 = vcvt.s32.f32 %v2843
        %v2908 = vcvt.s32.f32 %v2844
        %v2909 = vcvt.s32.f32 %v2845
        %v2910 = vcvt.s32.f32 %v2846
        %v2911 = vcvt.s32.f32 %v2847
        %v2912 = vcvt.s32.f32 %v2848
        %v2913 = vcvt.s32.f32 %v2849
        %v2914 = vcvt.s32.f32 %v2850
        %v2915 = vcvt.s32.f32 %v2851
        %v2916 = vcvt.s32.f32 %v2852
        %v2917 = vcvt.s32.f32 %v2853
        %v2918 = vcvt.s32.f32 %v2854
        %v2919 = vcvt.s32.f32 %v2855
        %v2920 = vcvt.s32.f32 %v2856
        %v2921 = vcvt.s32.f32 %v2857
        %v2922 = vcvt.s32.f32 %v2858
        %v2923 = vcvt.s32.f32 %v2859
        %v2924 = vcvt.s32.f32 %v2860
        %v2925 = vcvt.s32.f32 %v2861
        %v2926 = vcvt.s32.f32 %v2862
        %v2927 = vcvt.s32.f32 %v2863
        %v2928 = vcvt.s32.f32 %v2864
        %v2929 = vcvt.s32.f32 %v2865
        %v2930 = vcvt.s32.f32 %v2866
        %v2931 = vcvt.s32.f32 %v2867
        %v2932 = vcvt.s32.f32 %v2868
        %v2933 = vcvt.s32.f32 %v2869
        %v2934 = vcvt.s32.f32 %v2870
        %v2935 = vcvt.s32.f32 %v2871
        %v2936 = vcvt.s32.f32 %v2872
        %v2937 = vcvt.s32.f32 %v2873
        %v2938 = vcvt.s32.f32 %v2874
        %v2939 = vcvt.s32.f32 %v2875
        %v2940 = vcvt.s32.f32 %v2876
        %v2941 = vcvt.s32.f32 %v2877
        %v2942 = vcvt.s32.f32 %v2878
        %v2943 = vcvt.s32.f32 %v2879
        %v2944 = vcvt.s32.f32 %v2880
        %v2945 = vcvt.s32.f32 %v2881
        %v2946 = vcvt.s32.f32 %v2882
        %v2947 = vcvt.s32.f32 %v2883
        %v2948 = vcvt.s32.f32 %v2884
        %v2949 = vcvt.s32.f32 %v2885
        %v2950 = vcvt.s32.f32 %v2886
        %v2951 = vcvt.s32.f32 %v2887
        %v2952 = vcvt.s32.f32 %v2888
        %v2953 = vcvt.s32.f32 %v2889
        %v2954 = vcvt.s32.f32 %v2890
        %v2955 = vcvt.s32.f32 %v2891
        %v2956 = vcvt.s32.f32 %v2892
        %v2957 = vcvt.s32.f32 %v2893
        %v2958 = vcvt.s32.f32 %v2894
        %v2959 = vcvt.s32.f32 %v2895
        %v2960 = vcvt.s32.f32 %v2896
        %v2961 = vcvt.s32.f32 %v2897
        %v2962 = vld [vmem:[%s471] sm:$0xff]
        %v2963 = vld [vmem:[%s471 + $0x8] sm:$0xff]
        %v2964 = vld [vmem:[%s471 + $0x10] sm:$0xff]
        %v2965 = vld [vmem:[%s471 + $0x18] sm:$0xff]
        %v2966 = vld [vmem:[%s471 + $0x20] sm:$0xff]
        %v2967 = vld [vmem:[%s471 + $0x28] sm:$0xff]
        %v2968 = vld [vmem:[%s471 + $0x30] sm:$0xff]
        %v2969 = vld [vmem:[%s471 + $0x38] sm:$0xff]
        %v2970 = vld [vmem:[%s471 + $0x40] sm:$0xff]
        %v2971 = vld [vmem:[%s471 + $0x48] sm:$0xff]
        %v2972 = vld [vmem:[%s471 + $0x50] sm:$0xff]
        %v2973 = vld [vmem:[%s471 + $0x58] sm:$0xff]
        %v2974 = vld [vmem:[%s471 + $0x60] sm:$0xff]
        %v2975 = vld [vmem:[%s471 + $0x68] sm:$0xff]
        %v2976 = vld [vmem:[%s471 + $0x70] sm:$0xff]
        %v2977 = vld [vmem:[%s471 + $0x78] sm:$0xff]
        %v2978 = vld [vmem:[%s471 + $0x80] sm:$0xff]
        %v2979 = vld [vmem:[%s471 + $0x88] sm:$0xff]
        %v2980 = vld [vmem:[%s471 + $0x90] sm:$0xff]
        %v2981 = vld [vmem:[%s471 + $0x98] sm:$0xff]
        %v2982 = vld [vmem:[%s471 + $0xa0] sm:$0xff]
        %v2983 = vld [vmem:[%s471 + $0xa8] sm:$0xff]
        %v2984 = vld [vmem:[%s471 + $0xb0] sm:$0xff]
        %v2985 = vld [vmem:[%s471 + $0xb8] sm:$0xff]
        %v2986 = vld [vmem:[%s471 + $0xc0] sm:$0xff]
        %v2987 = vld [vmem:[%s471 + $0xc8] sm:$0xff]
        %v2988 = vld [vmem:[%s471 + $0xd0] sm:$0xff]
        %v2989 = vld [vmem:[%s471 + $0xd8] sm:$0xff]
        %v2990 = vld [vmem:[%s471 + $0xe0] sm:$0xff]
        %v2991 = vld [vmem:[%s471 + $0xe8] sm:$0xff]
        %v2992 = vld [vmem:[%s471 + $0xf0] sm:$0xff]
        %v2993 = vld [vmem:[%s471 + $0xf8] sm:$0xff]
        %2995 = vset.pattern.permute.xlu0 2
        %2996 = vperm.xlu0 %2995, %v2962
        %v2997 = vpop.permute.xlu0 %2996
        %3000 = vset.pattern.permute.xlu0 2
        %3001 = vperm.xlu0 %3000, %v2963
        %v3002 = vpop.permute.xlu0 %3001
        %3005 = vset.pattern.permute.xlu0 2
        %3006 = vperm.xlu0 %3005, %v2964
        %v3007 = vpop.permute.xlu0 %3006
        %3010 = vset.pattern.permute.xlu0 2
        %3011 = vperm.xlu0 %3010, %v2965
        %v3012 = vpop.permute.xlu0 %3011
        %3015 = vset.pattern.permute.xlu0 2
        %3016 = vperm.xlu0 %3015, %v2966
        %v3017 = vpop.permute.xlu0 %3016
        %3020 = vset.pattern.permute.xlu0 2
        %3021 = vperm.xlu0 %3020, %v2967
        %v3022 = vpop.permute.xlu0 %3021
        %3025 = vset.pattern.permute.xlu0 2
        %3026 = vperm.xlu0 %3025, %v2968
        %v3027 = vpop.permute.xlu0 %3026
        %3030 = vset.pattern.permute.xlu0 2
        %3031 = vperm.xlu0 %3030, %v2969
        %v3032 = vpop.permute.xlu0 %3031
        %3035 = vset.pattern.permute.xlu0 2
        %3036 = vperm.xlu0 %3035, %v2970
        %v3037 = vpop.permute.xlu0 %3036
        %3040 = vset.pattern.permute.xlu0 2
        %3041 = vperm.xlu0 %3040, %v2971
        %v3042 = vpop.permute.xlu0 %3041
        %3045 = vset.pattern.permute.xlu0 2
        %3046 = vperm.xlu0 %3045, %v2972
        %v3047 = vpop.permute.xlu0 %3046
        %3050 = vset.pattern.permute.xlu0 2
        %3051 = vperm.xlu0 %3050, %v2973
        %v3052 = vpop.permute.xlu0 %3051
        %3055 = vset.pattern.permute.xlu0 2
        %3056 = vperm.xlu0 %3055, %v2974
        %v3057 = vpop.permute.xlu0 %3056
        %3060 = vset.pattern.permute.xlu0 2
        %3061 = vperm.xlu0 %3060, %v2975
        %v3062 = vpop.permute.xlu0 %3061
        %3065 = vset.pattern.permute.xlu0 2
        %3066 = vperm.xlu0 %3065, %v2976
        %v3067 = vpop.permute.xlu0 %3066
        %3070 = vset.pattern.permute.xlu0 2
        %3071 = vperm.xlu0 %3070, %v2977
        %v3072 = vpop.permute.xlu0 %3071
        %3075 = vset.pattern.permute.xlu0 2
        %3076 = vperm.xlu0 %3075, %v2978
        %v3077 = vpop.permute.xlu0 %3076
        %3080 = vset.pattern.permute.xlu0 2
        %3081 = vperm.xlu0 %3080, %v2979
        %v3082 = vpop.permute.xlu0 %3081
        %3085 = vset.pattern.permute.xlu0 2
        %3086 = vperm.xlu0 %3085, %v2980
        %v3087 = vpop.permute.xlu0 %3086
        %3090 = vset.pattern.permute.xlu0 2
        %3091 = vperm.xlu0 %3090, %v2981
        %v3092 = vpop.permute.xlu0 %3091
        %3095 = vset.pattern.permute.xlu0 2
        %3096 = vperm.xlu0 %3095, %v2982
        %v3097 = vpop.permute.xlu0 %3096
        %3100 = vset.pattern.permute.xlu0 2
        %3101 = vperm.xlu0 %3100, %v2983
        %v3102 = vpop.permute.xlu0 %3101
        %3105 = vset.pattern.permute.xlu0 2
        %3106 = vperm.xlu0 %3105, %v2984
        %v3107 = vpop.permute.xlu0 %3106
        %3110 = vset.pattern.permute.xlu0 2
        %3111 = vperm.xlu0 %3110, %v2985
        %v3112 = vpop.permute.xlu0 %3111
        %3115 = vset.pattern.permute.xlu0 2
        %3116 = vperm.xlu0 %3115, %v2986
        %v3117 = vpop.permute.xlu0 %3116
        %3120 = vset.pattern.permute.xlu0 2
        %3121 = vperm.xlu0 %3120, %v2987
        %v3122 = vpop.permute.xlu0 %3121
        %3125 = vset.pattern.permute.xlu0 2
        %3126 = vperm.xlu0 %3125, %v2988
        %v3127 = vpop.permute.xlu0 %3126
        %3130 = vset.pattern.permute.xlu0 2
        %3131 = vperm.xlu0 %3130, %v2989
        %v3132 = vpop.permute.xlu0 %3131
        %3135 = vset.pattern.permute.xlu0 2
        %3136 = vperm.xlu0 %3135, %v2990
        %v3137 = vpop.permute.xlu0 %3136
        %3140 = vset.pattern.permute.xlu0 2
        %3141 = vperm.xlu0 %3140, %v2991
        %v3142 = vpop.permute.xlu0 %3141
        %3145 = vset.pattern.permute.xlu0 2
        %3146 = vperm.xlu0 %3145, %v2992
        %v3147 = vpop.permute.xlu0 %3146
        %3150 = vset.pattern.permute.xlu0 2
        %3151 = vperm.xlu0 %3150, %v2993
        %v3152 = vpop.permute.xlu0 %3151
        %v3154 = vmul.f32 %v752, %v2997
        %v3155 = vmul.f32 %v753, %v2997
        %v3156 = vmul.f32 %v754, %v3002
        %v3157 = vmul.f32 %v755, %v3002
        %v3158 = vmul.f32 %v756, %v3007
        %v3159 = vmul.f32 %v757, %v3007
        %v3160 = vmul.f32 %v758, %v3012
        %v3161 = vmul.f32 %v759, %v3012
        %v3162 = vmul.f32 %v760, %v3017
        %v3163 = vmul.f32 %v761, %v3017
        %v3164 = vmul.f32 %v762, %v3022
        %v3165 = vmul.f32 %v763, %v3022
        %v3166 = vmul.f32 %v764, %v3027
        %v3167 = vmul.f32 %v765, %v3027
        %v3168 = vmul.f32 %v766, %v3032
        %v3169 = vmul.f32 %v767, %v3032
        %v3170 = vmul.f32 %v768, %v3037
        %v3171 = vmul.f32 %v769, %v3037
        %v3172 = vmul.f32 %v770, %v3042
        %v3173 = vmul.f32 %v771, %v3042
        %v3174 = vmul.f32 %v772, %v3047
        %v3175 = vmul.f32 %v773, %v3047
        %v3176 = vmul.f32 %v774, %v3052
        %v3177 = vmul.f32 %v775, %v3052
        %v3178 = vmul.f32 %v776, %v3057
        %v3179 = vmul.f32 %v777, %v3057
        %v3180 = vmul.f32 %v778, %v3062
        %v3181 = vmul.f32 %v779, %v3062
        %v3182 = vmul.f32 %v780, %v3067
        %v3183 = vmul.f32 %v781, %v3067
        %v3184 = vmul.f32 %v782, %v3072
        %v3185 = vmul.f32 %v783, %v3072
        %v3186 = vmul.f32 %v784, %v3077
        %v3187 = vmul.f32 %v785, %v3077
        %v3188 = vmul.f32 %v786, %v3082
        %v3189 = vmul.f32 %v787, %v3082
        %v3190 = vmul.f32 %v788, %v3087
        %v3191 = vmul.f32 %v789, %v3087
        %v3192 = vmul.f32 %v790, %v3092
        %v3193 = vmul.f32 %v791, %v3092
        %v3194 = vmul.f32 %v792, %v3097
        %v3195 = vmul.f32 %v793, %v3097
        %v3196 = vmul.f32 %v794, %v3102
        %v3197 = vmul.f32 %v795, %v3102
        %v3198 = vmul.f32 %v796, %v3107
        %v3199 = vmul.f32 %v797, %v3107
        %v3200 = vmul.f32 %v798, %v3112
        %v3201 = vmul.f32 %v799, %v3112
        %v3202 = vmul.f32 %v800, %v3117
        %v3203 = vmul.f32 %v801, %v3117
        %v3204 = vmul.f32 %v802, %v3122
        %v3205 = vmul.f32 %v803, %v3122
        %v3206 = vmul.f32 %v804, %v3127
        %v3207 = vmul.f32 %v805, %v3127
        %v3208 = vmul.f32 %v806, %v3132
        %v3209 = vmul.f32 %v807, %v3132
        %v3210 = vmul.f32 %v808, %v3137
        %v3211 = vmul.f32 %v809, %v3137
        %v3212 = vmul.f32 %v810, %v3142
        %v3213 = vmul.f32 %v811, %v3142
        %v3214 = vmul.f32 %v812, %v3147
        %v3215 = vmul.f32 %v813, %v3147
        %v3216 = vmul.f32 %v814, %v3152
        %v3217 = vmul.f32 %v815, %v3152
        %s3218 = scalar_lea.vmem %s418, 2 [#allocation5]
        %v3219 = vld [vmem:[%s3218] ss:$8 sm:$0x3]
        %v3221 = vperm.slane %v3219, 0
        %v3222 = vperm.slane %v3219, 1
        %v3225 = vadd.f32 %v3154, %v3221
        %v3226 = vadd.f32 %v3155, %v3222
        %v3227 = vadd.f32 %v3156, %v3221
        %v3228 = vadd.f32 %v3157, %v3222
        %v3229 = vadd.f32 %v3158, %v3221
        %v3230 = vadd.f32 %v3159, %v3222
        %v3231 = vadd.f32 %v3160, %v3221
        %v3232 = vadd.f32 %v3161, %v3222
        %v3233 = vadd.f32 %v3162, %v3221
        %v3234 = vadd.f32 %v3163, %v3222
        %v3235 = vadd.f32 %v3164, %v3221
        %v3236 = vadd.f32 %v3165, %v3222
        %v3237 = vadd.f32 %v3166, %v3221
        %v3238 = vadd.f32 %v3167, %v3222
        %v3239 = vadd.f32 %v3168, %v3221
        %v3240 = vadd.f32 %v3169, %v3222
        %v3241 = vadd.f32 %v3170, %v3221
        %v3242 = vadd.f32 %v3171, %v3222
        %v3243 = vadd.f32 %v3172, %v3221
        %v3244 = vadd.f32 %v3173, %v3222
        %v3245 = vadd.f32 %v3174, %v3221
        %v3246 = vadd.f32 %v3175, %v3222
        %v3247 = vadd.f32 %v3176, %v3221
        %v3248 = vadd.f32 %v3177, %v3222
        %v3249 = vadd.f32 %v3178, %v3221
        %v3250 = vadd.f32 %v3179, %v3222
        %v3251 = vadd.f32 %v3180, %v3221
        %v3252 = vadd.f32 %v3181, %v3222
        %v3253 = vadd.f32 %v3182, %v3221
        %v3254 = vadd.f32 %v3183, %v3222
        %v3255 = vadd.f32 %v3184, %v3221
        %v3256 = vadd.f32 %v3185, %v3222
        %v3257 = vadd.f32 %v3186, %v3221
        %v3258 = vadd.f32 %v3187, %v3222
        %v3259 = vadd.f32 %v3188, %v3221
        %v3260 = vadd.f32 %v3189, %v3222
        %v3261 = vadd.f32 %v3190, %v3221
        %v3262 = vadd.f32 %v3191, %v3222
        %v3263 = vadd.f32 %v3192, %v3221
        %v3264 = vadd.f32 %v3193, %v3222
        %v3265 = vadd.f32 %v3194, %v3221
        %v3266 = vadd.f32 %v3195, %v3222
        %v3267 = vadd.f32 %v3196, %v3221
        %v3268 = vadd.f32 %v3197, %v3222
        %v3269 = vadd.f32 %v3198, %v3221
        %v3270 = vadd.f32 %v3199, %v3222
        %v3271 = vadd.f32 %v3200, %v3221
        %v3272 = vadd.f32 %v3201, %v3222
        %v3273 = vadd.f32 %v3202, %v3221
        %v3274 = vadd.f32 %v3203, %v3222
        %v3275 = vadd.f32 %v3204, %v3221
        %v3276 = vadd.f32 %v3205, %v3222
        %v3277 = vadd.f32 %v3206, %v3221
        %v3278 = vadd.f32 %v3207, %v3222
        %v3279 = vadd.f32 %v3208, %v3221
        %v3280 = vadd.f32 %v3209, %v3222
        %v3281 = vadd.f32 %v3210, %v3221
        %v3282 = vadd.f32 %v3211, %v3222
        %v3283 = vadd.f32 %v3212, %v3221
        %v3284 = vadd.f32 %v3213, %v3222
        %v3285 = vadd.f32 %v3214, %v3221
        %v3286 = vadd.f32 %v3215, %v3222
        %v3287 = vadd.f32 %v3216, %v3221
        %v3288 = vadd.f32 %v3217, %v3222
        %v3289 = vmul.f32 %v3225, 0.01
        %v3290 = vmul.f32 %v3226, 0.01
        %v3291 = vmul.f32 %v3227, 0.01
        %v3292 = vmul.f32 %v3228, 0.01
        %v3293 = vmul.f32 %v3229, 0.01
        %v3294 = vmul.f32 %v3230, 0.01
        %v3295 = vmul.f32 %v3231, 0.01
        %v3296 = vmul.f32 %v3232, 0.01
        %v3297 = vmul.f32 %v3233, 0.01
        %v3298 = vmul.f32 %v3234, 0.01
        %v3299 = vmul.f32 %v3235, 0.01
        %v3300 = vmul.f32 %v3236, 0.01
        %v3301 = vmul.f32 %v3237, 0.01
        %v3302 = vmul.f32 %v3238, 0.01
        %v3303 = vmul.f32 %v3239, 0.01
        %v3304 = vmul.f32 %v3240, 0.01
        %v3305 = vmul.f32 %v3241, 0.01
        %v3306 = vmul.f32 %v3242, 0.01
        %v3307 = vmul.f32 %v3243, 0.01
        %v3308 = vmul.f32 %v3244, 0.01
        %v3309 = vmul.f32 %v3245, 0.01
        %v3310 = vmul.f32 %v3246, 0.01
        %v3311 = vmul.f32 %v3247, 0.01
        %v3312 = vmul.f32 %v3248, 0.01
        %v3313 = vmul.f32 %v3249, 0.01
        %v3314 = vmul.f32 %v3250, 0.01
        %v3315 = vmul.f32 %v3251, 0.01
        %v3316 = vmul.f32 %v3252, 0.01
        %v3317 = vmul.f32 %v3253, 0.01
        %v3318 = vmul.f32 %v3254, 0.01
        %v3319 = vmul.f32 %v3255, 0.01
        %v3320 = vmul.f32 %v3256, 0.01
        %v3321 = vmul.f32 %v3257, 0.01
        %v3322 = vmul.f32 %v3258, 0.01
        %v3323 = vmul.f32 %v3259, 0.01
        %v3324 = vmul.f32 %v3260, 0.01
        %v3325 = vmul.f32 %v3261, 0.01
        %v3326 = vmul.f32 %v3262, 0.01
        %v3327 = vmul.f32 %v3263, 0.01
        %v3328 = vmul.f32 %v3264, 0.01
        %v3329 = vmul.f32 %v3265, 0.01
        %v3330 = vmul.f32 %v3266, 0.01
        %v3331 = vmul.f32 %v3267, 0.01
        %v3332 = vmul.f32 %v3268, 0.01
        %v3333 = vmul.f32 %v3269, 0.01
        %v3334 = vmul.f32 %v3270, 0.01
        %v3335 = vmul.f32 %v3271, 0.01
        %v3336 = vmul.f32 %v3272, 0.01
        %v3337 = vmul.f32 %v3273, 0.01
        %v3338 = vmul.f32 %v3274, 0.01
        %v3339 = vmul.f32 %v3275, 0.01
        %v3340 = vmul.f32 %v3276, 0.01
        %v3341 = vmul.f32 %v3277, 0.01
        %v3342 = vmul.f32 %v3278, 0.01
        %v3343 = vmul.f32 %v3279, 0.01
        %v3344 = vmul.f32 %v3280, 0.01
        %v3345 = vmul.f32 %v3281, 0.01
        %v3346 = vmul.f32 %v3282, 0.01
        %v3347 = vmul.f32 %v3283, 0.01
        %v3348 = vmul.f32 %v3284, 0.01
        %v3349 = vmul.f32 %v3285, 0.01
        %v3350 = vmul.f32 %v3286, 0.01
        %v3351 = vmul.f32 %v3287, 0.01
        %v3352 = vmul.f32 %v3288, 0.01
        %v3353 = vmax.f32 %v3225, %v3289
        %v3354 = vmax.f32 %v3226, %v3290
        %v3355 = vmax.f32 %v3227, %v3291
        %v3356 = vmax.f32 %v3228, %v3292
        %v3357 = vmax.f32 %v3229, %v3293
        %v3358 = vmax.f32 %v3230, %v3294
        %v3359 = vmax.f32 %v3231, %v3295
        %v3360 = vmax.f32 %v3232, %v3296
        %v3361 = vmax.f32 %v3233, %v3297
        %v3362 = vmax.f32 %v3234, %v3298
        %v3363 = vmax.f32 %v3235, %v3299
        %v3364 = vmax.f32 %v3236, %v3300
        %v3365 = vmax.f32 %v3237, %v3301
        %v3366 = vmax.f32 %v3238, %v3302
        %v3367 = vmax.f32 %v3239, %v3303
        %v3368 = vmax.f32 %v3240, %v3304
        %v3369 = vmax.f32 %v3241, %v3305
        %v3370 = vmax.f32 %v3242, %v3306
        %v3371 = vmax.f32 %v3243, %v3307
        %v3372 = vmax.f32 %v3244, %v3308
        %v3373 = vmax.f32 %v3245, %v3309
        %v3374 = vmax.f32 %v3246, %v3310
        %v3375 = vmax.f32 %v3247, %v3311
        %v3376 = vmax.f32 %v3248, %v3312
        %v3377 = vmax.f32 %v3249, %v3313
        %v3378 = vmax.f32 %v3250, %v3314
        %v3379 = vmax.f32 %v3251, %v3315
        %v3380 = vmax.f32 %v3252, %v3316
        %v3381 = vmax.f32 %v3253, %v3317
        %v3382 = vmax.f32 %v3254, %v3318
        %v3383 = vmax.f32 %v3255, %v3319
        %v3384 = vmax.f32 %v3256, %v3320
        %v3385 = vmax.f32 %v3257, %v3321
        %v3386 = vmax.f32 %v3258, %v3322
        %v3387 = vmax.f32 %v3259, %v3323
        %v3388 = vmax.f32 %v3260, %v3324
        %v3389 = vmax.f32 %v3261, %v3325
        %v3390 = vmax.f32 %v3262, %v3326
        %v3391 = vmax.f32 %v3263, %v3327
        %v3392 = vmax.f32 %v3264, %v3328
        %v3393 = vmax.f32 %v3265, %v3329
        %v3394 = vmax.f32 %v3266, %v3330
        %v3395 = vmax.f32 %v3267, %v3331
        %v3396 = vmax.f32 %v3268, %v3332
        %v3397 = vmax.f32 %v3269, %v3333
        %v3398 = vmax.f32 %v3270, %v3334
        %v3399 = vmax.f32 %v3271, %v3335
        %v3400 = vmax.f32 %v3272, %v3336
        %v3401 = vmax.f32 %v3273, %v3337
        %v3402 = vmax.f32 %v3274, %v3338
        %v3403 = vmax.f32 %v3275, %v3339
        %v3404 = vmax.f32 %v3276, %v3340
        %v3405 = vmax.f32 %v3277, %v3341
        %v3406 = vmax.f32 %v3278, %v3342
        %v3407 = vmax.f32 %v3279, %v3343
        %v3408 = vmax.f32 %v3280, %v3344
        %v3409 = vmax.f32 %v3281, %v3345
        %v3410 = vmax.f32 %v3282, %v3346
        %v3411 = vmax.f32 %v3283, %v3347
        %v3412 = vmax.f32 %v3284, %v3348
        %v3413 = vmax.f32 %v3285, %v3349
        %v3414 = vmax.f32 %v3286, %v3350
        %v3415 = vmax.f32 %v3287, %v3351
        %v3416 = vmax.f32 %v3288, %v3352
        %s3417 = scalar_lea.vmem %s418, 7 [#allocation5]
        %v3418 = vld [vmem:[%s3417] ss:$8 sm:$0x3]
        %v3420 = vperm.slane %v3418, 0
        %v3421 = vperm.slane %v3418, 1
        %v3424 = vsub.f32 %v3353, %v3420
        %v3425 = vsub.f32 %v3354, %v3421
        %v3426 = vsub.f32 %v3355, %v3420
        %v3427 = vsub.f32 %v3356, %v3421
        %v3428 = vsub.f32 %v3357, %v3420
        %v3429 = vsub.f32 %v3358, %v3421
        %v3430 = vsub.f32 %v3359, %v3420
        %v3431 = vsub.f32 %v3360, %v3421
        %v3432 = vsub.f32 %v3361, %v3420
        %v3433 = vsub.f32 %v3362, %v3421
        %v3434 = vsub.f32 %v3363, %v3420
        %v3435 = vsub.f32 %v3364, %v3421
        %v3436 = vsub.f32 %v3365, %v3420
        %v3437 = vsub.f32 %v3366, %v3421
        %v3438 = vsub.f32 %v3367, %v3420
        %v3439 = vsub.f32 %v3368, %v3421
        %v3440 = vsub.f32 %v3369, %v3420
        %v3441 = vsub.f32 %v3370, %v3421
        %v3442 = vsub.f32 %v3371, %v3420
        %v3443 = vsub.f32 %v3372, %v3421
        %v3444 = vsub.f32 %v3373, %v3420
        %v3445 = vsub.f32 %v3374, %v3421
        %v3446 = vsub.f32 %v3375, %v3420
        %v3447 = vsub.f32 %v3376, %v3421
        %v3448 = vsub.f32 %v3377, %v3420
        %v3449 = vsub.f32 %v3378, %v3421
        %v3450 = vsub.f32 %v3379, %v3420
        %v3451 = vsub.f32 %v3380, %v3421
        %v3452 = vsub.f32 %v3381, %v3420
        %v3453 = vsub.f32 %v3382, %v3421
        %v3454 = vsub.f32 %v3383, %v3420
        %v3455 = vsub.f32 %v3384, %v3421
        %v3456 = vsub.f32 %v3385, %v3420
        %v3457 = vsub.f32 %v3386, %v3421
        %v3458 = vsub.f32 %v3387, %v3420
        %v3459 = vsub.f32 %v3388, %v3421
        %v3460 = vsub.f32 %v3389, %v3420
        %v3461 = vsub.f32 %v3390, %v3421
        %v3462 = vsub.f32 %v3391, %v3420
        %v3463 = vsub.f32 %v3392, %v3421
        %v3464 = vsub.f32 %v3393, %v3420
        %v3465 = vsub.f32 %v3394, %v3421
        %v3466 = vsub.f32 %v3395, %v3420
        %v3467 = vsub.f32 %v3396, %v3421
        %v3468 = vsub.f32 %v3397, %v3420
        %v3469 = vsub.f32 %v3398, %v3421
        %v3470 = vsub.f32 %v3399, %v3420
        %v3471 = vsub.f32 %v3400, %v3421
        %v3472 = vsub.f32 %v3401, %v3420
        %v3473 = vsub.f32 %v3402, %v3421
        %v3474 = vsub.f32 %v3403, %v3420
        %v3475 = vsub.f32 %v3404, %v3421
        %v3476 = vsub.f32 %v3405, %v3420
        %v3477 = vsub.f32 %v3406, %v3421
        %v3478 = vsub.f32 %v3407, %v3420
        %v3479 = vsub.f32 %v3408, %v3421
        %v3480 = vsub.f32 %v3409, %v3420
        %v3481 = vsub.f32 %v3410, %v3421
        %v3482 = vsub.f32 %v3411, %v3420
        %v3483 = vsub.f32 %v3412, %v3421
        %v3484 = vsub.f32 %v3413, %v3420
        %v3485 = vsub.f32 %v3414, %v3421
        %v3486 = vsub.f32 %v3415, %v3420
        %v3487 = vsub.f32 %v3416, %v3421
        %v3488 = vmul.f32 %v3424, 1.442695
        %v3489 = vpow.pop %v3488
        %v3490 = vmul.f32 %v3425, 1.442695
        %v3491 = vpow.pop %v3490
        %v3492 = vmul.f32 %v3426, 1.442695
        %v3493 = vpow.pop %v3492
        %v3494 = vmul.f32 %v3427, 1.442695
        %v3495 = vpow.pop %v3494
        %v3496 = vmul.f32 %v3428, 1.442695
        %v3497 = vpow.pop %v3496
        %v3498 = vmul.f32 %v3429, 1.442695
        %v3499 = vpow.pop %v3498
        %v3500 = vmul.f32 %v3430, 1.442695
        %v3501 = vpow.pop %v3500
        %v3502 = vmul.f32 %v3431, 1.442695
        %v3503 = vpow.pop %v3502
        %v3504 = vmul.f32 %v3432, 1.442695
        %v3505 = vpow.pop %v3504
        %v3506 = vmul.f32 %v3433, 1.442695
        %v3507 = vpow.pop %v3506
        %v3508 = vmul.f32 %v3434, 1.442695
        %v3509 = vpow.pop %v3508
        %v3510 = vmul.f32 %v3435, 1.442695
        %v3511 = vpow.pop %v3510
        %v3512 = vmul.f32 %v3436, 1.442695
        %v3513 = vpow.pop %v3512
        %v3514 = vmul.f32 %v3437, 1.442695
        %v3515 = vpow.pop %v3514
        %v3516 = vmul.f32 %v3438, 1.442695
        %v3517 = vpow.pop %v3516
        %v3518 = vmul.f32 %v3439, 1.442695
        %v3519 = vpow.pop %v3518
        %v3520 = vmul.f32 %v3440, 1.442695
        %v3521 = vpow.pop %v3520
        %v3522 = vmul.f32 %v3441, 1.442695
        %v3523 = vpow.pop %v3522
        %v3524 = vmul.f32 %v3442, 1.442695
        %v3525 = vpow.pop %v3524
        %v3526 = vmul.f32 %v3443, 1.442695
        %v3527 = vpow.pop %v3526
        %v3528 = vmul.f32 %v3444, 1.442695
        %v3529 = vpow.pop %v3528
        %v3530 = vmul.f32 %v3445, 1.442695
        %v3531 = vpow.pop %v3530
        %v3532 = vmul.f32 %v3446, 1.442695
        %v3533 = vpow.pop %v3532
        %v3534 = vmul.f32 %v3447, 1.442695
        %v3535 = vpow.pop %v3534
        %v3536 = vmul.f32 %v3448, 1.442695
        %v3537 = vpow.pop %v3536
        %v3538 = vmul.f32 %v3449, 1.442695
        %v3539 = vpow.pop %v3538
        %v3540 = vmul.f32 %v3450, 1.442695
        %v3541 = vpow.pop %v3540
        %v3542 = vmul.f32 %v3451, 1.442695
        %v3543 = vpow.pop %v3542
        %v3544 = vmul.f32 %v3452, 1.442695
        %v3545 = vpow.pop %v3544
        %v3546 = vmul.f32 %v3453, 1.442695
        %v3547 = vpow.pop %v3546
        %v3548 = vmul.f32 %v3454, 1.442695
        %v3549 = vpow.pop %v3548
        %v3550 = vmul.f32 %v3455, 1.442695
        %v3551 = vpow.pop %v3550
        %v3552 = vmul.f32 %v3456, 1.442695
        %v3553 = vpow.pop %v3552
        %v3554 = vmul.f32 %v3457, 1.442695
        %v3555 = vpow.pop %v3554
        %v3556 = vmul.f32 %v3458, 1.442695
        %v3557 = vpow.pop %v3556
        %v3558 = vmul.f32 %v3459, 1.442695
        %v3559 = vpow.pop %v3558
        %v3560 = vmul.f32 %v3460, 1.442695
        %v3561 = vpow.pop %v3560
        %v3562 = vmul.f32 %v3461, 1.442695
        %v3563 = vpow.pop %v3562
        %v3564 = vmul.f32 %v3462, 1.442695
        %v3565 = vpow.pop %v3564
        %v3566 = vmul.f32 %v3463, 1.442695
        %v3567 = vpow.pop %v3566
        %v3568 = vmul.f32 %v3464, 1.442695
        %v3569 = vpow.pop %v3568
        %v3570 = vmul.f32 %v3465, 1.442695
        %v3571 = vpow.pop %v3570
        %v3572 = vmul.f32 %v3466, 1.442695
        %v3573 = vpow.pop %v3572
        %v3574 = vmul.f32 %v3467, 1.442695
        %v3575 = vpow.pop %v3574
        %v3576 = vmul.f32 %v3468, 1.442695
        %v3577 = vpow.pop %v3576
        %v3578 = vmul.f32 %v3469, 1.442695
        %v3579 = vpow.pop %v3578
        %v3580 = vmul.f32 %v3470, 1.442695
        %v3581 = vpow.pop %v3580
        %v3582 = vmul.f32 %v3471, 1.442695
        %v3583 = vpow.pop %v3582
        %v3584 = vmul.f32 %v3472, 1.442695
        %v3585 = vpow.pop %v3584
        %v3586 = vmul.f32 %v3473, 1.442695
        %v3587 = vpow.pop %v3586
        %v3588 = vmul.f32 %v3474, 1.442695
        %v3589 = vpow.pop %v3588
        %v3590 = vmul.f32 %v3475, 1.442695
        %v3591 = vpow.pop %v3590
        %v3592 = vmul.f32 %v3476, 1.442695
        %v3593 = vpow.pop %v3592
        %v3594 = vmul.f32 %v3477, 1.442695
        %v3595 = vpow.pop %v3594
        %v3596 = vmul.f32 %v3478, 1.442695
        %v3597 = vpow.pop %v3596
        %v3598 = vmul.f32 %v3479, 1.442695
        %v3599 = vpow.pop %v3598
        %v3600 = vmul.f32 %v3480, 1.442695
        %v3601 = vpow.pop %v3600
        %v3602 = vmul.f32 %v3481, 1.442695
        %v3603 = vpow.pop %v3602
        %v3604 = vmul.f32 %v3482, 1.442695
        %v3605 = vpow.pop %v3604
        %v3606 = vmul.f32 %v3483, 1.442695
        %v3607 = vpow.pop %v3606
        %v3608 = vmul.f32 %v3484, 1.442695
        %v3609 = vpow.pop %v3608
        %v3610 = vmul.f32 %v3485, 1.442695
        %v3611 = vpow.pop %v3610
        %v3612 = vmul.f32 %v3486, 1.442695
        %v3613 = vpow.pop %v3612
        %v3614 = vmul.f32 %v3487, 1.442695
        %v3615 = vpow.pop %v3614
        %v3616 = vmul.f32 %v3489, %v2898
        %v3617 = vmul.f32 %v3491, %v2899
        %v3618 = vmul.f32 %v3493, %v2900
        %v3619 = vmul.f32 %v3495, %v2901
        %v3620 = vmul.f32 %v3497, %v2902
        %v3621 = vmul.f32 %v3499, %v2903
        %v3622 = vmul.f32 %v3501, %v2904
        %v3623 = vmul.f32 %v3503, %v2905
        %v3624 = vmul.f32 %v3505, %v2906
        %v3625 = vmul.f32 %v3507, %v2907
        %v3626 = vmul.f32 %v3509, %v2908
        %v3627 = vmul.f32 %v3511, %v2909
        %v3628 = vmul.f32 %v3513, %v2910
        %v3629 = vmul.f32 %v3515, %v2911
        %v3630 = vmul.f32 %v3517, %v2912
        %v3631 = vmul.f32 %v3519, %v2913
        %v3632 = vmul.f32 %v3521, %v2914
        %v3633 = vmul.f32 %v3523, %v2915
        %v3634 = vmul.f32 %v3525, %v2916
        %v3635 = vmul.f32 %v3527, %v2917
        %v3636 = vmul.f32 %v3529, %v2918
        %v3637 = vmul.f32 %v3531, %v2919
        %v3638 = vmul.f32 %v3533, %v2920
        %v3639 = vmul.f32 %v3535, %v2921
        %v3640 = vmul.f32 %v3537, %v2922
        %v3641 = vmul.f32 %v3539, %v2923
        %v3642 = vmul.f32 %v3541, %v2924
        %v3643 = vmul.f32 %v3543, %v2925
        %v3644 = vmul.f32 %v3545, %v2926
        %v3645 = vmul.f32 %v3547, %v2927
        %v3646 = vmul.f32 %v3549, %v2928
        %v3647 = vmul.f32 %v3551, %v2929
        %v3648 = vmul.f32 %v3553, %v2930
        %v3649 = vmul.f32 %v3555, %v2931
        %v3650 = vmul.f32 %v3557, %v2932
        %v3651 = vmul.f32 %v3559, %v2933
        %v3652 = vmul.f32 %v3561, %v2934
        %v3653 = vmul.f32 %v3563, %v2935
        %v3654 = vmul.f32 %v3565, %v2936
        %v3655 = vmul.f32 %v3567, %v2937
        %v3656 = vmul.f32 %v3569, %v2938
        %v3657 = vmul.f32 %v3571, %v2939
        %v3658 = vmul.f32 %v3573, %v2940
        %v3659 = vmul.f32 %v3575, %v2941
        %v3660 = vmul.f32 %v3577, %v2942
        %v3661 = vmul.f32 %v3579, %v2943
        %v3662 = vmul.f32 %v3581, %v2944
        %v3663 = vmul.f32 %v3583, %v2945
        %v3664 = vmul.f32 %v3585, %v2946
        %v3665 = vmul.f32 %v3587, %v2947
        %v3666 = vmul.f32 %v3589, %v2948
        %v3667 = vmul.f32 %v3591, %v2949
        %v3668 = vmul.f32 %v3593, %v2950
        %v3669 = vmul.f32 %v3595, %v2951
        %v3670 = vmul.f32 %v3597, %v2952
        %v3671 = vmul.f32 %v3599, %v2953
        %v3672 = vmul.f32 %v3601, %v2954
        %v3673 = vmul.f32 %v3603, %v2955
        %v3674 = vmul.f32 %v3605, %v2956
        %v3675 = vmul.f32 %v3607, %v2957
        %v3676 = vmul.f32 %v3609, %v2958
        %v3677 = vmul.f32 %v3611, %v2959
        %v3678 = vmul.f32 %v3613, %v2960
        %v3679 = vmul.f32 %v3615, %v2961
        %s3680 = scalar_lea.vmem [#allocation2], 2
        %v3681 = vld [vmem:[%s3680] ss:$4 sm:$0x3]
        %3682 = vmatpush.msra.mxu0 %v3646
        %3683 = vmatpush.msra.mxu0 %v3644
        %3684 = vmatpush.msra.mxu0 %v3642
        %3685 = vmatpush.msra.mxu0 %v3640
        %3686 = vmatpush.msra.mxu0 %v3638
        %3687 = vmatpush.msra.mxu0 %v3636
        %3688 = vmatpush.msra.mxu0 %v3634
        %3689 = vmatpush.msra.mxu0 %v3632
        %3690 = vmatpush.msra.mxu0 %v3630
        %3691 = vmatpush.msra.mxu0 %v3628
        %3692 = vmatpush.msra.mxu0 %v3626
        %3693 = vmatpush.msra.mxu0 %v3624
        %3694 = vmatpush.msra.mxu0 %v3622
        %3695 = vmatpush.msra.mxu0 %v3620
        %3696 = vmatpush.msra.mxu0 %v3618
        %3697 = vmatpush.msra.mxu0 %v3616
        %3698 = vmatmul.f32.gmra.mxu0 1.0
        %v3699 = vpop.f32.mrf.mxu0
        %v3700 = vadd.f32 0.0, %v3699
        %3701 = vdwg.mxu0
        %3702 = vmatpush.msra.mxu0 %v3678
        %3703 = vmatpush.msra.mxu0 %v3676
        %3704 = vmatpush.msra.mxu0 %v3674
        %3705 = vmatpush.msra.mxu0 %v3672
        %3706 = vmatpush.msra.mxu0 %v3670
        %3707 = vmatpush.msra.mxu0 %v3668
        %3708 = vmatpush.msra.mxu0 %v3666
        %3709 = vmatpush.msra.mxu0 %v3664
        %3710 = vmatpush.msra.mxu0 %v3662
        %3711 = vmatpush.msra.mxu0 %v3660
        %3712 = vmatpush.msra.mxu0 %v3658
        %3713 = vmatpush.msra.mxu0 %v3656
        %3714 = vmatpush.msra.mxu0 %v3654
        %3715 = vmatpush.msra.mxu0 %v3652
        %3716 = vmatpush.msra.mxu0 %v3650
        %3717 = vmatpush.msra.mxu0 %v3648
        %3718 = vmatmul.f32.gmra.mxu0 1.0
        %v3719 = vpop.f32.mrf.mxu0
        %v3720 = vadd.f32 %v3700, %v3719
        %3721 = vdwg.mxu0
        %3722 = vmatpush.msra.mxu0 %v3647
        %3723 = vmatpush.msra.mxu0 %v3645
        %3724 = vmatpush.msra.mxu0 %v3643
        %3725 = vmatpush.msra.mxu0 %v3641
        %3726 = vmatpush.msra.mxu0 %v3639
        %3727 = vmatpush.msra.mxu0 %v3637
        %3728 = vmatpush.msra.mxu0 %v3635
        %3729 = vmatpush.msra.mxu0 %v3633
        %3730 = vmatpush.msra.mxu0 %v3631
        %3731 = vmatpush.msra.mxu0 %v3629
        %3732 = vmatpush.msra.mxu0 %v3627
        %3733 = vmatpush.msra.mxu0 %v3625
        %3734 = vmatpush.msra.mxu0 %v3623
        %3735 = vmatpush.msra.mxu0 %v3621
        %3736 = vmatpush.msra.mxu0 %v3619
        %3737 = vmatpush.msra.mxu0 %v3617
        %3738 = vmatmul.f32.gmra.mxu0 1.0
        %v3739 = vpop.f32.mrf.mxu0
        %v3740 = vadd.f32 0.0, %v3739
        %3741 = vdwg.mxu0
        %3742 = vmatpush.msra.mxu0 %v3679
        %3743 = vmatpush.msra.mxu0 %v3677
        %3744 = vmatpush.msra.mxu0 %v3675
        %3745 = vmatpush.msra.mxu0 %v3673
        %3746 = vmatpush.msra.mxu0 %v3671
        %3747 = vmatpush.msra.mxu0 %v3669
        %3748 = vmatpush.msra.mxu0 %v3667
        %3749 = vmatpush.msra.mxu0 %v3665
        %3750 = vmatpush.msra.mxu0 %v3663
        %3751 = vmatpush.msra.mxu0 %v3661
        %3752 = vmatpush.msra.mxu0 %v3659
        %3753 = vmatpush.msra.mxu0 %v3657
        %3754 = vmatpush.msra.mxu0 %v3655
        %3755 = vmatpush.msra.mxu0 %v3653
        %3756 = vmatpush.msra.mxu0 %v3651
        %3757 = vmatpush.msra.mxu0 %v3649
        %3758 = vmatmul.f32.gmra.mxu0 1.0
        %v3759 = vpop.f32.mrf.mxu0
        %v3760 = vadd.f32 %v3740, %v3759
        %3761 = vdwg.mxu0
        %v3764 = vrot.slane %v3760, 7
        %v3765 = vsel %vm1697, %v3720, %v3764
        %v3767 = vadd.f32 %v3681, %v3765
        %3768 = vst.msk [vmem:[%s3680] ss:$4 sm:$0x3] %vm1704, %v3767
        %v3769 = vmul.f32 %v3616, %v752
        %v3770 = vmul.f32 %v3617, %v753
        %v3771 = vmul.f32 %v3618, %v754
        %v3772 = vmul.f32 %v3619, %v755
        %v3773 = vmul.f32 %v3620, %v756
        %v3774 = vmul.f32 %v3621, %v757
        %v3775 = vmul.f32 %v3622, %v758
        %v3776 = vmul.f32 %v3623, %v759
        %v3777 = vmul.f32 %v3624, %v760
        %v3778 = vmul.f32 %v3625, %v761
        %v3779 = vmul.f32 %v3626, %v762
        %v3780 = vmul.f32 %v3627, %v763
        %v3781 = vmul.f32 %v3628, %v764
        %v3782 = vmul.f32 %v3629, %v765
        %v3783 = vmul.f32 %v3630, %v766
        %v3784 = vmul.f32 %v3631, %v767
        %v3785 = vmul.f32 %v3632, %v768
        %v3786 = vmul.f32 %v3633, %v769
        %v3787 = vmul.f32 %v3634, %v770
        %v3788 = vmul.f32 %v3635, %v771
        %v3789 = vmul.f32 %v3636, %v772
        %v3790 = vmul.f32 %v3637, %v773
        %v3791 = vmul.f32 %v3638, %v774
        %v3792 = vmul.f32 %v3639, %v775
        %v3793 = vmul.f32 %v3640, %v776
        %v3794 = vmul.f32 %v3641, %v777
        %v3795 = vmul.f32 %v3642, %v778
        %v3796 = vmul.f32 %v3643, %v779
        %v3797 = vmul.f32 %v3644, %v780
        %v3798 = vmul.f32 %v3645, %v781
        %v3799 = vmul.f32 %v3646, %v782
        %v3800 = vmul.f32 %v3647, %v783
        %v3801 = vmul.f32 %v3648, %v784
        %v3802 = vmul.f32 %v3649, %v785
        %v3803 = vmul.f32 %v3650, %v786
        %v3804 = vmul.f32 %v3651, %v787
        %v3805 = vmul.f32 %v3652, %v788
        %v3806 = vmul.f32 %v3653, %v789
        %v3807 = vmul.f32 %v3654, %v790
        %v3808 = vmul.f32 %v3655, %v791
        %v3809 = vmul.f32 %v3656, %v792
        %v3810 = vmul.f32 %v3657, %v793
        %v3811 = vmul.f32 %v3658, %v794
        %v3812 = vmul.f32 %v3659, %v795
        %v3813 = vmul.f32 %v3660, %v796
        %v3814 = vmul.f32 %v3661, %v797
        %v3815 = vmul.f32 %v3662, %v798
        %v3816 = vmul.f32 %v3663, %v799
        %v3817 = vmul.f32 %v3664, %v800
        %v3818 = vmul.f32 %v3665, %v801
        %v3819 = vmul.f32 %v3666, %v802
        %v3820 = vmul.f32 %v3667, %v803
        %v3821 = vmul.f32 %v3668, %v804
        %v3822 = vmul.f32 %v3669, %v805
        %v3823 = vmul.f32 %v3670, %v806
        %v3824 = vmul.f32 %v3671, %v807
        %v3825 = vmul.f32 %v3672, %v808
        %v3826 = vmul.f32 %v3673, %v809
        %v3827 = vmul.f32 %v3674, %v810
        %v3828 = vmul.f32 %v3675, %v811
        %v3829 = vmul.f32 %v3676, %v812
        %v3830 = vmul.f32 %v3677, %v813
        %v3831 = vmul.f32 %v3678, %v814
        %v3832 = vmul.f32 %v3679, %v815
        %v3833 = vld [vmem:[%s425 + $0x20] sm:$0xff]
        %v3834 = vld [vmem:[%s425 + $0x28] sm:$0xff]
        %v3835 = vld [vmem:[#allocation3 + $0x20] sm:$0xff]
        %v3836 = vld [vmem:[#allocation3 + $0x28] sm:$0xff]
        %3837 = vmatpush.msra.mxu0 %v3799
        %3838 = vmatpush.msra.mxu0 %v3797
        %3839 = vmatpush.msra.mxu0 %v3795
        %3840 = vmatpush.msra.mxu0 %v3793
        %3841 = vmatpush.msra.mxu0 %v3791
        %3842 = vmatpush.msra.mxu0 %v3789
        %3843 = vmatpush.msra.mxu0 %v3787
        %3844 = vmatpush.msra.mxu0 %v3785
        %3845 = vmatpush.msra.mxu0 %v3783
        %3846 = vmatpush.msra.mxu0 %v3781
        %3847 = vmatpush.msra.mxu0 %v3779
        %3848 = vmatpush.msra.mxu0 %v3777
        %3849 = vmatpush.msra.mxu0 %v3775
        %3850 = vmatpush.msra.mxu0 %v3773
        %3851 = vmatpush.msra.mxu0 %v3771
        %3852 = vmatpush.msra.mxu0 %v3769
        %3853 = vmatmul.f32.gmra.mxu0 %v3833
        %v3854 = vpop.f32.mrf.mxu0
        %v3855 = vadd.f32 0.0, %v3854
        %3856 = vdwg.mxu0
        %3857 = vmatpush.msra.mxu0 %v3831
        %3858 = vmatpush.msra.mxu0 %v3829
        %3859 = vmatpush.msra.mxu0 %v3827
        %3860 = vmatpush.msra.mxu0 %v3825
        %3861 = vmatpush.msra.mxu0 %v3823
        %3862 = vmatpush.msra.mxu0 %v3821
        %3863 = vmatpush.msra.mxu0 %v3819
        %3864 = vmatpush.msra.mxu0 %v3817
        %3865 = vmatpush.msra.mxu0 %v3815
        %3866 = vmatpush.msra.mxu0 %v3813
        %3867 = vmatpush.msra.mxu0 %v3811
        %3868 = vmatpush.msra.mxu0 %v3809
        %3869 = vmatpush.msra.mxu0 %v3807
        %3870 = vmatpush.msra.mxu0 %v3805
        %3871 = vmatpush.msra.mxu0 %v3803
        %3872 = vmatpush.msra.mxu0 %v3801
        %3873 = vmatmul.f32.gmra.mxu0 %v3834
        %v3874 = vpop.f32.mrf.mxu0
        %v3875 = vadd.f32 %v3855, %v3874
        %3876 = vdwg.mxu0
        %3877 = vmatpush.msra.mxu0 %v3800
        %3878 = vmatpush.msra.mxu0 %v3798
        %3879 = vmatpush.msra.mxu0 %v3796
        %3880 = vmatpush.msra.mxu0 %v3794
        %3881 = vmatpush.msra.mxu0 %v3792
        %3882 = vmatpush.msra.mxu0 %v3790
        %3883 = vmatpush.msra.mxu0 %v3788
        %3884 = vmatpush.msra.mxu0 %v3786
        %3885 = vmatpush.msra.mxu0 %v3784
        %3886 = vmatpush.msra.mxu0 %v3782
        %3887 = vmatpush.msra.mxu0 %v3780
        %3888 = vmatpush.msra.mxu0 %v3778
        %3889 = vmatpush.msra.mxu0 %v3776
        %3890 = vmatpush.msra.mxu0 %v3774
        %3891 = vmatpush.msra.mxu0 %v3772
        %3892 = vmatpush.msra.mxu0 %v3770
        %3893 = vmatmul.f32.gmra.mxu0 %v3833
        %v3894 = vpop.f32.mrf.mxu0
        %v3895 = vadd.f32 0.0, %v3894
        %3896 = vdwg.mxu0
        %3897 = vmatpush.msra.mxu0 %v3832
        %3898 = vmatpush.msra.mxu0 %v3830
        %3899 = vmatpush.msra.mxu0 %v3828
        %3900 = vmatpush.msra.mxu0 %v3826
        %3901 = vmatpush.msra.mxu0 %v3824
        %3902 = vmatpush.msra.mxu0 %v3822
        %3903 = vmatpush.msra.mxu0 %v3820
        %3904 = vmatpush.msra.mxu0 %v3818
        %3905 = vmatpush.msra.mxu0 %v3816
        %3906 = vmatpush.msra.mxu0 %v3814
        %3907 = vmatpush.msra.mxu0 %v3812
        %3908 = vmatpush.msra.mxu0 %v3810
        %3909 = vmatpush.msra.mxu0 %v3808
        %3910 = vmatpush.msra.mxu0 %v3806
        %3911 = vmatpush.msra.mxu0 %v3804
        %3912 = vmatpush.msra.mxu0 %v3802
        %3913 = vmatmul.f32.gmra.mxu0 %v3834
        %v3914 = vpop.f32.mrf.mxu0
        %v3915 = vadd.f32 %v3895, %v3914
        %3916 = vdwg.mxu0
        %v3917 = vadd.f32 %v3835, %v3875
        %v3918 = vadd.f32 %v3836, %v3915
        %3919 = vst [vmem:[#allocation3 + $0x20] sm:$0xff] %v3917
        %3920 = vst [vmem:[#allocation3 + $0x28] sm:$0xff] %v3918
        %v3921 = vld [vmem:[%s471] sm:$0xff]
        %v3922 = vld [vmem:[%s471 + $0x8] sm:$0xff]
        %v3923 = vld [vmem:[%s471 + $0x10] sm:$0xff]
        %v3924 = vld [vmem:[%s471 + $0x18] sm:$0xff]
        %v3925 = vld [vmem:[%s471 + $0x20] sm:$0xff]
        %v3926 = vld [vmem:[%s471 + $0x28] sm:$0xff]
        %v3927 = vld [vmem:[%s471 + $0x30] sm:$0xff]
        %v3928 = vld [vmem:[%s471 + $0x38] sm:$0xff]
        %v3929 = vld [vmem:[%s471 + $0x40] sm:$0xff]
        %v3930 = vld [vmem:[%s471 + $0x48] sm:$0xff]
        %v3931 = vld [vmem:[%s471 + $0x50] sm:$0xff]
        %v3932 = vld [vmem:[%s471 + $0x58] sm:$0xff]
        %v3933 = vld [vmem:[%s471 + $0x60] sm:$0xff]
        %v3934 = vld [vmem:[%s471 + $0x68] sm:$0xff]
        %v3935 = vld [vmem:[%s471 + $0x70] sm:$0xff]
        %v3936 = vld [vmem:[%s471 + $0x78] sm:$0xff]
        %v3937 = vld [vmem:[%s471 + $0x80] sm:$0xff]
        %v3938 = vld [vmem:[%s471 + $0x88] sm:$0xff]
        %v3939 = vld [vmem:[%s471 + $0x90] sm:$0xff]
        %v3940 = vld [vmem:[%s471 + $0x98] sm:$0xff]
        %v3941 = vld [vmem:[%s471 + $0xa0] sm:$0xff]
        %v3942 = vld [vmem:[%s471 + $0xa8] sm:$0xff]
        %v3943 = vld [vmem:[%s471 + $0xb0] sm:$0xff]
        %v3944 = vld [vmem:[%s471 + $0xb8] sm:$0xff]
        %v3945 = vld [vmem:[%s471 + $0xc0] sm:$0xff]
        %v3946 = vld [vmem:[%s471 + $0xc8] sm:$0xff]
        %v3947 = vld [vmem:[%s471 + $0xd0] sm:$0xff]
        %v3948 = vld [vmem:[%s471 + $0xd8] sm:$0xff]
        %v3949 = vld [vmem:[%s471 + $0xe0] sm:$0xff]
        %v3950 = vld [vmem:[%s471 + $0xe8] sm:$0xff]
        %v3951 = vld [vmem:[%s471 + $0xf0] sm:$0xff]
        %v3952 = vld [vmem:[%s471 + $0xf8] sm:$0xff]
        %3954 = vset.pattern.permute.xlu0 3
        %3955 = vperm.xlu0 %3954, %v3921
        %v3956 = vpop.permute.xlu0 %3955
        %3959 = vset.pattern.permute.xlu0 3
        %3960 = vperm.xlu0 %3959, %v3922
        %v3961 = vpop.permute.xlu0 %3960
        %3964 = vset.pattern.permute.xlu0 3
        %3965 = vperm.xlu0 %3964, %v3923
        %v3966 = vpop.permute.xlu0 %3965
        %3969 = vset.pattern.permute.xlu0 3
        %3970 = vperm.xlu0 %3969, %v3924
        %v3971 = vpop.permute.xlu0 %3970
        %3974 = vset.pattern.permute.xlu0 3
        %3975 = vperm.xlu0 %3974, %v3925
        %v3976 = vpop.permute.xlu0 %3975
        %3979 = vset.pattern.permute.xlu0 3
        %3980 = vperm.xlu0 %3979, %v3926
        %v3981 = vpop.permute.xlu0 %3980
        %3984 = vset.pattern.permute.xlu0 3
        %3985 = vperm.xlu0 %3984, %v3927
        %v3986 = vpop.permute.xlu0 %3985
        %3989 = vset.pattern.permute.xlu0 3
        %3990 = vperm.xlu0 %3989, %v3928
        %v3991 = vpop.permute.xlu0 %3990
        %3994 = vset.pattern.permute.xlu0 3
        %3995 = vperm.xlu0 %3994, %v3929
        %v3996 = vpop.permute.xlu0 %3995
        %3999 = vset.pattern.permute.xlu0 3
        %4000 = vperm.xlu0 %3999, %v3930
        %v4001 = vpop.permute.xlu0 %4000
        %4004 = vset.pattern.permute.xlu0 3
        %4005 = vperm.xlu0 %4004, %v3931
        %v4006 = vpop.permute.xlu0 %4005
        %4009 = vset.pattern.permute.xlu0 3
        %4010 = vperm.xlu0 %4009, %v3932
        %v4011 = vpop.permute.xlu0 %4010
        %4014 = vset.pattern.permute.xlu0 3
        %4015 = vperm.xlu0 %4014, %v3933
        %v4016 = vpop.permute.xlu0 %4015
        %4019 = vset.pattern.permute.xlu0 3
        %4020 = vperm.xlu0 %4019, %v3934
        %v4021 = vpop.permute.xlu0 %4020
        %4024 = vset.pattern.permute.xlu0 3
        %4025 = vperm.xlu0 %4024, %v3935
        %v4026 = vpop.permute.xlu0 %4025
        %4029 = vset.pattern.permute.xlu0 3
        %4030 = vperm.xlu0 %4029, %v3936
        %v4031 = vpop.permute.xlu0 %4030
        %4034 = vset.pattern.permute.xlu0 3
        %4035 = vperm.xlu0 %4034, %v3937
        %v4036 = vpop.permute.xlu0 %4035
        %4039 = vset.pattern.permute.xlu0 3
        %4040 = vperm.xlu0 %4039, %v3938
        %v4041 = vpop.permute.xlu0 %4040
        %4044 = vset.pattern.permute.xlu0 3
        %4045 = vperm.xlu0 %4044, %v3939
        %v4046 = vpop.permute.xlu0 %4045
        %4049 = vset.pattern.permute.xlu0 3
        %4050 = vperm.xlu0 %4049, %v3940
        %v4051 = vpop.permute.xlu0 %4050
        %4054 = vset.pattern.permute.xlu0 3
        %4055 = vperm.xlu0 %4054, %v3941
        %v4056 = vpop.permute.xlu0 %4055
        %4059 = vset.pattern.permute.xlu0 3
        %4060 = vperm.xlu0 %4059, %v3942
        %v4061 = vpop.permute.xlu0 %4060
        %4064 = vset.pattern.permute.xlu0 3
        %4065 = vperm.xlu0 %4064, %v3943
        %v4066 = vpop.permute.xlu0 %4065
        %4069 = vset.pattern.permute.xlu0 3
        %4070 = vperm.xlu0 %4069, %v3944
        %v4071 = vpop.permute.xlu0 %4070
        %4074 = vset.pattern.permute.xlu0 3
        %4075 = vperm.xlu0 %4074, %v3945
        %v4076 = vpop.permute.xlu0 %4075
        %4079 = vset.pattern.permute.xlu0 3
        %4080 = vperm.xlu0 %4079, %v3946
        %v4081 = vpop.permute.xlu0 %4080
        %4084 = vset.pattern.permute.xlu0 3
        %4085 = vperm.xlu0 %4084, %v3947
        %v4086 = vpop.permute.xlu0 %4085
        %4089 = vset.pattern.permute.xlu0 3
        %4090 = vperm.xlu0 %4089, %v3948
        %v4091 = vpop.permute.xlu0 %4090
        %4094 = vset.pattern.permute.xlu0 3
        %4095 = vperm.xlu0 %4094, %v3949
        %v4096 = vpop.permute.xlu0 %4095
        %4099 = vset.pattern.permute.xlu0 3
        %4100 = vperm.xlu0 %4099, %v3950
        %v4101 = vpop.permute.xlu0 %4100
        %4104 = vset.pattern.permute.xlu0 3
        %4105 = vperm.xlu0 %4104, %v3951
        %v4106 = vpop.permute.xlu0 %4105
        %4109 = vset.pattern.permute.xlu0 3
        %4110 = vperm.xlu0 %4109, %v3952
        %v4111 = vpop.permute.xlu0 %4110
        %v4113 = vmul.f32 %v752, %v3956
        %v4114 = vmul.f32 %v753, %v3956
        %v4115 = vmul.f32 %v754, %v3961
        %v4116 = vmul.f32 %v755, %v3961
        %v4117 = vmul.f32 %v756, %v3966
        %v4118 = vmul.f32 %v757, %v3966
        %v4119 = vmul.f32 %v758, %v3971
        %v4120 = vmul.f32 %v759, %v3971
        %v4121 = vmul.f32 %v760, %v3976
        %v4122 = vmul.f32 %v761, %v3976
        %v4123 = vmul.f32 %v762, %v3981
        %v4124 = vmul.f32 %v763, %v3981
        %v4125 = vmul.f32 %v764, %v3986
        %v4126 = vmul.f32 %v765, %v3986
        %v4127 = vmul.f32 %v766, %v3991
        %v4128 = vmul.f32 %v767, %v3991
        %v4129 = vmul.f32 %v768, %v3996
        %v4130 = vmul.f32 %v769, %v3996
        %v4131 = vmul.f32 %v770, %v4001
        %v4132 = vmul.f32 %v771, %v4001
        %v4133 = vmul.f32 %v772, %v4006
        %v4134 = vmul.f32 %v773, %v4006
        %v4135 = vmul.f32 %v774, %v4011
        %v4136 = vmul.f32 %v775, %v4011
        %v4137 = vmul.f32 %v776, %v4016
        %v4138 = vmul.f32 %v777, %v4016
        %v4139 = vmul.f32 %v778, %v4021
        %v4140 = vmul.f32 %v779, %v4021
        %v4141 = vmul.f32 %v780, %v4026
        %v4142 = vmul.f32 %v781, %v4026
        %v4143 = vmul.f32 %v782, %v4031
        %v4144 = vmul.f32 %v783, %v4031
        %v4145 = vmul.f32 %v784, %v4036
        %v4146 = vmul.f32 %v785, %v4036
        %v4147 = vmul.f32 %v786, %v4041
        %v4148 = vmul.f32 %v787, %v4041
        %v4149 = vmul.f32 %v788, %v4046
        %v4150 = vmul.f32 %v789, %v4046
        %v4151 = vmul.f32 %v790, %v4051
        %v4152 = vmul.f32 %v791, %v4051
        %v4153 = vmul.f32 %v792, %v4056
        %v4154 = vmul.f32 %v793, %v4056
        %v4155 = vmul.f32 %v794, %v4061
        %v4156 = vmul.f32 %v795, %v4061
        %v4157 = vmul.f32 %v796, %v4066
        %v4158 = vmul.f32 %v797, %v4066
        %v4159 = vmul.f32 %v798, %v4071
        %v4160 = vmul.f32 %v799, %v4071
        %v4161 = vmul.f32 %v800, %v4076
        %v4162 = vmul.f32 %v801, %v4076
        %v4163 = vmul.f32 %v802, %v4081
        %v4164 = vmul.f32 %v803, %v4081
        %v4165 = vmul.f32 %v804, %v4086
        %v4166 = vmul.f32 %v805, %v4086
        %v4167 = vmul.f32 %v806, %v4091
        %v4168 = vmul.f32 %v807, %v4091
        %v4169 = vmul.f32 %v808, %v4096
        %v4170 = vmul.f32 %v809, %v4096
        %v4171 = vmul.f32 %v810, %v4101
        %v4172 = vmul.f32 %v811, %v4101
        %v4173 = vmul.f32 %v812, %v4106
        %v4174 = vmul.f32 %v813, %v4106
        %v4175 = vmul.f32 %v814, %v4111
        %v4176 = vmul.f32 %v815, %v4111
        %s4177 = scalar_lea.vmem %s418, 3 [#allocation5]
        %v4178 = vld [vmem:[%s4177] ss:$8 sm:$0x3]
        %v4180 = vperm.slane %v4178, 0
        %v4181 = vperm.slane %v4178, 1
        %v4184 = vadd.f32 %v4113, %v4180
        %v4185 = vadd.f32 %v4114, %v4181
        %v4186 = vadd.f32 %v4115, %v4180
        %v4187 = vadd.f32 %v4116, %v4181
        %v4188 = vadd.f32 %v4117, %v4180
        %v4189 = vadd.f32 %v4118, %v4181
        %v4190 = vadd.f32 %v4119, %v4180
        %v4191 = vadd.f32 %v4120, %v4181
        %v4192 = vadd.f32 %v4121, %v4180
        %v4193 = vadd.f32 %v4122, %v4181
        %v4194 = vadd.f32 %v4123, %v4180
        %v4195 = vadd.f32 %v4124, %v4181
        %v4196 = vadd.f32 %v4125, %v4180
        %v4197 = vadd.f32 %v4126, %v4181
        %v4198 = vadd.f32 %v4127, %v4180
        %v4199 = vadd.f32 %v4128, %v4181
        %v4200 = vadd.f32 %v4129, %v4180
        %v4201 = vadd.f32 %v4130, %v4181
        %v4202 = vadd.f32 %v4131, %v4180
        %v4203 = vadd.f32 %v4132, %v4181
        %v4204 = vadd.f32 %v4133, %v4180
        %v4205 = vadd.f32 %v4134, %v4181
        %v4206 = vadd.f32 %v4135, %v4180
        %v4207 = vadd.f32 %v4136, %v4181
        %v4208 = vadd.f32 %v4137, %v4180
        %v4209 = vadd.f32 %v4138, %v4181
        %v4210 = vadd.f32 %v4139, %v4180
        %v4211 = vadd.f32 %v4140, %v4181
        %v4212 = vadd.f32 %v4141, %v4180
        %v4213 = vadd.f32 %v4142, %v4181
        %v4214 = vadd.f32 %v4143, %v4180
        %v4215 = vadd.f32 %v4144, %v4181
        %v4216 = vadd.f32 %v4145, %v4180
        %v4217 = vadd.f32 %v4146, %v4181
        %v4218 = vadd.f32 %v4147, %v4180
        %v4219 = vadd.f32 %v4148, %v4181
        %v4220 = vadd.f32 %v4149, %v4180
        %v4221 = vadd.f32 %v4150, %v4181
        %v4222 = vadd.f32 %v4151, %v4180
        %v4223 = vadd.f32 %v4152, %v4181
        %v4224 = vadd.f32 %v4153, %v4180
        %v4225 = vadd.f32 %v4154, %v4181
        %v4226 = vadd.f32 %v4155, %v4180
        %v4227 = vadd.f32 %v4156, %v4181
        %v4228 = vadd.f32 %v4157, %v4180
        %v4229 = vadd.f32 %v4158, %v4181
        %v4230 = vadd.f32 %v4159, %v4180
        %v4231 = vadd.f32 %v4160, %v4181
        %v4232 = vadd.f32 %v4161, %v4180
        %v4233 = vadd.f32 %v4162, %v4181
        %v4234 = vadd.f32 %v4163, %v4180
        %v4235 = vadd.f32 %v4164, %v4181
        %v4236 = vadd.f32 %v4165, %v4180
        %v4237 = vadd.f32 %v4166, %v4181
        %v4238 = vadd.f32 %v4167, %v4180
        %v4239 = vadd.f32 %v4168, %v4181
        %v4240 = vadd.f32 %v4169, %v4180
        %v4241 = vadd.f32 %v4170, %v4181
        %v4242 = vadd.f32 %v4171, %v4180
        %v4243 = vadd.f32 %v4172, %v4181
        %v4244 = vadd.f32 %v4173, %v4180
        %v4245 = vadd.f32 %v4174, %v4181
        %v4246 = vadd.f32 %v4175, %v4180
        %v4247 = vadd.f32 %v4176, %v4181
        %v4248 = vmul.f32 %v4184, 0.01
        %v4249 = vmul.f32 %v4185, 0.01
        %v4250 = vmul.f32 %v4186, 0.01
        %v4251 = vmul.f32 %v4187, 0.01
        %v4252 = vmul.f32 %v4188, 0.01
        %v4253 = vmul.f32 %v4189, 0.01
        %v4254 = vmul.f32 %v4190, 0.01
        %v4255 = vmul.f32 %v4191, 0.01
        %v4256 = vmul.f32 %v4192, 0.01
        %v4257 = vmul.f32 %v4193, 0.01
        %v4258 = vmul.f32 %v4194, 0.01
        %v4259 = vmul.f32 %v4195, 0.01
        %v4260 = vmul.f32 %v4196, 0.01
        %v4261 = vmul.f32 %v4197, 0.01
        %v4262 = vmul.f32 %v4198, 0.01
        %v4263 = vmul.f32 %v4199, 0.01
        %v4264 = vmul.f32 %v4200, 0.01
        %v4265 = vmul.f32 %v4201, 0.01
        %v4266 = vmul.f32 %v4202, 0.01
        %v4267 = vmul.f32 %v4203, 0.01
        %v4268 = vmul.f32 %v4204, 0.01
        %v4269 = vmul.f32 %v4205, 0.01
        %v4270 = vmul.f32 %v4206, 0.01
        %v4271 = vmul.f32 %v4207, 0.01
        %v4272 = vmul.f32 %v4208, 0.01
        %v4273 = vmul.f32 %v4209, 0.01
        %v4274 = vmul.f32 %v4210, 0.01
        %v4275 = vmul.f32 %v4211, 0.01
        %v4276 = vmul.f32 %v4212, 0.01
        %v4277 = vmul.f32 %v4213, 0.01
        %v4278 = vmul.f32 %v4214, 0.01
        %v4279 = vmul.f32 %v4215, 0.01
        %v4280 = vmul.f32 %v4216, 0.01
        %v4281 = vmul.f32 %v4217, 0.01
        %v4282 = vmul.f32 %v4218, 0.01
        %v4283 = vmul.f32 %v4219, 0.01
        %v4284 = vmul.f32 %v4220, 0.01
        %v4285 = vmul.f32 %v4221, 0.01
        %v4286 = vmul.f32 %v4222, 0.01
        %v4287 = vmul.f32 %v4223, 0.01
        %v4288 = vmul.f32 %v4224, 0.01
        %v4289 = vmul.f32 %v4225, 0.01
        %v4290 = vmul.f32 %v4226, 0.01
        %v4291 = vmul.f32 %v4227, 0.01
        %v4292 = vmul.f32 %v4228, 0.01
        %v4293 = vmul.f32 %v4229, 0.01
        %v4294 = vmul.f32 %v4230, 0.01
        %v4295 = vmul.f32 %v4231, 0.01
        %v4296 = vmul.f32 %v4232, 0.01
        %v4297 = vmul.f32 %v4233, 0.01
        %v4298 = vmul.f32 %v4234, 0.01
        %v4299 = vmul.f32 %v4235, 0.01
        %v4300 = vmul.f32 %v4236, 0.01
        %v4301 = vmul.f32 %v4237, 0.01
        %v4302 = vmul.f32 %v4238, 0.01
        %v4303 = vmul.f32 %v4239, 0.01
        %v4304 = vmul.f32 %v4240, 0.01
        %v4305 = vmul.f32 %v4241, 0.01
        %v4306 = vmul.f32 %v4242, 0.01
        %v4307 = vmul.f32 %v4243, 0.01
        %v4308 = vmul.f32 %v4244, 0.01
        %v4309 = vmul.f32 %v4245, 0.01
        %v4310 = vmul.f32 %v4246, 0.01
        %v4311 = vmul.f32 %v4247, 0.01
        %v4312 = vmax.f32 %v4184, %v4248
        %v4313 = vmax.f32 %v4185, %v4249
        %v4314 = vmax.f32 %v4186, %v4250
        %v4315 = vmax.f32 %v4187, %v4251
        %v4316 = vmax.f32 %v4188, %v4252
        %v4317 = vmax.f32 %v4189, %v4253
        %v4318 = vmax.f32 %v4190, %v4254
        %v4319 = vmax.f32 %v4191, %v4255
        %v4320 = vmax.f32 %v4192, %v4256
        %v4321 = vmax.f32 %v4193, %v4257
        %v4322 = vmax.f32 %v4194, %v4258
        %v4323 = vmax.f32 %v4195, %v4259
        %v4324 = vmax.f32 %v4196, %v4260
        %v4325 = vmax.f32 %v4197, %v4261
        %v4326 = vmax.f32 %v4198, %v4262
        %v4327 = vmax.f32 %v4199, %v4263
        %v4328 = vmax.f32 %v4200, %v4264
        %v4329 = vmax.f32 %v4201, %v4265
        %v4330 = vmax.f32 %v4202, %v4266
        %v4331 = vmax.f32 %v4203, %v4267
        %v4332 = vmax.f32 %v4204, %v4268
        %v4333 = vmax.f32 %v4205, %v4269
        %v4334 = vmax.f32 %v4206, %v4270
        %v4335 = vmax.f32 %v4207, %v4271
        %v4336 = vmax.f32 %v4208, %v4272
        %v4337 = vmax.f32 %v4209, %v4273
        %v4338 = vmax.f32 %v4210, %v4274
        %v4339 = vmax.f32 %v4211, %v4275
        %v4340 = vmax.f32 %v4212, %v4276
        %v4341 = vmax.f32 %v4213, %v4277
        %v4342 = vmax.f32 %v4214, %v4278
        %v4343 = vmax.f32 %v4215, %v4279
        %v4344 = vmax.f32 %v4216, %v4280
        %v4345 = vmax.f32 %v4217, %v4281
        %v4346 = vmax.f32 %v4218, %v4282
        %v4347 = vmax.f32 %v4219, %v4283
        %v4348 = vmax.f32 %v4220, %v4284
        %v4349 = vmax.f32 %v4221, %v4285
        %v4350 = vmax.f32 %v4222, %v4286
        %v4351 = vmax.f32 %v4223, %v4287
        %v4352 = vmax.f32 %v4224, %v4288
        %v4353 = vmax.f32 %v4225, %v4289
        %v4354 = vmax.f32 %v4226, %v4290
        %v4355 = vmax.f32 %v4227, %v4291
        %v4356 = vmax.f32 %v4228, %v4292
        %v4357 = vmax.f32 %v4229, %v4293
        %v4358 = vmax.f32 %v4230, %v4294
        %v4359 = vmax.f32 %v4231, %v4295
        %v4360 = vmax.f32 %v4232, %v4296
        %v4361 = vmax.f32 %v4233, %v4297
        %v4362 = vmax.f32 %v4234, %v4298
        %v4363 = vmax.f32 %v4235, %v4299
        %v4364 = vmax.f32 %v4236, %v4300
        %v4365 = vmax.f32 %v4237, %v4301
        %v4366 = vmax.f32 %v4238, %v4302
        %v4367 = vmax.f32 %v4239, %v4303
        %v4368 = vmax.f32 %v4240, %v4304
        %v4369 = vmax.f32 %v4241, %v4305
        %v4370 = vmax.f32 %v4242, %v4306
        %v4371 = vmax.f32 %v4243, %v4307
        %v4372 = vmax.f32 %v4244, %v4308
        %v4373 = vmax.f32 %v4245, %v4309
        %v4374 = vmax.f32 %v4246, %v4310
        %v4375 = vmax.f32 %v4247, %v4311
        %s4376 = scalar_lea.vmem %s418, 16 [#allocation5]
        %v4377 = vld [vmem:[%s4376] ss:$8 sm:$0x3]
        %v4379 = vperm.slane %v4377, 0
        %v4380 = vperm.slane %v4377, 1
        %v4383 = vsub.f32 %v4312, %v4379
        %v4384 = vsub.f32 %v4313, %v4380
        %v4385 = vsub.f32 %v4314, %v4379
        %v4386 = vsub.f32 %v4315, %v4380
        %v4387 = vsub.f32 %v4316, %v4379
        %v4388 = vsub.f32 %v4317, %v4380
        %v4389 = vsub.f32 %v4318, %v4379
        %v4390 = vsub.f32 %v4319, %v4380
        %v4391 = vsub.f32 %v4320, %v4379
        %v4392 = vsub.f32 %v4321, %v4380
        %v4393 = vsub.f32 %v4322, %v4379
        %v4394 = vsub.f32 %v4323, %v4380
        %v4395 = vsub.f32 %v4324, %v4379
        %v4396 = vsub.f32 %v4325, %v4380
        %v4397 = vsub.f32 %v4326, %v4379
        %v4398 = vsub.f32 %v4327, %v4380
        %v4399 = vsub.f32 %v4328, %v4379
        %v4400 = vsub.f32 %v4329, %v4380
        %v4401 = vsub.f32 %v4330, %v4379
        %v4402 = vsub.f32 %v4331, %v4380
        %v4403 = vsub.f32 %v4332, %v4379
        %v4404 = vsub.f32 %v4333, %v4380
        %v4405 = vsub.f32 %v4334, %v4379
        %v4406 = vsub.f32 %v4335, %v4380
        %v4407 = vsub.f32 %v4336, %v4379
        %v4408 = vsub.f32 %v4337, %v4380
        %v4409 = vsub.f32 %v4338, %v4379
        %v4410 = vsub.f32 %v4339, %v4380
        %v4411 = vsub.f32 %v4340, %v4379
        %v4412 = vsub.f32 %v4341, %v4380
        %v4413 = vsub.f32 %v4342, %v4379
        %v4414 = vsub.f32 %v4343, %v4380
        %v4415 = vsub.f32 %v4344, %v4379
        %v4416 = vsub.f32 %v4345, %v4380
        %v4417 = vsub.f32 %v4346, %v4379
        %v4418 = vsub.f32 %v4347, %v4380
        %v4419 = vsub.f32 %v4348, %v4379
        %v4420 = vsub.f32 %v4349, %v4380
        %v4421 = vsub.f32 %v4350, %v4379
        %v4422 = vsub.f32 %v4351, %v4380
        %v4423 = vsub.f32 %v4352, %v4379
        %v4424 = vsub.f32 %v4353, %v4380
        %v4425 = vsub.f32 %v4354, %v4379
        %v4426 = vsub.f32 %v4355, %v4380
        %v4427 = vsub.f32 %v4356, %v4379
        %v4428 = vsub.f32 %v4357, %v4380
        %v4429 = vsub.f32 %v4358, %v4379
        %v4430 = vsub.f32 %v4359, %v4380
        %v4431 = vsub.f32 %v4360, %v4379
        %v4432 = vsub.f32 %v4361, %v4380
        %v4433 = vsub.f32 %v4362, %v4379
        %v4434 = vsub.f32 %v4363, %v4380
        %v4435 = vsub.f32 %v4364, %v4379
        %v4436 = vsub.f32 %v4365, %v4380
        %v4437 = vsub.f32 %v4366, %v4379
        %v4438 = vsub.f32 %v4367, %v4380
        %v4439 = vsub.f32 %v4368, %v4379
        %v4440 = vsub.f32 %v4369, %v4380
        %v4441 = vsub.f32 %v4370, %v4379
        %v4442 = vsub.f32 %v4371, %v4380
        %v4443 = vsub.f32 %v4372, %v4379
        %v4444 = vsub.f32 %v4373, %v4380
        %v4445 = vsub.f32 %v4374, %v4379
        %v4446 = vsub.f32 %v4375, %v4380
        %v4447 = vmul.f32 %v4383, 1.442695
        %v4448 = vpow.pop %v4447
        %v4449 = vmul.f32 %v4384, 1.442695
        %v4450 = vpow.pop %v4449
        %v4451 = vmul.f32 %v4385, 1.442695
        %v4452 = vpow.pop %v4451
        %v4453 = vmul.f32 %v4386, 1.442695
        %v4454 = vpow.pop %v4453
        %v4455 = vmul.f32 %v4387, 1.442695
        %v4456 = vpow.pop %v4455
        %v4457 = vmul.f32 %v4388, 1.442695
        %v4458 = vpow.pop %v4457
        %v4459 = vmul.f32 %v4389, 1.442695
        %v4460 = vpow.pop %v4459
        %v4461 = vmul.f32 %v4390, 1.442695
        %v4462 = vpow.pop %v4461
        %v4463 = vmul.f32 %v4391, 1.442695
        %v4464 = vpow.pop %v4463
        %v4465 = vmul.f32 %v4392, 1.442695
        %v4466 = vpow.pop %v4465
        %v4467 = vmul.f32 %v4393, 1.442695
        %v4468 = vpow.pop %v4467
        %v4469 = vmul.f32 %v4394, 1.442695
        %v4470 = vpow.pop %v4469
        %v4471 = vmul.f32 %v4395, 1.442695
        %v4472 = vpow.pop %v4471
        %v4473 = vmul.f32 %v4396, 1.442695
        %v4474 = vpow.pop %v4473
        %v4475 = vmul.f32 %v4397, 1.442695
        %v4476 = vpow.pop %v4475
        %v4477 = vmul.f32 %v4398, 1.442695
        %v4478 = vpow.pop %v4477
        %v4479 = vmul.f32 %v4399, 1.442695
        %v4480 = vpow.pop %v4479
        %v4481 = vmul.f32 %v4400, 1.442695
        %v4482 = vpow.pop %v4481
        %v4483 = vmul.f32 %v4401, 1.442695
        %v4484 = vpow.pop %v4483
        %v4485 = vmul.f32 %v4402, 1.442695
        %v4486 = vpow.pop %v4485
        %v4487 = vmul.f32 %v4403, 1.442695
        %v4488 = vpow.pop %v4487
        %v4489 = vmul.f32 %v4404, 1.442695
        %v4490 = vpow.pop %v4489
        %v4491 = vmul.f32 %v4405, 1.442695
        %v4492 = vpow.pop %v4491
        %v4493 = vmul.f32 %v4406, 1.442695
        %v4494 = vpow.pop %v4493
        %v4495 = vmul.f32 %v4407, 1.442695
        %v4496 = vpow.pop %v4495
        %v4497 = vmul.f32 %v4408, 1.442695
        %v4498 = vpow.pop %v4497
        %v4499 = vmul.f32 %v4409, 1.442695
        %v4500 = vpow.pop %v4499
        %v4501 = vmul.f32 %v4410, 1.442695
        %v4502 = vpow.pop %v4501
        %v4503 = vmul.f32 %v4411, 1.442695
        %v4504 = vpow.pop %v4503
        %v4505 = vmul.f32 %v4412, 1.442695
        %v4506 = vpow.pop %v4505
        %v4507 = vmul.f32 %v4413, 1.442695
        %v4508 = vpow.pop %v4507
        %v4509 = vmul.f32 %v4414, 1.442695
        %v4510 = vpow.pop %v4509
        %v4511 = vmul.f32 %v4415, 1.442695
        %v4512 = vpow.pop %v4511
        %v4513 = vmul.f32 %v4416, 1.442695
        %v4514 = vpow.pop %v4513
        %v4515 = vmul.f32 %v4417, 1.442695
        %v4516 = vpow.pop %v4515
        %v4517 = vmul.f32 %v4418, 1.442695
        %v4518 = vpow.pop %v4517
        %v4519 = vmul.f32 %v4419, 1.442695
        %v4520 = vpow.pop %v4519
        %v4521 = vmul.f32 %v4420, 1.442695
        %v4522 = vpow.pop %v4521
        %v4523 = vmul.f32 %v4421, 1.442695
        %v4524 = vpow.pop %v4523
        %v4525 = vmul.f32 %v4422, 1.442695
        %v4526 = vpow.pop %v4525
        %v4527 = vmul.f32 %v4423, 1.442695
        %v4528 = vpow.pop %v4527
        %v4529 = vmul.f32 %v4424, 1.442695
        %v4530 = vpow.pop %v4529
        %v4531 = vmul.f32 %v4425, 1.442695
        %v4532 = vpow.pop %v4531
        %v4533 = vmul.f32 %v4426, 1.442695
        %v4534 = vpow.pop %v4533
        %v4535 = vmul.f32 %v4427, 1.442695
        %v4536 = vpow.pop %v4535
        %v4537 = vmul.f32 %v4428, 1.442695
        %v4538 = vpow.pop %v4537
        %v4539 = vmul.f32 %v4429, 1.442695
        %v4540 = vpow.pop %v4539
        %v4541 = vmul.f32 %v4430, 1.442695
        %v4542 = vpow.pop %v4541
        %v4543 = vmul.f32 %v4431, 1.442695
        %v4544 = vpow.pop %v4543
        %v4545 = vmul.f32 %v4432, 1.442695
        %v4546 = vpow.pop %v4545
        %v4547 = vmul.f32 %v4433, 1.442695
        %v4548 = vpow.pop %v4547
        %v4549 = vmul.f32 %v4434, 1.442695
        %v4550 = vpow.pop %v4549
        %v4551 = vmul.f32 %v4435, 1.442695
        %v4552 = vpow.pop %v4551
        %v4553 = vmul.f32 %v4436, 1.442695
        %v4554 = vpow.pop %v4553
        %v4555 = vmul.f32 %v4437, 1.442695
        %v4556 = vpow.pop %v4555
        %v4557 = vmul.f32 %v4438, 1.442695
        %v4558 = vpow.pop %v4557
        %v4559 = vmul.f32 %v4439, 1.442695
        %v4560 = vpow.pop %v4559
        %v4561 = vmul.f32 %v4440, 1.442695
        %v4562 = vpow.pop %v4561
        %v4563 = vmul.f32 %v4441, 1.442695
        %v4564 = vpow.pop %v4563
        %v4565 = vmul.f32 %v4442, 1.442695
        %v4566 = vpow.pop %v4565
        %v4567 = vmul.f32 %v4443, 1.442695
        %v4568 = vpow.pop %v4567
        %v4569 = vmul.f32 %v4444, 1.442695
        %v4570 = vpow.pop %v4569
        %v4571 = vmul.f32 %v4445, 1.442695
        %v4572 = vpow.pop %v4571
        %v4573 = vmul.f32 %v4446, 1.442695
        %v4574 = vpow.pop %v4573
        %v4575 = vmul.f32 %v4448, %v2898
        %v4576 = vmul.f32 %v4450, %v2899
        %v4577 = vmul.f32 %v4452, %v2900
        %v4578 = vmul.f32 %v4454, %v2901
        %v4579 = vmul.f32 %v4456, %v2902
        %v4580 = vmul.f32 %v4458, %v2903
        %v4581 = vmul.f32 %v4460, %v2904
        %v4582 = vmul.f32 %v4462, %v2905
        %v4583 = vmul.f32 %v4464, %v2906
        %v4584 = vmul.f32 %v4466, %v2907
        %v4585 = vmul.f32 %v4468, %v2908
        %v4586 = vmul.f32 %v4470, %v2909
        %v4587 = vmul.f32 %v4472, %v2910
        %v4588 = vmul.f32 %v4474, %v2911
        %v4589 = vmul.f32 %v4476, %v2912
        %v4590 = vmul.f32 %v4478, %v2913
        %v4591 = vmul.f32 %v4480, %v2914
        %v4592 = vmul.f32 %v4482, %v2915
        %v4593 = vmul.f32 %v4484, %v2916
        %v4594 = vmul.f32 %v4486, %v2917
        %v4595 = vmul.f32 %v4488, %v2918
        %v4596 = vmul.f32 %v4490, %v2919
        %v4597 = vmul.f32 %v4492, %v2920
        %v4598 = vmul.f32 %v4494, %v2921
        %v4599 = vmul.f32 %v4496, %v2922
        %v4600 = vmul.f32 %v4498, %v2923
        %v4601 = vmul.f32 %v4500, %v2924
        %v4602 = vmul.f32 %v4502, %v2925
        %v4603 = vmul.f32 %v4504, %v2926
        %v4604 = vmul.f32 %v4506, %v2927
        %v4605 = vmul.f32 %v4508, %v2928
        %v4606 = vmul.f32 %v4510, %v2929
        %v4607 = vmul.f32 %v4512, %v2930
        %v4608 = vmul.f32 %v4514, %v2931
        %v4609 = vmul.f32 %v4516, %v2932
        %v4610 = vmul.f32 %v4518, %v2933
        %v4611 = vmul.f32 %v4520, %v2934
        %v4612 = vmul.f32 %v4522, %v2935
        %v4613 = vmul.f32 %v4524, %v2936
        %v4614 = vmul.f32 %v4526, %v2937
        %v4615 = vmul.f32 %v4528, %v2938
        %v4616 = vmul.f32 %v4530, %v2939
        %v4617 = vmul.f32 %v4532, %v2940
        %v4618 = vmul.f32 %v4534, %v2941
        %v4619 = vmul.f32 %v4536, %v2942
        %v4620 = vmul.f32 %v4538, %v2943
        %v4621 = vmul.f32 %v4540, %v2944
        %v4622 = vmul.f32 %v4542, %v2945
        %v4623 = vmul.f32 %v4544, %v2946
        %v4624 = vmul.f32 %v4546, %v2947
        %v4625 = vmul.f32 %v4548, %v2948
        %v4626 = vmul.f32 %v4550, %v2949
        %v4627 = vmul.f32 %v4552, %v2950
        %v4628 = vmul.f32 %v4554, %v2951
        %v4629 = vmul.f32 %v4556, %v2952
        %v4630 = vmul.f32 %v4558, %v2953
        %v4631 = vmul.f32 %v4560, %v2954
        %v4632 = vmul.f32 %v4562, %v2955
        %v4633 = vmul.f32 %v4564, %v2956
        %v4634 = vmul.f32 %v4566, %v2957
        %v4635 = vmul.f32 %v4568, %v2958
        %v4636 = vmul.f32 %v4570, %v2959
        %v4637 = vmul.f32 %v4572, %v2960
        %v4638 = vmul.f32 %v4574, %v2961
        %s4639 = scalar_lea.vmem [#allocation2], 3
        %v4640 = vld [vmem:[%s4639] ss:$4 sm:$0x3]
        %4641 = vmatpush.msra.mxu0 %v4605
        %4642 = vmatpush.msra.mxu0 %v4603
        %4643 = vmatpush.msra.mxu0 %v4601
        %4644 = vmatpush.msra.mxu0 %v4599
        %4645 = vmatpush.msra.mxu0 %v4597
        %4646 = vmatpush.msra.mxu0 %v4595
        %4647 = vmatpush.msra.mxu0 %v4593
        %4648 = vmatpush.msra.mxu0 %v4591
        %4649 = vmatpush.msra.mxu0 %v4589
        %4650 = vmatpush.msra.mxu0 %v4587
        %4651 = vmatpush.msra.mxu0 %v4585
        %4652 = vmatpush.msra.mxu0 %v4583
        %4653 = vmatpush.msra.mxu0 %v4581
        %4654 = vmatpush.msra.mxu0 %v4579
        %4655 = vmatpush.msra.mxu0 %v4577
        %4656 = vmatpush.msra.mxu0 %v4575
        %4657 = vmatmul.f32.gmra.mxu0 1.0
        %v4658 = vpop.f32.mrf.mxu0
        %v4659 = vadd.f32 0.0, %v4658
        %4660 = vdwg.mxu0
        %4661 = vmatpush.msra.mxu0 %v4637
        %4662 = vmatpush.msra.mxu0 %v4635
        %4663 = vmatpush.msra.mxu0 %v4633
        %4664 = vmatpush.msra.mxu0 %v4631
        %4665 = vmatpush.msra.mxu0 %v4629
        %4666 = vmatpush.msra.mxu0 %v4627
        %4667 = vmatpush.msra.mxu0 %v4625
        %4668 = vmatpush.msra.mxu0 %v4623
        %4669 = vmatpush.msra.mxu0 %v4621
        %4670 = vmatpush.msra.mxu0 %v4619
        %4671 = vmatpush.msra.mxu0 %v4617
        %4672 = vmatpush.msra.mxu0 %v4615
        %4673 = vmatpush.msra.mxu0 %v4613
        %4674 = vmatpush.msra.mxu0 %v4611
        %4675 = vmatpush.msra.mxu0 %v4609
        %4676 = vmatpush.msra.mxu0 %v4607
        %4677 = vmatmul.f32.gmra.mxu0 1.0
        %v4678 = vpop.f32.mrf.mxu0
        %v4679 = vadd.f32 %v4659, %v4678
        %4680 = vdwg.mxu0
        %4681 = vmatpush.msra.mxu0 %v4606
        %4682 = vmatpush.msra.mxu0 %v4604
        %4683 = vmatpush.msra.mxu0 %v4602
        %4684 = vmatpush.msra.mxu0 %v4600
        %4685 = vmatpush.msra.mxu0 %v4598
        %4686 = vmatpush.msra.mxu0 %v4596
        %4687 = vmatpush.msra.mxu0 %v4594
        %4688 = vmatpush.msra.mxu0 %v4592
        %4689 = vmatpush.msra.mxu0 %v4590
        %4690 = vmatpush.msra.mxu0 %v4588
        %4691 = vmatpush.msra.mxu0 %v4586
        %4692 = vmatpush.msra.mxu0 %v4584
        %4693 = vmatpush.msra.mxu0 %v4582
        %4694 = vmatpush.msra.mxu0 %v4580
        %4695 = vmatpush.msra.mxu0 %v4578
        %4696 = vmatpush.msra.mxu0 %v4576
        %4697 = vmatmul.f32.gmra.mxu0 1.0
        %v4698 = vpop.f32.mrf.mxu0
        %v4699 = vadd.f32 0.0, %v4698
        %4700 = vdwg.mxu0
        %4701 = vmatpush.msra.mxu0 %v4638
        %4702 = vmatpush.msra.mxu0 %v4636
        %4703 = vmatpush.msra.mxu0 %v4634
        %4704 = vmatpush.msra.mxu0 %v4632
        %4705 = vmatpush.msra.mxu0 %v4630
        %4706 = vmatpush.msra.mxu0 %v4628
        %4707 = vmatpush.msra.mxu0 %v4626
        %4708 = vmatpush.msra.mxu0 %v4624
        %4709 = vmatpush.msra.mxu0 %v4622
        %4710 = vmatpush.msra.mxu0 %v4620
        %4711 = vmatpush.msra.mxu0 %v4618
        %4712 = vmatpush.msra.mxu0 %v4616
        %4713 = vmatpush.msra.mxu0 %v4614
        %4714 = vmatpush.msra.mxu0 %v4612
        %4715 = vmatpush.msra.mxu0 %v4610
        %4716 = vmatpush.msra.mxu0 %v4608
        %4717 = vmatmul.f32.gmra.mxu0 1.0
        %v4718 = vpop.f32.mrf.mxu0
        %v4719 = vadd.f32 %v4699, %v4718
        %4720 = vdwg.mxu0
        %v4723 = vrot.slane %v4719, 7
        %v4724 = vsel %vm1697, %v4679, %v4723
        %v4726 = vadd.f32 %v4640, %v4724
        %4727 = vst.msk [vmem:[%s4639] ss:$4 sm:$0x3] %vm1704, %v4726
        %v4728 = vmul.f32 %v4575, %v752
        %v4729 = vmul.f32 %v4576, %v753
        %v4730 = vmul.f32 %v4577, %v754
        %v4731 = vmul.f32 %v4578, %v755
        %v4732 = vmul.f32 %v4579, %v756
        %v4733 = vmul.f32 %v4580, %v757
        %v4734 = vmul.f32 %v4581, %v758
        %v4735 = vmul.f32 %v4582, %v759
        %v4736 = vmul.f32 %v4583, %v760
        %v4737 = vmul.f32 %v4584, %v761
        %v4738 = vmul.f32 %v4585, %v762
        %v4739 = vmul.f32 %v4586, %v763
        %v4740 = vmul.f32 %v4587, %v764
        %v4741 = vmul.f32 %v4588, %v765
        %v4742 = vmul.f32 %v4589, %v766
        %v4743 = vmul.f32 %v4590, %v767
        %v4744 = vmul.f32 %v4591, %v768
        %v4745 = vmul.f32 %v4592, %v769
        %v4746 = vmul.f32 %v4593, %v770
        %v4747 = vmul.f32 %v4594, %v771
        %v4748 = vmul.f32 %v4595, %v772
        %v4749 = vmul.f32 %v4596, %v773
        %v4750 = vmul.f32 %v4597, %v774
        %v4751 = vmul.f32 %v4598, %v775
        %v4752 = vmul.f32 %v4599, %v776
        %v4753 = vmul.f32 %v4600, %v777
        %v4754 = vmul.f32 %v4601, %v778
        %v4755 = vmul.f32 %v4602, %v779
        %v4756 = vmul.f32 %v4603, %v780
        %v4757 = vmul.f32 %v4604, %v781
        %v4758 = vmul.f32 %v4605, %v782
        %v4759 = vmul.f32 %v4606, %v783
        %v4760 = vmul.f32 %v4607, %v784
        %v4761 = vmul.f32 %v4608, %v785
        %v4762 = vmul.f32 %v4609, %v786
        %v4763 = vmul.f32 %v4610, %v787
        %v4764 = vmul.f32 %v4611, %v788
        %v4765 = vmul.f32 %v4612, %v789
        %v4766 = vmul.f32 %v4613, %v790
        %v4767 = vmul.f32 %v4614, %v791
        %v4768 = vmul.f32 %v4615, %v792
        %v4769 = vmul.f32 %v4616, %v793
        %v4770 = vmul.f32 %v4617, %v794
        %v4771 = vmul.f32 %v4618, %v795
        %v4772 = vmul.f32 %v4619, %v796
        %v4773 = vmul.f32 %v4620, %v797
        %v4774 = vmul.f32 %v4621, %v798
        %v4775 = vmul.f32 %v4622, %v799
        %v4776 = vmul.f32 %v4623, %v800
        %v4777 = vmul.f32 %v4624, %v801
        %v4778 = vmul.f32 %v4625, %v802
        %v4779 = vmul.f32 %v4626, %v803
        %v4780 = vmul.f32 %v4627, %v804
        %v4781 = vmul.f32 %v4628, %v805
        %v4782 = vmul.f32 %v4629, %v806
        %v4783 = vmul.f32 %v4630, %v807
        %v4784 = vmul.f32 %v4631, %v808
        %v4785 = vmul.f32 %v4632, %v809
        %v4786 = vmul.f32 %v4633, %v810
        %v4787 = vmul.f32 %v4634, %v811
        %v4788 = vmul.f32 %v4635, %v812
        %v4789 = vmul.f32 %v4636, %v813
        %v4790 = vmul.f32 %v4637, %v814
        %v4791 = vmul.f32 %v4638, %v815
        %v4792 = vld [vmem:[%s425 + $0x30] sm:$0xff]
        %v4793 = vld [vmem:[%s425 + $0x38] sm:$0xff]
        %v4794 = vld [vmem:[#allocation3 + $0x30] sm:$0xff]
        %v4795 = vld [vmem:[#allocation3 + $0x38] sm:$0xff]
        %4796 = vmatpush.msra.mxu0 %v4758
        %4797 = vmatpush.msra.mxu0 %v4756
        %4798 = vmatpush.msra.mxu0 %v4754
        %4799 = vmatpush.msra.mxu0 %v4752
        %4800 = vmatpush.msra.mxu0 %v4750
        %4801 = vmatpush.msra.mxu0 %v4748
        %4802 = vmatpush.msra.mxu0 %v4746
        %4803 = vmatpush.msra.mxu0 %v4744
        %4804 = vmatpush.msra.mxu0 %v4742
        %4805 = vmatpush.msra.mxu0 %v4740
        %4806 = vmatpush.msra.mxu0 %v4738
        %4807 = vmatpush.msra.mxu0 %v4736
        %4808 = vmatpush.msra.mxu0 %v4734
        %4809 = vmatpush.msra.mxu0 %v4732
        %4810 = vmatpush.msra.mxu0 %v4730
        %4811 = vmatpush.msra.mxu0 %v4728
        %4812 = vmatmul.f32.gmra.mxu0 %v4792
        %v4813 = vpop.f32.mrf.mxu0
        %v4814 = vadd.f32 0.0, %v4813
        %4815 = vdwg.mxu0
        %4816 = vmatpush.msra.mxu0 %v4790
        %4817 = vmatpush.msra.mxu0 %v4788
        %4818 = vmatpush.msra.mxu0 %v4786
        %4819 = vmatpush.msra.mxu0 %v4784
        %4820 = vmatpush.msra.mxu0 %v4782
        %4821 = vmatpush.msra.mxu0 %v4780
        %4822 = vmatpush.msra.mxu0 %v4778
        %4823 = vmatpush.msra.mxu0 %v4776
        %4824 = vmatpush.msra.mxu0 %v4774
        %4825 = vmatpush.msra.mxu0 %v4772
        %4826 = vmatpush.msra.mxu0 %v4770
        %4827 = vmatpush.msra.mxu0 %v4768
        %4828 = vmatpush.msra.mxu0 %v4766
        %4829 = vmatpush.msra.mxu0 %v4764
        %4830 = vmatpush.msra.mxu0 %v4762
        %4831 = vmatpush.msra.mxu0 %v4760
        %4832 = vmatmul.f32.gmra.mxu0 %v4793
        %v4833 = vpop.f32.mrf.mxu0
        %v4834 = vadd.f32 %v4814, %v4833
        %4835 = vdwg.mxu0
        %4836 = vmatpush.msra.mxu0 %v4759
        %4837 = vmatpush.msra.mxu0 %v4757
        %4838 = vmatpush.msra.mxu0 %v4755
        %4839 = vmatpush.msra.mxu0 %v4753
        %4840 = vmatpush.msra.mxu0 %v4751
        %4841 = vmatpush.msra.mxu0 %v4749
        %4842 = vmatpush.msra.mxu0 %v4747
        %4843 = vmatpush.msra.mxu0 %v4745
        %4844 = vmatpush.msra.mxu0 %v4743
        %4845 = vmatpush.msra.mxu0 %v4741
        %4846 = vmatpush.msra.mxu0 %v4739
        %4847 = vmatpush.msra.mxu0 %v4737
        %4848 = vmatpush.msra.mxu0 %v4735
        %4849 = vmatpush.msra.mxu0 %v4733
        %4850 = vmatpush.msra.mxu0 %v4731
        %4851 = vmatpush.msra.mxu0 %v4729
        %4852 = vmatmul.f32.gmra.mxu0 %v4792
        %v4853 = vpop.f32.mrf.mxu0
        %v4854 = vadd.f32 0.0, %v4853
        %4855 = vdwg.mxu0
        %4856 = vmatpush.msra.mxu0 %v4791
        %4857 = vmatpush.msra.mxu0 %v4789
        %4858 = vmatpush.msra.mxu0 %v4787
        %4859 = vmatpush.msra.mxu0 %v4785
        %4860 = vmatpush.msra.mxu0 %v4783
        %4861 = vmatpush.msra.mxu0 %v4781
        %4862 = vmatpush.msra.mxu0 %v4779
        %4863 = vmatpush.msra.mxu0 %v4777
        %4864 = vmatpush.msra.mxu0 %v4775
        %4865 = vmatpush.msra.mxu0 %v4773
        %4866 = vmatpush.msra.mxu0 %v4771
        %4867 = vmatpush.msra.mxu0 %v4769
        %4868 = vmatpush.msra.mxu0 %v4767
        %4869 = vmatpush.msra.mxu0 %v4765
        %4870 = vmatpush.msra.mxu0 %v4763
        %4871 = vmatpush.msra.mxu0 %v4761
        %4872 = vmatmul.f32.gmra.mxu0 %v4793
        %v4873 = vpop.f32.mrf.mxu0
        %v4874 = vadd.f32 %v4854, %v4873
        %4875 = vdwg.mxu0
        %v4876 = vadd.f32 %v4794, %v4834
        %v4877 = vadd.f32 %v4795, %v4874
        %4878 = vst [vmem:[#allocation3 + $0x30] sm:$0xff] %v4876
        %4879 = vst [vmem:[#allocation3 + $0x38] sm:$0xff] %v4877
        %p4880 = scmp.eq.s32.totalorder %s25, 1
        // Predicated region
        $region118: #{mr_dual_hfd_forward.4} parent=100 // pred_check
          %p4881 = pneg %p4880
        $region119: #{mr_dual_hfd_forward.4} parent=100 // pred_check_branch
          %4883 = sbr.rel (%p4881) target = $region121
        $region120: #{mr_dual_hfd_forward.4} parent=100 // pred_region
          %v4884 = vld [vmem:[#allocation2] ss:$4 sm:$0x3]
          %vm4885 = vcmp.gt.f32.partialorder %v4884, 0.0
          %v4886 = vsel %vm4885, %v4884, 1.0
          %v4887 = vrcp.pop %v4886
          %v4888 = vld [vmem:[#allocation3] sm:$0xff]
          %v4889 = vld [vmem:[#allocation3 + $0x8] sm:$0xff]
          %v4891 = vperm.slane %v4887, 0
          %v4892 = vperm.slane %v4887, 1
          %v4895 = vmul.f32 %v4888, %v4891
          %v4896 = vmul.f32 %v4889, %v4892
          %v4897 = vadd.f32 %v4895, 0.0
          %v4898 = vadd.f32 %v4896, 0.0
          %v4899 = vld [vmem:[%s2576] ss:$4 sm:$0x3]
          %vm4900 = vcmp.gt.f32.partialorder %v4899, 0.0
          %v4901 = vsel %vm4900, %v4899, 1.0
          %v4902 = vrcp.pop %v4901
          %v4903 = vld [vmem:[#allocation3 + $0x10] sm:$0xff]
          %v4904 = vld [vmem:[#allocation3 + $0x18] sm:$0xff]
          %v4906 = vperm.slane %v4902, 0
          %v4907 = vperm.slane %v4902, 1
          %v4910 = vmul.f32 %v4903, %v4906
          %v4911 = vmul.f32 %v4904, %v4907
          %v4912 = vadd.f32 %v4897, %v4910
          %v4913 = vadd.f32 %v4898, %v4911
          %v4914 = vld [vmem:[%s4] sm:$0xff]
          %v4915 = vld [vmem:[%s3680] ss:$4 sm:$0x3]
          %vm4916 = vcmp.gt.f32.partialorder %v4915, 0.0
          %v4917 = vsel %vm4916, %v4915, 1.0
          %v4918 = vrcp.pop %v4917
          %v4919 = vld [vmem:[#allocation3 + $0x20] sm:$0xff]
          %v4920 = vld [vmem:[#allocation3 + $0x28] sm:$0xff]
          %v4922 = vperm.slane %v4918, 0
          %v4923 = vperm.slane %v4918, 1
          %v4926 = vmul.f32 %v4919, %v4922
          %v4927 = vmul.f32 %v4920, %v4923
          %v4928 = vadd.f32 %v4926, 0.0
          %v4929 = vadd.f32 %v4927, 0.0
          %v4930 = vld [vmem:[%s4639] ss:$4 sm:$0x3]
          %vm4931 = vcmp.gt.f32.partialorder %v4930, 0.0
          %v4932 = vsel %vm4931, %v4930, 1.0
          %v4933 = vrcp.pop %v4932
          %v4934 = vld [vmem:[#allocation3 + $0x30] sm:$0xff]
          %v4935 = vld [vmem:[#allocation3 + $0x38] sm:$0xff]
          %v4937 = vperm.slane %v4933, 0
          %v4938 = vperm.slane %v4933, 1
          %v4941 = vmul.f32 %v4934, %v4937
          %v4942 = vmul.f32 %v4935, %v4938
          %v4943 = vadd.f32 %v4928, %v4941
          %v4944 = vadd.f32 %v4929, %v4942
          %4946 = vrot.lane.b32.xlu0 %v4914, 120
          %v4947 = vpop.permute.xlu0 %4946
          %vm4948 = vcmask 64512
          %v4949 = vsel %vm4948, %v4947, 0
          %4951 = vmatpush.msra.mxu0 0.0
          %4952 = vmatpush.msra.mxu0 0.0
          %4953 = vmatpush.msra.mxu0 0.0
          %4954 = vmatpush.msra.mxu0 0.0
          %4955 = vmatpush.msra.mxu0 0.0
          %4956 = vmatpush.msra.mxu0 0.0
          %4957 = vmatpush.msra.mxu0 0.0
          %4958 = vmatpush.msra.mxu0 0.0
          %4959 = vmatpush.msra.mxu0 0.0
          %4960 = vmatpush.msra.mxu0 0.0
          %4961 = vmatpush.msra.mxu0 0.0
          %4962 = vmatpush.msra.mxu0 0.0
          %4963 = vmatpush.msra.mxu0 0.0
          %4964 = vmatpush.msra.mxu0 0.0
          %4965 = vmatpush.msra.mxu0 0.0
          %4966 = vmatpush.msra.mxu0 %v4943
          %4967 = vmatmul.f32.gmra.mxu0 %v4949
          %v4968 = vpop.f32.mrf.mxu0
          %v4969 = vadd.f32 0.0, %v4968
          %4970 = vdwg.mxu0
          %4971 = vmatpush.msra.mxu0 0.0
          %4972 = vmatpush.msra.mxu0 0.0
          %4973 = vmatpush.msra.mxu0 0.0
          %4974 = vmatpush.msra.mxu0 0.0
          %4975 = vmatpush.msra.mxu0 0.0
          %4976 = vmatpush.msra.mxu0 0.0
          %4977 = vmatpush.msra.mxu0 0.0
          %4978 = vmatpush.msra.mxu0 0.0
          %4979 = vmatpush.msra.mxu0 0.0
          %4980 = vmatpush.msra.mxu0 0.0
          %4981 = vmatpush.msra.mxu0 0.0
          %4982 = vmatpush.msra.mxu0 0.0
          %4983 = vmatpush.msra.mxu0 0.0
          %4984 = vmatpush.msra.mxu0 0.0
          %4985 = vmatpush.msra.mxu0 0.0
          %4986 = vmatpush.msra.mxu0 %v4944
          %4987 = vmatmul.f32.gmra.mxu0 %v4949
          %v4988 = vpop.f32.mrf.mxu0
          %v4989 = vadd.f32 0.0, %v4988
          %4990 = vdwg.mxu0
          %v4991 = vsel %vm4948, %v4914, 0
          %4993 = vmatpush.msra.mxu0 0.0
          %4994 = vmatpush.msra.mxu0 0.0
          %4995 = vmatpush.msra.mxu0 0.0
          %4996 = vmatpush.msra.mxu0 0.0
          %4997 = vmatpush.msra.mxu0 0.0
          %4998 = vmatpush.msra.mxu0 0.0
          %4999 = vmatpush.msra.mxu0 0.0
          %5000 = vmatpush.msra.mxu0 0.0
          %5001 = vmatpush.msra.mxu0 0.0
          %5002 = vmatpush.msra.mxu0 0.0
          %5003 = vmatpush.msra.mxu0 0.0
          %5004 = vmatpush.msra.mxu0 0.0
          %5005 = vmatpush.msra.mxu0 0.0
          %5006 = vmatpush.msra.mxu0 0.0
          %5007 = vmatpush.msra.mxu0 0.0
          %5008 = vmatpush.msra.mxu0 %v4912
          %5009 = vmatmul.f32.gmra.mxu0 %v4991
          %v5010 = vpop.f32.mrf.mxu0
          %v5011 = vadd.f32 %v4969, %v5010
          %5012 = vdwg.mxu0
          %5013 = vmatpush.msra.mxu0 0.0
          %5014 = vmatpush.msra.mxu0 0.0
          %5015 = vmatpush.msra.mxu0 0.0
          %5016 = vmatpush.msra.mxu0 0.0
          %5017 = vmatpush.msra.mxu0 0.0
          %5018 = vmatpush.msra.mxu0 0.0
          %5019 = vmatpush.msra.mxu0 0.0
          %5020 = vmatpush.msra.mxu0 0.0
          %5021 = vmatpush.msra.mxu0 0.0
          %5022 = vmatpush.msra.mxu0 0.0
          %5023 = vmatpush.msra.mxu0 0.0
          %5024 = vmatpush.msra.mxu0 0.0
          %5025 = vmatpush.msra.mxu0 0.0
          %5026 = vmatpush.msra.mxu0 0.0
          %5027 = vmatpush.msra.mxu0 0.0
          %5028 = vmatpush.msra.mxu0 %v4913
          %5029 = vmatmul.f32.gmra.mxu0 %v4991
          %v5030 = vpop.f32.mrf.mxu0
          %v5031 = vadd.f32 %v4989, %v5030
          %5032 = vdwg.mxu0
          %v5033 = vld [vmem:[%s5] sm:$0xff]
          %5035 = vset.pattern.permute.xlu0 0
          %5036 = vperm.xlu0 %5035, %v5033
          %v5037 = vpop.permute.xlu0 %5036
          %v5039 = vadd.f32 %v5011, %v5037
          %v5040 = vadd.f32 %v5031, %v5037
          %5041 = vst [vmem:[%s464] sm:$0xff] %v5039
          %5042 = vst [vmem:[%s464 + $0x8] sm:$0xff] %v5040
        $region121: #{mr_dual_hfd_forward.4} parent=100 // pred_fallthru
          _
        %s5043 = sand.u32 %s188, 1
        %s5044 = scalar_lea.sflag [#allocation8], %s5043
        %s5045 = sand.u32 %s188, 1
        %s5046 = smul.addr %s5045, 16
        %s5047 = scalar_lea.vmem [#allocation7], %s5046
        // Predicated region
        $region122: #{mr_dual_hfd_forward.4} parent=100 // pred_check
          %p5048 = pneg %p198
        $region123: #{mr_dual_hfd_forward.4} parent=100 // pred_check_branch
          %5050 = sbr.rel (%p5048) target = $region125
        $region124: #{mr_dual_hfd_forward.4} parent=100 // pred_region
          %s5051 = smul.u32 2, %s24
          %5053 = vsyncadd %s5044, 0
          %s5054 = smul.addr %s5051, 8
          %s5055 = scalar_lea.hbm %s6, %s5054
          %s5057 = sshll.u32 %s5047, 4
          %s5058 = int_to_ptr.vmem [resolvable:$true] %s5057
          %s5059 = sshll.u32 %s5055, 4
          %s5060 = int_to_ptr.hbm [resolvable:$true] %s5059
          %5062 = dma.vmem_to_hbm [thread:$0]  %s5058, 256, %s5060, %s5044
        $region125: #{mr_dual_hfd_forward.4} parent=100 // pred_fallthru
          _
      $region101: #{mr_dual_hfd_forward.4} parent=5 // pred_fallthru
        _
      %p5063 = scmp.le.s32.totalorder 2, %s15
      // Predicated region
      $region126: #{mr_dual_hfd_forward.4} parent=5 // pred_check
        %p5064 = pneg %p5063
      $region127: #{mr_dual_hfd_forward.4} parent=5 // pred_check_branch
        %5066 = sbr.rel (%p5064) target = $region129
      $region128: #{mr_dual_hfd_forward.4} parent=5 // pred_region
        %s5067 = ssub.s32 %s15, 2
        // Predicated region
        $region130: #{mr_dual_hfd_forward.4} parent=128 // pred_check
          %p5068 = pneg %p204
        $region131: #{mr_dual_hfd_forward.4} parent=128 // pred_check_branch
          %5070 = sbr.rel (%p5068) target = $region133
        $region132: #{mr_dual_hfd_forward.4} parent=128 // pred_region
          %s5071 = sand.u32 %s189, 1
          %s5072 = scalar_lea.sflag [#allocation8], %s5071
          %s5073 = sand.u32 %s189, 1
          %s5074 = smul.addr %s5073, 16
          %s5075 = scalar_lea.vmem [#allocation7], %s5074
          %5077 = dma.done %s5072, 256
        $region133: #{mr_dual_hfd_forward.4} parent=128 // pred_fallthru
          _
      $region129: #{mr_dual_hfd_forward.4} parent=5 // pred_fallthru
        _
    $region6: #{mr_dual_hfd_forward.4} parent=1 // loop_footer
      %s19 = sadd.s32 1, %s15
    $region7: #{mr_dual_hfd_forward.4} parent=1 // loop_footer_branch
      %14 = sbr.rel target = $region3
    $region8: #{mr_dual_hfd_forward.4} parent=1 // loop_exit
      _
    %5078 = vsyncpa [#allocation8], 1
    %s5079 = scalar_lea.sflag [#allocation8], 1
    %5080 = vsyncpa %s5079, 1

</llo_original>
